<compile_context>
chip_gen: v5e
topology: v5e:2x2
jax: 0.10.0
libtpu: 0.0.40
codegen_flags: <defaults>
</compile_context>

<pallas_src>
import numpy as np

import jax
import jax.numpy as jnp
from jax.experimental import pallas as pl
from jax.experimental.pallas import tpu as pltpu


# ----------------------------- constant gather matrices (0/1 -> lossless in bf16) ----

def build_gather_constants():
    H = 16          # input / final output spatial size
    Ho2 = 8         # latent spatial size
    L = 17          # decoder zero-interleaved spatial size

    # enc1 taps: 3x3, stride 1, pad 1, 16x16 -> 16x16
    g1 = np.zeros((9, H * H, H * H), np.float32)
    for i in range(3):
        for j in range(3):
            t = i * 3 + j
            for ho in range(H):
                for wo in range(H):
                    hi, wi = ho + i - 1, wo + j - 1
                    if 0 <= hi < H and 0 <= wi < H:
                        g1[t, hi * H + wi, ho * H + wo] = 1.0

    # enc2 taps: 3x3, stride 2, pad 1, 16x16 -> 8x8
    g2 = np.zeros((9, H * H, Ho2 * Ho2), np.float32)
    for i in range(3):
        for j in range(3):
            t = i * 3 + j
            for ho in range(Ho2):
                for wo in range(Ho2):
                    hi, wi = 2 * ho + i - 1, 2 * wo + j - 1
                    if 0 <= hi < H and 0 <= wi < H:
                        g2[t, hi * H + wi, ho * Ho2 + wo] = 1.0

    # decoder zero-interleave: z(8x8) placed at odd positions of 17x17
    u = np.zeros((Ho2 * Ho2, L * L), np.float32)
    for hz in range(Ho2):
        for wz in range(Ho2):
            u[hz * Ho2 + wz, (2 * hz + 1) * L + (2 * wz + 1)] = 1.0

    # dec1 taps (3x3, s1, p1, 17x17 -> 17x17), folded with the interleave: UG_t = U @ G3_t
    ug = np.zeros((9, Ho2 * Ho2, L * L), np.float32)
    for i in range(3):
        for j in range(3):
            t = i * 3 + j
            g3 = np.zeros((L * L, L * L), np.float32)
            for ho in range(L):
                for wo in range(L):
                    hi, wi = ho + i - 1, wo + j - 1
                    if 0 <= hi < L and 0 <= wi < L:
                        g3[hi * L + wi, ho * L + wo] = 1.0
            ug[t] = u @ g3

    # dec2 taps: 2x2, stride 1, valid, 17x17 -> 16x16
    s4 = np.zeros((4, L * L, H * H), np.float32)
    for i in range(2):
        for j in range(2):
            t = i * 2 + j
            for ho in range(H):
                for wo in range(H):
                    s4[t, (ho + i) * L + (wo + j), ho * H + wo] = 1.0

    # 0/1 matrices -> bf16 is exact; halves HBM traffic and VMEM footprint.
    bf16 = jnp.bfloat16
    return {"g1": jnp.asarray(g1, bf16), "g2": jnp.asarray(g2, bf16),
            "ug": jnp.asarray(ug, bf16), "s4": jnp.asarray(s4, bf16)}


# ----------------------------- fused Pallas kernel -----------------------------

def _tree_sum(parts):
    """Balanced (log-depth) sum of a Python list of arrays."""
    while len(parts) > 1:
        nxt = [parts[i] + parts[i + 1] for i in range(0, len(parts) - 1, 2)]
        if len(parts) % 2:
            nxt.append(parts[-1])
        parts = nxt
    return parts[0]


def _autoencoder_kernel(x_ref, w1_ref, b1_ref, g1_ref, w2_ref, b2_ref, g2_ref,
                        w3_ref, b3_ref, ug_ref, w4_ref, b4_ref, s4_ref,
                        z_ref, xh_ref):
    f32 = jnp.float32
    bf16 = jnp.bfloat16
    x = x_ref[0]                                                         # (3, 256) bf16

    # ---- Encoder conv1: 3->16, 3x3, s1, p1, ReLU ----
    # one K=3 weight matmul for all 9 taps, then 9 independent K=256 gather matmuls
    wx1 = jnp.dot(w1_ref[...], x, preferred_element_type=f32)            # (144, 256) f32
    p1 = [jnp.dot(wx1[t * 16:(t + 1) * 16, :].astype(bf16), g1_ref[t],
                  preferred_element_type=f32) for t in range(9)]         # 9 x (16, 256)
    a1 = jnp.maximum(_tree_sum(p1) + b1_ref[...], 0.0)                   # (16, 256) f32

    # ---- Encoder conv2: 16->32, 3x3, s2, p1, ReLU ----
    wx2 = jnp.dot(w2_ref[...], a1.astype(bf16),
                  preferred_element_type=f32)                            # (288, 256) f32
    p2 = [jnp.dot(wx2[t * 32:(t + 1) * 32, :].astype(bf16), g2_ref[t],
                  preferred_element_type=f32) for t in range(9)]         # 9 x (32, 64)
    z = jnp.maximum(_tree_sum(p2) + b2_ref[...], 0.0)                    # (32, 64) f32
    z_ref[0] = z.astype(z_ref.dtype)

    # ---- Decoder zero-interleave + conv1 (folded): 32->16, 3x3, s1, p1, ReLU ----
    wz = jnp.dot(w3_ref[...], z.astype(bf16),
                 preferred_element_type=f32)                             # (144, 64) f32
    p3 = [jnp.dot(wz[t * 16:(t + 1) * 16, :].astype(bf16), ug_ref[t],
                  preferred_element_type=f32) for t in range(9)]         # 9 x (16, 289)
    d = jnp.maximum(_tree_sum(p3) + b3_ref[...], 0.0)                    # (16, 289) f32

    # ---- Decoder conv2: 16->3 (rows zero-padded to 8), 2x2, s1, p0, Tanh ----
    wd = jnp.dot(w4_ref[...], d.astype(bf16),
                 preferred_element_type=f32)                             # (32, 289) f32
    p4 = [jnp.dot(wd[t * 8:(t + 1) * 8, :].astype(bf16), s4_ref[t],
                  preferred_element_type=f32) for t in range(4)]         # 4 x (8, 256)
    acc4 = _tree_sum(p4)                                                 # (8, 256)
    xh = jnp.tanh(acc4[0:3, :] + b4_ref[...])                            # (3, 256)
    xh_ref[0] = xh.astype(xh_ref.dtype)


# ----------------------------- wrapper -----------------------------

def _w2d(w, pad_cout_to=None):
    # PyTorch (Cout, Cin, kh, kw) -> (kh*kw*Cp, Cin) bf16, rows tap-major then cout,
    # optionally zero-padding Cout to a sublane-aligned Cp.
    cout, cin, kh, kw = w.shape
    wt = jnp.transpose(w, (2, 3, 0, 1)).reshape(kh * kw, cout, cin)
    if pad_cout_to is not None and pad_cout_to > cout:
        wt = jnp.pad(wt, ((0, 0), (0, pad_cout_to - cout), (0, 0)))
    return wt.reshape(-1, cin).astype(jnp.bfloat16)


def _b2d(b):
    return b.reshape(-1, 1).astype(jnp.float32)


def autoencoder_forward(params, consts, x_nchw):
    n = x_nchw.shape[0]
    x2 = x_nchw.reshape(n, 3, 256).astype(jnp.bfloat16)

    w1, b1 = params["enc1"]
    w2, b2 = params["enc2"]
    w3, b3 = params["dec1"]
    w4, b4 = params["dec2"]

    inputs = (x2,
              _w2d(w1), _b2d(b1), consts["g1"],
              _w2d(w2), _b2d(b2), consts["g2"],
              _w2d(w3), _b2d(b3), consts["ug"],
              _w2d(w4, pad_cout_to=8), _b2d(b4), consts["s4"])

    macs_per_img = (144 * 3 * 256 + 9 * 16 * 256 * 256          # enc1
                    + 288 * 16 * 256 + 9 * 32 * 256 * 64        # enc2
                    + 144 * 32 * 64 + 9 * 16 * 64 * 289         # dec1 (interleave folded)
                    + 32 * 16 * 289 + 4 * 8 * 289 * 256)        # dec2
    bytes_accessed = sum(int(a.size) * a.dtype.itemsize for a in inputs)
    bytes_accessed += n * (32 * 64 + 3 * 256) * 4
    cost = pl.CostEstimate(flops=2 * macs_per_img * n,
                           transcendentals=n * 3 * 256,
                           bytes_accessed=int(bytes_accessed))

    def _full_spec(a):
        nd = a.ndim
        return pl.BlockSpec(a.shape, lambda b, _nd=nd: (0,) * _nd)

    in_specs = [pl.BlockSpec((1, 3, 256), lambda b: (b, 0, 0))]
    in_specs += [_full_spec(a) for a in inputs[1:]]

    z2, xh2 = pl.pallas_call(
        _autoencoder_kernel,
        grid=(n,),
        in_specs=in_specs,
        out_specs=(pl.BlockSpec((1, 32, 64), lambda b: (b, 0, 0)),
                   pl.BlockSpec((1, 3, 256), lambda b: (b, 0, 0))),
        out_shape=(jax.ShapeDtypeStruct((n, 32, 64), jnp.float32),
                   jax.ShapeDtypeStruct((n, 3, 256), jnp.float32)),
        compiler_params=pltpu.CompilerParams(
            dimension_semantics=("parallel",),
            vmem_limit_bytes=16 * 1024 * 1024),
        cost_estimate=cost,
    )(*inputs)

    return z2.reshape(n, 32, 8, 8), xh2.reshape(n, 3, 16, 16)


# ----------------------------- params & pure-JAX reference -----------------------------

def init_params(key):
    def conv_init(k, cout, cin, kh, kw):
        k1, k2 = jax.random.split(k)
        fan_in = cin * kh * kw
        bound = 1.0 / float(fan_in) ** 0.5
        w = jax.random.uniform(k1, (cout, cin, kh, kw), jnp.float32, -bound, bound)
        b = jax.random.uniform(k2, (cout,), jnp.float32, -bound, bound)
        return w, b

    ks = jax.random.split(key, 4)
    return {
        "enc1": conv_init(ks[0], 16, 3, 3, 3),   # Conv2d(3, 16, 3, 1, 1)
        "enc2": conv_init(ks[1], 32, 16, 3, 3),  # Conv2d(16, 32, 3, 2, 1)
        "dec1": conv_init(ks[2], 16, 32, 3, 3),  # Conv2d(32, 16, 3, 1, 1)
        "dec2": conv_init(ks[3], 3, 16, 2, 2),   # Conv2d(16, 3, 2, 1)
    }


def reference_forward(params, x):
    def conv(inp, w, b, stride, pad):
        out = jax.lax.conv_general_dilated(
            inp, w, window_strides=(stride, stride),
            padding=((pad, pad), (pad, pad)),
            dimension_numbers=("NCHW", "OIHW", "NCHW"),
            precision=jax.lax.Precision.HIGHEST)
        return out + b[None, :, None, None]

    h = jax.nn.relu(conv(x, *params["enc1"], 1, 1))
    z = jax.nn.relu(conv(h, *params["enc2"], 2, 1))
    n, c, hz, wz = z.shape
    zp = jnp.zeros((n, c, 2 * hz + 1, 2 * wz + 1), z.dtype).at[:, :, 1::2, 1::2].set(z)
    d = jax.nn.relu(conv(zp, *params["dec1"], 1, 1))
    x_hat = jnp.tanh(conv(d, *params["dec2"], 1, 0))
    return z, x_hat


# ----------------------------- main -----------------------------

if __name__ == "__main__":
    key = jax.random.PRNGKey(0)
    pkey, xkey = jax.random.split(key)
    params = init_params(pkey)
    x = jax.random.normal(xkey, (2, 3, 16, 16), jnp.float32)  # NCHW, like PyTorch
    consts = build_gather_constants()

    fwd = jax.jit(autoencoder_forward)
    z, x_hat = fwd(params, consts, x)
    jax.block_until_ready((z, x_hat))

    assert z.shape == (2, 32, 8, 8), z.shape
    assert x_hat.shape == (2, 3, 16, 16), x_hat.shape
    assert bool(jnp.all(jnp.isfinite(z))) and bool(jnp.all(jnp.isfinite(x_hat)))

    z_ref, xh_ref = jax.jit(reference_forward)(params, x)
    err_z = float(jnp.max(jnp.abs(z - z_ref)))
    err_x = float(jnp.max(jnp.abs(x_hat - xh_ref)))
    assert err_z < 5e-2 and err_x < 5e-2, (err_z, err_x)

    print("KERNEL_OK")
</pallas_src>

<mosaic_0001>
module attributes {stable_mosaic.version = 11 : i64} {
  func.func @_autoencoder_kernel(%arg0: i32, %arg1: memref<1x3x256xbf16, #tpu.memory_space<vmem>>, %arg2: memref<144x3xbf16, #tpu.memory_space<vmem>>, %arg3: memref<16x1xf32, #tpu.memory_space<vmem>>, %arg4: memref<9x256x256xbf16, #tpu.memory_space<vmem>>, %arg5: memref<288x16xbf16, #tpu.memory_space<vmem>>, %arg6: memref<32x1xf32, #tpu.memory_space<vmem>>, %arg7: memref<9x256x64xbf16, #tpu.memory_space<vmem>>, %arg8: memref<144x32xbf16, #tpu.memory_space<vmem>>, %arg9: memref<16x1xf32, #tpu.memory_space<vmem>>, %arg10: memref<9x64x289xbf16, #tpu.memory_space<vmem>>, %arg11: memref<32x16xbf16, #tpu.memory_space<vmem>>, %arg12: memref<3x1xf32, #tpu.memory_space<vmem>>, %arg13: memref<4x289x256xbf16, #tpu.memory_space<vmem>>, %arg14: memref<1x32x64xf32, #tpu.memory_space<vmem>>, %arg15: memref<1x3x256xf32, #tpu.memory_space<vmem>>) attributes {dimension_semantics = [#tpu.dimension_semantics<parallel>], iteration_bounds = array<i64: 2>, scalar_prefetch = 0 : i64, scratch_operands = 0 : i64, tpu.core_type = #tpu.core_type<tc>, window_params = [{transform_indices = @transform_0, window_bounds = array<i64: 1, 3, 256>}, {pipeline_mode = #tpu.pipeline_mode<synchronous>, transform_indices = @transform_1, window_bounds = array<i64: 144, 3>}, {pipeline_mode = #tpu.pipeline_mode<synchronous>, transform_indices = @transform_2, window_bounds = array<i64: 16, 1>}, {pipeline_mode = #tpu.pipeline_mode<synchronous>, transform_indices = @transform_3, window_bounds = array<i64: 9, 256, 256>}, {pipeline_mode = #tpu.pipeline_mode<synchronous>, transform_indices = @transform_4, window_bounds = array<i64: 288, 16>}, {pipeline_mode = #tpu.pipeline_mode<synchronous>, transform_indices = @transform_5, window_bounds = array<i64: 32, 1>}, {pipeline_mode = #tpu.pipeline_mode<synchronous>, transform_indices = @transform_6, window_bounds = array<i64: 9, 256, 64>}, {pipeline_mode = #tpu.pipeline_mode<synchronous>, transform_indices = @transform_7, window_bounds = array<i64: 144, 32>}, {pipeline_mode = #tpu.pipeline_mode<synchronous>, transform_indices = @transform_8, window_bounds = array<i64: 16, 1>}, {pipeline_mode = #tpu.pipeline_mode<synchronous>, transform_indices = @transform_9, window_bounds = array<i64: 9, 64, 289>}, {pipeline_mode = #tpu.pipeline_mode<synchronous>, transform_indices = @transform_10, window_bounds = array<i64: 32, 16>}, {pipeline_mode = #tpu.pipeline_mode<synchronous>, transform_indices = @transform_11, window_bounds = array<i64: 3, 1>}, {pipeline_mode = #tpu.pipeline_mode<synchronous>, transform_indices = @transform_12, window_bounds = array<i64: 4, 289, 256>}, {transform_indices = @transform_13, window_bounds = array<i64: 1, 32, 64>}, {transform_indices = @transform_14, window_bounds = array<i64: 1, 3, 256>}]} {
    %c0 = arith.constant 0 : index
    %c0_0 = arith.constant 0 : index
    %c0_1 = arith.constant 0 : index
    %0 = vector.load %arg1[%c0, %c0_0, %c0_1] : memref<1x3x256xbf16, #tpu.memory_space<vmem>>, vector<1x3x256xbf16>
    %1 = vector.shape_cast %0 : vector<1x3x256xbf16> to vector<3x256xbf16>
    %c0_2 = arith.constant 0 : index
    %c0_3 = arith.constant 0 : index
    %2 = vector.load %arg2[%c0_2, %c0_3] : memref<144x3xbf16, #tpu.memory_space<vmem>>, vector<144x3xbf16>
    %cst = arith.constant dense<0.000000e+00> : vector<144x256xf32>
    %3 = tpu.matmul %2, %1, %cst {dimension_numbers = #tpu.dot_dimension_numbers<[1], [0], [0], [1], [0, 0, 1, 1], [], []>} : vector<144x3xbf16>, vector<3x256xbf16>, vector<144x256xf32> -> vector<144x256xf32>
    %4 = vector.extract_strided_slice %3 {offsets = [0, 0], sizes = [16, 256], strides = [1, 1]} : vector<144x256xf32> to vector<16x256xf32>
    %5 = arith.truncf %4 : vector<16x256xf32> to vector<16x256xbf16>
    %c0_4 = arith.constant 0 : index
    %c0_5 = arith.constant 0 : index
    %c0_6 = arith.constant 0 : index
    %6 = vector.load %arg4[%c0_4, %c0_5, %c0_6] : memref<9x256x256xbf16, #tpu.memory_space<vmem>>, vector<1x256x256xbf16>
    %7 = vector.shape_cast %6 : vector<1x256x256xbf16> to vector<256x256xbf16>
    %cst_7 = arith.constant dense<0.000000e+00> : vector<16x256xf32>
    %8 = tpu.matmul %5, %7, %cst_7 {dimension_numbers = #tpu.dot_dimension_numbers<[1], [0], [0], [1], [0, 0, 1, 1], [], []>} : vector<16x256xbf16>, vector<256x256xbf16>, vector<16x256xf32> -> vector<16x256xf32>
    %9 = vector.extract_strided_slice %3 {offsets = [16, 0], sizes = [16, 256], strides = [1, 1]} : vector<144x256xf32> to vector<16x256xf32>
    %10 = arith.truncf %9 : vector<16x256xf32> to vector<16x256xbf16>
    %c1 = arith.constant 1 : index
    %c0_8 = arith.constant 0 : index
    %c0_9 = arith.constant 0 : index
    %11 = vector.load %arg4[%c1, %c0_8, %c0_9] : memref<9x256x256xbf16, #tpu.memory_space<vmem>>, vector<1x256x256xbf16>
    %12 = vector.shape_cast %11 : vector<1x256x256xbf16> to vector<256x256xbf16>
    %cst_10 = arith.constant dense<0.000000e+00> : vector<16x256xf32>
    %13 = tpu.matmul %10, %12, %cst_10 {dimension_numbers = #tpu.dot_dimension_numbers<[1], [0], [0], [1], [0, 0, 1, 1], [], []>} : vector<16x256xbf16>, vector<256x256xbf16>, vector<16x256xf32> -> vector<16x256xf32>
    %14 = vector.extract_strided_slice %3 {offsets = [32, 0], sizes = [16, 256], strides = [1, 1]} : vector<144x256xf32> to vector<16x256xf32>
    %15 = arith.truncf %14 : vector<16x256xf32> to vector<16x256xbf16>
    %c2 = arith.constant 2 : index
    %c0_11 = arith.constant 0 : index
    %c0_12 = arith.constant 0 : index
    %16 = vector.load %arg4[%c2, %c0_11, %c0_12] : memref<9x256x256xbf16, #tpu.memory_space<vmem>>, vector<1x256x256xbf16>
    %17 = vector.shape_cast %16 : vector<1x256x256xbf16> to vector<256x256xbf16>
    %cst_13 = arith.constant dense<0.000000e+00> : vector<16x256xf32>
    %18 = tpu.matmul %15, %17, %cst_13 {dimension_numbers = #tpu.dot_dimension_numbers<[1], [0], [0], [1], [0, 0, 1, 1], [], []>} : vector<16x256xbf16>, vector<256x256xbf16>, vector<16x256xf32> -> vector<16x256xf32>
    %19 = vector.extract_strided_slice %3 {offsets = [48, 0], sizes = [16, 256], strides = [1, 1]} : vector<144x256xf32> to vector<16x256xf32>
    %20 = arith.truncf %19 : vector<16x256xf32> to vector<16x256xbf16>
    %c3 = arith.constant 3 : index
    %c0_14 = arith.constant 0 : index
    %c0_15 = arith.constant 0 : index
    %21 = vector.load %arg4[%c3, %c0_14, %c0_15] : memref<9x256x256xbf16, #tpu.memory_space<vmem>>, vector<1x256x256xbf16>
    %22 = vector.shape_cast %21 : vector<1x256x256xbf16> to vector<256x256xbf16>
    %cst_16 = arith.constant dense<0.000000e+00> : vector<16x256xf32>
    %23 = tpu.matmul %20, %22, %cst_16 {dimension_numbers = #tpu.dot_dimension_numbers<[1], [0], [0], [1], [0, 0, 1, 1], [], []>} : vector<16x256xbf16>, vector<256x256xbf16>, vector<16x256xf32> -> vector<16x256xf32>
    %24 = vector.extract_strided_slice %3 {offsets = [64, 0], sizes = [16, 256], strides = [1, 1]} : vector<144x256xf32> to vector<16x256xf32>
    %25 = arith.truncf %24 : vector<16x256xf32> to vector<16x256xbf16>
    %c4 = arith.constant 4 : index
    %c0_17 = arith.constant 0 : index
    %c0_18 = arith.constant 0 : index
    %26 = vector.load %arg4[%c4, %c0_17, %c0_18] : memref<9x256x256xbf16, #tpu.memory_space<vmem>>, vector<1x256x256xbf16>
    %27 = vector.shape_cast %26 : vector<1x256x256xbf16> to vector<256x256xbf16>
    %cst_19 = arith.constant dense<0.000000e+00> : vector<16x256xf32>
    %28 = tpu.matmul %25, %27, %cst_19 {dimension_numbers = #tpu.dot_dimension_numbers<[1], [0], [0], [1], [0, 0, 1, 1], [], []>} : vector<16x256xbf16>, vector<256x256xbf16>, vector<16x256xf32> -> vector<16x256xf32>
    %29 = vector.extract_strided_slice %3 {offsets = [80, 0], sizes = [16, 256], strides = [1, 1]} : vector<144x256xf32> to vector<16x256xf32>
    %30 = arith.truncf %29 : vector<16x256xf32> to vector<16x256xbf16>
    %c5 = arith.constant 5 : index
    %c0_20 = arith.constant 0 : index
    %c0_21 = arith.constant 0 : index
    %31 = vector.load %arg4[%c5, %c0_20, %c0_21] : memref<9x256x256xbf16, #tpu.memory_space<vmem>>, vector<1x256x256xbf16>
    %32 = vector.shape_cast %31 : vector<1x256x256xbf16> to vector<256x256xbf16>
    %cst_22 = arith.constant dense<0.000000e+00> : vector<16x256xf32>
    %33 = tpu.matmul %30, %32, %cst_22 {dimension_numbers = #tpu.dot_dimension_numbers<[1], [0], [0], [1], [0, 0, 1, 1], [], []>} : vector<16x256xbf16>, vector<256x256xbf16>, vector<16x256xf32> -> vector<16x256xf32>
    %34 = vector.extract_strided_slice %3 {offsets = [96, 0], sizes = [16, 256], strides = [1, 1]} : vector<144x256xf32> to vector<16x256xf32>
    %35 = arith.truncf %34 : vector<16x256xf32> to vector<16x256xbf16>
    %c6 = arith.constant 6 : index
    %c0_23 = arith.constant 0 : index
    %c0_24 = arith.constant 0 : index
    %36 = vector.load %arg4[%c6, %c0_23, %c0_24] : memref<9x256x256xbf16, #tpu.memory_space<vmem>>, vector<1x256x256xbf16>
    %37 = vector.shape_cast %36 : vector<1x256x256xbf16> to vector<256x256xbf16>
    %cst_25 = arith.constant dense<0.000000e+00> : vector<16x256xf32>
    %38 = tpu.matmul %35, %37, %cst_25 {dimension_numbers = #tpu.dot_dimension_numbers<[1], [0], [0], [1], [0, 0, 1, 1], [], []>} : vector<16x256xbf16>, vector<256x256xbf16>, vector<16x256xf32> -> vector<16x256xf32>
    %39 = vector.extract_strided_slice %3 {offsets = [112, 0], sizes = [16, 256], strides = [1, 1]} : vector<144x256xf32> to vector<16x256xf32>
    %40 = arith.truncf %39 : vector<16x256xf32> to vector<16x256xbf16>
    %c7 = arith.constant 7 : index
    %c0_26 = arith.constant 0 : index
    %c0_27 = arith.constant 0 : index
    %41 = vector.load %arg4[%c7, %c0_26, %c0_27] : memref<9x256x256xbf16, #tpu.memory_space<vmem>>, vector<1x256x256xbf16>
    %42 = vector.shape_cast %41 : vector<1x256x256xbf16> to vector<256x256xbf16>
    %cst_28 = arith.constant dense<0.000000e+00> : vector<16x256xf32>
    %43 = tpu.matmul %40, %42, %cst_28 {dimension_numbers = #tpu.dot_dimension_numbers<[1], [0], [0], [1], [0, 0, 1, 1], [], []>} : vector<16x256xbf16>, vector<256x256xbf16>, vector<16x256xf32> -> vector<16x256xf32>
    %44 = vector.extract_strided_slice %3 {offsets = [128, 0], sizes = [16, 256], strides = [1, 1]} : vector<144x256xf32> to vector<16x256xf32>
    %45 = arith.truncf %44 : vector<16x256xf32> to vector<16x256xbf16>
    %c8 = arith.constant 8 : index
    %c0_29 = arith.constant 0 : index
    %c0_30 = arith.constant 0 : index
    %46 = vector.load %arg4[%c8, %c0_29, %c0_30] : memref<9x256x256xbf16, #tpu.memory_space<vmem>>, vector<1x256x256xbf16>
    %47 = vector.shape_cast %46 : vector<1x256x256xbf16> to vector<256x256xbf16>
    %cst_31 = arith.constant dense<0.000000e+00> : vector<16x256xf32>
    %48 = tpu.matmul %45, %47, %cst_31 {dimension_numbers = #tpu.dot_dimension_numbers<[1], [0], [0], [1], [0, 0, 1, 1], [], []>} : vector<16x256xbf16>, vector<256x256xbf16>, vector<16x256xf32> -> vector<16x256xf32>
    %49 = arith.addf %8, %13 : vector<16x256xf32>
    %50 = arith.addf %18, %23 : vector<16x256xf32>
    %51 = arith.addf %28, %33 : vector<16x256xf32>
    %52 = arith.addf %38, %43 : vector<16x256xf32>
    %53 = arith.addf %49, %50 : vector<16x256xf32>
    %54 = arith.addf %51, %52 : vector<16x256xf32>
    %55 = arith.addf %53, %54 : vector<16x256xf32>
    %56 = arith.addf %55, %48 : vector<16x256xf32>
    %c0_32 = arith.constant 0 : index
    %c0_33 = arith.constant 0 : index
    %57 = vector.load %arg3[%c0_32, %c0_33] : memref<16x1xf32, #tpu.memory_space<vmem>>, vector<16x1xf32>
    %58 = vector.broadcast %57 : vector<16x1xf32> to vector<16x256xf32>
    %59 = arith.addf %56, %58 : vector<16x256xf32>
    %cst_34 = arith.constant 0.000000e+00 : f32
    %60 = vector.broadcast %cst_34 : f32 to vector<16x256xf32>
    %61 = arith.maximumf %59, %60 : vector<16x256xf32>
    %c0_35 = arith.constant 0 : index
    %c0_36 = arith.constant 0 : index
    %62 = vector.load %arg5[%c0_35, %c0_36] : memref<288x16xbf16, #tpu.memory_space<vmem>>, vector<288x16xbf16>
    %63 = arith.truncf %61 : vector<16x256xf32> to vector<16x256xbf16>
    %cst_37 = arith.constant dense<0.000000e+00> : vector<288x256xf32>
    %64 = tpu.matmul %62, %63, %cst_37 {dimension_numbers = #tpu.dot_dimension_numbers<[1], [0], [0], [1], [0, 0, 1, 1], [], []>} : vector<288x16xbf16>, vector<16x256xbf16>, vector<288x256xf32> -> vector<288x256xf32>
    %65 = vector.extract_strided_slice %64 {offsets = [0, 0], sizes = [32, 256], strides = [1, 1]} : vector<288x256xf32> to vector<32x256xf32>
    %66 = arith.truncf %65 : vector<32x256xf32> to vector<32x256xbf16>
    %c0_38 = arith.constant 0 : index
    %c0_39 = arith.constant 0 : index
    %c0_40 = arith.constant 0 : index
    %67 = vector.load %arg7[%c0_38, %c0_39, %c0_40] : memref<9x256x64xbf16, #tpu.memory_space<vmem>>, vector<1x256x64xbf16>
    %68 = vector.shape_cast %67 : vector<1x256x64xbf16> to vector<256x64xbf16>
    %cst_41 = arith.constant dense<0.000000e+00> : vector<32x64xf32>
    %69 = tpu.matmul %66, %68, %cst_41 {dimension_numbers = #tpu.dot_dimension_numbers<[1], [0], [0], [1], [0, 0, 1, 1], [], []>} : vector<32x256xbf16>, vector<256x64xbf16>, vector<32x64xf32> -> vector<32x64xf32>
    %70 = vector.extract_strided_slice %64 {offsets = [32, 0], sizes = [32, 256], strides = [1, 1]} : vector<288x256xf32> to vector<32x256xf32>
    %71 = arith.truncf %70 : vector<32x256xf32> to vector<32x256xbf16>
    %c1_42 = arith.constant 1 : index
    %c0_43 = arith.constant 0 : index
    %c0_44 = arith.constant 0 : index
    %72 = vector.load %arg7[%c1_42, %c0_43, %c0_44] : memref<9x256x64xbf16, #tpu.memory_space<vmem>>, vector<1x256x64xbf16>
    %73 = vector.shape_cast %72 : vector<1x256x64xbf16> to vector<256x64xbf16>
    %cst_45 = arith.constant dense<0.000000e+00> : vector<32x64xf32>
    %74 = tpu.matmul %71, %73, %cst_45 {dimension_numbers = #tpu.dot_dimension_numbers<[1], [0], [0], [1], [0, 0, 1, 1], [], []>} : vector<32x256xbf16>, vector<256x64xbf16>, vector<32x64xf32> -> vector<32x64xf32>
    %75 = vector.extract_strided_slice %64 {offsets = [64, 0], sizes = [32, 256], strides = [1, 1]} : vector<288x256xf32> to vector<32x256xf32>
    %76 = arith.truncf %75 : vector<32x256xf32> to vector<32x256xbf16>
    %c2_46 = arith.constant 2 : index
    %c0_47 = arith.constant 0 : index
    %c0_48 = arith.constant 0 : index
    %77 = vector.load %arg7[%c2_46, %c0_47, %c0_48] : memref<9x256x64xbf16, #tpu.memory_space<vmem>>, vector<1x256x64xbf16>
    %78 = vector.shape_cast %77 : vector<1x256x64xbf16> to vector<256x64xbf16>
    %cst_49 = arith.constant dense<0.000000e+00> : vector<32x64xf32>
    %79 = tpu.matmul %76, %78, %cst_49 {dimension_numbers = #tpu.dot_dimension_numbers<[1], [0], [0], [1], [0, 0, 1, 1], [], []>} : vector<32x256xbf16>, vector<256x64xbf16>, vector<32x64xf32> -> vector<32x64xf32>
    %80 = vector.extract_strided_slice %64 {offsets = [96, 0], sizes = [32, 256], strides = [1, 1]} : vector<288x256xf32> to vector<32x256xf32>
    %81 = arith.truncf %80 : vector<32x256xf32> to vector<32x256xbf16>
    %c3_50 = arith.constant 3 : index
    %c0_51 = arith.constant 0 : index
    %c0_52 = arith.constant 0 : index
    %82 = vector.load %arg7[%c3_50, %c0_51, %c0_52] : memref<9x256x64xbf16, #tpu.memory_space<vmem>>, vector<1x256x64xbf16>
    %83 = vector.shape_cast %82 : vector<1x256x64xbf16> to vector<256x64xbf16>
    %cst_53 = arith.constant dense<0.000000e+00> : vector<32x64xf32>
    %84 = tpu.matmul %81, %83, %cst_53 {dimension_numbers = #tpu.dot_dimension_numbers<[1], [0], [0], [1], [0, 0, 1, 1], [], []>} : vector<32x256xbf16>, vector<256x64xbf16>, vector<32x64xf32> -> vector<32x64xf32>
    %85 = vector.extract_strided_slice %64 {offsets = [128, 0], sizes = [32, 256], strides = [1, 1]} : vector<288x256xf32> to vector<32x256xf32>
    %86 = arith.truncf %85 : vector<32x256xf32> to vector<32x256xbf16>
    %c4_54 = arith.constant 4 : index
    %c0_55 = arith.constant 0 : index
    %c0_56 = arith.constant 0 : index
    %87 = vector.load %arg7[%c4_54, %c0_55, %c0_56] : memref<9x256x64xbf16, #tpu.memory_space<vmem>>, vector<1x256x64xbf16>
    %88 = vector.shape_cast %87 : vector<1x256x64xbf16> to vector<256x64xbf16>
    %cst_57 = arith.constant dense<0.000000e+00> : vector<32x64xf32>
    %89 = tpu.matmul %86, %88, %cst_57 {dimension_numbers = #tpu.dot_dimension_numbers<[1], [0], [0], [1], [0, 0, 1, 1], [], []>} : vector<32x256xbf16>, vector<256x64xbf16>, vector<32x64xf32> -> vector<32x64xf32>
    %90 = vector.extract_strided_slice %64 {offsets = [160, 0], sizes = [32, 256], strides = [1, 1]} : vector<288x256xf32> to vector<32x256xf32>
    %91 = arith.truncf %90 : vector<32x256xf32> to vector<32x256xbf16>
    %c5_58 = arith.constant 5 : index
    %c0_59 = arith.constant 0 : index
    %c0_60 = arith.constant 0 : index
    %92 = vector.load %arg7[%c5_58, %c0_59, %c0_60] : memref<9x256x64xbf16, #tpu.memory_space<vmem>>, vector<1x256x64xbf16>
    %93 = vector.shape_cast %92 : vector<1x256x64xbf16> to vector<256x64xbf16>
    %cst_61 = arith.constant dense<0.000000e+00> : vector<32x64xf32>
    %94 = tpu.matmul %91, %93, %cst_61 {dimension_numbers = #tpu.dot_dimension_numbers<[1], [0], [0], [1], [0, 0, 1, 1], [], []>} : vector<32x256xbf16>, vector<256x64xbf16>, vector<32x64xf32> -> vector<32x64xf32>
    %95 = vector.extract_strided_slice %64 {offsets = [192, 0], sizes = [32, 256], strides = [1, 1]} : vector<288x256xf32> to vector<32x256xf32>
    %96 = arith.truncf %95 : vector<32x256xf32> to vector<32x256xbf16>
    %c6_62 = arith.constant 6 : index
    %c0_63 = arith.constant 0 : index
    %c0_64 = arith.constant 0 : index
    %97 = vector.load %arg7[%c6_62, %c0_63, %c0_64] : memref<9x256x64xbf16, #tpu.memory_space<vmem>>, vector<1x256x64xbf16>
    %98 = vector.shape_cast %97 : vector<1x256x64xbf16> to vector<256x64xbf16>
    %cst_65 = arith.constant dense<0.000000e+00> : vector<32x64xf32>
    %99 = tpu.matmul %96, %98, %cst_65 {dimension_numbers = #tpu.dot_dimension_numbers<[1], [0], [0], [1], [0, 0, 1, 1], [], []>} : vector<32x256xbf16>, vector<256x64xbf16>, vector<32x64xf32> -> vector<32x64xf32>
    %100 = vector.extract_strided_slice %64 {offsets = [224, 0], sizes = [32, 256], strides = [1, 1]} : vector<288x256xf32> to vector<32x256xf32>
    %101 = arith.truncf %100 : vector<32x256xf32> to vector<32x256xbf16>
    %c7_66 = arith.constant 7 : index
    %c0_67 = arith.constant 0 : index
    %c0_68 = arith.constant 0 : index
    %102 = vector.load %arg7[%c7_66, %c0_67, %c0_68] : memref<9x256x64xbf16, #tpu.memory_space<vmem>>, vector<1x256x64xbf16>
    %103 = vector.shape_cast %102 : vector<1x256x64xbf16> to vector<256x64xbf16>
    %cst_69 = arith.constant dense<0.000000e+00> : vector<32x64xf32>
    %104 = tpu.matmul %101, %103, %cst_69 {dimension_numbers = #tpu.dot_dimension_numbers<[1], [0], [0], [1], [0, 0, 1, 1], [], []>} : vector<32x256xbf16>, vector<256x64xbf16>, vector<32x64xf32> -> vector<32x64xf32>
    %105 = vector.extract_strided_slice %64 {offsets = [256, 0], sizes = [32, 256], strides = [1, 1]} : vector<288x256xf32> to vector<32x256xf32>
    %106 = arith.truncf %105 : vector<32x256xf32> to vector<32x256xbf16>
    %c8_70 = arith.constant 8 : index
    %c0_71 = arith.constant 0 : index
    %c0_72 = arith.constant 0 : index
    %107 = vector.load %arg7[%c8_70, %c0_71, %c0_72] : memref<9x256x64xbf16, #tpu.memory_space<vmem>>, vector<1x256x64xbf16>
    %108 = vector.shape_cast %107 : vector<1x256x64xbf16> to vector<256x64xbf16>
    %cst_73 = arith.constant dense<0.000000e+00> : vector<32x64xf32>
    %109 = tpu.matmul %106, %108, %cst_73 {dimension_numbers = #tpu.dot_dimension_numbers<[1], [0], [0], [1], [0, 0, 1, 1], [], []>} : vector<32x256xbf16>, vector<256x64xbf16>, vector<32x64xf32> -> vector<32x64xf32>
    %110 = arith.addf %69, %74 : vector<32x64xf32>
    %111 = arith.addf %79, %84 : vector<32x64xf32>
    %112 = arith.addf %89, %94 : vector<32x64xf32>
    %113 = arith.addf %99, %104 : vector<32x64xf32>
    %114 = arith.addf %110, %111 : vector<32x64xf32>
    %115 = arith.addf %112, %113 : vector<32x64xf32>
    %116 = arith.addf %114, %115 : vector<32x64xf32>
    %117 = arith.addf %116, %109 : vector<32x64xf32>
    %c0_74 = arith.constant 0 : index
    %c0_75 = arith.constant 0 : index
    %118 = vector.load %arg6[%c0_74, %c0_75] : memref<32x1xf32, #tpu.memory_space<vmem>>, vector<32x1xf32>
    %119 = vector.broadcast %118 : vector<32x1xf32> to vector<32x64xf32>
    %120 = arith.addf %117, %119 : vector<32x64xf32>
    %cst_76 = arith.constant 0.000000e+00 : f32
    %121 = vector.broadcast %cst_76 : f32 to vector<32x64xf32>
    %122 = arith.maximumf %120, %121 : vector<32x64xf32>
    %c0_77 = arith.constant 0 : index
    %c0_78 = arith.constant 0 : index
    %c0_79 = arith.constant 0 : index
    %123 = vector.load %arg14[%c0_77, %c0_78, %c0_79] : memref<1x32x64xf32, #tpu.memory_space<vmem>>, vector<1x32x64xf32>
    %124 = vector.shape_cast %123 : vector<1x32x64xf32> to vector<32x64xf32>
    %125 = vector.shape_cast %122 : vector<32x64xf32> to vector<1x32x64xf32>
    tpu.vector_store %arg14[%c0_77, %c0_78, %c0_79], %125 {strides = array<i32>} : memref<1x32x64xf32, #tpu.memory_space<vmem>>, vector<1x32x64xf32>,
    %c0_80 = arith.constant 0 : index
    %c0_81 = arith.constant 0 : index
    %126 = vector.load %arg8[%c0_80, %c0_81] : memref<144x32xbf16, #tpu.memory_space<vmem>>, vector<144x32xbf16>
    %127 = arith.truncf %122 : vector<32x64xf32> to vector<32x64xbf16>
    %cst_82 = arith.constant dense<0.000000e+00> : vector<144x64xf32>
    %128 = tpu.matmul %126, %127, %cst_82 {dimension_numbers = #tpu.dot_dimension_numbers<[1], [0], [0], [1], [0, 0, 1, 1], [], []>} : vector<144x32xbf16>, vector<32x64xbf16>, vector<144x64xf32> -> vector<144x64xf32>
    %129 = vector.extract_strided_slice %128 {offsets = [0, 0], sizes = [16, 64], strides = [1, 1]} : vector<144x64xf32> to vector<16x64xf32>
    %130 = arith.truncf %129 : vector<16x64xf32> to vector<16x64xbf16>
    %c0_83 = arith.constant 0 : index
    %c0_84 = arith.constant 0 : index
    %c0_85 = arith.constant 0 : index
    %131 = vector.load %arg10[%c0_83, %c0_84, %c0_85] : memref<9x64x289xbf16, #tpu.memory_space<vmem>>, vector<1x64x289xbf16>
    %132 = vector.shape_cast %131 : vector<1x64x289xbf16> to vector<64x289xbf16>
    %cst_86 = arith.constant dense<0.000000e+00> : vector<16x289xf32>
    %133 = tpu.matmul %130, %132, %cst_86 {dimension_numbers = #tpu.dot_dimension_numbers<[1], [0], [0], [1], [0, 0, 1, 1], [], []>} : vector<16x64xbf16>, vector<64x289xbf16>, vector<16x289xf32> -> vector<16x289xf32>
    %134 = vector.extract_strided_slice %128 {offsets = [16, 0], sizes = [16, 64], strides = [1, 1]} : vector<144x64xf32> to vector<16x64xf32>
    %135 = arith.truncf %134 : vector<16x64xf32> to vector<16x64xbf16>
    %c1_87 = arith.constant 1 : index
    %c0_88 = arith.constant 0 : index
    %c0_89 = arith.constant 0 : index
    %136 = vector.load %arg10[%c1_87, %c0_88, %c0_89] : memref<9x64x289xbf16, #tpu.memory_space<vmem>>, vector<1x64x289xbf16>
    %137 = vector.shape_cast %136 : vector<1x64x289xbf16> to vector<64x289xbf16>
    %cst_90 = arith.constant dense<0.000000e+00> : vector<16x289xf32>
    %138 = tpu.matmul %135, %137, %cst_90 {dimension_numbers = #tpu.dot_dimension_numbers<[1], [0], [0], [1], [0, 0, 1, 1], [], []>} : vector<16x64xbf16>, vector<64x289xbf16>, vector<16x289xf32> -> vector<16x289xf32>
    %139 = vector.extract_strided_slice %128 {offsets = [32, 0], sizes = [16, 64], strides = [1, 1]} : vector<144x64xf32> to vector<16x64xf32>
    %140 = arith.truncf %139 : vector<16x64xf32> to vector<16x64xbf16>
    %c2_91 = arith.constant 2 : index
    %c0_92 = arith.constant 0 : index
    %c0_93 = arith.constant 0 : index
    %141 = vector.load %arg10[%c2_91, %c0_92, %c0_93] : memref<9x64x289xbf16, #tpu.memory_space<vmem>>, vector<1x64x289xbf16>
    %142 = vector.shape_cast %141 : vector<1x64x289xbf16> to vector<64x289xbf16>
    %cst_94 = arith.constant dense<0.000000e+00> : vector<16x289xf32>
    %143 = tpu.matmul %140, %142, %cst_94 {dimension_numbers = #tpu.dot_dimension_numbers<[1], [0], [0], [1], [0, 0, 1, 1], [], []>} : vector<16x64xbf16>, vector<64x289xbf16>, vector<16x289xf32> -> vector<16x289xf32>
    %144 = vector.extract_strided_slice %128 {offsets = [48, 0], sizes = [16, 64], strides = [1, 1]} : vector<144x64xf32> to vector<16x64xf32>
    %145 = arith.truncf %144 : vector<16x64xf32> to vector<16x64xbf16>
    %c3_95 = arith.constant 3 : index
    %c0_96 = arith.constant 0 : index
    %c0_97 = arith.constant 0 : index
    %146 = vector.load %arg10[%c3_95, %c0_96, %c0_97] : memref<9x64x289xbf16, #tpu.memory_space<vmem>>, vector<1x64x289xbf16>
    %147 = vector.shape_cast %146 : vector<1x64x289xbf16> to vector<64x289xbf16>
    %cst_98 = arith.constant dense<0.000000e+00> : vector<16x289xf32>
    %148 = tpu.matmul %145, %147, %cst_98 {dimension_numbers = #tpu.dot_dimension_numbers<[1], [0], [0], [1], [0, 0, 1, 1], [], []>} : vector<16x64xbf16>, vector<64x289xbf16>, vector<16x289xf32> -> vector<16x289xf32>
    %149 = vector.extract_strided_slice %128 {offsets = [64, 0], sizes = [16, 64], strides = [1, 1]} : vector<144x64xf32> to vector<16x64xf32>
    %150 = arith.truncf %149 : vector<16x64xf32> to vector<16x64xbf16>
    %c4_99 = arith.constant 4 : index
    %c0_100 = arith.constant 0 : index
    %c0_101 = arith.constant 0 : index
    %151 = vector.load %arg10[%c4_99, %c0_100, %c0_101] : memref<9x64x289xbf16, #tpu.memory_space<vmem>>, vector<1x64x289xbf16>
    %152 = vector.shape_cast %151 : vector<1x64x289xbf16> to vector<64x289xbf16>
    %cst_102 = arith.constant dense<0.000000e+00> : vector<16x289xf32>
    %153 = tpu.matmul %150, %152, %cst_102 {dimension_numbers = #tpu.dot_dimension_numbers<[1], [0], [0], [1], [0, 0, 1, 1], [], []>} : vector<16x64xbf16>, vector<64x289xbf16>, vector<16x289xf32> -> vector<16x289xf32>
    %154 = vector.extract_strided_slice %128 {offsets = [80, 0], sizes = [16, 64], strides = [1, 1]} : vector<144x64xf32> to vector<16x64xf32>
    %155 = arith.truncf %154 : vector<16x64xf32> to vector<16x64xbf16>
    %c5_103 = arith.constant 5 : index
    %c0_104 = arith.constant 0 : index
    %c0_105 = arith.constant 0 : index
    %156 = vector.load %arg10[%c5_103, %c0_104, %c0_105] : memref<9x64x289xbf16, #tpu.memory_space<vmem>>, vector<1x64x289xbf16>
    %157 = vector.shape_cast %156 : vector<1x64x289xbf16> to vector<64x289xbf16>
    %cst_106 = arith.constant dense<0.000000e+00> : vector<16x289xf32>
    %158 = tpu.matmul %155, %157, %cst_106 {dimension_numbers = #tpu.dot_dimension_numbers<[1], [0], [0], [1], [0, 0, 1, 1], [], []>} : vector<16x64xbf16>, vector<64x289xbf16>, vector<16x289xf32> -> vector<16x289xf32>
    %159 = vector.extract_strided_slice %128 {offsets = [96, 0], sizes = [16, 64], strides = [1, 1]} : vector<144x64xf32> to vector<16x64xf32>
    %160 = arith.truncf %159 : vector<16x64xf32> to vector<16x64xbf16>
    %c6_107 = arith.constant 6 : index
    %c0_108 = arith.constant 0 : index
    %c0_109 = arith.constant 0 : index
    %161 = vector.load %arg10[%c6_107, %c0_108, %c0_109] : memref<9x64x289xbf16, #tpu.memory_space<vmem>>, vector<1x64x289xbf16>
    %162 = vector.shape_cast %161 : vector<1x64x289xbf16> to vector<64x289xbf16>
    %cst_110 = arith.constant dense<0.000000e+00> : vector<16x289xf32>
    %163 = tpu.matmul %160, %162, %cst_110 {dimension_numbers = #tpu.dot_dimension_numbers<[1], [0], [0], [1], [0, 0, 1, 1], [], []>} : vector<16x64xbf16>, vector<64x289xbf16>, vector<16x289xf32> -> vector<16x289xf32>
    %164 = vector.extract_strided_slice %128 {offsets = [112, 0], sizes = [16, 64], strides = [1, 1]} : vector<144x64xf32> to vector<16x64xf32>
    %165 = arith.truncf %164 : vector<16x64xf32> to vector<16x64xbf16>
    %c7_111 = arith.constant 7 : index
    %c0_112 = arith.constant 0 : index
    %c0_113 = arith.constant 0 : index
    %166 = vector.load %arg10[%c7_111, %c0_112, %c0_113] : memref<9x64x289xbf16, #tpu.memory_space<vmem>>, vector<1x64x289xbf16>
    %167 = vector.shape_cast %166 : vector<1x64x289xbf16> to vector<64x289xbf16>
    %cst_114 = arith.constant dense<0.000000e+00> : vector<16x289xf32>
    %168 = tpu.matmul %165, %167, %cst_114 {dimension_numbers = #tpu.dot_dimension_numbers<[1], [0], [0], [1], [0, 0, 1, 1], [], []>} : vector<16x64xbf16>, vector<64x289xbf16>, vector<16x289xf32> -> vector<16x289xf32>
    %169 = vector.extract_strided_slice %128 {offsets = [128, 0], sizes = [16, 64], strides = [1, 1]} : vector<144x64xf32> to vector<16x64xf32>
    %170 = arith.truncf %169 : vector<16x64xf32> to vector<16x64xbf16>
    %c8_115 = arith.constant 8 : index
    %c0_116 = arith.constant 0 : index
    %c0_117 = arith.constant 0 : index
    %171 = vector.load %arg10[%c8_115, %c0_116, %c0_117] : memref<9x64x289xbf16, #tpu.memory_space<vmem>>, vector<1x64x289xbf16>
    %172 = vector.shape_cast %171 : vector<1x64x289xbf16> to vector<64x289xbf16>
    %cst_118 = arith.constant dense<0.000000e+00> : vector<16x289xf32>
    %173 = tpu.matmul %170, %172, %cst_118 {dimension_numbers = #tpu.dot_dimension_numbers<[1], [0], [0], [1], [0, 0, 1, 1], [], []>} : vector<16x64xbf16>, vector<64x289xbf16>, vector<16x289xf32> -> vector<16x289xf32>
    %174 = arith.addf %133, %138 : vector<16x289xf32>
    %175 = arith.addf %143, %148 : vector<16x289xf32>
    %176 = arith.addf %153, %158 : vector<16x289xf32>
    %177 = arith.addf %163, %168 : vector<16x289xf32>
    %178 = arith.addf %174, %175 : vector<16x289xf32>
    %179 = arith.addf %176, %177 : vector<16x289xf32>
    %180 = arith.addf %178, %179 : vector<16x289xf32>
    %181 = arith.addf %180, %173 : vector<16x289xf32>
    %c0_119 = arith.constant 0 : index
    %c0_120 = arith.constant 0 : index
    %182 = vector.load %arg9[%c0_119, %c0_120] : memref<16x1xf32, #tpu.memory_space<vmem>>, vector<16x1xf32>
    %183 = vector.broadcast %182 : vector<16x1xf32> to vector<16x289xf32>
    %184 = arith.addf %181, %183 : vector<16x289xf32>
    %cst_121 = arith.constant 0.000000e+00 : f32
    %185 = vector.broadcast %cst_121 : f32 to vector<16x289xf32>
    %186 = arith.maximumf %184, %185 : vector<16x289xf32>
    %c0_122 = arith.constant 0 : index
    %c0_123 = arith.constant 0 : index
    %187 = vector.load %arg11[%c0_122, %c0_123] : memref<32x16xbf16, #tpu.memory_space<vmem>>, vector<32x16xbf16>
    %188 = arith.truncf %186 : vector<16x289xf32> to vector<16x289xbf16>
    %cst_124 = arith.constant dense<0.000000e+00> : vector<32x289xf32>
    %189 = tpu.matmul %187, %188, %cst_124 {dimension_numbers = #tpu.dot_dimension_numbers<[1], [0], [0], [1], [0, 0, 1, 1], [], []>} : vector<32x16xbf16>, vector<16x289xbf16>, vector<32x289xf32> -> vector<32x289xf32>
    %190 = vector.extract_strided_slice %189 {offsets = [0, 0], sizes = [8, 289], strides = [1, 1]} : vector<32x289xf32> to vector<8x289xf32>
    %191 = arith.truncf %190 : vector<8x289xf32> to vector<8x289xbf16>
    %c0_125 = arith.constant 0 : index
    %c0_126 = arith.constant 0 : index
    %c0_127 = arith.constant 0 : index
    %192 = vector.load %arg13[%c0_125, %c0_126, %c0_127] : memref<4x289x256xbf16, #tpu.memory_space<vmem>>, vector<1x289x256xbf16>
    %193 = vector.shape_cast %192 : vector<1x289x256xbf16> to vector<289x256xbf16>
    %cst_128 = arith.constant dense<0.000000e+00> : vector<8x256xf32>
    %194 = tpu.matmul %191, %193, %cst_128 {dimension_numbers = #tpu.dot_dimension_numbers<[1], [0], [0], [1], [0, 0, 1, 1], [], []>} : vector<8x289xbf16>, vector<289x256xbf16>, vector<8x256xf32> -> vector<8x256xf32>
    %195 = vector.extract_strided_slice %189 {offsets = [8, 0], sizes = [8, 289], strides = [1, 1]} : vector<32x289xf32> to vector<8x289xf32>
    %196 = arith.truncf %195 : vector<8x289xf32> to vector<8x289xbf16>
    %c1_129 = arith.constant 1 : index
    %c0_130 = arith.constant 0 : index
    %c0_131 = arith.constant 0 : index
    %197 = vector.load %arg13[%c1_129, %c0_130, %c0_131] : memref<4x289x256xbf16, #tpu.memory_space<vmem>>, vector<1x289x256xbf16>
    %198 = vector.shape_cast %197 : vector<1x289x256xbf16> to vector<289x256xbf16>
    %cst_132 = arith.constant dense<0.000000e+00> : vector<8x256xf32>
    %199 = tpu.matmul %196, %198, %cst_132 {dimension_numbers = #tpu.dot_dimension_numbers<[1], [0], [0], [1], [0, 0, 1, 1], [], []>} : vector<8x289xbf16>, vector<289x256xbf16>, vector<8x256xf32> -> vector<8x256xf32>
    %200 = vector.extract_strided_slice %189 {offsets = [16, 0], sizes = [8, 289], strides = [1, 1]} : vector<32x289xf32> to vector<8x289xf32>
    %201 = arith.truncf %200 : vector<8x289xf32> to vector<8x289xbf16>
    %c2_133 = arith.constant 2 : index
    %c0_134 = arith.constant 0 : index
    %c0_135 = arith.constant 0 : index
    %202 = vector.load %arg13[%c2_133, %c0_134, %c0_135] : memref<4x289x256xbf16, #tpu.memory_space<vmem>>, vector<1x289x256xbf16>
    %203 = vector.shape_cast %202 : vector<1x289x256xbf16> to vector<289x256xbf16>
    %cst_136 = arith.constant dense<0.000000e+00> : vector<8x256xf32>
    %204 = tpu.matmul %201, %203, %cst_136 {dimension_numbers = #tpu.dot_dimension_numbers<[1], [0], [0], [1], [0, 0, 1, 1], [], []>} : vector<8x289xbf16>, vector<289x256xbf16>, vector<8x256xf32> -> vector<8x256xf32>
    %205 = vector.extract_strided_slice %189 {offsets = [24, 0], sizes = [8, 289], strides = [1, 1]} : vector<32x289xf32> to vector<8x289xf32>
    %206 = arith.truncf %205 : vector<8x289xf32> to vector<8x289xbf16>
    %c3_137 = arith.constant 3 : index
    %c0_138 = arith.constant 0 : index
    %c0_139 = arith.constant 0 : index
    %207 = vector.load %arg13[%c3_137, %c0_138, %c0_139] : memref<4x289x256xbf16, #tpu.memory_space<vmem>>, vector<1x289x256xbf16>
    %208 = vector.shape_cast %207 : vector<1x289x256xbf16> to vector<289x256xbf16>
    %cst_140 = arith.constant dense<0.000000e+00> : vector<8x256xf32>
    %209 = tpu.matmul %206, %208, %cst_140 {dimension_numbers = #tpu.dot_dimension_numbers<[1], [0], [0], [1], [0, 0, 1, 1], [], []>} : vector<8x289xbf16>, vector<289x256xbf16>, vector<8x256xf32> -> vector<8x256xf32>
    %210 = arith.addf %194, %199 : vector<8x256xf32>
    %211 = arith.addf %204, %209 : vector<8x256xf32>
    %212 = arith.addf %210, %211 : vector<8x256xf32>
    %213 = vector.extract_strided_slice %212 {offsets = [0, 0], sizes = [3, 256], strides = [1, 1]} : vector<8x256xf32> to vector<3x256xf32>
    %c0_141 = arith.constant 0 : index
    %c0_142 = arith.constant 0 : index
    %214 = vector.load %arg12[%c0_141, %c0_142] : memref<3x1xf32, #tpu.memory_space<vmem>>, vector<3x1xf32>
    %215 = vector.broadcast %214 : vector<3x1xf32> to vector<3x256xf32>
    %216 = arith.addf %213, %215 : vector<3x256xf32>
    %217 = math.tanh %216 : vector<3x256xf32>
    %c0_143 = arith.constant 0 : index
    %c0_144 = arith.constant 0 : index
    %c0_145 = arith.constant 0 : index
    %218 = vector.load %arg15[%c0_143, %c0_144, %c0_145] : memref<1x3x256xf32, #tpu.memory_space<vmem>>, vector<1x3x256xf32>
    %219 = vector.shape_cast %218 : vector<1x3x256xf32> to vector<3x256xf32>
    %220 = vector.shape_cast %217 : vector<3x256xf32> to vector<1x3x256xf32>
    tpu.vector_store %arg15[%c0_143, %c0_144, %c0_145], %220 {strides = array<i32>} : memref<1x3x256xf32, #tpu.memory_space<vmem>>, vector<1x3x256xf32>,
    return
  }
  func.func @transform_0(%arg0: i32) -> (i32, i32, i32) {
    %c0_i32 = arith.constant 0 : i32
    %c0_i32_0 = arith.constant 0 : i32
    %c0_i32_1 = arith.constant 0 : i32
    return %arg0, %c0_i32, %c0_i32_0 : i32, i32, i32
  }
  func.func @transform_1(%arg0: i32) -> (i32, i32) {
    %c0_i32 = arith.constant 0 : i32
    %c0_i32_0 = arith.constant 0 : i32
    %c0_i32_1 = arith.constant 0 : i32
    return %c0_i32, %c0_i32_0 : i32, i32
  }
  func.func @transform_2(%arg0: i32) -> (i32, i32) {
    %c0_i32 = arith.constant 0 : i32
    %c0_i32_0 = arith.constant 0 : i32
    %c0_i32_1 = arith.constant 0 : i32
    return %c0_i32, %c0_i32_0 : i32, i32
  }
  func.func @transform_3(%arg0: i32) -> (i32, i32, i32) {
    %c0_i32 = arith.constant 0 : i32
    %c0_i32_0 = arith.constant 0 : i32
    %c0_i32_1 = arith.constant 0 : i32
    %c0_i32_2 = arith.constant 0 : i32
    return %c0_i32, %c0_i32_0, %c0_i32_1 : i32, i32, i32
  }
  func.func @transform_4(%arg0: i32) -> (i32, i32) {
    %c0_i32 = arith.constant 0 : i32
    %c0_i32_0 = arith.constant 0 : i32
    %c0_i32_1 = arith.constant 0 : i32
    return %c0_i32, %c0_i32_0 : i32, i32
  }
  func.func @transform_5(%arg0: i32) -> (i32, i32) {
    %c0_i32 = arith.constant 0 : i32
    %c0_i32_0 = arith.constant 0 : i32
    %c0_i32_1 = arith.constant 0 : i32
    return %c0_i32, %c0_i32_0 : i32, i32
  }
  func.func @transform_6(%arg0: i32) -> (i32, i32, i32) {
    %c0_i32 = arith.constant 0 : i32
    %c0_i32_0 = arith.constant 0 : i32
    %c0_i32_1 = arith.constant 0 : i32
    %c0_i32_2 = arith.constant 0 : i32
    return %c0_i32, %c0_i32_0, %c0_i32_1 : i32, i32, i32
  }
  func.func @transform_7(%arg0: i32) -> (i32, i32) {
    %c0_i32 = arith.constant 0 : i32
    %c0_i32_0 = arith.constant 0 : i32
    %c0_i32_1 = arith.constant 0 : i32
    return %c0_i32, %c0_i32_0 : i32, i32
  }
  func.func @transform_8(%arg0: i32) -> (i32, i32) {
    %c0_i32 = arith.constant 0 : i32
    %c0_i32_0 = arith.constant 0 : i32
    %c0_i32_1 = arith.constant 0 : i32
    return %c0_i32, %c0_i32_0 : i32, i32
  }
  func.func @transform_9(%arg0: i32) -> (i32, i32, i32) {
    %c0_i32 = arith.constant 0 : i32
    %c0_i32_0 = arith.constant 0 : i32
    %c0_i32_1 = arith.constant 0 : i32
    %c0_i32_2 = arith.constant 0 : i32
    return %c0_i32, %c0_i32_0, %c0_i32_1 : i32, i32, i32
  }
  func.func @transform_10(%arg0: i32) -> (i32, i32) {
    %c0_i32 = arith.constant 0 : i32
    %c0_i32_0 = arith.constant 0 : i32
    %c0_i32_1 = arith.constant 0 : i32
    return %c0_i32, %c0_i32_0 : i32, i32
  }
  func.func @transform_11(%arg0: i32) -> (i32, i32) {
    %c0_i32 = arith.constant 0 : i32
    %c0_i32_0 = arith.constant 0 : i32
    %c0_i32_1 = arith.constant 0 : i32
    return %c0_i32, %c0_i32_0 : i32, i32
  }
  func.func @transform_12(%arg0: i32) -> (i32, i32, i32) {
    %c0_i32 = arith.constant 0 : i32
    %c0_i32_0 = arith.constant 0 : i32
    %c0_i32_1 = arith.constant 0 : i32
    %c0_i32_2 = arith.constant 0 : i32
    return %c0_i32, %c0_i32_0, %c0_i32_1 : i32, i32, i32
  }
  func.func @transform_13(%arg0: i32) -> (i32, i32, i32) {
    %c0_i32 = arith.constant 0 : i32
    %c0_i32_0 = arith.constant 0 : i32
    %c0_i32_1 = arith.constant 0 : i32
    return %arg0, %c0_i32, %c0_i32_0 : i32, i32, i32
  }
  func.func @transform_14(%arg0: i32) -> (i32, i32, i32) {
    %c0_i32 = arith.constant 0 : i32
    %c0_i32_0 = arith.constant 0 : i32
    %c0_i32_1 = arith.constant 0 : i32
    return %arg0, %c0_i32, %c0_i32_0 : i32, i32, i32
  }
}

</mosaic_0001>

<llo_original>
// kernel: autoencoder_forward.1
$region0: #{autoencoder_forward.1}
  #allocation0 [shape = 'u32[]', space=smem, size = 0x4, offset = 0x4, fixed_abs, tag = 'smem constant byte address 0x4 - core index']
  #allocation1 [shape = 'u32[72,128]{1,0:T(1,128)}', space=vmem, size = 0x9000, scoped, tag = 'internal scratch']
  %s0 = inlined_call_operand.vmem [shape: bf16[2,3,256], index: 0, kind: input, shape index: {}]
  %s1 = inlined_call_operand.vmem [shape: bf16[144,3], index: 1, kind: input, shape index: {}]
  %s2 = inlined_call_operand.vmem [shape: f32[16,1], index: 2, kind: input, shape index: {}]
  %s3 = inlined_call_operand.vmem [shape: bf16[9,256,256], index: 3, kind: input, shape index: {}]
  %s4 = inlined_call_operand.vmem [shape: bf16[288,16], index: 4, kind: input, shape index: {}]
  %s5 = inlined_call_operand.vmem [shape: f32[32,1], index: 5, kind: input, shape index: {}]
  %s6 = inlined_call_operand.vmem [shape: bf16[9,256,64], index: 6, kind: input, shape index: {}]
  %s7 = inlined_call_operand.vmem [shape: bf16[144,32], index: 7, kind: input, shape index: {}]
  %s8 = inlined_call_operand.vmem [shape: f32[16,1], index: 8, kind: input, shape index: {}]
  %s9 = inlined_call_operand.vmem [shape: bf16[9,64,289], index: 9, kind: input, shape index: {}]
  %s10 = inlined_call_operand.vmem [shape: bf16[32,16], index: 10, kind: input, shape index: {}]
  %s11 = inlined_call_operand.vmem [shape: f32[3,1], index: 11, kind: input, shape index: {}]
  %s12 = inlined_call_operand.vmem [shape: bf16[4,289,256], index: 12, kind: input, shape index: {}]
  %s13 = inlined_call_operand.vmem [shape: f32[2,32,64], index: 13, kind: output, shape index: {0}]
  %s14 = inlined_call_operand.vmem [shape: f32[2,3,256], index: 14, kind: output, shape index: {1}]
  %15 = xla_tuple %s13, %s14
  %s16 = sld [smem:[#allocation0]]
  $region93: #{autoencoder_forward.1} parent=0
    _
  %s18 = ssub.s32 1, %s16
  %s19 = scalar_select 0, %s18, %s16
  loop: start=0, step=1, limit=4
  $region2: #{autoencoder_forward.1} parent=0 // loop_pre_header
    _
  $region3: #{autoencoder_forward.1} parent=0 // loop_header
    %s21 = sphi 0, %s25
    %p22 = scmp.ge.s32.totalorder %s21, 4
    %s31 = sphi 0, %s33
    %s34 = sphi 0, %s31
    %s35 = sphi 0, %s34
    %s51 = sphi 0, %s35
    %s55 = sphi 0, %s55
    %s57 = sphi 0, %s55
    %s58 = sphi 0, %s57
    %s72 = sphi 0, %s58
    %s76 = sphi 0, %s76
    %s78 = sphi 0, %s76
    %s79 = sphi 0, %s78
    %s93 = sphi 0, %s79
    %s97 = sphi 0, %s97
    %s99 = sphi 0, %s97
    %s100 = sphi 0, %s99
    %s114 = sphi 0, %s100
    %s118 = sphi 0, %s118
    %s120 = sphi 0, %s118
    %s121 = sphi 0, %s120
    %s135 = sphi 0, %s121
    %s139 = sphi 0, %s139
    %s141 = sphi 0, %s139
    %s142 = sphi 0, %s141
    %s156 = sphi 0, %s142
    %s160 = sphi 0, %s160
    %s162 = sphi 0, %s160
    %s163 = sphi 0, %s162
    %s177 = sphi 0, %s163
    %s181 = sphi 0, %s181
    %s183 = sphi 0, %s181
    %s184 = sphi 0, %s183
    %s198 = sphi 0, %s184
    %s202 = sphi 0, %s202
    %s204 = sphi 0, %s202
    %s205 = sphi 0, %s204
    %s219 = sphi 0, %s205
    %s223 = sphi 0, %s223
    %s225 = sphi 0, %s223
    %s226 = sphi 0, %s225
    %s240 = sphi 0, %s226
    %s244 = sphi 0, %s244
    %s246 = sphi 0, %s244
    %s247 = sphi 0, %s246
    %s261 = sphi 0, %s247
    %s265 = sphi 0, %s265
    %s267 = sphi 0, %s265
    %s268 = sphi 0, %s267
    %s282 = sphi 0, %s268
    %s286 = sphi 0, %s286
    %s288 = sphi 0, %s286
    %s289 = sphi 0, %s288
    %s303 = sphi 0, %s289
    %s309 = sphi 0, %s311
    %s312 = sphi 0, %s309
    %s313 = sphi 0, %s312
    %s329 = sphi 0, %s313
    %s335 = sphi 0, %s337
    %s338 = sphi 0, %s335
    %s339 = sphi 0, %s338
    %s355 = sphi 0, %s339
  $region4: #{autoencoder_forward.1} parent=0 // loop_header_branch
    %24 = sbr.rel (%p22) target = $region8
  $region5: #{autoencoder_forward.1} parent=0 // loop_body
    %s26 = ssub.s32 %s21, 1
    %s27 = ssub.s32 %s21, 2
    %s28 = sadd.s32 %s21, 1
    %s29 = ssub.s32 %s21, %s28
    %p30 = scmp.eq.s32.totalorder %s29, 0
    %s32 = sadd.s32 %s31, 1
    %s33 = scalar_select %p30, %s31, %s32
    %p36 = pneg %p30
    %p37 = scmp.eq.s32.totalorder %s21, 1
    %p38 = por %p36, %p37
    %p39 = scmp.ne.s32.totalorder %s31, %s34
    %p40 = scmp.eq.s32.totalorder %s21, 0
    %p41 = por %p39, %p40
    %p42 = scmp.ne.s32.totalorder %s31, %s34
    %p43 = scmp.eq.s32.totalorder %s26, 1
    %p44 = por %p42, %p43
    %p45 = scmp.ne.s32.totalorder %s34, %s35
    %p46 = scmp.eq.s32.totalorder %s26, 0
    %p47 = por %p45, %p46
    %p48 = scmp.ne.s32.totalorder %s34, %s35
    %p49 = scmp.eq.s32.totalorder %s27, 1
    %p50 = por %p48, %p49
    %p52 = scmp.ne.s32.totalorder %s35, %s51
    %p53 = scmp.eq.s32.totalorder %s27, 0
    %p54 = por %p52, %p53
    %s56 = sadd.s32 %s55, 1
    %p59 = scmp.eq.s32.totalorder %s21, 1
    %p60 = scmp.ne.s32.totalorder %s55, %s57
    %p61 = scmp.eq.s32.totalorder %s21, 0
    %p62 = por %p60, %p61
    %p63 = scmp.ne.s32.totalorder %s55, %s57
    %p64 = scmp.eq.s32.totalorder %s26, 1
    %p65 = por %p63, %p64
    %p66 = scmp.ne.s32.totalorder %s57, %s58
    %p67 = scmp.eq.s32.totalorder %s26, 0
    %p68 = por %p66, %p67
    %p69 = scmp.ne.s32.totalorder %s57, %s58
    %p70 = scmp.eq.s32.totalorder %s27, 1
    %p71 = por %p69, %p70
    %p73 = scmp.ne.s32.totalorder %s58, %s72
    %p74 = scmp.eq.s32.totalorder %s27, 0
    %p75 = por %p73, %p74
    %s77 = sadd.s32 %s76, 1
    %p80 = scmp.eq.s32.totalorder %s21, 1
    %p81 = scmp.ne.s32.totalorder %s76, %s78
    %p82 = scmp.eq.s32.totalorder %s21, 0
    %p83 = por %p81, %p82
    %p84 = scmp.ne.s32.totalorder %s76, %s78
    %p85 = scmp.eq.s32.totalorder %s26, 1
    %p86 = por %p84, %p85
    %p87 = scmp.ne.s32.totalorder %s78, %s79
    %p88 = scmp.eq.s32.totalorder %s26, 0
    %p89 = por %p87, %p88
    %p90 = scmp.ne.s32.totalorder %s78, %s79
    %p91 = scmp.eq.s32.totalorder %s27, 1
    %p92 = por %p90, %p91
    %p94 = scmp.ne.s32.totalorder %s79, %s93
    %p95 = scmp.eq.s32.totalorder %s27, 0
    %p96 = por %p94, %p95
    %s98 = sadd.s32 %s97, 1
    %p101 = scmp.eq.s32.totalorder %s21, 1
    %p102 = scmp.ne.s32.totalorder %s97, %s99
    %p103 = scmp.eq.s32.totalorder %s21, 0
    %p104 = por %p102, %p103
    %p105 = scmp.ne.s32.totalorder %s97, %s99
    %p106 = scmp.eq.s32.totalorder %s26, 1
    %p107 = por %p105, %p106
    %p108 = scmp.ne.s32.totalorder %s99, %s100
    %p109 = scmp.eq.s32.totalorder %s26, 0
    %p110 = por %p108, %p109
    %p111 = scmp.ne.s32.totalorder %s99, %s100
    %p112 = scmp.eq.s32.totalorder %s27, 1
    %p113 = por %p111, %p112
    %p115 = scmp.ne.s32.totalorder %s100, %s114
    %p116 = scmp.eq.s32.totalorder %s27, 0
    %p117 = por %p115, %p116
    %s119 = sadd.s32 %s118, 1
    %p122 = scmp.eq.s32.totalorder %s21, 1
    %p123 = scmp.ne.s32.totalorder %s118, %s120
    %p124 = scmp.eq.s32.totalorder %s21, 0
    %p125 = por %p123, %p124
    %p126 = scmp.ne.s32.totalorder %s118, %s120
    %p127 = scmp.eq.s32.totalorder %s26, 1
    %p128 = por %p126, %p127
    %p129 = scmp.ne.s32.totalorder %s120, %s121
    %p130 = scmp.eq.s32.totalorder %s26, 0
    %p131 = por %p129, %p130
    %p132 = scmp.ne.s32.totalorder %s120, %s121
    %p133 = scmp.eq.s32.totalorder %s27, 1
    %p134 = por %p132, %p133
    %p136 = scmp.ne.s32.totalorder %s121, %s135
    %p137 = scmp.eq.s32.totalorder %s27, 0
    %p138 = por %p136, %p137
    %s140 = sadd.s32 %s139, 1
    %p143 = scmp.eq.s32.totalorder %s21, 1
    %p144 = scmp.ne.s32.totalorder %s139, %s141
    %p145 = scmp.eq.s32.totalorder %s21, 0
    %p146 = por %p144, %p145
    %p147 = scmp.ne.s32.totalorder %s139, %s141
    %p148 = scmp.eq.s32.totalorder %s26, 1
    %p149 = por %p147, %p148
    %p150 = scmp.ne.s32.totalorder %s141, %s142
    %p151 = scmp.eq.s32.totalorder %s26, 0
    %p152 = por %p150, %p151
    %p153 = scmp.ne.s32.totalorder %s141, %s142
    %p154 = scmp.eq.s32.totalorder %s27, 1
    %p155 = por %p153, %p154
    %p157 = scmp.ne.s32.totalorder %s142, %s156
    %p158 = scmp.eq.s32.totalorder %s27, 0
    %p159 = por %p157, %p158
    %s161 = sadd.s32 %s160, 1
    %p164 = scmp.eq.s32.totalorder %s21, 1
    %p165 = scmp.ne.s32.totalorder %s160, %s162
    %p166 = scmp.eq.s32.totalorder %s21, 0
    %p167 = por %p165, %p166
    %p168 = scmp.ne.s32.totalorder %s160, %s162
    %p169 = scmp.eq.s32.totalorder %s26, 1
    %p170 = por %p168, %p169
    %p171 = scmp.ne.s32.totalorder %s162, %s163
    %p172 = scmp.eq.s32.totalorder %s26, 0
    %p173 = por %p171, %p172
    %p174 = scmp.ne.s32.totalorder %s162, %s163
    %p175 = scmp.eq.s32.totalorder %s27, 1
    %p176 = por %p174, %p175
    %p178 = scmp.ne.s32.totalorder %s163, %s177
    %p179 = scmp.eq.s32.totalorder %s27, 0
    %p180 = por %p178, %p179
    %s182 = sadd.s32 %s181, 1
    %p185 = scmp.eq.s32.totalorder %s21, 1
    %p186 = scmp.ne.s32.totalorder %s181, %s183
    %p187 = scmp.eq.s32.totalorder %s21, 0
    %p188 = por %p186, %p187
    %p189 = scmp.ne.s32.totalorder %s181, %s183
    %p190 = scmp.eq.s32.totalorder %s26, 1
    %p191 = por %p189, %p190
    %p192 = scmp.ne.s32.totalorder %s183, %s184
    %p193 = scmp.eq.s32.totalorder %s26, 0
    %p194 = por %p192, %p193
    %p195 = scmp.ne.s32.totalorder %s183, %s184
    %p196 = scmp.eq.s32.totalorder %s27, 1
    %p197 = por %p195, %p196
    %p199 = scmp.ne.s32.totalorder %s184, %s198
    %p200 = scmp.eq.s32.totalorder %s27, 0
    %p201 = por %p199, %p200
    %s203 = sadd.s32 %s202, 1
    %p206 = scmp.eq.s32.totalorder %s21, 1
    %p207 = scmp.ne.s32.totalorder %s202, %s204
    %p208 = scmp.eq.s32.totalorder %s21, 0
    %p209 = por %p207, %p208
    %p210 = scmp.ne.s32.totalorder %s202, %s204
    %p211 = scmp.eq.s32.totalorder %s26, 1
    %p212 = por %p210, %p211
    %p213 = scmp.ne.s32.totalorder %s204, %s205
    %p214 = scmp.eq.s32.totalorder %s26, 0
    %p215 = por %p213, %p214
    %p216 = scmp.ne.s32.totalorder %s204, %s205
    %p217 = scmp.eq.s32.totalorder %s27, 1
    %p218 = por %p216, %p217
    %p220 = scmp.ne.s32.totalorder %s205, %s219
    %p221 = scmp.eq.s32.totalorder %s27, 0
    %p222 = por %p220, %p221
    %s224 = sadd.s32 %s223, 1
    %p227 = scmp.eq.s32.totalorder %s21, 1
    %p228 = scmp.ne.s32.totalorder %s223, %s225
    %p229 = scmp.eq.s32.totalorder %s21, 0
    %p230 = por %p228, %p229
    %p231 = scmp.ne.s32.totalorder %s223, %s225
    %p232 = scmp.eq.s32.totalorder %s26, 1
    %p233 = por %p231, %p232
    %p234 = scmp.ne.s32.totalorder %s225, %s226
    %p235 = scmp.eq.s32.totalorder %s26, 0
    %p236 = por %p234, %p235
    %p237 = scmp.ne.s32.totalorder %s225, %s226
    %p238 = scmp.eq.s32.totalorder %s27, 1
    %p239 = por %p237, %p238
    %p241 = scmp.ne.s32.totalorder %s226, %s240
    %p242 = scmp.eq.s32.totalorder %s27, 0
    %p243 = por %p241, %p242
    %s245 = sadd.s32 %s244, 1
    %p248 = scmp.eq.s32.totalorder %s21, 1
    %p249 = scmp.ne.s32.totalorder %s244, %s246
    %p250 = scmp.eq.s32.totalorder %s21, 0
    %p251 = por %p249, %p250
    %p252 = scmp.ne.s32.totalorder %s244, %s246
    %p253 = scmp.eq.s32.totalorder %s26, 1
    %p254 = por %p252, %p253
    %p255 = scmp.ne.s32.totalorder %s246, %s247
    %p256 = scmp.eq.s32.totalorder %s26, 0
    %p257 = por %p255, %p256
    %p258 = scmp.ne.s32.totalorder %s246, %s247
    %p259 = scmp.eq.s32.totalorder %s27, 1
    %p260 = por %p258, %p259
    %p262 = scmp.ne.s32.totalorder %s247, %s261
    %p263 = scmp.eq.s32.totalorder %s27, 0
    %p264 = por %p262, %p263
    %s266 = sadd.s32 %s265, 1
    %p269 = scmp.eq.s32.totalorder %s21, 1
    %p270 = scmp.ne.s32.totalorder %s265, %s267
    %p271 = scmp.eq.s32.totalorder %s21, 0
    %p272 = por %p270, %p271
    %p273 = scmp.ne.s32.totalorder %s265, %s267
    %p274 = scmp.eq.s32.totalorder %s26, 1
    %p275 = por %p273, %p274
    %p276 = scmp.ne.s32.totalorder %s267, %s268
    %p277 = scmp.eq.s32.totalorder %s26, 0
    %p278 = por %p276, %p277
    %p279 = scmp.ne.s32.totalorder %s267, %s268
    %p280 = scmp.eq.s32.totalorder %s27, 1
    %p281 = por %p279, %p280
    %p283 = scmp.ne.s32.totalorder %s268, %s282
    %p284 = scmp.eq.s32.totalorder %s27, 0
    %p285 = por %p283, %p284
    %s287 = sadd.s32 %s286, 1
    %p290 = scmp.eq.s32.totalorder %s21, 1
    %p291 = scmp.ne.s32.totalorder %s286, %s288
    %p292 = scmp.eq.s32.totalorder %s21, 0
    %p293 = por %p291, %p292
    %p294 = scmp.ne.s32.totalorder %s286, %s288
    %p295 = scmp.eq.s32.totalorder %s26, 1
    %p296 = por %p294, %p295
    %p297 = scmp.ne.s32.totalorder %s288, %s289
    %p298 = scmp.eq.s32.totalorder %s26, 0
    %p299 = por %p297, %p298
    %p300 = scmp.ne.s32.totalorder %s288, %s289
    %p301 = scmp.eq.s32.totalorder %s27, 1
    %p302 = por %p300, %p301
    %p304 = scmp.ne.s32.totalorder %s289, %s303
    %p305 = scmp.eq.s32.totalorder %s27, 0
    %p306 = por %p304, %p305
    %s307 = ssub.s32 %s21, %s28
    %p308 = scmp.eq.s32.totalorder %s307, 0
    %s310 = sadd.s32 %s309, 1
    %s311 = scalar_select %p308, %s309, %s310
    %p314 = pneg %p308
    %p315 = scmp.eq.s32.totalorder %s21, 1
    %p316 = por %p314, %p315
    %p317 = scmp.ne.s32.totalorder %s309, %s312
    %p318 = scmp.eq.s32.totalorder %s21, 0
    %p319 = por %p317, %p318
    %p320 = scmp.ne.s32.totalorder %s309, %s312
    %p321 = scmp.eq.s32.totalorder %s26, 1
    %p322 = por %p320, %p321
    %p323 = scmp.ne.s32.totalorder %s312, %s313
    %p324 = scmp.eq.s32.totalorder %s26, 0
    %p325 = por %p323, %p324
    %p326 = scmp.ne.s32.totalorder %s312, %s313
    %p327 = scmp.eq.s32.totalorder %s27, 1
    %p328 = por %p326, %p327
    %p330 = scmp.ne.s32.totalorder %s313, %s329
    %p331 = scmp.eq.s32.totalorder %s27, 0
    %p332 = por %p330, %p331
    %s333 = ssub.s32 %s21, %s28
    %p334 = scmp.eq.s32.totalorder %s333, 0
    %s336 = sadd.s32 %s335, 1
    %s337 = scalar_select %p334, %s335, %s336
    %p340 = pneg %p334
    %p341 = scmp.eq.s32.totalorder %s21, 1
    %p342 = por %p340, %p341
    %p343 = scmp.ne.s32.totalorder %s335, %s338
    %p344 = scmp.eq.s32.totalorder %s21, 0
    %p345 = por %p343, %p344
    %p346 = scmp.ne.s32.totalorder %s335, %s338
    %p347 = scmp.eq.s32.totalorder %s26, 1
    %p348 = por %p346, %p347
    %p349 = scmp.ne.s32.totalorder %s338, %s339
    %p350 = scmp.eq.s32.totalorder %s26, 0
    %p351 = por %p349, %p350
    %p352 = scmp.ne.s32.totalorder %s338, %s339
    %p353 = scmp.eq.s32.totalorder %s27, 1
    %p354 = por %p352, %p353
    %p356 = scmp.ne.s32.totalorder %s339, %s355
    %p357 = scmp.eq.s32.totalorder %s27, 0
    %p358 = por %p356, %p357
    %p359 = scmp.le.s32.totalorder 1, %s21
    %p360 = scmp.lt.s32.totalorder %s21, 3
    %p361 = pnand %p359, %p360
    %p362 = pneg %p361
    // Predicated region
    $region9: #{autoencoder_forward.1} parent=5 // pred_check
      _
    $region10: #{autoencoder_forward.1} parent=5 // pred_check_branch
      %364 = sbr.rel (%p361) target = $region12
    $region11: #{autoencoder_forward.1} parent=5 // pred_region
      %s365 = ssub.s32 %s21, 1
      // Predicated region
      $region13: #{autoencoder_forward.1} parent=11 // pred_check
        %p366 = pneg %p68
      $region14: #{autoencoder_forward.1} parent=11 // pred_check_branch
        %368 = sbr.rel (%p366) target = $region16
      $region15: #{autoencoder_forward.1} parent=11 // pred_region
        _
      $region16: #{autoencoder_forward.1} parent=11 // pred_fallthru
        _
      // Predicated region
      $region17: #{autoencoder_forward.1} parent=11 // pred_check
        %p369 = pneg %p89
      $region18: #{autoencoder_forward.1} parent=11 // pred_check_branch
        %371 = sbr.rel (%p369) target = $region20
      $region19: #{autoencoder_forward.1} parent=11 // pred_region
        _
      $region20: #{autoencoder_forward.1} parent=11 // pred_fallthru
        _
      // Predicated region
      $region21: #{autoencoder_forward.1} parent=11 // pred_check
        %p372 = pneg %p110
      $region22: #{autoencoder_forward.1} parent=11 // pred_check_branch
        %374 = sbr.rel (%p372) target = $region24
      $region23: #{autoencoder_forward.1} parent=11 // pred_region
        _
      $region24: #{autoencoder_forward.1} parent=11 // pred_fallthru
        _
      // Predicated region
      $region25: #{autoencoder_forward.1} parent=11 // pred_check
        %p375 = pneg %p131
      $region26: #{autoencoder_forward.1} parent=11 // pred_check_branch
        %377 = sbr.rel (%p375) target = $region28
      $region27: #{autoencoder_forward.1} parent=11 // pred_region
        _
      $region28: #{autoencoder_forward.1} parent=11 // pred_fallthru
        _
      // Predicated region
      $region29: #{autoencoder_forward.1} parent=11 // pred_check
        %p378 = pneg %p152
      $region30: #{autoencoder_forward.1} parent=11 // pred_check_branch
        %380 = sbr.rel (%p378) target = $region32
      $region31: #{autoencoder_forward.1} parent=11 // pred_region
        _
      $region32: #{autoencoder_forward.1} parent=11 // pred_fallthru
        _
      // Predicated region
      $region33: #{autoencoder_forward.1} parent=11 // pred_check
        %p381 = pneg %p173
      $region34: #{autoencoder_forward.1} parent=11 // pred_check_branch
        %383 = sbr.rel (%p381) target = $region36
      $region35: #{autoencoder_forward.1} parent=11 // pred_region
        _
      $region36: #{autoencoder_forward.1} parent=11 // pred_fallthru
        _
      // Predicated region
      $region37: #{autoencoder_forward.1} parent=11 // pred_check
        %p384 = pneg %p194
      $region38: #{autoencoder_forward.1} parent=11 // pred_check_branch
        %386 = sbr.rel (%p384) target = $region40
      $region39: #{autoencoder_forward.1} parent=11 // pred_region
        _
      $region40: #{autoencoder_forward.1} parent=11 // pred_fallthru
        _
      // Predicated region
      $region41: #{autoencoder_forward.1} parent=11 // pred_check
        %p387 = pneg %p215
      $region42: #{autoencoder_forward.1} parent=11 // pred_check_branch
        %389 = sbr.rel (%p387) target = $region44
      $region43: #{autoencoder_forward.1} parent=11 // pred_region
        _
      $region44: #{autoencoder_forward.1} parent=11 // pred_fallthru
        _
      // Predicated region
      $region45: #{autoencoder_forward.1} parent=11 // pred_check
        %p390 = pneg %p236
      $region46: #{autoencoder_forward.1} parent=11 // pred_check_branch
        %392 = sbr.rel (%p390) target = $region48
      $region47: #{autoencoder_forward.1} parent=11 // pred_region
        _
      $region48: #{autoencoder_forward.1} parent=11 // pred_fallthru
        _
      // Predicated region
      $region49: #{autoencoder_forward.1} parent=11 // pred_check
        %p393 = pneg %p257
      $region50: #{autoencoder_forward.1} parent=11 // pred_check_branch
        %395 = sbr.rel (%p393) target = $region52
      $region51: #{autoencoder_forward.1} parent=11 // pred_region
        _
      $region52: #{autoencoder_forward.1} parent=11 // pred_fallthru
        _
      // Predicated region
      $region53: #{autoencoder_forward.1} parent=11 // pred_check
        %p396 = pneg %p278
      $region54: #{autoencoder_forward.1} parent=11 // pred_check_branch
        %398 = sbr.rel (%p396) target = $region56
      $region55: #{autoencoder_forward.1} parent=11 // pred_region
        _
      $region56: #{autoencoder_forward.1} parent=11 // pred_fallthru
        _
      // Predicated region
      $region57: #{autoencoder_forward.1} parent=11 // pred_check
        %p399 = pneg %p299
      $region58: #{autoencoder_forward.1} parent=11 // pred_check_branch
        %401 = sbr.rel (%p399) target = $region60
      $region59: #{autoencoder_forward.1} parent=11 // pred_region
        _
      $region60: #{autoencoder_forward.1} parent=11 // pred_fallthru
        _
    $region12: #{autoencoder_forward.1} parent=5 // pred_fallthru
      _
    %p402 = scmp.lt.s32.totalorder %s21, 2
    // Predicated region
    $region61: #{autoencoder_forward.1} parent=5 // pred_check
      %p403 = pneg %p402
    $region62: #{autoencoder_forward.1} parent=5 // pred_check_branch
      %405 = sbr.rel (%p403) target = $region64
    $region63: #{autoencoder_forward.1} parent=5 // pred_region
      // Predicated region
      $region65: #{autoencoder_forward.1} parent=63 // pred_check
        %p406 = pneg %p41
      $region66: #{autoencoder_forward.1} parent=63 // pred_check_branch
        %408 = sbr.rel (%p406) target = $region68
      $region67: #{autoencoder_forward.1} parent=63 // pred_region
        %p409 = scmp.lt.s32.totalorder %s21, 1
        %s410 = scalar_select %p409, %s21, 1
        %s411 = smul.addr %s410, 2
        %s412 = smul.addr %s411, 2
        %s413 = scalar_lea.vmem %s0, %s412
      $region68: #{autoencoder_forward.1} parent=63 // pred_fallthru
        _
    $region64: #{autoencoder_forward.1} parent=5 // pred_fallthru
      _
    %p414 = scmp.le.s32.totalorder 1, %s21
    %p415 = scmp.lt.s32.totalorder %s21, 3
    %p416 = pnand %p414, %p415
    %p417 = pneg %p416
    // Predicated region
    $region69: #{autoencoder_forward.1} parent=5 // pred_check
      _
    $region70: #{autoencoder_forward.1} parent=5 // pred_check_branch
      %419 = sbr.rel (%p416) target = $region72
    $region71: #{autoencoder_forward.1} parent=5 // pred_region
      %s420 = ssub.s32 %s21, 1
      %p421 = scmp.lt.s32.totalorder %s26, 1
      %s422 = scalar_select %p421, %s26, 1
      %s423 = smul.addr %s422, 2
      %s424 = smul.addr %s423, 2
      %s425 = scalar_lea.vmem %s0, %s424
      %p426 = pneg %p47
      %p427 = pneg %p44
      %p428 = pneg %p68
      %p429 = pneg %p65
      %p430 = pneg %p89
      %p431 = pneg %p86
      %p432 = pneg %p110
      %p433 = pneg %p107
      %p434 = pneg %p131
      %p435 = pneg %p128
      %p436 = pneg %p152
      %p437 = pneg %p149
      %p438 = pneg %p173
      %p439 = pneg %p170
      %p440 = pneg %p194
      %p441 = pneg %p191
      %p442 = pneg %p215
      %p443 = pneg %p212
      %p444 = pneg %p236
      %p445 = pneg %p233
      %p446 = pneg %p257
      %p447 = pneg %p254
      %p448 = pneg %p278
      %p449 = pneg %p275
      %p450 = pneg %p299
      %p451 = pneg %p296
      %p452 = pneg %p325
      %p453 = pneg %p322
      %p454 = scmp.lt.s32.totalorder %s26, 1
      %s455 = scalar_select %p454, %s26, 1
      %s456 = smul.addr %s455, 4
      %s457 = smul.addr %s456, 8
      %s458 = scalar_lea.vmem %s13, %s457
      %p459 = pneg %p351
      %p460 = pneg %p348
      %p461 = scmp.lt.s32.totalorder %s26, 1
      %s462 = scalar_select %p461, %s26, 1
      %s463 = smul.addr %s462, 2
      %s464 = smul.addr %s463, 4
      %s465 = scalar_lea.vmem %s14, %s464
      %p466 = scmp.lt.s32.totalorder %s26, 1
      %s467 = scalar_select %p466, %s26, 1
      %s468 = smul.addr %s467, 2
      %s469 = smul.addr %s468, 2
      %s470 = scalar_lea.vmem %s0, %s469
      %p471 = scmp.lt.s32.totalorder %s26, 1
      %s472 = scalar_select %p471, %s26, 1
      %s473 = smul.addr %s472, 4
      %s474 = smul.addr %s473, 8
      %s475 = scalar_lea.vmem %s13, %s474
      %p476 = scmp.lt.s32.totalorder %s26, 1
      %s477 = scalar_select %p476, %s26, 1
      %s478 = smul.addr %s477, 2
      %s479 = smul.addr %s478, 4
      %s480 = scalar_lea.vmem %s14, %s479
      %v482 = vld [vmem:[%s470] sm:$0xf]
      %v483 = vld [vmem:[%s1] sm:$0xf]
      %v484 = vld [vmem:[%s1 + $0x4] sm:$0xf]
      %v485 = vld [vmem:[%s1 + $0x8] sm:$0xf]
      %v486 = vld [vmem:[%s1 + $0xc] sm:$0xf]
      %v487 = vld [vmem:[%s1 + $0x10] sm:$0xf]
      %v488 = vld [vmem:[%s1 + $0x14] sm:$0xf]
      %v489 = vld [vmem:[%s1 + $0x18] sm:$0xf]
      %v490 = vld [vmem:[%s1 + $0x1c] sm:$0xf]
      %v491 = vld [vmem:[%s1 + $0x20] sm:$0xf]
      %v492 = vld [vmem:[%s1 + $0x24] sm:$0xf]
      %v493 = vld [vmem:[%s1 + $0x28] sm:$0xf]
      %v494 = vld [vmem:[%s1 + $0x2c] sm:$0xf]
      %v495 = vld [vmem:[%s1 + $0x30] sm:$0xf]
      %v496 = vld [vmem:[%s1 + $0x34] sm:$0xf]
      %v497 = vld [vmem:[%s1 + $0x38] sm:$0xf]
      %v498 = vld [vmem:[%s1 + $0x3c] sm:$0xf]
      %v499 = vld [vmem:[%s1 + $0x40] sm:$0xf]
      %v500 = vld [vmem:[%s1 + $0x44] sm:$0xf]
      %v519 = vunpack.c.l.b16 %v483
      %v520 = vunpack.c.l.b16 %v484
      %v521 = vunpack.c.l.b16 %v485
      %v522 = vunpack.c.l.b16 %v486
      %v523 = vunpack.c.l.b16 %v487
      %v524 = vunpack.c.l.b16 %v488
      %v525 = vunpack.c.l.b16 %v489
      %v526 = vunpack.c.l.b16 %v490
      %v527 = vunpack.c.l.b16 %v491
      %v528 = vunpack.c.l.b16 %v492
      %v529 = vunpack.c.l.b16 %v493
      %v530 = vunpack.c.l.b16 %v494
      %v531 = vunpack.c.l.b16 %v495
      %v532 = vunpack.c.l.b16 %v496
      %v533 = vunpack.c.l.b16 %v497
      %v534 = vunpack.c.l.b16 %v498
      %v535 = vunpack.c.l.b16 %v499
      %v536 = vunpack.c.l.b16 %v500
      %v537 = vpack.c.b16 %v520, %v519
      %v538 = vpack.c.b16 %v522, %v521
      %v539 = vpack.c.b16 %v524, %v523
      %v540 = vpack.c.b16 %v526, %v525
      %v541 = vpack.c.b16 %v528, %v527
      %v542 = vpack.c.b16 %v530, %v529
      %v543 = vpack.c.b16 %v532, %v531
      %v544 = vpack.c.b16 %v534, %v533
      %v545 = vpack.c.b16 %v536, %v535
      %547 = vst [vmem:[#allocation1] ss:$4 sm:$0xff] %v482
      %v548 = vld.sshfl [vmem:[#allocation1] sm:$0xff pattern:$0x73625140]
      %v549 = vld.sshfl [vmem:[#allocation1 + $0x8] sm:$0xff pattern:$0x73625140]
      %vm550 = vcmask 23552
      %v552 = vsel %vm550, %v537, 0
      %v555 = vsel %vm550, %v538, 0
      %v558 = vsel %vm550, %v539, 0
      %v561 = vsel %vm550, %v540, 0
      %v564 = vsel %vm550, %v541, 0
      %v567 = vsel %vm550, %v542, 0
      %v570 = vsel %vm550, %v543, 0
      %v573 = vsel %vm550, %v544, 0
      %v576 = vsel %vm550, %v545, 0
      %vm578 = vcmask 1040384
      %vm579 = vcmask 1041408
      %v580 = vsel %vm578, 4294967295, 65535
      %v581 = vsel %vm579, %v580, 0
      %v582 = vand.u32 %v548, %v581
      %v584 = vand.u32 %v549, %v581
      %586 = vmatpush.bf16.msra.mxu0 0
      %587 = vmatpush.bf16.msra.mxu0 0
      %588 = vmatpush.bf16.msra.mxu0 0
      %589 = vmatpush.bf16.msra.mxu0 0
      %590 = vmatpush.bf16.msra.mxu0 0
      %591 = vmatpush.bf16.msra.mxu0 0
      %592 = vmatpush.bf16.msra.mxu0 0
      %593 = vmatpush.bf16.msra.mxu0 %v582
      %594 = vmatmul.bf16.gmra.mxu0 %v552
      %v595 = vpop.f32.mrf.mxu0
      %v596 = vadd.f32 0.0, %v595
      %v597 = vpop.f32.mrf.mxu0
      %v598 = vadd.f32 0.0, %v597
      %599 = vmatmul.bf16.gmra.mxu0 %v555
      %v600 = vpop.f32.mrf.mxu0
      %v601 = vadd.f32 0.0, %v600
      %v602 = vpop.f32.mrf.mxu0
      %v603 = vadd.f32 0.0, %v602
      %604 = vmatmul.bf16.gmra.mxu0 %v558
      %v605 = vpop.f32.mrf.mxu0
      %v606 = vadd.f32 0.0, %v605
      %v607 = vpop.f32.mrf.mxu0
      %v608 = vadd.f32 0.0, %v607
      %609 = vmatmul.bf16.gmra.mxu0 %v561
      %v610 = vpop.f32.mrf.mxu0
      %v611 = vadd.f32 0.0, %v610
      %v612 = vpop.f32.mrf.mxu0
      %v613 = vadd.f32 0.0, %v612
      %614 = vmatmul.bf16.gmra.mxu0 %v564
      %v615 = vpop.f32.mrf.mxu0
      %v616 = vadd.f32 0.0, %v615
      %v617 = vpop.f32.mrf.mxu0
      %v618 = vadd.f32 0.0, %v617
      %619 = vmatmul.bf16.gmra.mxu0 %v567
      %v620 = vpop.f32.mrf.mxu0
      %v621 = vadd.f32 0.0, %v620
      %v622 = vpop.f32.mrf.mxu0
      %v623 = vadd.f32 0.0, %v622
      %624 = vmatmul.bf16.gmra.mxu0 %v570
      %v625 = vpop.f32.mrf.mxu0
      %v626 = vadd.f32 0.0, %v625
      %v627 = vpop.f32.mrf.mxu0
      %v628 = vadd.f32 0.0, %v627
      %629 = vmatmul.bf16.gmra.mxu0 %v573
      %v630 = vpop.f32.mrf.mxu0
      %v631 = vadd.f32 0.0, %v630
      %v632 = vpop.f32.mrf.mxu0
      %v633 = vadd.f32 0.0, %v632
      %634 = vmatmul.bf16.gmra.mxu0 %v576
      %v635 = vpop.f32.mrf.mxu0
      %v636 = vadd.f32 0.0, %v635
      %v637 = vpop.f32.mrf.mxu0
      %v638 = vadd.f32 0.0, %v637
      %639 = vdwg.mxu0
      %640 = vmatpush.bf16.msra.mxu0 0
      %641 = vmatpush.bf16.msra.mxu0 0
      %642 = vmatpush.bf16.msra.mxu0 0
      %643 = vmatpush.bf16.msra.mxu0 0
      %644 = vmatpush.bf16.msra.mxu0 0
      %645 = vmatpush.bf16.msra.mxu0 0
      %646 = vmatpush.bf16.msra.mxu0 0
      %647 = vmatpush.bf16.msra.mxu0 %v584
      %648 = vmatmul.bf16.gmra.mxu0 %v552
      %v649 = vpop.f32.mrf.mxu0
      %v650 = vadd.f32 0.0, %v649
      %v651 = vpop.f32.mrf.mxu0
      %v652 = vadd.f32 0.0, %v651
      %653 = vmatmul.bf16.gmra.mxu0 %v555
      %v654 = vpop.f32.mrf.mxu0
      %v655 = vadd.f32 0.0, %v654
      %v656 = vpop.f32.mrf.mxu0
      %v657 = vadd.f32 0.0, %v656
      %658 = vmatmul.bf16.gmra.mxu0 %v558
      %v659 = vpop.f32.mrf.mxu0
      %v660 = vadd.f32 0.0, %v659
      %v661 = vpop.f32.mrf.mxu0
      %v662 = vadd.f32 0.0, %v661
      %663 = vmatmul.bf16.gmra.mxu0 %v561
      %v664 = vpop.f32.mrf.mxu0
      %v665 = vadd.f32 0.0, %v664
      %v666 = vpop.f32.mrf.mxu0
      %v667 = vadd.f32 0.0, %v666
      %668 = vmatmul.bf16.gmra.mxu0 %v564
      %v669 = vpop.f32.mrf.mxu0
      %v670 = vadd.f32 0.0, %v669
      %v671 = vpop.f32.mrf.mxu0
      %v672 = vadd.f32 0.0, %v671
      %673 = vmatmul.bf16.gmra.mxu0 %v567
      %v674 = vpop.f32.mrf.mxu0
      %v675 = vadd.f32 0.0, %v674
      %v676 = vpop.f32.mrf.mxu0
      %v677 = vadd.f32 0.0, %v676
      %678 = vmatmul.bf16.gmra.mxu0 %v570
      %v679 = vpop.f32.mrf.mxu0
      %v680 = vadd.f32 0.0, %v679
      %v681 = vpop.f32.mrf.mxu0
      %v682 = vadd.f32 0.0, %v681
      %683 = vmatmul.bf16.gmra.mxu0 %v573
      %v684 = vpop.f32.mrf.mxu0
      %v685 = vadd.f32 0.0, %v684
      %v686 = vpop.f32.mrf.mxu0
      %v687 = vadd.f32 0.0, %v686
      %688 = vmatmul.bf16.gmra.mxu0 %v576
      %v689 = vpop.f32.mrf.mxu0
      %v690 = vadd.f32 0.0, %v689
      %v691 = vpop.f32.mrf.mxu0
      %v692 = vadd.f32 0.0, %v691
      %693 = vdwg.mxu0
      %v694 = vpack.c.bf16 %v598, %v596
      %v695 = vpack.c.bf16 %v652, %v650
      %v696 = vld [vmem:[%s3] sm:$0xff]
      %v697 = vld [vmem:[%s3 + $0x8] sm:$0xff]
      %v698 = vld [vmem:[%s3 + $0x10] sm:$0xff]
      %v699 = vld [vmem:[%s3 + $0x18] sm:$0xff]
      %v700 = vld [vmem:[%s3 + $0x20] sm:$0xff]
      %v701 = vld [vmem:[%s3 + $0x28] sm:$0xff]
      %v702 = vld [vmem:[%s3 + $0x30] sm:$0xff]
      %v703 = vld [vmem:[%s3 + $0x38] sm:$0xff]
      %v704 = vld [vmem:[%s3 + $0x40] sm:$0xff]
      %v705 = vld [vmem:[%s3 + $0x48] sm:$0xff]
      %v706 = vld [vmem:[%s3 + $0x50] sm:$0xff]
      %v707 = vld [vmem:[%s3 + $0x58] sm:$0xff]
      %v708 = vld [vmem:[%s3 + $0x60] sm:$0xff]
      %v709 = vld [vmem:[%s3 + $0x68] sm:$0xff]
      %v710 = vld [vmem:[%s3 + $0x70] sm:$0xff]
      %v711 = vld [vmem:[%s3 + $0x78] sm:$0xff]
      %v712 = vld [vmem:[%s3 + $0x80] sm:$0xff]
      %v713 = vld [vmem:[%s3 + $0x88] sm:$0xff]
      %v714 = vld [vmem:[%s3 + $0x90] sm:$0xff]
      %v715 = vld [vmem:[%s3 + $0x98] sm:$0xff]
      %v716 = vld [vmem:[%s3 + $0xa0] sm:$0xff]
      %v717 = vld [vmem:[%s3 + $0xa8] sm:$0xff]
      %v718 = vld [vmem:[%s3 + $0xb0] sm:$0xff]
      %v719 = vld [vmem:[%s3 + $0xb8] sm:$0xff]
      %v720 = vld [vmem:[%s3 + $0xc0] sm:$0xff]
      %v721 = vld [vmem:[%s3 + $0xc8] sm:$0xff]
      %v722 = vld [vmem:[%s3 + $0xd0] sm:$0xff]
      %v723 = vld [vmem:[%s3 + $0xd8] sm:$0xff]
      %v724 = vld [vmem:[%s3 + $0xe0] sm:$0xff]
      %v725 = vld [vmem:[%s3 + $0xe8] sm:$0xff]
      %v726 = vld [vmem:[%s3 + $0xf0] sm:$0xff]
      %v727 = vld [vmem:[%s3 + $0xf8] sm:$0xff]
      %v728 = vpack.c.bf16 %v603, %v601
      %v729 = vpack.c.bf16 %v657, %v655
      %s730 = scalar_lea.vmem %s3, 256
      %v731 = vld [vmem:[%s730] sm:$0xff]
      %v732 = vld [vmem:[%s730 + $0x8] sm:$0xff]
      %v733 = vld [vmem:[%s730 + $0x10] sm:$0xff]
      %v734 = vld [vmem:[%s730 + $0x18] sm:$0xff]
      %v735 = vld [vmem:[%s730 + $0x20] sm:$0xff]
      %v736 = vld [vmem:[%s730 + $0x28] sm:$0xff]
      %v737 = vld [vmem:[%s730 + $0x30] sm:$0xff]
      %v738 = vld [vmem:[%s730 + $0x38] sm:$0xff]
      %v739 = vld [vmem:[%s730 + $0x40] sm:$0xff]
      %v740 = vld [vmem:[%s730 + $0x48] sm:$0xff]
      %v741 = vld [vmem:[%s730 + $0x50] sm:$0xff]
      %v742 = vld [vmem:[%s730 + $0x58] sm:$0xff]
      %v743 = vld [vmem:[%s730 + $0x60] sm:$0xff]
      %v744 = vld [vmem:[%s730 + $0x68] sm:$0xff]
      %v745 = vld [vmem:[%s730 + $0x70] sm:$0xff]
      %v746 = vld [vmem:[%s730 + $0x78] sm:$0xff]
      %v747 = vld [vmem:[%s730 + $0x80] sm:$0xff]
      %v748 = vld [vmem:[%s730 + $0x88] sm:$0xff]
      %v749 = vld [vmem:[%s730 + $0x90] sm:$0xff]
      %v750 = vld [vmem:[%s730 + $0x98] sm:$0xff]
      %v751 = vld [vmem:[%s730 + $0xa0] sm:$0xff]
      %v752 = vld [vmem:[%s730 + $0xa8] sm:$0xff]
      %v753 = vld [vmem:[%s730 + $0xb0] sm:$0xff]
      %v754 = vld [vmem:[%s730 + $0xb8] sm:$0xff]
      %v755 = vld [vmem:[%s730 + $0xc0] sm:$0xff]
      %v756 = vld [vmem:[%s730 + $0xc8] sm:$0xff]
      %v757 = vld [vmem:[%s730 + $0xd0] sm:$0xff]
      %v758 = vld [vmem:[%s730 + $0xd8] sm:$0xff]
      %v759 = vld [vmem:[%s730 + $0xe0] sm:$0xff]
      %v760 = vld [vmem:[%s730 + $0xe8] sm:$0xff]
      %v761 = vld [vmem:[%s730 + $0xf0] sm:$0xff]
      %v762 = vld [vmem:[%s730 + $0xf8] sm:$0xff]
      %v795 = vunpack.c.l.b16 %v731
      %v796 = vunpack.c.h.b16 %v731
      %v797 = vunpack.c.l.b16 %v732
      %v798 = vunpack.c.h.b16 %v732
      %v799 = vunpack.c.l.b16 %v733
      %v800 = vunpack.c.h.b16 %v733
      %v801 = vunpack.c.l.b16 %v734
      %v802 = vunpack.c.h.b16 %v734
      %v803 = vunpack.c.l.b16 %v735
      %v804 = vunpack.c.h.b16 %v735
      %v805 = vunpack.c.l.b16 %v736
      %v806 = vunpack.c.h.b16 %v736
      %v807 = vunpack.c.l.b16 %v737
      %v808 = vunpack.c.h.b16 %v737
      %v809 = vunpack.c.l.b16 %v738
      %v810 = vunpack.c.h.b16 %v738
      %v811 = vunpack.c.l.b16 %v739
      %v812 = vunpack.c.h.b16 %v739
      %v813 = vunpack.c.l.b16 %v740
      %v814 = vunpack.c.h.b16 %v740
      %v815 = vunpack.c.l.b16 %v741
      %v816 = vunpack.c.h.b16 %v741
      %v817 = vunpack.c.l.b16 %v742
      %v818 = vunpack.c.h.b16 %v742
      %v819 = vunpack.c.l.b16 %v743
      %v820 = vunpack.c.h.b16 %v743
      %v821 = vunpack.c.l.b16 %v744
      %v822 = vunpack.c.h.b16 %v744
      %v823 = vunpack.c.l.b16 %v745
      %v824 = vunpack.c.h.b16 %v745
      %v825 = vunpack.c.l.b16 %v746
      %v826 = vunpack.c.h.b16 %v746
      %v827 = vunpack.c.l.b16 %v747
      %v828 = vunpack.c.h.b16 %v747
      %v829 = vunpack.c.l.b16 %v748
      %v830 = vunpack.c.h.b16 %v748
      %v831 = vunpack.c.l.b16 %v749
      %v832 = vunpack.c.h.b16 %v749
      %v833 = vunpack.c.l.b16 %v750
      %v834 = vunpack.c.h.b16 %v750
      %v835 = vunpack.c.l.b16 %v751
      %v836 = vunpack.c.h.b16 %v751
      %v837 = vunpack.c.l.b16 %v752
      %v838 = vunpack.c.h.b16 %v752
      %v839 = vunpack.c.l.b16 %v753
      %v840 = vunpack.c.h.b16 %v753
      %v841 = vunpack.c.l.b16 %v754
      %v842 = vunpack.c.h.b16 %v754
      %v843 = vunpack.c.l.b16 %v755
      %v844 = vunpack.c.h.b16 %v755
      %v845 = vunpack.c.l.b16 %v756
      %v846 = vunpack.c.h.b16 %v756
      %v847 = vunpack.c.l.b16 %v757
      %v848 = vunpack.c.h.b16 %v757
      %v849 = vunpack.c.l.b16 %v758
      %v850 = vunpack.c.h.b16 %v758
      %v851 = vunpack.c.l.b16 %v759
      %v852 = vunpack.c.h.b16 %v759
      %v853 = vunpack.c.l.b16 %v760
      %v854 = vunpack.c.h.b16 %v760
      %v855 = vunpack.c.l.b16 %v761
      %v856 = vunpack.c.h.b16 %v761
      %v857 = vunpack.c.l.b16 %v762
      %v858 = vunpack.c.h.b16 %v762
      %v859 = vpack.c.b16 %v797, %v795
      %v860 = vpack.c.b16 %v798, %v796
      %v861 = vpack.c.b16 %v801, %v799
      %v862 = vpack.c.b16 %v802, %v800
      %v863 = vpack.c.b16 %v805, %v803
      %v864 = vpack.c.b16 %v806, %v804
      %v865 = vpack.c.b16 %v809, %v807
      %v866 = vpack.c.b16 %v810, %v808
      %v867 = vpack.c.b16 %v813, %v811
      %v868 = vpack.c.b16 %v814, %v812
      %v869 = vpack.c.b16 %v817, %v815
      %v870 = vpack.c.b16 %v818, %v816
      %v871 = vpack.c.b16 %v821, %v819
      %v872 = vpack.c.b16 %v822, %v820
      %v873 = vpack.c.b16 %v825, %v823
      %v874 = vpack.c.b16 %v826, %v824
      %v875 = vpack.c.b16 %v829, %v827
      %v876 = vpack.c.b16 %v830, %v828
      %v877 = vpack.c.b16 %v833, %v831
      %v878 = vpack.c.b16 %v834, %v832
      %v879 = vpack.c.b16 %v837, %v835
      %v880 = vpack.c.b16 %v838, %v836
      %v881 = vpack.c.b16 %v841, %v839
      %v882 = vpack.c.b16 %v842, %v840
      %v883 = vpack.c.b16 %v845, %v843
      %v884 = vpack.c.b16 %v846, %v844
      %v885 = vpack.c.b16 %v849, %v847
      %v886 = vpack.c.b16 %v850, %v848
      %v887 = vpack.c.b16 %v853, %v851
      %v888 = vpack.c.b16 %v854, %v852
      %v889 = vpack.c.b16 %v857, %v855
      %v890 = vpack.c.b16 %v858, %v856
      %923 = vmatpush.bf16.msra.mxu0 %v873
      %924 = vmatpush.bf16.msra.mxu0 %v871
      %925 = vmatpush.bf16.msra.mxu0 %v869
      %926 = vmatpush.bf16.msra.mxu0 %v867
      %927 = vmatpush.bf16.msra.mxu0 %v865
      %928 = vmatpush.bf16.msra.mxu0 %v863
      %929 = vmatpush.bf16.msra.mxu0 %v861
      %930 = vmatpush.bf16.msra.mxu0 %v859
      %931 = vmatmul.bf16.gmra.mxu0 %v728
      %v932 = vpop.f32.mrf.mxu0
      %v933 = vadd.f32 0.0, %v932
      %v934 = vpop.f32.mrf.mxu0
      %v935 = vadd.f32 0.0, %v934
      %936 = vdwg.mxu0
      %937 = vmatpush.bf16.msra.mxu0 %v889
      %938 = vmatpush.bf16.msra.mxu0 %v887
      %939 = vmatpush.bf16.msra.mxu0 %v885
      %940 = vmatpush.bf16.msra.mxu0 %v883
      %941 = vmatpush.bf16.msra.mxu0 %v881
      %942 = vmatpush.bf16.msra.mxu0 %v879
      %943 = vmatpush.bf16.msra.mxu0 %v877
      %944 = vmatpush.bf16.msra.mxu0 %v875
      %945 = vmatmul.bf16.gmra.mxu0 %v729
      %v946 = vpop.f32.mrf.mxu0
      %v947 = vadd.f32 %v933, %v946
      %v948 = vpop.f32.mrf.mxu0
      %v949 = vadd.f32 %v935, %v948
      %950 = vdwg.mxu0
      %951 = vmatpush.bf16.msra.mxu0 %v874
      %952 = vmatpush.bf16.msra.mxu0 %v872
      %953 = vmatpush.bf16.msra.mxu0 %v870
      %954 = vmatpush.bf16.msra.mxu0 %v868
      %955 = vmatpush.bf16.msra.mxu0 %v866
      %956 = vmatpush.bf16.msra.mxu0 %v864
      %957 = vmatpush.bf16.msra.mxu0 %v862
      %958 = vmatpush.bf16.msra.mxu0 %v860
      %959 = vmatmul.bf16.gmra.mxu0 %v728
      %v960 = vpop.f32.mrf.mxu0
      %v961 = vadd.f32 0.0, %v960
      %v962 = vpop.f32.mrf.mxu0
      %v963 = vadd.f32 0.0, %v962
      %964 = vdwg.mxu0
      %965 = vmatpush.bf16.msra.mxu0 %v890
      %966 = vmatpush.bf16.msra.mxu0 %v888
      %967 = vmatpush.bf16.msra.mxu0 %v886
      %968 = vmatpush.bf16.msra.mxu0 %v884
      %969 = vmatpush.bf16.msra.mxu0 %v882
      %970 = vmatpush.bf16.msra.mxu0 %v880
      %971 = vmatpush.bf16.msra.mxu0 %v878
      %972 = vmatpush.bf16.msra.mxu0 %v876
      %973 = vmatmul.bf16.gmra.mxu0 %v729
      %v974 = vpop.f32.mrf.mxu0
      %v975 = vadd.f32 %v961, %v974
      %v976 = vpop.f32.mrf.mxu0
      %v977 = vadd.f32 %v963, %v976
      %978 = vdwg.mxu0
      %v979 = vpack.c.bf16 %v608, %v606
      %v980 = vpack.c.bf16 %v662, %v660
      %s981 = scalar_lea.vmem %s3, 512
      %v982 = vld [vmem:[%s981] sm:$0xff]
      %v983 = vld [vmem:[%s981 + $0x8] sm:$0xff]
      %v984 = vld [vmem:[%s981 + $0x10] sm:$0xff]
      %v985 = vld [vmem:[%s981 + $0x18] sm:$0xff]
      %v986 = vld [vmem:[%s981 + $0x20] sm:$0xff]
      %v987 = vld [vmem:[%s981 + $0x28] sm:$0xff]
      %v988 = vld [vmem:[%s981 + $0x30] sm:$0xff]
      %v989 = vld [vmem:[%s981 + $0x38] sm:$0xff]
      %v990 = vld [vmem:[%s981 + $0x40] sm:$0xff]
      %v991 = vld [vmem:[%s981 + $0x48] sm:$0xff]
      %v992 = vld [vmem:[%s981 + $0x50] sm:$0xff]
      %v993 = vld [vmem:[%s981 + $0x58] sm:$0xff]
      %v994 = vld [vmem:[%s981 + $0x60] sm:$0xff]
      %v995 = vld [vmem:[%s981 + $0x68] sm:$0xff]
      %v996 = vld [vmem:[%s981 + $0x70] sm:$0xff]
      %v997 = vld [vmem:[%s981 + $0x78] sm:$0xff]
      %v998 = vld [vmem:[%s981 + $0x80] sm:$0xff]
      %v999 = vld [vmem:[%s981 + $0x88] sm:$0xff]
      %v1000 = vld [vmem:[%s981 + $0x90] sm:$0xff]
      %v1001 = vld [vmem:[%s981 + $0x98] sm:$0xff]
      %v1002 = vld [vmem:[%s981 + $0xa0] sm:$0xff]
      %v1003 = vld [vmem:[%s981 + $0xa8] sm:$0xff]
      %v1004 = vld [vmem:[%s981 + $0xb0] sm:$0xff]
      %v1005 = vld [vmem:[%s981 + $0xb8] sm:$0xff]
      %v1006 = vld [vmem:[%s981 + $0xc0] sm:$0xff]
      %v1007 = vld [vmem:[%s981 + $0xc8] sm:$0xff]
      %v1008 = vld [vmem:[%s981 + $0xd0] sm:$0xff]
      %v1009 = vld [vmem:[%s981 + $0xd8] sm:$0xff]
      %v1010 = vld [vmem:[%s981 + $0xe0] sm:$0xff]
      %v1011 = vld [vmem:[%s981 + $0xe8] sm:$0xff]
      %v1012 = vld [vmem:[%s981 + $0xf0] sm:$0xff]
      %v1013 = vld [vmem:[%s981 + $0xf8] sm:$0xff]
      %v1014 = vpack.c.bf16 %v613, %v611
      %v1015 = vpack.c.bf16 %v667, %v665
      %s1016 = scalar_lea.vmem %s3, 768
      %v1017 = vld [vmem:[%s1016] sm:$0xff]
      %v1018 = vld [vmem:[%s1016 + $0x8] sm:$0xff]
      %v1019 = vld [vmem:[%s1016 + $0x10] sm:$0xff]
      %v1020 = vld [vmem:[%s1016 + $0x18] sm:$0xff]
      %v1021 = vld [vmem:[%s1016 + $0x20] sm:$0xff]
      %v1022 = vld [vmem:[%s1016 + $0x28] sm:$0xff]
      %v1023 = vld [vmem:[%s1016 + $0x30] sm:$0xff]
      %v1024 = vld [vmem:[%s1016 + $0x38] sm:$0xff]
      %v1025 = vld [vmem:[%s1016 + $0x40] sm:$0xff]
      %v1026 = vld [vmem:[%s1016 + $0x48] sm:$0xff]
      %v1027 = vld [vmem:[%s1016 + $0x50] sm:$0xff]
      %v1028 = vld [vmem:[%s1016 + $0x58] sm:$0xff]
      %v1029 = vld [vmem:[%s1016 + $0x60] sm:$0xff]
      %v1030 = vld [vmem:[%s1016 + $0x68] sm:$0xff]
      %v1031 = vld [vmem:[%s1016 + $0x70] sm:$0xff]
      %v1032 = vld [vmem:[%s1016 + $0x78] sm:$0xff]
      %v1033 = vld [vmem:[%s1016 + $0x80] sm:$0xff]
      %v1034 = vld [vmem:[%s1016 + $0x88] sm:$0xff]
      %v1035 = vld [vmem:[%s1016 + $0x90] sm:$0xff]
      %v1036 = vld [vmem:[%s1016 + $0x98] sm:$0xff]
      %v1037 = vld [vmem:[%s1016 + $0xa0] sm:$0xff]
      %v1038 = vld [vmem:[%s1016 + $0xa8] sm:$0xff]
      %v1039 = vld [vmem:[%s1016 + $0xb0] sm:$0xff]
      %v1040 = vld [vmem:[%s1016 + $0xb8] sm:$0xff]
      %v1041 = vld [vmem:[%s1016 + $0xc0] sm:$0xff]
      %v1042 = vld [vmem:[%s1016 + $0xc8] sm:$0xff]
      %v1043 = vld [vmem:[%s1016 + $0xd0] sm:$0xff]
      %v1044 = vld [vmem:[%s1016 + $0xd8] sm:$0xff]
      %v1045 = vld [vmem:[%s1016 + $0xe0] sm:$0xff]
      %v1046 = vld [vmem:[%s1016 + $0xe8] sm:$0xff]
      %v1047 = vld [vmem:[%s1016 + $0xf0] sm:$0xff]
      %v1048 = vld [vmem:[%s1016 + $0xf8] sm:$0xff]
      %v1081 = vunpack.c.l.b16 %v1017
      %v1082 = vunpack.c.h.b16 %v1017
      %v1083 = vunpack.c.l.b16 %v1018
      %v1084 = vunpack.c.h.b16 %v1018
      %v1085 = vunpack.c.l.b16 %v1019
      %v1086 = vunpack.c.h.b16 %v1019
      %v1087 = vunpack.c.l.b16 %v1020
      %v1088 = vunpack.c.h.b16 %v1020
      %v1089 = vunpack.c.l.b16 %v1021
      %v1090 = vunpack.c.h.b16 %v1021
      %v1091 = vunpack.c.l.b16 %v1022
      %v1092 = vunpack.c.h.b16 %v1022
      %v1093 = vunpack.c.l.b16 %v1023
      %v1094 = vunpack.c.h.b16 %v1023
      %v1095 = vunpack.c.l.b16 %v1024
      %v1096 = vunpack.c.h.b16 %v1024
      %v1097 = vunpack.c.l.b16 %v1025
      %v1098 = vunpack.c.h.b16 %v1025
      %v1099 = vunpack.c.l.b16 %v1026
      %v1100 = vunpack.c.h.b16 %v1026
      %v1101 = vunpack.c.l.b16 %v1027
      %v1102 = vunpack.c.h.b16 %v1027
      %v1103 = vunpack.c.l.b16 %v1028
      %v1104 = vunpack.c.h.b16 %v1028
      %v1105 = vunpack.c.l.b16 %v1029
      %v1106 = vunpack.c.h.b16 %v1029
      %v1107 = vunpack.c.l.b16 %v1030
      %v1108 = vunpack.c.h.b16 %v1030
      %v1109 = vunpack.c.l.b16 %v1031
      %v1110 = vunpack.c.h.b16 %v1031
      %v1111 = vunpack.c.l.b16 %v1032
      %v1112 = vunpack.c.h.b16 %v1032
      %v1113 = vunpack.c.l.b16 %v1033
      %v1114 = vunpack.c.h.b16 %v1033
      %v1115 = vunpack.c.l.b16 %v1034
      %v1116 = vunpack.c.h.b16 %v1034
      %v1117 = vunpack.c.l.b16 %v1035
      %v1118 = vunpack.c.h.b16 %v1035
      %v1119 = vunpack.c.l.b16 %v1036
      %v1120 = vunpack.c.h.b16 %v1036
      %v1121 = vunpack.c.l.b16 %v1037
      %v1122 = vunpack.c.h.b16 %v1037
      %v1123 = vunpack.c.l.b16 %v1038
      %v1124 = vunpack.c.h.b16 %v1038
      %v1125 = vunpack.c.l.b16 %v1039
      %v1126 = vunpack.c.h.b16 %v1039
      %v1127 = vunpack.c.l.b16 %v1040
      %v1128 = vunpack.c.h.b16 %v1040
      %v1129 = vunpack.c.l.b16 %v1041
      %v1130 = vunpack.c.h.b16 %v1041
      %v1131 = vunpack.c.l.b16 %v1042
      %v1132 = vunpack.c.h.b16 %v1042
      %v1133 = vunpack.c.l.b16 %v1043
      %v1134 = vunpack.c.h.b16 %v1043
      %v1135 = vunpack.c.l.b16 %v1044
      %v1136 = vunpack.c.h.b16 %v1044
      %v1137 = vunpack.c.l.b16 %v1045
      %v1138 = vunpack.c.h.b16 %v1045
      %v1139 = vunpack.c.l.b16 %v1046
      %v1140 = vunpack.c.h.b16 %v1046
      %v1141 = vunpack.c.l.b16 %v1047
      %v1142 = vunpack.c.h.b16 %v1047
      %v1143 = vunpack.c.l.b16 %v1048
      %v1144 = vunpack.c.h.b16 %v1048
      %v1145 = vpack.c.b16 %v1083, %v1081
      %v1146 = vpack.c.b16 %v1084, %v1082
      %v1147 = vpack.c.b16 %v1087, %v1085
      %v1148 = vpack.c.b16 %v1088, %v1086
      %v1149 = vpack.c.b16 %v1091, %v1089
      %v1150 = vpack.c.b16 %v1092, %v1090
      %v1151 = vpack.c.b16 %v1095, %v1093
      %v1152 = vpack.c.b16 %v1096, %v1094
      %v1153 = vpack.c.b16 %v1099, %v1097
      %v1154 = vpack.c.b16 %v1100, %v1098
      %v1155 = vpack.c.b16 %v1103, %v1101
      %v1156 = vpack.c.b16 %v1104, %v1102
      %v1157 = vpack.c.b16 %v1107, %v1105
      %v1158 = vpack.c.b16 %v1108, %v1106
      %v1159 = vpack.c.b16 %v1111, %v1109
      %v1160 = vpack.c.b16 %v1112, %v1110
      %v1161 = vpack.c.b16 %v1115, %v1113
      %v1162 = vpack.c.b16 %v1116, %v1114
      %v1163 = vpack.c.b16 %v1119, %v1117
      %v1164 = vpack.c.b16 %v1120, %v1118
      %v1165 = vpack.c.b16 %v1123, %v1121
      %v1166 = vpack.c.b16 %v1124, %v1122
      %v1167 = vpack.c.b16 %v1127, %v1125
      %v1168 = vpack.c.b16 %v1128, %v1126
      %v1169 = vpack.c.b16 %v1131, %v1129
      %v1170 = vpack.c.b16 %v1132, %v1130
      %v1171 = vpack.c.b16 %v1135, %v1133
      %v1172 = vpack.c.b16 %v1136, %v1134
      %v1173 = vpack.c.b16 %v1139, %v1137
      %v1174 = vpack.c.b16 %v1140, %v1138
      %v1175 = vpack.c.b16 %v1143, %v1141
      %v1176 = vpack.c.b16 %v1144, %v1142
      %1209 = vmatpush.bf16.msra.mxu0 %v1159
      %1210 = vmatpush.bf16.msra.mxu0 %v1157
      %1211 = vmatpush.bf16.msra.mxu0 %v1155
      %1212 = vmatpush.bf16.msra.mxu0 %v1153
      %1213 = vmatpush.bf16.msra.mxu0 %v1151
      %1214 = vmatpush.bf16.msra.mxu0 %v1149
      %1215 = vmatpush.bf16.msra.mxu0 %v1147
      %1216 = vmatpush.bf16.msra.mxu0 %v1145
      %1217 = vmatmul.bf16.gmra.mxu0 %v1014
      %v1218 = vpop.f32.mrf.mxu0
      %v1219 = vadd.f32 0.0, %v1218
      %v1220 = vpop.f32.mrf.mxu0
      %v1221 = vadd.f32 0.0, %v1220
      %1222 = vdwg.mxu0
      %1223 = vmatpush.bf16.msra.mxu0 %v1175
      %1224 = vmatpush.bf16.msra.mxu0 %v1173
      %1225 = vmatpush.bf16.msra.mxu0 %v1171
      %1226 = vmatpush.bf16.msra.mxu0 %v1169
      %1227 = vmatpush.bf16.msra.mxu0 %v1167
      %1228 = vmatpush.bf16.msra.mxu0 %v1165
      %1229 = vmatpush.bf16.msra.mxu0 %v1163
      %1230 = vmatpush.bf16.msra.mxu0 %v1161
      %1231 = vmatmul.bf16.gmra.mxu0 %v1015
      %v1232 = vpop.f32.mrf.mxu0
      %v1233 = vadd.f32 %v1219, %v1232
      %v1234 = vpop.f32.mrf.mxu0
      %v1235 = vadd.f32 %v1221, %v1234
      %1236 = vdwg.mxu0
      %1237 = vmatpush.bf16.msra.mxu0 %v1160
      %1238 = vmatpush.bf16.msra.mxu0 %v1158
      %1239 = vmatpush.bf16.msra.mxu0 %v1156
      %1240 = vmatpush.bf16.msra.mxu0 %v1154
      %1241 = vmatpush.bf16.msra.mxu0 %v1152
      %1242 = vmatpush.bf16.msra.mxu0 %v1150
      %1243 = vmatpush.bf16.msra.mxu0 %v1148
      %1244 = vmatpush.bf16.msra.mxu0 %v1146
      %1245 = vmatmul.bf16.gmra.mxu0 %v1014
      %v1246 = vpop.f32.mrf.mxu0
      %v1247 = vadd.f32 0.0, %v1246
      %v1248 = vpop.f32.mrf.mxu0
      %v1249 = vadd.f32 0.0, %v1248
      %1250 = vdwg.mxu0
      %1251 = vmatpush.bf16.msra.mxu0 %v1176
      %1252 = vmatpush.bf16.msra.mxu0 %v1174
      %1253 = vmatpush.bf16.msra.mxu0 %v1172
      %1254 = vmatpush.bf16.msra.mxu0 %v1170
      %1255 = vmatpush.bf16.msra.mxu0 %v1168
      %1256 = vmatpush.bf16.msra.mxu0 %v1166
      %1257 = vmatpush.bf16.msra.mxu0 %v1164
      %1258 = vmatpush.bf16.msra.mxu0 %v1162
      %1259 = vmatmul.bf16.gmra.mxu0 %v1015
      %v1260 = vpop.f32.mrf.mxu0
      %v1261 = vadd.f32 %v1247, %v1260
      %v1262 = vpop.f32.mrf.mxu0
      %v1263 = vadd.f32 %v1249, %v1262
      %1264 = vdwg.mxu0
      %v1265 = vpack.c.bf16 %v618, %v616
      %v1266 = vpack.c.bf16 %v672, %v670
      %s1267 = scalar_lea.vmem %s3, 1024
      %v1268 = vld [vmem:[%s1267] sm:$0xff]
      %v1269 = vld [vmem:[%s1267 + $0x8] sm:$0xff]
      %v1270 = vld [vmem:[%s1267 + $0x10] sm:$0xff]
      %v1271 = vld [vmem:[%s1267 + $0x18] sm:$0xff]
      %v1272 = vld [vmem:[%s1267 + $0x20] sm:$0xff]
      %v1273 = vld [vmem:[%s1267 + $0x28] sm:$0xff]
      %v1274 = vld [vmem:[%s1267 + $0x30] sm:$0xff]
      %v1275 = vld [vmem:[%s1267 + $0x38] sm:$0xff]
      %v1276 = vld [vmem:[%s1267 + $0x40] sm:$0xff]
      %v1277 = vld [vmem:[%s1267 + $0x48] sm:$0xff]
      %v1278 = vld [vmem:[%s1267 + $0x50] sm:$0xff]
      %v1279 = vld [vmem:[%s1267 + $0x58] sm:$0xff]
      %v1280 = vld [vmem:[%s1267 + $0x60] sm:$0xff]
      %v1281 = vld [vmem:[%s1267 + $0x68] sm:$0xff]
      %v1282 = vld [vmem:[%s1267 + $0x70] sm:$0xff]
      %v1283 = vld [vmem:[%s1267 + $0x78] sm:$0xff]
      %v1284 = vld [vmem:[%s1267 + $0x80] sm:$0xff]
      %v1285 = vld [vmem:[%s1267 + $0x88] sm:$0xff]
      %v1286 = vld [vmem:[%s1267 + $0x90] sm:$0xff]
      %v1287 = vld [vmem:[%s1267 + $0x98] sm:$0xff]
      %v1288 = vld [vmem:[%s1267 + $0xa0] sm:$0xff]
      %v1289 = vld [vmem:[%s1267 + $0xa8] sm:$0xff]
      %v1290 = vld [vmem:[%s1267 + $0xb0] sm:$0xff]
      %v1291 = vld [vmem:[%s1267 + $0xb8] sm:$0xff]
      %v1292 = vld [vmem:[%s1267 + $0xc0] sm:$0xff]
      %v1293 = vld [vmem:[%s1267 + $0xc8] sm:$0xff]
      %v1294 = vld [vmem:[%s1267 + $0xd0] sm:$0xff]
      %v1295 = vld [vmem:[%s1267 + $0xd8] sm:$0xff]
      %v1296 = vld [vmem:[%s1267 + $0xe0] sm:$0xff]
      %v1297 = vld [vmem:[%s1267 + $0xe8] sm:$0xff]
      %v1298 = vld [vmem:[%s1267 + $0xf0] sm:$0xff]
      %v1299 = vld [vmem:[%s1267 + $0xf8] sm:$0xff]
      %v1300 = vpack.c.bf16 %v623, %v621
      %v1301 = vpack.c.bf16 %v677, %v675
      %s1302 = scalar_lea.vmem %s3, 1280
      %v1303 = vld [vmem:[%s1302] sm:$0xff]
      %v1304 = vld [vmem:[%s1302 + $0x8] sm:$0xff]
      %v1305 = vld [vmem:[%s1302 + $0x10] sm:$0xff]
      %v1306 = vld [vmem:[%s1302 + $0x18] sm:$0xff]
      %v1307 = vld [vmem:[%s1302 + $0x20] sm:$0xff]
      %v1308 = vld [vmem:[%s1302 + $0x28] sm:$0xff]
      %v1309 = vld [vmem:[%s1302 + $0x30] sm:$0xff]
      %v1310 = vld [vmem:[%s1302 + $0x38] sm:$0xff]
      %v1311 = vld [vmem:[%s1302 + $0x40] sm:$0xff]
      %v1312 = vld [vmem:[%s1302 + $0x48] sm:$0xff]
      %v1313 = vld [vmem:[%s1302 + $0x50] sm:$0xff]
      %v1314 = vld [vmem:[%s1302 + $0x58] sm:$0xff]
      %v1315 = vld [vmem:[%s1302 + $0x60] sm:$0xff]
      %v1316 = vld [vmem:[%s1302 + $0x68] sm:$0xff]
      %v1317 = vld [vmem:[%s1302 + $0x70] sm:$0xff]
      %v1318 = vld [vmem:[%s1302 + $0x78] sm:$0xff]
      %v1319 = vld [vmem:[%s1302 + $0x80] sm:$0xff]
      %v1320 = vld [vmem:[%s1302 + $0x88] sm:$0xff]
      %v1321 = vld [vmem:[%s1302 + $0x90] sm:$0xff]
      %v1322 = vld [vmem:[%s1302 + $0x98] sm:$0xff]
      %v1323 = vld [vmem:[%s1302 + $0xa0] sm:$0xff]
      %v1324 = vld [vmem:[%s1302 + $0xa8] sm:$0xff]
      %v1325 = vld [vmem:[%s1302 + $0xb0] sm:$0xff]
      %v1326 = vld [vmem:[%s1302 + $0xb8] sm:$0xff]
      %v1327 = vld [vmem:[%s1302 + $0xc0] sm:$0xff]
      %v1328 = vld [vmem:[%s1302 + $0xc8] sm:$0xff]
      %v1329 = vld [vmem:[%s1302 + $0xd0] sm:$0xff]
      %v1330 = vld [vmem:[%s1302 + $0xd8] sm:$0xff]
      %v1331 = vld [vmem:[%s1302 + $0xe0] sm:$0xff]
      %v1332 = vld [vmem:[%s1302 + $0xe8] sm:$0xff]
      %v1333 = vld [vmem:[%s1302 + $0xf0] sm:$0xff]
      %v1334 = vld [vmem:[%s1302 + $0xf8] sm:$0xff]
      %v1367 = vunpack.c.l.b16 %v1303
      %v1368 = vunpack.c.h.b16 %v1303
      %v1369 = vunpack.c.l.b16 %v1304
      %v1370 = vunpack.c.h.b16 %v1304
      %v1371 = vunpack.c.l.b16 %v1305
      %v1372 = vunpack.c.h.b16 %v1305
      %v1373 = vunpack.c.l.b16 %v1306
      %v1374 = vunpack.c.h.b16 %v1306
      %v1375 = vunpack.c.l.b16 %v1307
      %v1376 = vunpack.c.h.b16 %v1307
      %v1377 = vunpack.c.l.b16 %v1308
      %v1378 = vunpack.c.h.b16 %v1308
      %v1379 = vunpack.c.l.b16 %v1309
      %v1380 = vunpack.c.h.b16 %v1309
      %v1381 = vunpack.c.l.b16 %v1310
      %v1382 = vunpack.c.h.b16 %v1310
      %v1383 = vunpack.c.l.b16 %v1311
      %v1384 = vunpack.c.h.b16 %v1311
      %v1385 = vunpack.c.l.b16 %v1312
      %v1386 = vunpack.c.h.b16 %v1312
      %v1387 = vunpack.c.l.b16 %v1313
      %v1388 = vunpack.c.h.b16 %v1313
      %v1389 = vunpack.c.l.b16 %v1314
      %v1390 = vunpack.c.h.b16 %v1314
      %v1391 = vunpack.c.l.b16 %v1315
      %v1392 = vunpack.c.h.b16 %v1315
      %v1393 = vunpack.c.l.b16 %v1316
      %v1394 = vunpack.c.h.b16 %v1316
      %v1395 = vunpack.c.l.b16 %v1317
      %v1396 = vunpack.c.h.b16 %v1317
      %v1397 = vunpack.c.l.b16 %v1318
      %v1398 = vunpack.c.h.b16 %v1318
      %v1399 = vunpack.c.l.b16 %v1319
      %v1400 = vunpack.c.h.b16 %v1319
      %v1401 = vunpack.c.l.b16 %v1320
      %v1402 = vunpack.c.h.b16 %v1320
      %v1403 = vunpack.c.l.b16 %v1321
      %v1404 = vunpack.c.h.b16 %v1321
      %v1405 = vunpack.c.l.b16 %v1322
      %v1406 = vunpack.c.h.b16 %v1322
      %v1407 = vunpack.c.l.b16 %v1323
      %v1408 = vunpack.c.h.b16 %v1323
      %v1409 = vunpack.c.l.b16 %v1324
      %v1410 = vunpack.c.h.b16 %v1324
      %v1411 = vunpack.c.l.b16 %v1325
      %v1412 = vunpack.c.h.b16 %v1325
      %v1413 = vunpack.c.l.b16 %v1326
      %v1414 = vunpack.c.h.b16 %v1326
      %v1415 = vunpack.c.l.b16 %v1327
      %v1416 = vunpack.c.h.b16 %v1327
      %v1417 = vunpack.c.l.b16 %v1328
      %v1418 = vunpack.c.h.b16 %v1328
      %v1419 = vunpack.c.l.b16 %v1329
      %v1420 = vunpack.c.h.b16 %v1329
      %v1421 = vunpack.c.l.b16 %v1330
      %v1422 = vunpack.c.h.b16 %v1330
      %v1423 = vunpack.c.l.b16 %v1331
      %v1424 = vunpack.c.h.b16 %v1331
      %v1425 = vunpack.c.l.b16 %v1332
      %v1426 = vunpack.c.h.b16 %v1332
      %v1427 = vunpack.c.l.b16 %v1333
      %v1428 = vunpack.c.h.b16 %v1333
      %v1429 = vunpack.c.l.b16 %v1334
      %v1430 = vunpack.c.h.b16 %v1334
      %v1431 = vpack.c.b16 %v1369, %v1367
      %v1432 = vpack.c.b16 %v1370, %v1368
      %v1433 = vpack.c.b16 %v1373, %v1371
      %v1434 = vpack.c.b16 %v1374, %v1372
      %v1435 = vpack.c.b16 %v1377, %v1375
      %v1436 = vpack.c.b16 %v1378, %v1376
      %v1437 = vpack.c.b16 %v1381, %v1379
      %v1438 = vpack.c.b16 %v1382, %v1380
      %v1439 = vpack.c.b16 %v1385, %v1383
      %v1440 = vpack.c.b16 %v1386, %v1384
      %v1441 = vpack.c.b16 %v1389, %v1387
      %v1442 = vpack.c.b16 %v1390, %v1388
      %v1443 = vpack.c.b16 %v1393, %v1391
      %v1444 = vpack.c.b16 %v1394, %v1392
      %v1445 = vpack.c.b16 %v1397, %v1395
      %v1446 = vpack.c.b16 %v1398, %v1396
      %v1447 = vpack.c.b16 %v1401, %v1399
      %v1448 = vpack.c.b16 %v1402, %v1400
      %v1449 = vpack.c.b16 %v1405, %v1403
      %v1450 = vpack.c.b16 %v1406, %v1404
      %v1451 = vpack.c.b16 %v1409, %v1407
      %v1452 = vpack.c.b16 %v1410, %v1408
      %v1453 = vpack.c.b16 %v1413, %v1411
      %v1454 = vpack.c.b16 %v1414, %v1412
      %v1455 = vpack.c.b16 %v1417, %v1415
      %v1456 = vpack.c.b16 %v1418, %v1416
      %v1457 = vpack.c.b16 %v1421, %v1419
      %v1458 = vpack.c.b16 %v1422, %v1420
      %v1459 = vpack.c.b16 %v1425, %v1423
      %v1460 = vpack.c.b16 %v1426, %v1424
      %v1461 = vpack.c.b16 %v1429, %v1427
      %v1462 = vpack.c.b16 %v1430, %v1428
      %1495 = vmatpush.bf16.msra.mxu0 %v1445
      %1496 = vmatpush.bf16.msra.mxu0 %v1443
      %1497 = vmatpush.bf16.msra.mxu0 %v1441
      %1498 = vmatpush.bf16.msra.mxu0 %v1439
      %1499 = vmatpush.bf16.msra.mxu0 %v1437
      %1500 = vmatpush.bf16.msra.mxu0 %v1435
      %1501 = vmatpush.bf16.msra.mxu0 %v1433
      %1502 = vmatpush.bf16.msra.mxu0 %v1431
      %1503 = vmatmul.bf16.gmra.mxu0 %v1300
      %v1504 = vpop.f32.mrf.mxu0
      %v1505 = vadd.f32 0.0, %v1504
      %v1506 = vpop.f32.mrf.mxu0
      %v1507 = vadd.f32 0.0, %v1506
      %1508 = vdwg.mxu0
      %1509 = vmatpush.bf16.msra.mxu0 %v1461
      %1510 = vmatpush.bf16.msra.mxu0 %v1459
      %1511 = vmatpush.bf16.msra.mxu0 %v1457
      %1512 = vmatpush.bf16.msra.mxu0 %v1455
      %1513 = vmatpush.bf16.msra.mxu0 %v1453
      %1514 = vmatpush.bf16.msra.mxu0 %v1451
      %1515 = vmatpush.bf16.msra.mxu0 %v1449
      %1516 = vmatpush.bf16.msra.mxu0 %v1447
      %1517 = vmatmul.bf16.gmra.mxu0 %v1301
      %v1518 = vpop.f32.mrf.mxu0
      %v1519 = vadd.f32 %v1505, %v1518
      %v1520 = vpop.f32.mrf.mxu0
      %v1521 = vadd.f32 %v1507, %v1520
      %1522 = vdwg.mxu0
      %1523 = vmatpush.bf16.msra.mxu0 %v1446
      %1524 = vmatpush.bf16.msra.mxu0 %v1444
      %1525 = vmatpush.bf16.msra.mxu0 %v1442
      %1526 = vmatpush.bf16.msra.mxu0 %v1440
      %1527 = vmatpush.bf16.msra.mxu0 %v1438
      %1528 = vmatpush.bf16.msra.mxu0 %v1436
      %1529 = vmatpush.bf16.msra.mxu0 %v1434
      %1530 = vmatpush.bf16.msra.mxu0 %v1432
      %1531 = vmatmul.bf16.gmra.mxu0 %v1300
      %v1532 = vpop.f32.mrf.mxu0
      %v1533 = vadd.f32 0.0, %v1532
      %v1534 = vpop.f32.mrf.mxu0
      %v1535 = vadd.f32 0.0, %v1534
      %1536 = vdwg.mxu0
      %1537 = vmatpush.bf16.msra.mxu0 %v1462
      %1538 = vmatpush.bf16.msra.mxu0 %v1460
      %1539 = vmatpush.bf16.msra.mxu0 %v1458
      %1540 = vmatpush.bf16.msra.mxu0 %v1456
      %1541 = vmatpush.bf16.msra.mxu0 %v1454
      %1542 = vmatpush.bf16.msra.mxu0 %v1452
      %1543 = vmatpush.bf16.msra.mxu0 %v1450
      %1544 = vmatpush.bf16.msra.mxu0 %v1448
      %1545 = vmatmul.bf16.gmra.mxu0 %v1301
      %v1546 = vpop.f32.mrf.mxu0
      %v1547 = vadd.f32 %v1533, %v1546
      %v1548 = vpop.f32.mrf.mxu0
      %v1549 = vadd.f32 %v1535, %v1548
      %1550 = vdwg.mxu0
      %v1551 = vpack.c.bf16 %v628, %v626
      %v1552 = vpack.c.bf16 %v682, %v680
      %s1553 = scalar_lea.vmem %s3, 1536
      %v1554 = vld [vmem:[%s1553] sm:$0xff]
      %v1555 = vld [vmem:[%s1553 + $0x8] sm:$0xff]
      %v1556 = vld [vmem:[%s1553 + $0x10] sm:$0xff]
      %v1557 = vld [vmem:[%s1553 + $0x18] sm:$0xff]
      %v1558 = vld [vmem:[%s1553 + $0x20] sm:$0xff]
      %v1559 = vld [vmem:[%s1553 + $0x28] sm:$0xff]
      %v1560 = vld [vmem:[%s1553 + $0x30] sm:$0xff]
      %v1561 = vld [vmem:[%s1553 + $0x38] sm:$0xff]
      %v1562 = vld [vmem:[%s1553 + $0x40] sm:$0xff]
      %v1563 = vld [vmem:[%s1553 + $0x48] sm:$0xff]
      %v1564 = vld [vmem:[%s1553 + $0x50] sm:$0xff]
      %v1565 = vld [vmem:[%s1553 + $0x58] sm:$0xff]
      %v1566 = vld [vmem:[%s1553 + $0x60] sm:$0xff]
      %v1567 = vld [vmem:[%s1553 + $0x68] sm:$0xff]
      %v1568 = vld [vmem:[%s1553 + $0x70] sm:$0xff]
      %v1569 = vld [vmem:[%s1553 + $0x78] sm:$0xff]
      %v1570 = vld [vmem:[%s1553 + $0x80] sm:$0xff]
      %v1571 = vld [vmem:[%s1553 + $0x88] sm:$0xff]
      %v1572 = vld [vmem:[%s1553 + $0x90] sm:$0xff]
      %v1573 = vld [vmem:[%s1553 + $0x98] sm:$0xff]
      %v1574 = vld [vmem:[%s1553 + $0xa0] sm:$0xff]
      %v1575 = vld [vmem:[%s1553 + $0xa8] sm:$0xff]
      %v1576 = vld [vmem:[%s1553 + $0xb0] sm:$0xff]
      %v1577 = vld [vmem:[%s1553 + $0xb8] sm:$0xff]
      %v1578 = vld [vmem:[%s1553 + $0xc0] sm:$0xff]
      %v1579 = vld [vmem:[%s1553 + $0xc8] sm:$0xff]
      %v1580 = vld [vmem:[%s1553 + $0xd0] sm:$0xff]
      %v1581 = vld [vmem:[%s1553 + $0xd8] sm:$0xff]
      %v1582 = vld [vmem:[%s1553 + $0xe0] sm:$0xff]
      %v1583 = vld [vmem:[%s1553 + $0xe8] sm:$0xff]
      %v1584 = vld [vmem:[%s1553 + $0xf0] sm:$0xff]
      %v1585 = vld [vmem:[%s1553 + $0xf8] sm:$0xff]
      %v1586 = vpack.c.bf16 %v633, %v631
      %v1587 = vpack.c.bf16 %v687, %v685
      %s1588 = scalar_lea.vmem %s3, 1792
      %v1589 = vld [vmem:[%s1588] sm:$0xff]
      %v1590 = vld [vmem:[%s1588 + $0x8] sm:$0xff]
      %v1591 = vld [vmem:[%s1588 + $0x10] sm:$0xff]
      %v1592 = vld [vmem:[%s1588 + $0x18] sm:$0xff]
      %v1593 = vld [vmem:[%s1588 + $0x20] sm:$0xff]
      %v1594 = vld [vmem:[%s1588 + $0x28] sm:$0xff]
      %v1595 = vld [vmem:[%s1588 + $0x30] sm:$0xff]
      %v1596 = vld [vmem:[%s1588 + $0x38] sm:$0xff]
      %v1597 = vld [vmem:[%s1588 + $0x40] sm:$0xff]
      %v1598 = vld [vmem:[%s1588 + $0x48] sm:$0xff]
      %v1599 = vld [vmem:[%s1588 + $0x50] sm:$0xff]
      %v1600 = vld [vmem:[%s1588 + $0x58] sm:$0xff]
      %v1601 = vld [vmem:[%s1588 + $0x60] sm:$0xff]
      %v1602 = vld [vmem:[%s1588 + $0x68] sm:$0xff]
      %v1603 = vld [vmem:[%s1588 + $0x70] sm:$0xff]
      %v1604 = vld [vmem:[%s1588 + $0x78] sm:$0xff]
      %v1605 = vld [vmem:[%s1588 + $0x80] sm:$0xff]
      %v1606 = vld [vmem:[%s1588 + $0x88] sm:$0xff]
      %v1607 = vld [vmem:[%s1588 + $0x90] sm:$0xff]
      %v1608 = vld [vmem:[%s1588 + $0x98] sm:$0xff]
      %v1609 = vld [vmem:[%s1588 + $0xa0] sm:$0xff]
      %v1610 = vld [vmem:[%s1588 + $0xa8] sm:$0xff]
      %v1611 = vld [vmem:[%s1588 + $0xb0] sm:$0xff]
      %v1612 = vld [vmem:[%s1588 + $0xb8] sm:$0xff]
      %v1613 = vld [vmem:[%s1588 + $0xc0] sm:$0xff]
      %v1614 = vld [vmem:[%s1588 + $0xc8] sm:$0xff]
      %v1615 = vld [vmem:[%s1588 + $0xd0] sm:$0xff]
      %v1616 = vld [vmem:[%s1588 + $0xd8] sm:$0xff]
      %v1617 = vld [vmem:[%s1588 + $0xe0] sm:$0xff]
      %v1618 = vld [vmem:[%s1588 + $0xe8] sm:$0xff]
      %v1619 = vld [vmem:[%s1588 + $0xf0] sm:$0xff]
      %v1620 = vld [vmem:[%s1588 + $0xf8] sm:$0xff]
      %v1653 = vunpack.c.l.b16 %v1589
      %v1654 = vunpack.c.h.b16 %v1589
      %v1655 = vunpack.c.l.b16 %v1590
      %v1656 = vunpack.c.h.b16 %v1590
      %v1657 = vunpack.c.l.b16 %v1591
      %v1658 = vunpack.c.h.b16 %v1591
      %v1659 = vunpack.c.l.b16 %v1592
      %v1660 = vunpack.c.h.b16 %v1592
      %v1661 = vunpack.c.l.b16 %v1593
      %v1662 = vunpack.c.h.b16 %v1593
      %v1663 = vunpack.c.l.b16 %v1594
      %v1664 = vunpack.c.h.b16 %v1594
      %v1665 = vunpack.c.l.b16 %v1595
      %v1666 = vunpack.c.h.b16 %v1595
      %v1667 = vunpack.c.l.b16 %v1596
      %v1668 = vunpack.c.h.b16 %v1596
      %v1669 = vunpack.c.l.b16 %v1597
      %v1670 = vunpack.c.h.b16 %v1597
      %v1671 = vunpack.c.l.b16 %v1598
      %v1672 = vunpack.c.h.b16 %v1598
      %v1673 = vunpack.c.l.b16 %v1599
      %v1674 = vunpack.c.h.b16 %v1599
      %v1675 = vunpack.c.l.b16 %v1600
      %v1676 = vunpack.c.h.b16 %v1600
      %v1677 = vunpack.c.l.b16 %v1601
      %v1678 = vunpack.c.h.b16 %v1601
      %v1679 = vunpack.c.l.b16 %v1602
      %v1680 = vunpack.c.h.b16 %v1602
      %v1681 = vunpack.c.l.b16 %v1603
      %v1682 = vunpack.c.h.b16 %v1603
      %v1683 = vunpack.c.l.b16 %v1604
      %v1684 = vunpack.c.h.b16 %v1604
      %v1685 = vunpack.c.l.b16 %v1605
      %v1686 = vunpack.c.h.b16 %v1605
      %v1687 = vunpack.c.l.b16 %v1606
      %v1688 = vunpack.c.h.b16 %v1606
      %v1689 = vunpack.c.l.b16 %v1607
      %v1690 = vunpack.c.h.b16 %v1607
      %v1691 = vunpack.c.l.b16 %v1608
      %v1692 = vunpack.c.h.b16 %v1608
      %v1693 = vunpack.c.l.b16 %v1609
      %v1694 = vunpack.c.h.b16 %v1609
      %v1695 = vunpack.c.l.b16 %v1610
      %v1696 = vunpack.c.h.b16 %v1610
      %v1697 = vunpack.c.l.b16 %v1611
      %v1698 = vunpack.c.h.b16 %v1611
      %v1699 = vunpack.c.l.b16 %v1612
      %v1700 = vunpack.c.h.b16 %v1612
      %v1701 = vunpack.c.l.b16 %v1613
      %v1702 = vunpack.c.h.b16 %v1613
      %v1703 = vunpack.c.l.b16 %v1614
      %v1704 = vunpack.c.h.b16 %v1614
      %v1705 = vunpack.c.l.b16 %v1615
      %v1706 = vunpack.c.h.b16 %v1615
      %v1707 = vunpack.c.l.b16 %v1616
      %v1708 = vunpack.c.h.b16 %v1616
      %v1709 = vunpack.c.l.b16 %v1617
      %v1710 = vunpack.c.h.b16 %v1617
      %v1711 = vunpack.c.l.b16 %v1618
      %v1712 = vunpack.c.h.b16 %v1618
      %v1713 = vunpack.c.l.b16 %v1619
      %v1714 = vunpack.c.h.b16 %v1619
      %v1715 = vunpack.c.l.b16 %v1620
      %v1716 = vunpack.c.h.b16 %v1620
      %v1717 = vpack.c.b16 %v1655, %v1653
      %v1718 = vpack.c.b16 %v1656, %v1654
      %v1719 = vpack.c.b16 %v1659, %v1657
      %v1720 = vpack.c.b16 %v1660, %v1658
      %v1721 = vpack.c.b16 %v1663, %v1661
      %v1722 = vpack.c.b16 %v1664, %v1662
      %v1723 = vpack.c.b16 %v1667, %v1665
      %v1724 = vpack.c.b16 %v1668, %v1666
      %v1725 = vpack.c.b16 %v1671, %v1669
      %v1726 = vpack.c.b16 %v1672, %v1670
      %v1727 = vpack.c.b16 %v1675, %v1673
      %v1728 = vpack.c.b16 %v1676, %v1674
      %v1729 = vpack.c.b16 %v1679, %v1677
      %v1730 = vpack.c.b16 %v1680, %v1678
      %v1731 = vpack.c.b16 %v1683, %v1681
      %v1732 = vpack.c.b16 %v1684, %v1682
      %v1733 = vpack.c.b16 %v1687, %v1685
      %v1734 = vpack.c.b16 %v1688, %v1686
      %v1735 = vpack.c.b16 %v1691, %v1689
      %v1736 = vpack.c.b16 %v1692, %v1690
      %v1737 = vpack.c.b16 %v1695, %v1693
      %v1738 = vpack.c.b16 %v1696, %v1694
      %v1739 = vpack.c.b16 %v1699, %v1697
      %v1740 = vpack.c.b16 %v1700, %v1698
      %v1741 = vpack.c.b16 %v1703, %v1701
      %v1742 = vpack.c.b16 %v1704, %v1702
      %v1743 = vpack.c.b16 %v1707, %v1705
      %v1744 = vpack.c.b16 %v1708, %v1706
      %v1745 = vpack.c.b16 %v1711, %v1709
      %v1746 = vpack.c.b16 %v1712, %v1710
      %v1747 = vpack.c.b16 %v1715, %v1713
      %v1748 = vpack.c.b16 %v1716, %v1714
      %1781 = vmatpush.bf16.msra.mxu0 %v1731
      %1782 = vmatpush.bf16.msra.mxu0 %v1729
      %1783 = vmatpush.bf16.msra.mxu0 %v1727
      %1784 = vmatpush.bf16.msra.mxu0 %v1725
      %1785 = vmatpush.bf16.msra.mxu0 %v1723
      %1786 = vmatpush.bf16.msra.mxu0 %v1721
      %1787 = vmatpush.bf16.msra.mxu0 %v1719
      %1788 = vmatpush.bf16.msra.mxu0 %v1717
      %1789 = vmatmul.bf16.gmra.mxu0 %v1586
      %v1790 = vpop.f32.mrf.mxu0
      %v1791 = vadd.f32 0.0, %v1790
      %v1792 = vpop.f32.mrf.mxu0
      %v1793 = vadd.f32 0.0, %v1792
      %1794 = vdwg.mxu0
      %1795 = vmatpush.bf16.msra.mxu0 %v1747
      %1796 = vmatpush.bf16.msra.mxu0 %v1745
      %1797 = vmatpush.bf16.msra.mxu0 %v1743
      %1798 = vmatpush.bf16.msra.mxu0 %v1741
      %1799 = vmatpush.bf16.msra.mxu0 %v1739
      %1800 = vmatpush.bf16.msra.mxu0 %v1737
      %1801 = vmatpush.bf16.msra.mxu0 %v1735
      %1802 = vmatpush.bf16.msra.mxu0 %v1733
      %1803 = vmatmul.bf16.gmra.mxu0 %v1587
      %v1804 = vpop.f32.mrf.mxu0
      %v1805 = vadd.f32 %v1791, %v1804
      %v1806 = vpop.f32.mrf.mxu0
      %v1807 = vadd.f32 %v1793, %v1806
      %1808 = vdwg.mxu0
      %1809 = vmatpush.bf16.msra.mxu0 %v1732
      %1810 = vmatpush.bf16.msra.mxu0 %v1730
      %1811 = vmatpush.bf16.msra.mxu0 %v1728
      %1812 = vmatpush.bf16.msra.mxu0 %v1726
      %1813 = vmatpush.bf16.msra.mxu0 %v1724
      %1814 = vmatpush.bf16.msra.mxu0 %v1722
      %1815 = vmatpush.bf16.msra.mxu0 %v1720
      %1816 = vmatpush.bf16.msra.mxu0 %v1718
      %1817 = vmatmul.bf16.gmra.mxu0 %v1586
      %v1818 = vpop.f32.mrf.mxu0
      %v1819 = vadd.f32 0.0, %v1818
      %v1820 = vpop.f32.mrf.mxu0
      %v1821 = vadd.f32 0.0, %v1820
      %1822 = vdwg.mxu0
      %1823 = vmatpush.bf16.msra.mxu0 %v1748
      %1824 = vmatpush.bf16.msra.mxu0 %v1746
      %1825 = vmatpush.bf16.msra.mxu0 %v1744
      %1826 = vmatpush.bf16.msra.mxu0 %v1742
      %1827 = vmatpush.bf16.msra.mxu0 %v1740
      %1828 = vmatpush.bf16.msra.mxu0 %v1738
      %1829 = vmatpush.bf16.msra.mxu0 %v1736
      %1830 = vmatpush.bf16.msra.mxu0 %v1734
      %1831 = vmatmul.bf16.gmra.mxu0 %v1587
      %v1832 = vpop.f32.mrf.mxu0
      %v1833 = vadd.f32 %v1819, %v1832
      %v1834 = vpop.f32.mrf.mxu0
      %v1835 = vadd.f32 %v1821, %v1834
      %1836 = vdwg.mxu0
      %v1837 = vpack.c.bf16 %v638, %v636
      %v1838 = vpack.c.bf16 %v692, %v690
      %s1839 = scalar_lea.vmem %s3, 2048
      %v1840 = vld [vmem:[%s1839] sm:$0xff]
      %v1841 = vld [vmem:[%s1839 + $0x8] sm:$0xff]
      %v1842 = vld [vmem:[%s1839 + $0x10] sm:$0xff]
      %v1843 = vld [vmem:[%s1839 + $0x18] sm:$0xff]
      %v1844 = vld [vmem:[%s1839 + $0x20] sm:$0xff]
      %v1845 = vld [vmem:[%s1839 + $0x28] sm:$0xff]
      %v1846 = vld [vmem:[%s1839 + $0x30] sm:$0xff]
      %v1847 = vld [vmem:[%s1839 + $0x38] sm:$0xff]
      %v1848 = vld [vmem:[%s1839 + $0x40] sm:$0xff]
      %v1849 = vld [vmem:[%s1839 + $0x48] sm:$0xff]
      %v1850 = vld [vmem:[%s1839 + $0x50] sm:$0xff]
      %v1851 = vld [vmem:[%s1839 + $0x58] sm:$0xff]
      %v1852 = vld [vmem:[%s1839 + $0x60] sm:$0xff]
      %v1853 = vld [vmem:[%s1839 + $0x68] sm:$0xff]
      %v1854 = vld [vmem:[%s1839 + $0x70] sm:$0xff]
      %v1855 = vld [vmem:[%s1839 + $0x78] sm:$0xff]
      %v1856 = vld [vmem:[%s1839 + $0x80] sm:$0xff]
      %v1857 = vld [vmem:[%s1839 + $0x88] sm:$0xff]
      %v1858 = vld [vmem:[%s1839 + $0x90] sm:$0xff]
      %v1859 = vld [vmem:[%s1839 + $0x98] sm:$0xff]
      %v1860 = vld [vmem:[%s1839 + $0xa0] sm:$0xff]
      %v1861 = vld [vmem:[%s1839 + $0xa8] sm:$0xff]
      %v1862 = vld [vmem:[%s1839 + $0xb0] sm:$0xff]
      %v1863 = vld [vmem:[%s1839 + $0xb8] sm:$0xff]
      %v1864 = vld [vmem:[%s1839 + $0xc0] sm:$0xff]
      %v1865 = vld [vmem:[%s1839 + $0xc8] sm:$0xff]
      %v1866 = vld [vmem:[%s1839 + $0xd0] sm:$0xff]
      %v1867 = vld [vmem:[%s1839 + $0xd8] sm:$0xff]
      %v1868 = vld [vmem:[%s1839 + $0xe0] sm:$0xff]
      %v1869 = vld [vmem:[%s1839 + $0xe8] sm:$0xff]
      %v1870 = vld [vmem:[%s1839 + $0xf0] sm:$0xff]
      %v1871 = vld [vmem:[%s1839 + $0xf8] sm:$0xff]
      %v1904 = vunpack.c.l.b16 %v1840
      %v1905 = vunpack.c.h.b16 %v1840
      %v1906 = vunpack.c.l.b16 %v1841
      %v1907 = vunpack.c.h.b16 %v1841
      %v1908 = vunpack.c.l.b16 %v1842
      %v1909 = vunpack.c.h.b16 %v1842
      %v1910 = vunpack.c.l.b16 %v1843
      %v1911 = vunpack.c.h.b16 %v1843
      %v1912 = vunpack.c.l.b16 %v1844
      %v1913 = vunpack.c.h.b16 %v1844
      %v1914 = vunpack.c.l.b16 %v1845
      %v1915 = vunpack.c.h.b16 %v1845
      %v1916 = vunpack.c.l.b16 %v1846
      %v1917 = vunpack.c.h.b16 %v1846
      %v1918 = vunpack.c.l.b16 %v1847
      %v1919 = vunpack.c.h.b16 %v1847
      %v1920 = vunpack.c.l.b16 %v1848
      %v1921 = vunpack.c.h.b16 %v1848
      %v1922 = vunpack.c.l.b16 %v1849
      %v1923 = vunpack.c.h.b16 %v1849
      %v1924 = vunpack.c.l.b16 %v1850
      %v1925 = vunpack.c.h.b16 %v1850
      %v1926 = vunpack.c.l.b16 %v1851
      %v1927 = vunpack.c.h.b16 %v1851
      %v1928 = vunpack.c.l.b16 %v1852
      %v1929 = vunpack.c.h.b16 %v1852
      %v1930 = vunpack.c.l.b16 %v1853
      %v1931 = vunpack.c.h.b16 %v1853
      %v1932 = vunpack.c.l.b16 %v1854
      %v1933 = vunpack.c.h.b16 %v1854
      %v1934 = vunpack.c.l.b16 %v1855
      %v1935 = vunpack.c.h.b16 %v1855
      %v1936 = vunpack.c.l.b16 %v1856
      %v1937 = vunpack.c.h.b16 %v1856
      %v1938 = vunpack.c.l.b16 %v1857
      %v1939 = vunpack.c.h.b16 %v1857
      %v1940 = vunpack.c.l.b16 %v1858
      %v1941 = vunpack.c.h.b16 %v1858
      %v1942 = vunpack.c.l.b16 %v1859
      %v1943 = vunpack.c.h.b16 %v1859
      %v1944 = vunpack.c.l.b16 %v1860
      %v1945 = vunpack.c.h.b16 %v1860
      %v1946 = vunpack.c.l.b16 %v1861
      %v1947 = vunpack.c.h.b16 %v1861
      %v1948 = vunpack.c.l.b16 %v1862
      %v1949 = vunpack.c.h.b16 %v1862
      %v1950 = vunpack.c.l.b16 %v1863
      %v1951 = vunpack.c.h.b16 %v1863
      %v1952 = vunpack.c.l.b16 %v1864
      %v1953 = vunpack.c.h.b16 %v1864
      %v1954 = vunpack.c.l.b16 %v1865
      %v1955 = vunpack.c.h.b16 %v1865
      %v1956 = vunpack.c.l.b16 %v1866
      %v1957 = vunpack.c.h.b16 %v1866
      %v1958 = vunpack.c.l.b16 %v1867
      %v1959 = vunpack.c.h.b16 %v1867
      %v1960 = vunpack.c.l.b16 %v1868
      %v1961 = vunpack.c.h.b16 %v1868
      %v1962 = vunpack.c.l.b16 %v1869
      %v1963 = vunpack.c.h.b16 %v1869
      %v1964 = vunpack.c.l.b16 %v1870
      %v1965 = vunpack.c.h.b16 %v1870
      %v1966 = vunpack.c.l.b16 %v1871
      %v1967 = vunpack.c.h.b16 %v1871
      %v1968 = vpack.c.b16 %v1906, %v1904
      %v1969 = vpack.c.b16 %v1907, %v1905
      %v1970 = vpack.c.b16 %v1910, %v1908
      %v1971 = vpack.c.b16 %v1911, %v1909
      %v1972 = vpack.c.b16 %v1914, %v1912
      %v1973 = vpack.c.b16 %v1915, %v1913
      %v1974 = vpack.c.b16 %v1918, %v1916
      %v1975 = vpack.c.b16 %v1919, %v1917
      %v1976 = vpack.c.b16 %v1922, %v1920
      %v1977 = vpack.c.b16 %v1923, %v1921
      %v1978 = vpack.c.b16 %v1926, %v1924
      %v1979 = vpack.c.b16 %v1927, %v1925
      %v1980 = vpack.c.b16 %v1930, %v1928
      %v1981 = vpack.c.b16 %v1931, %v1929
      %v1982 = vpack.c.b16 %v1934, %v1932
      %v1983 = vpack.c.b16 %v1935, %v1933
      %v1984 = vpack.c.b16 %v1938, %v1936
      %v1985 = vpack.c.b16 %v1939, %v1937
      %v1986 = vpack.c.b16 %v1942, %v1940
      %v1987 = vpack.c.b16 %v1943, %v1941
      %v1988 = vpack.c.b16 %v1946, %v1944
      %v1989 = vpack.c.b16 %v1947, %v1945
      %v1990 = vpack.c.b16 %v1950, %v1948
      %v1991 = vpack.c.b16 %v1951, %v1949
      %v1992 = vpack.c.b16 %v1954, %v1952
      %v1993 = vpack.c.b16 %v1955, %v1953
      %v1994 = vpack.c.b16 %v1958, %v1956
      %v1995 = vpack.c.b16 %v1959, %v1957
      %v1996 = vpack.c.b16 %v1962, %v1960
      %v1997 = vpack.c.b16 %v1963, %v1961
      %v1998 = vpack.c.b16 %v1966, %v1964
      %v1999 = vpack.c.b16 %v1967, %v1965
      %2032 = vmatpush.bf16.msra.mxu0 %v1982
      %2033 = vmatpush.bf16.msra.mxu0 %v1980
      %2034 = vmatpush.bf16.msra.mxu0 %v1978
      %2035 = vmatpush.bf16.msra.mxu0 %v1976
      %2036 = vmatpush.bf16.msra.mxu0 %v1974
      %2037 = vmatpush.bf16.msra.mxu0 %v1972
      %2038 = vmatpush.bf16.msra.mxu0 %v1970
      %2039 = vmatpush.bf16.msra.mxu0 %v1968
      %2040 = vmatmul.bf16.gmra.mxu0 %v1837
      %v2041 = vpop.f32.mrf.mxu0
      %v2042 = vadd.f32 0.0, %v2041
      %v2043 = vpop.f32.mrf.mxu0
      %v2044 = vadd.f32 0.0, %v2043
      %2045 = vdwg.mxu0
      %2046 = vmatpush.bf16.msra.mxu0 %v1998
      %2047 = vmatpush.bf16.msra.mxu0 %v1996
      %2048 = vmatpush.bf16.msra.mxu0 %v1994
      %2049 = vmatpush.bf16.msra.mxu0 %v1992
      %2050 = vmatpush.bf16.msra.mxu0 %v1990
      %2051 = vmatpush.bf16.msra.mxu0 %v1988
      %2052 = vmatpush.bf16.msra.mxu0 %v1986
      %2053 = vmatpush.bf16.msra.mxu0 %v1984
      %2054 = vmatmul.bf16.gmra.mxu0 %v1838
      %v2055 = vpop.f32.mrf.mxu0
      %v2056 = vadd.f32 %v2042, %v2055
      %v2057 = vpop.f32.mrf.mxu0
      %v2058 = vadd.f32 %v2044, %v2057
      %2059 = vdwg.mxu0
      %2060 = vmatpush.bf16.msra.mxu0 %v1983
      %2061 = vmatpush.bf16.msra.mxu0 %v1981
      %2062 = vmatpush.bf16.msra.mxu0 %v1979
      %2063 = vmatpush.bf16.msra.mxu0 %v1977
      %2064 = vmatpush.bf16.msra.mxu0 %v1975
      %2065 = vmatpush.bf16.msra.mxu0 %v1973
      %2066 = vmatpush.bf16.msra.mxu0 %v1971
      %2067 = vmatpush.bf16.msra.mxu0 %v1969
      %2068 = vmatmul.bf16.gmra.mxu0 %v1837
      %v2069 = vpop.f32.mrf.mxu0
      %v2070 = vadd.f32 0.0, %v2069
      %v2071 = vpop.f32.mrf.mxu0
      %v2072 = vadd.f32 0.0, %v2071
      %2073 = vdwg.mxu0
      %2074 = vmatpush.bf16.msra.mxu0 %v1999
      %2075 = vmatpush.bf16.msra.mxu0 %v1997
      %2076 = vmatpush.bf16.msra.mxu0 %v1995
      %2077 = vmatpush.bf16.msra.mxu0 %v1993
      %2078 = vmatpush.bf16.msra.mxu0 %v1991
      %2079 = vmatpush.bf16.msra.mxu0 %v1989
      %2080 = vmatpush.bf16.msra.mxu0 %v1987
      %2081 = vmatpush.bf16.msra.mxu0 %v1985
      %2082 = vmatmul.bf16.gmra.mxu0 %v1838
      %v2083 = vpop.f32.mrf.mxu0
      %v2084 = vadd.f32 %v2070, %v2083
      %v2085 = vpop.f32.mrf.mxu0
      %v2086 = vadd.f32 %v2072, %v2085
      %2087 = vdwg.mxu0
      %v2120 = vunpack.c.l.b16 %v696
      %v2121 = vunpack.c.h.b16 %v696
      %v2122 = vunpack.c.l.b16 %v697
      %v2123 = vunpack.c.h.b16 %v697
      %v2124 = vunpack.c.l.b16 %v698
      %v2125 = vunpack.c.h.b16 %v698
      %v2126 = vunpack.c.l.b16 %v699
      %v2127 = vunpack.c.h.b16 %v699
      %v2128 = vunpack.c.l.b16 %v700
      %v2129 = vunpack.c.h.b16 %v700
      %v2130 = vunpack.c.l.b16 %v701
      %v2131 = vunpack.c.h.b16 %v701
      %v2132 = vunpack.c.l.b16 %v702
      %v2133 = vunpack.c.h.b16 %v702
      %v2134 = vunpack.c.l.b16 %v703
      %v2135 = vunpack.c.h.b16 %v703
      %v2136 = vunpack.c.l.b16 %v704
      %v2137 = vunpack.c.h.b16 %v704
      %v2138 = vunpack.c.l.b16 %v705
      %v2139 = vunpack.c.h.b16 %v705
      %v2140 = vunpack.c.l.b16 %v706
      %v2141 = vunpack.c.h.b16 %v706
      %v2142 = vunpack.c.l.b16 %v707
      %v2143 = vunpack.c.h.b16 %v707
      %v2144 = vunpack.c.l.b16 %v708
      %v2145 = vunpack.c.h.b16 %v708
      %v2146 = vunpack.c.l.b16 %v709
      %v2147 = vunpack.c.h.b16 %v709
      %v2148 = vunpack.c.l.b16 %v710
      %v2149 = vunpack.c.h.b16 %v710
      %v2150 = vunpack.c.l.b16 %v711
      %v2151 = vunpack.c.h.b16 %v711
      %v2152 = vunpack.c.l.b16 %v712
      %v2153 = vunpack.c.h.b16 %v712
      %v2154 = vunpack.c.l.b16 %v713
      %v2155 = vunpack.c.h.b16 %v713
      %v2156 = vunpack.c.l.b16 %v714
      %v2157 = vunpack.c.h.b16 %v714
      %v2158 = vunpack.c.l.b16 %v715
      %v2159 = vunpack.c.h.b16 %v715
      %v2160 = vunpack.c.l.b16 %v716
      %v2161 = vunpack.c.h.b16 %v716
      %v2162 = vunpack.c.l.b16 %v717
      %v2163 = vunpack.c.h.b16 %v717
      %v2164 = vunpack.c.l.b16 %v718
      %v2165 = vunpack.c.h.b16 %v718
      %v2166 = vunpack.c.l.b16 %v719
      %v2167 = vunpack.c.h.b16 %v719
      %v2168 = vunpack.c.l.b16 %v720
      %v2169 = vunpack.c.h.b16 %v720
      %v2170 = vunpack.c.l.b16 %v721
      %v2171 = vunpack.c.h.b16 %v721
      %v2172 = vunpack.c.l.b16 %v722
      %v2173 = vunpack.c.h.b16 %v722
      %v2174 = vunpack.c.l.b16 %v723
      %v2175 = vunpack.c.h.b16 %v723
      %v2176 = vunpack.c.l.b16 %v724
      %v2177 = vunpack.c.h.b16 %v724
      %v2178 = vunpack.c.l.b16 %v725
      %v2179 = vunpack.c.h.b16 %v725
      %v2180 = vunpack.c.l.b16 %v726
      %v2181 = vunpack.c.h.b16 %v726
      %v2182 = vunpack.c.l.b16 %v727
      %v2183 = vunpack.c.h.b16 %v727
      %v2184 = vpack.c.b16 %v2122, %v2120
      %v2185 = vpack.c.b16 %v2123, %v2121
      %v2186 = vpack.c.b16 %v2126, %v2124
      %v2187 = vpack.c.b16 %v2127, %v2125
      %v2188 = vpack.c.b16 %v2130, %v2128
      %v2189 = vpack.c.b16 %v2131, %v2129
      %v2190 = vpack.c.b16 %v2134, %v2132
      %v2191 = vpack.c.b16 %v2135, %v2133
      %v2192 = vpack.c.b16 %v2138, %v2136
      %v2193 = vpack.c.b16 %v2139, %v2137
      %v2194 = vpack.c.b16 %v2142, %v2140
      %v2195 = vpack.c.b16 %v2143, %v2141
      %v2196 = vpack.c.b16 %v2146, %v2144
      %v2197 = vpack.c.b16 %v2147, %v2145
      %v2198 = vpack.c.b16 %v2150, %v2148
      %v2199 = vpack.c.b16 %v2151, %v2149
      %v2200 = vpack.c.b16 %v2154, %v2152
      %v2201 = vpack.c.b16 %v2155, %v2153
      %v2202 = vpack.c.b16 %v2158, %v2156
      %v2203 = vpack.c.b16 %v2159, %v2157
      %v2204 = vpack.c.b16 %v2162, %v2160
      %v2205 = vpack.c.b16 %v2163, %v2161
      %v2206 = vpack.c.b16 %v2166, %v2164
      %v2207 = vpack.c.b16 %v2167, %v2165
      %v2208 = vpack.c.b16 %v2170, %v2168
      %v2209 = vpack.c.b16 %v2171, %v2169
      %v2210 = vpack.c.b16 %v2174, %v2172
      %v2211 = vpack.c.b16 %v2175, %v2173
      %v2212 = vpack.c.b16 %v2178, %v2176
      %v2213 = vpack.c.b16 %v2179, %v2177
      %v2214 = vpack.c.b16 %v2182, %v2180
      %v2215 = vpack.c.b16 %v2183, %v2181
      %2248 = vmatpush.bf16.msra.mxu0 %v2198
      %2249 = vmatpush.bf16.msra.mxu0 %v2196
      %2250 = vmatpush.bf16.msra.mxu0 %v2194
      %2251 = vmatpush.bf16.msra.mxu0 %v2192
      %2252 = vmatpush.bf16.msra.mxu0 %v2190
      %2253 = vmatpush.bf16.msra.mxu0 %v2188
      %2254 = vmatpush.bf16.msra.mxu0 %v2186
      %2255 = vmatpush.bf16.msra.mxu0 %v2184
      %2256 = vmatmul.bf16.gmra.mxu0 %v694
      %v2257 = vpop.f32.mrf.mxu0
      %v2258 = vadd.f32 %v947, %v2257
      %v2259 = vpop.f32.mrf.mxu0
      %v2260 = vadd.f32 %v949, %v2259
      %2261 = vdwg.mxu0
      %2262 = vmatpush.bf16.msra.mxu0 %v2214
      %2263 = vmatpush.bf16.msra.mxu0 %v2212
      %2264 = vmatpush.bf16.msra.mxu0 %v2210
      %2265 = vmatpush.bf16.msra.mxu0 %v2208
      %2266 = vmatpush.bf16.msra.mxu0 %v2206
      %2267 = vmatpush.bf16.msra.mxu0 %v2204
      %2268 = vmatpush.bf16.msra.mxu0 %v2202
      %2269 = vmatpush.bf16.msra.mxu0 %v2200
      %2270 = vmatmul.bf16.gmra.mxu0 %v695
      %v2271 = vpop.f32.mrf.mxu0
      %v2272 = vadd.f32 %v2258, %v2271
      %v2273 = vpop.f32.mrf.mxu0
      %v2274 = vadd.f32 %v2260, %v2273
      %2275 = vdwg.mxu0
      %2276 = vmatpush.bf16.msra.mxu0 %v2199
      %2277 = vmatpush.bf16.msra.mxu0 %v2197
      %2278 = vmatpush.bf16.msra.mxu0 %v2195
      %2279 = vmatpush.bf16.msra.mxu0 %v2193
      %2280 = vmatpush.bf16.msra.mxu0 %v2191
      %2281 = vmatpush.bf16.msra.mxu0 %v2189
      %2282 = vmatpush.bf16.msra.mxu0 %v2187
      %2283 = vmatpush.bf16.msra.mxu0 %v2185
      %2284 = vmatmul.bf16.gmra.mxu0 %v694
      %v2285 = vpop.f32.mrf.mxu0
      %v2286 = vadd.f32 %v975, %v2285
      %v2287 = vpop.f32.mrf.mxu0
      %v2288 = vadd.f32 %v977, %v2287
      %2289 = vdwg.mxu0
      %2290 = vmatpush.bf16.msra.mxu0 %v2215
      %2291 = vmatpush.bf16.msra.mxu0 %v2213
      %2292 = vmatpush.bf16.msra.mxu0 %v2211
      %2293 = vmatpush.bf16.msra.mxu0 %v2209
      %2294 = vmatpush.bf16.msra.mxu0 %v2207
      %2295 = vmatpush.bf16.msra.mxu0 %v2205
      %2296 = vmatpush.bf16.msra.mxu0 %v2203
      %2297 = vmatpush.bf16.msra.mxu0 %v2201
      %2298 = vmatmul.bf16.gmra.mxu0 %v695
      %v2299 = vpop.f32.mrf.mxu0
      %v2300 = vadd.f32 %v2286, %v2299
      %v2301 = vpop.f32.mrf.mxu0
      %v2302 = vadd.f32 %v2288, %v2301
      %2303 = vdwg.mxu0
      %v2336 = vunpack.c.l.b16 %v982
      %v2337 = vunpack.c.h.b16 %v982
      %v2338 = vunpack.c.l.b16 %v983
      %v2339 = vunpack.c.h.b16 %v983
      %v2340 = vunpack.c.l.b16 %v984
      %v2341 = vunpack.c.h.b16 %v984
      %v2342 = vunpack.c.l.b16 %v985
      %v2343 = vunpack.c.h.b16 %v985
      %v2344 = vunpack.c.l.b16 %v986
      %v2345 = vunpack.c.h.b16 %v986
      %v2346 = vunpack.c.l.b16 %v987
      %v2347 = vunpack.c.h.b16 %v987
      %v2348 = vunpack.c.l.b16 %v988
      %v2349 = vunpack.c.h.b16 %v988
      %v2350 = vunpack.c.l.b16 %v989
      %v2351 = vunpack.c.h.b16 %v989
      %v2352 = vunpack.c.l.b16 %v990
      %v2353 = vunpack.c.h.b16 %v990
      %v2354 = vunpack.c.l.b16 %v991
      %v2355 = vunpack.c.h.b16 %v991
      %v2356 = vunpack.c.l.b16 %v992
      %v2357 = vunpack.c.h.b16 %v992
      %v2358 = vunpack.c.l.b16 %v993
      %v2359 = vunpack.c.h.b16 %v993
      %v2360 = vunpack.c.l.b16 %v994
      %v2361 = vunpack.c.h.b16 %v994
      %v2362 = vunpack.c.l.b16 %v995
      %v2363 = vunpack.c.h.b16 %v995
      %v2364 = vunpack.c.l.b16 %v996
      %v2365 = vunpack.c.h.b16 %v996
      %v2366 = vunpack.c.l.b16 %v997
      %v2367 = vunpack.c.h.b16 %v997
      %v2368 = vunpack.c.l.b16 %v998
      %v2369 = vunpack.c.h.b16 %v998
      %v2370 = vunpack.c.l.b16 %v999
      %v2371 = vunpack.c.h.b16 %v999
      %v2372 = vunpack.c.l.b16 %v1000
      %v2373 = vunpack.c.h.b16 %v1000
      %v2374 = vunpack.c.l.b16 %v1001
      %v2375 = vunpack.c.h.b16 %v1001
      %v2376 = vunpack.c.l.b16 %v1002
      %v2377 = vunpack.c.h.b16 %v1002
      %v2378 = vunpack.c.l.b16 %v1003
      %v2379 = vunpack.c.h.b16 %v1003
      %v2380 = vunpack.c.l.b16 %v1004
      %v2381 = vunpack.c.h.b16 %v1004
      %v2382 = vunpack.c.l.b16 %v1005
      %v2383 = vunpack.c.h.b16 %v1005
      %v2384 = vunpack.c.l.b16 %v1006
      %v2385 = vunpack.c.h.b16 %v1006
      %v2386 = vunpack.c.l.b16 %v1007
      %v2387 = vunpack.c.h.b16 %v1007
      %v2388 = vunpack.c.l.b16 %v1008
      %v2389 = vunpack.c.h.b16 %v1008
      %v2390 = vunpack.c.l.b16 %v1009
      %v2391 = vunpack.c.h.b16 %v1009
      %v2392 = vunpack.c.l.b16 %v1010
      %v2393 = vunpack.c.h.b16 %v1010
      %v2394 = vunpack.c.l.b16 %v1011
      %v2395 = vunpack.c.h.b16 %v1011
      %v2396 = vunpack.c.l.b16 %v1012
      %v2397 = vunpack.c.h.b16 %v1012
      %v2398 = vunpack.c.l.b16 %v1013
      %v2399 = vunpack.c.h.b16 %v1013
      %v2400 = vpack.c.b16 %v2338, %v2336
      %v2401 = vpack.c.b16 %v2339, %v2337
      %v2402 = vpack.c.b16 %v2342, %v2340
      %v2403 = vpack.c.b16 %v2343, %v2341
      %v2404 = vpack.c.b16 %v2346, %v2344
      %v2405 = vpack.c.b16 %v2347, %v2345
      %v2406 = vpack.c.b16 %v2350, %v2348
      %v2407 = vpack.c.b16 %v2351, %v2349
      %v2408 = vpack.c.b16 %v2354, %v2352
      %v2409 = vpack.c.b16 %v2355, %v2353
      %v2410 = vpack.c.b16 %v2358, %v2356
      %v2411 = vpack.c.b16 %v2359, %v2357
      %v2412 = vpack.c.b16 %v2362, %v2360
      %v2413 = vpack.c.b16 %v2363, %v2361
      %v2414 = vpack.c.b16 %v2366, %v2364
      %v2415 = vpack.c.b16 %v2367, %v2365
      %v2416 = vpack.c.b16 %v2370, %v2368
      %v2417 = vpack.c.b16 %v2371, %v2369
      %v2418 = vpack.c.b16 %v2374, %v2372
      %v2419 = vpack.c.b16 %v2375, %v2373
      %v2420 = vpack.c.b16 %v2378, %v2376
      %v2421 = vpack.c.b16 %v2379, %v2377
      %v2422 = vpack.c.b16 %v2382, %v2380
      %v2423 = vpack.c.b16 %v2383, %v2381
      %v2424 = vpack.c.b16 %v2386, %v2384
      %v2425 = vpack.c.b16 %v2387, %v2385
      %v2426 = vpack.c.b16 %v2390, %v2388
      %v2427 = vpack.c.b16 %v2391, %v2389
      %v2428 = vpack.c.b16 %v2394, %v2392
      %v2429 = vpack.c.b16 %v2395, %v2393
      %v2430 = vpack.c.b16 %v2398, %v2396
      %v2431 = vpack.c.b16 %v2399, %v2397
      %2464 = vmatpush.bf16.msra.mxu0 %v2414
      %2465 = vmatpush.bf16.msra.mxu0 %v2412
      %2466 = vmatpush.bf16.msra.mxu0 %v2410
      %2467 = vmatpush.bf16.msra.mxu0 %v2408
      %2468 = vmatpush.bf16.msra.mxu0 %v2406
      %2469 = vmatpush.bf16.msra.mxu0 %v2404
      %2470 = vmatpush.bf16.msra.mxu0 %v2402
      %2471 = vmatpush.bf16.msra.mxu0 %v2400
      %2472 = vmatmul.bf16.gmra.mxu0 %v979
      %v2473 = vpop.f32.mrf.mxu0
      %v2474 = vadd.f32 %v1233, %v2473
      %v2475 = vpop.f32.mrf.mxu0
      %v2476 = vadd.f32 %v1235, %v2475
      %2477 = vdwg.mxu0
      %2478 = vmatpush.bf16.msra.mxu0 %v2430
      %2479 = vmatpush.bf16.msra.mxu0 %v2428
      %2480 = vmatpush.bf16.msra.mxu0 %v2426
      %2481 = vmatpush.bf16.msra.mxu0 %v2424
      %2482 = vmatpush.bf16.msra.mxu0 %v2422
      %2483 = vmatpush.bf16.msra.mxu0 %v2420
      %2484 = vmatpush.bf16.msra.mxu0 %v2418
      %2485 = vmatpush.bf16.msra.mxu0 %v2416
      %2486 = vmatmul.bf16.gmra.mxu0 %v980
      %v2487 = vpop.f32.mrf.mxu0
      %v2488 = vadd.f32 %v2474, %v2487
      %v2489 = vpop.f32.mrf.mxu0
      %v2490 = vadd.f32 %v2476, %v2489
      %2491 = vdwg.mxu0
      %2492 = vmatpush.bf16.msra.mxu0 %v2415
      %2493 = vmatpush.bf16.msra.mxu0 %v2413
      %2494 = vmatpush.bf16.msra.mxu0 %v2411
      %2495 = vmatpush.bf16.msra.mxu0 %v2409
      %2496 = vmatpush.bf16.msra.mxu0 %v2407
      %2497 = vmatpush.bf16.msra.mxu0 %v2405
      %2498 = vmatpush.bf16.msra.mxu0 %v2403
      %2499 = vmatpush.bf16.msra.mxu0 %v2401
      %2500 = vmatmul.bf16.gmra.mxu0 %v979
      %v2501 = vpop.f32.mrf.mxu0
      %v2502 = vadd.f32 %v1261, %v2501
      %v2503 = vpop.f32.mrf.mxu0
      %v2504 = vadd.f32 %v1263, %v2503
      %2505 = vdwg.mxu0
      %2506 = vmatpush.bf16.msra.mxu0 %v2431
      %2507 = vmatpush.bf16.msra.mxu0 %v2429
      %2508 = vmatpush.bf16.msra.mxu0 %v2427
      %2509 = vmatpush.bf16.msra.mxu0 %v2425
      %2510 = vmatpush.bf16.msra.mxu0 %v2423
      %2511 = vmatpush.bf16.msra.mxu0 %v2421
      %2512 = vmatpush.bf16.msra.mxu0 %v2419
      %2513 = vmatpush.bf16.msra.mxu0 %v2417
      %2514 = vmatmul.bf16.gmra.mxu0 %v980
      %v2515 = vpop.f32.mrf.mxu0
      %v2516 = vadd.f32 %v2502, %v2515
      %v2517 = vpop.f32.mrf.mxu0
      %v2518 = vadd.f32 %v2504, %v2517
      %2519 = vdwg.mxu0
      %v2552 = vunpack.c.l.b16 %v1268
      %v2553 = vunpack.c.h.b16 %v1268
      %v2554 = vunpack.c.l.b16 %v1269
      %v2555 = vunpack.c.h.b16 %v1269
      %v2556 = vunpack.c.l.b16 %v1270
      %v2557 = vunpack.c.h.b16 %v1270
      %v2558 = vunpack.c.l.b16 %v1271
      %v2559 = vunpack.c.h.b16 %v1271
      %v2560 = vunpack.c.l.b16 %v1272
      %v2561 = vunpack.c.h.b16 %v1272
      %v2562 = vunpack.c.l.b16 %v1273
      %v2563 = vunpack.c.h.b16 %v1273
      %v2564 = vunpack.c.l.b16 %v1274
      %v2565 = vunpack.c.h.b16 %v1274
      %v2566 = vunpack.c.l.b16 %v1275
      %v2567 = vunpack.c.h.b16 %v1275
      %v2568 = vunpack.c.l.b16 %v1276
      %v2569 = vunpack.c.h.b16 %v1276
      %v2570 = vunpack.c.l.b16 %v1277
      %v2571 = vunpack.c.h.b16 %v1277
      %v2572 = vunpack.c.l.b16 %v1278
      %v2573 = vunpack.c.h.b16 %v1278
      %v2574 = vunpack.c.l.b16 %v1279
      %v2575 = vunpack.c.h.b16 %v1279
      %v2576 = vunpack.c.l.b16 %v1280
      %v2577 = vunpack.c.h.b16 %v1280
      %v2578 = vunpack.c.l.b16 %v1281
      %v2579 = vunpack.c.h.b16 %v1281
      %v2580 = vunpack.c.l.b16 %v1282
      %v2581 = vunpack.c.h.b16 %v1282
      %v2582 = vunpack.c.l.b16 %v1283
      %v2583 = vunpack.c.h.b16 %v1283
      %v2584 = vunpack.c.l.b16 %v1284
      %v2585 = vunpack.c.h.b16 %v1284
      %v2586 = vunpack.c.l.b16 %v1285
      %v2587 = vunpack.c.h.b16 %v1285
      %v2588 = vunpack.c.l.b16 %v1286
      %v2589 = vunpack.c.h.b16 %v1286
      %v2590 = vunpack.c.l.b16 %v1287
      %v2591 = vunpack.c.h.b16 %v1287
      %v2592 = vunpack.c.l.b16 %v1288
      %v2593 = vunpack.c.h.b16 %v1288
      %v2594 = vunpack.c.l.b16 %v1289
      %v2595 = vunpack.c.h.b16 %v1289
      %v2596 = vunpack.c.l.b16 %v1290
      %v2597 = vunpack.c.h.b16 %v1290
      %v2598 = vunpack.c.l.b16 %v1291
      %v2599 = vunpack.c.h.b16 %v1291
      %v2600 = vunpack.c.l.b16 %v1292
      %v2601 = vunpack.c.h.b16 %v1292
      %v2602 = vunpack.c.l.b16 %v1293
      %v2603 = vunpack.c.h.b16 %v1293
      %v2604 = vunpack.c.l.b16 %v1294
      %v2605 = vunpack.c.h.b16 %v1294
      %v2606 = vunpack.c.l.b16 %v1295
      %v2607 = vunpack.c.h.b16 %v1295
      %v2608 = vunpack.c.l.b16 %v1296
      %v2609 = vunpack.c.h.b16 %v1296
      %v2610 = vunpack.c.l.b16 %v1297
      %v2611 = vunpack.c.h.b16 %v1297
      %v2612 = vunpack.c.l.b16 %v1298
      %v2613 = vunpack.c.h.b16 %v1298
      %v2614 = vunpack.c.l.b16 %v1299
      %v2615 = vunpack.c.h.b16 %v1299
      %v2616 = vpack.c.b16 %v2554, %v2552
      %v2617 = vpack.c.b16 %v2555, %v2553
      %v2618 = vpack.c.b16 %v2558, %v2556
      %v2619 = vpack.c.b16 %v2559, %v2557
      %v2620 = vpack.c.b16 %v2562, %v2560
      %v2621 = vpack.c.b16 %v2563, %v2561
      %v2622 = vpack.c.b16 %v2566, %v2564
      %v2623 = vpack.c.b16 %v2567, %v2565
      %v2624 = vpack.c.b16 %v2570, %v2568
      %v2625 = vpack.c.b16 %v2571, %v2569
      %v2626 = vpack.c.b16 %v2574, %v2572
      %v2627 = vpack.c.b16 %v2575, %v2573
      %v2628 = vpack.c.b16 %v2578, %v2576
      %v2629 = vpack.c.b16 %v2579, %v2577
      %v2630 = vpack.c.b16 %v2582, %v2580
      %v2631 = vpack.c.b16 %v2583, %v2581
      %v2632 = vpack.c.b16 %v2586, %v2584
      %v2633 = vpack.c.b16 %v2587, %v2585
      %v2634 = vpack.c.b16 %v2590, %v2588
      %v2635 = vpack.c.b16 %v2591, %v2589
      %v2636 = vpack.c.b16 %v2594, %v2592
      %v2637 = vpack.c.b16 %v2595, %v2593
      %v2638 = vpack.c.b16 %v2598, %v2596
      %v2639 = vpack.c.b16 %v2599, %v2597
      %v2640 = vpack.c.b16 %v2602, %v2600
      %v2641 = vpack.c.b16 %v2603, %v2601
      %v2642 = vpack.c.b16 %v2606, %v2604
      %v2643 = vpack.c.b16 %v2607, %v2605
      %v2644 = vpack.c.b16 %v2610, %v2608
      %v2645 = vpack.c.b16 %v2611, %v2609
      %v2646 = vpack.c.b16 %v2614, %v2612
      %v2647 = vpack.c.b16 %v2615, %v2613
      %2680 = vmatpush.bf16.msra.mxu0 %v2630
      %2681 = vmatpush.bf16.msra.mxu0 %v2628
      %2682 = vmatpush.bf16.msra.mxu0 %v2626
      %2683 = vmatpush.bf16.msra.mxu0 %v2624
      %2684 = vmatpush.bf16.msra.mxu0 %v2622
      %2685 = vmatpush.bf16.msra.mxu0 %v2620
      %2686 = vmatpush.bf16.msra.mxu0 %v2618
      %2687 = vmatpush.bf16.msra.mxu0 %v2616
      %2688 = vmatmul.bf16.gmra.mxu0 %v1265
      %v2689 = vpop.f32.mrf.mxu0
      %v2690 = vadd.f32 %v1519, %v2689
      %v2691 = vpop.f32.mrf.mxu0
      %v2692 = vadd.f32 %v1521, %v2691
      %2693 = vdwg.mxu0
      %2694 = vmatpush.bf16.msra.mxu0 %v2646
      %2695 = vmatpush.bf16.msra.mxu0 %v2644
      %2696 = vmatpush.bf16.msra.mxu0 %v2642
      %2697 = vmatpush.bf16.msra.mxu0 %v2640
      %2698 = vmatpush.bf16.msra.mxu0 %v2638
      %2699 = vmatpush.bf16.msra.mxu0 %v2636
      %2700 = vmatpush.bf16.msra.mxu0 %v2634
      %2701 = vmatpush.bf16.msra.mxu0 %v2632
      %2702 = vmatmul.bf16.gmra.mxu0 %v1266
      %v2703 = vpop.f32.mrf.mxu0
      %v2704 = vadd.f32 %v2690, %v2703
      %v2705 = vpop.f32.mrf.mxu0
      %v2706 = vadd.f32 %v2692, %v2705
      %2707 = vdwg.mxu0
      %2708 = vmatpush.bf16.msra.mxu0 %v2631
      %2709 = vmatpush.bf16.msra.mxu0 %v2629
      %2710 = vmatpush.bf16.msra.mxu0 %v2627
      %2711 = vmatpush.bf16.msra.mxu0 %v2625
      %2712 = vmatpush.bf16.msra.mxu0 %v2623
      %2713 = vmatpush.bf16.msra.mxu0 %v2621
      %2714 = vmatpush.bf16.msra.mxu0 %v2619
      %2715 = vmatpush.bf16.msra.mxu0 %v2617
      %2716 = vmatmul.bf16.gmra.mxu0 %v1265
      %v2717 = vpop.f32.mrf.mxu0
      %v2718 = vadd.f32 %v1547, %v2717
      %v2719 = vpop.f32.mrf.mxu0
      %v2720 = vadd.f32 %v1549, %v2719
      %2721 = vdwg.mxu0
      %2722 = vmatpush.bf16.msra.mxu0 %v2647
      %2723 = vmatpush.bf16.msra.mxu0 %v2645
      %2724 = vmatpush.bf16.msra.mxu0 %v2643
      %2725 = vmatpush.bf16.msra.mxu0 %v2641
      %2726 = vmatpush.bf16.msra.mxu0 %v2639
      %2727 = vmatpush.bf16.msra.mxu0 %v2637
      %2728 = vmatpush.bf16.msra.mxu0 %v2635
      %2729 = vmatpush.bf16.msra.mxu0 %v2633
      %2730 = vmatmul.bf16.gmra.mxu0 %v1266
      %v2731 = vpop.f32.mrf.mxu0
      %v2732 = vadd.f32 %v2718, %v2731
      %v2733 = vpop.f32.mrf.mxu0
      %v2734 = vadd.f32 %v2720, %v2733
      %2735 = vdwg.mxu0
      %v2768 = vunpack.c.l.b16 %v1554
      %v2769 = vunpack.c.h.b16 %v1554
      %v2770 = vunpack.c.l.b16 %v1555
      %v2771 = vunpack.c.h.b16 %v1555
      %v2772 = vunpack.c.l.b16 %v1556
      %v2773 = vunpack.c.h.b16 %v1556
      %v2774 = vunpack.c.l.b16 %v1557
      %v2775 = vunpack.c.h.b16 %v1557
      %v2776 = vunpack.c.l.b16 %v1558
      %v2777 = vunpack.c.h.b16 %v1558
      %v2778 = vunpack.c.l.b16 %v1559
      %v2779 = vunpack.c.h.b16 %v1559
      %v2780 = vunpack.c.l.b16 %v1560
      %v2781 = vunpack.c.h.b16 %v1560
      %v2782 = vunpack.c.l.b16 %v1561
      %v2783 = vunpack.c.h.b16 %v1561
      %v2784 = vunpack.c.l.b16 %v1562
      %v2785 = vunpack.c.h.b16 %v1562
      %v2786 = vunpack.c.l.b16 %v1563
      %v2787 = vunpack.c.h.b16 %v1563
      %v2788 = vunpack.c.l.b16 %v1564
      %v2789 = vunpack.c.h.b16 %v1564
      %v2790 = vunpack.c.l.b16 %v1565
      %v2791 = vunpack.c.h.b16 %v1565
      %v2792 = vunpack.c.l.b16 %v1566
      %v2793 = vunpack.c.h.b16 %v1566
      %v2794 = vunpack.c.l.b16 %v1567
      %v2795 = vunpack.c.h.b16 %v1567
      %v2796 = vunpack.c.l.b16 %v1568
      %v2797 = vunpack.c.h.b16 %v1568
      %v2798 = vunpack.c.l.b16 %v1569
      %v2799 = vunpack.c.h.b16 %v1569
      %v2800 = vunpack.c.l.b16 %v1570
      %v2801 = vunpack.c.h.b16 %v1570
      %v2802 = vunpack.c.l.b16 %v1571
      %v2803 = vunpack.c.h.b16 %v1571
      %v2804 = vunpack.c.l.b16 %v1572
      %v2805 = vunpack.c.h.b16 %v1572
      %v2806 = vunpack.c.l.b16 %v1573
      %v2807 = vunpack.c.h.b16 %v1573
      %v2808 = vunpack.c.l.b16 %v1574
      %v2809 = vunpack.c.h.b16 %v1574
      %v2810 = vunpack.c.l.b16 %v1575
      %v2811 = vunpack.c.h.b16 %v1575
      %v2812 = vunpack.c.l.b16 %v1576
      %v2813 = vunpack.c.h.b16 %v1576
      %v2814 = vunpack.c.l.b16 %v1577
      %v2815 = vunpack.c.h.b16 %v1577
      %v2816 = vunpack.c.l.b16 %v1578
      %v2817 = vunpack.c.h.b16 %v1578
      %v2818 = vunpack.c.l.b16 %v1579
      %v2819 = vunpack.c.h.b16 %v1579
      %v2820 = vunpack.c.l.b16 %v1580
      %v2821 = vunpack.c.h.b16 %v1580
      %v2822 = vunpack.c.l.b16 %v1581
      %v2823 = vunpack.c.h.b16 %v1581
      %v2824 = vunpack.c.l.b16 %v1582
      %v2825 = vunpack.c.h.b16 %v1582
      %v2826 = vunpack.c.l.b16 %v1583
      %v2827 = vunpack.c.h.b16 %v1583
      %v2828 = vunpack.c.l.b16 %v1584
      %v2829 = vunpack.c.h.b16 %v1584
      %v2830 = vunpack.c.l.b16 %v1585
      %v2831 = vunpack.c.h.b16 %v1585
      %v2832 = vpack.c.b16 %v2770, %v2768
      %v2833 = vpack.c.b16 %v2771, %v2769
      %v2834 = vpack.c.b16 %v2774, %v2772
      %v2835 = vpack.c.b16 %v2775, %v2773
      %v2836 = vpack.c.b16 %v2778, %v2776
      %v2837 = vpack.c.b16 %v2779, %v2777
      %v2838 = vpack.c.b16 %v2782, %v2780
      %v2839 = vpack.c.b16 %v2783, %v2781
      %v2840 = vpack.c.b16 %v2786, %v2784
      %v2841 = vpack.c.b16 %v2787, %v2785
      %v2842 = vpack.c.b16 %v2790, %v2788
      %v2843 = vpack.c.b16 %v2791, %v2789
      %v2844 = vpack.c.b16 %v2794, %v2792
      %v2845 = vpack.c.b16 %v2795, %v2793
      %v2846 = vpack.c.b16 %v2798, %v2796
      %v2847 = vpack.c.b16 %v2799, %v2797
      %v2848 = vpack.c.b16 %v2802, %v2800
      %v2849 = vpack.c.b16 %v2803, %v2801
      %v2850 = vpack.c.b16 %v2806, %v2804
      %v2851 = vpack.c.b16 %v2807, %v2805
      %v2852 = vpack.c.b16 %v2810, %v2808
      %v2853 = vpack.c.b16 %v2811, %v2809
      %v2854 = vpack.c.b16 %v2814, %v2812
      %v2855 = vpack.c.b16 %v2815, %v2813
      %v2856 = vpack.c.b16 %v2818, %v2816
      %v2857 = vpack.c.b16 %v2819, %v2817
      %v2858 = vpack.c.b16 %v2822, %v2820
      %v2859 = vpack.c.b16 %v2823, %v2821
      %v2860 = vpack.c.b16 %v2826, %v2824
      %v2861 = vpack.c.b16 %v2827, %v2825
      %v2862 = vpack.c.b16 %v2830, %v2828
      %v2863 = vpack.c.b16 %v2831, %v2829
      %2896 = vmatpush.bf16.msra.mxu0 %v2846
      %2897 = vmatpush.bf16.msra.mxu0 %v2844
      %2898 = vmatpush.bf16.msra.mxu0 %v2842
      %2899 = vmatpush.bf16.msra.mxu0 %v2840
      %2900 = vmatpush.bf16.msra.mxu0 %v2838
      %2901 = vmatpush.bf16.msra.mxu0 %v2836
      %2902 = vmatpush.bf16.msra.mxu0 %v2834
      %2903 = vmatpush.bf16.msra.mxu0 %v2832
      %2904 = vmatmul.bf16.gmra.mxu0 %v1551
      %v2905 = vpop.f32.mrf.mxu0
      %v2906 = vadd.f32 %v1805, %v2905
      %v2907 = vpop.f32.mrf.mxu0
      %v2908 = vadd.f32 %v1807, %v2907
      %2909 = vdwg.mxu0
      %2910 = vmatpush.bf16.msra.mxu0 %v2862
      %2911 = vmatpush.bf16.msra.mxu0 %v2860
      %2912 = vmatpush.bf16.msra.mxu0 %v2858
      %2913 = vmatpush.bf16.msra.mxu0 %v2856
      %2914 = vmatpush.bf16.msra.mxu0 %v2854
      %2915 = vmatpush.bf16.msra.mxu0 %v2852
      %2916 = vmatpush.bf16.msra.mxu0 %v2850
      %2917 = vmatpush.bf16.msra.mxu0 %v2848
      %2918 = vmatmul.bf16.gmra.mxu0 %v1552
      %v2919 = vpop.f32.mrf.mxu0
      %v2920 = vadd.f32 %v2906, %v2919
      %v2921 = vpop.f32.mrf.mxu0
      %v2922 = vadd.f32 %v2908, %v2921
      %2923 = vdwg.mxu0
      %2924 = vmatpush.bf16.msra.mxu0 %v2847
      %2925 = vmatpush.bf16.msra.mxu0 %v2845
      %2926 = vmatpush.bf16.msra.mxu0 %v2843
      %2927 = vmatpush.bf16.msra.mxu0 %v2841
      %2928 = vmatpush.bf16.msra.mxu0 %v2839
      %2929 = vmatpush.bf16.msra.mxu0 %v2837
      %2930 = vmatpush.bf16.msra.mxu0 %v2835
      %2931 = vmatpush.bf16.msra.mxu0 %v2833
      %2932 = vmatmul.bf16.gmra.mxu0 %v1551
      %v2933 = vpop.f32.mrf.mxu0
      %v2934 = vadd.f32 %v1833, %v2933
      %v2935 = vpop.f32.mrf.mxu0
      %v2936 = vadd.f32 %v1835, %v2935
      %2937 = vdwg.mxu0
      %2938 = vmatpush.bf16.msra.mxu0 %v2863
      %2939 = vmatpush.bf16.msra.mxu0 %v2861
      %2940 = vmatpush.bf16.msra.mxu0 %v2859
      %2941 = vmatpush.bf16.msra.mxu0 %v2857
      %2942 = vmatpush.bf16.msra.mxu0 %v2855
      %2943 = vmatpush.bf16.msra.mxu0 %v2853
      %2944 = vmatpush.bf16.msra.mxu0 %v2851
      %2945 = vmatpush.bf16.msra.mxu0 %v2849
      %2946 = vmatmul.bf16.gmra.mxu0 %v1552
      %v2947 = vpop.f32.mrf.mxu0
      %v2948 = vadd.f32 %v2934, %v2947
      %v2949 = vpop.f32.mrf.mxu0
      %v2950 = vadd.f32 %v2936, %v2949
      %2951 = vdwg.mxu0
      %v2952 = vadd.f32 %v2272, %v2488
      %v2953 = vadd.f32 %v2300, %v2516
      %v2954 = vadd.f32 %v2274, %v2490
      %v2955 = vadd.f32 %v2302, %v2518
      %v2956 = vadd.f32 %v2704, %v2920
      %v2957 = vadd.f32 %v2732, %v2948
      %v2958 = vadd.f32 %v2706, %v2922
      %v2959 = vadd.f32 %v2734, %v2950
      %v2960 = vadd.f32 %v2952, %v2956
      %v2961 = vadd.f32 %v2953, %v2957
      %v2962 = vadd.f32 %v2954, %v2958
      %v2963 = vadd.f32 %v2955, %v2959
      %v2964 = vadd.f32 %v2960, %v2056
      %v2965 = vadd.f32 %v2961, %v2084
      %v2966 = vadd.f32 %v2962, %v2058
      %v2967 = vadd.f32 %v2963, %v2086
      %v2968 = vld [vmem:[%s2] sm:$0xff]
      %v2969 = vld [vmem:[%s2 + $0x8] sm:$0xff]
      %2971 = vset.pattern.permute.xlu0 0
      %2972 = vperm.xlu0 %2971, %v2968
      %v2973 = vpop.permute.xlu0 %2972
      %2976 = vset.pattern.permute.xlu0 0
      %2977 = vperm.xlu0 %2976, %v2969
      %v2978 = vpop.permute.xlu0 %2977
      %v2980 = vadd.f32 %v2964, %v2973
      %v2981 = vadd.f32 %v2965, %v2973
      %v2982 = vadd.f32 %v2966, %v2978
      %v2983 = vadd.f32 %v2967, %v2978
      %v2984 = vmax.f32 %v2980, 0.0
      %v2985 = vmax.f32 %v2981, 0.0
      %v2986 = vmax.f32 %v2982, 0.0
      %v2987 = vmax.f32 %v2983, 0.0
      %v2988 = vld [vmem:[%s4] sm:$0xf]
      %v2989 = vld [vmem:[%s4 + $0x4] sm:$0xf]
      %v2990 = vld [vmem:[%s4 + $0x8] sm:$0xf]
      %v2991 = vld [vmem:[%s4 + $0xc] sm:$0xf]
      %v2992 = vld [vmem:[%s4 + $0x10] sm:$0xf]
      %v2993 = vld [vmem:[%s4 + $0x14] sm:$0xf]
      %v2994 = vld [vmem:[%s4 + $0x18] sm:$0xf]
      %v2995 = vld [vmem:[%s4 + $0x1c] sm:$0xf]
      %v2996 = vld [vmem:[%s4 + $0x20] sm:$0xf]
      %v2997 = vld [vmem:[%s4 + $0x24] sm:$0xf]
      %v2998 = vld [vmem:[%s4 + $0x28] sm:$0xf]
      %v2999 = vld [vmem:[%s4 + $0x2c] sm:$0xf]
      %v3000 = vld [vmem:[%s4 + $0x30] sm:$0xf]
      %v3001 = vld [vmem:[%s4 + $0x34] sm:$0xf]
      %v3002 = vld [vmem:[%s4 + $0x38] sm:$0xf]
      %v3003 = vld [vmem:[%s4 + $0x3c] sm:$0xf]
      %v3004 = vld [vmem:[%s4 + $0x40] sm:$0xf]
      %v3005 = vld [vmem:[%s4 + $0x44] sm:$0xf]
      %v3006 = vld [vmem:[%s4 + $0x48] sm:$0xf]
      %v3007 = vld [vmem:[%s4 + $0x4c] sm:$0xf]
      %v3008 = vld [vmem:[%s4 + $0x50] sm:$0xf]
      %v3009 = vld [vmem:[%s4 + $0x54] sm:$0xf]
      %v3010 = vld [vmem:[%s4 + $0x58] sm:$0xf]
      %v3011 = vld [vmem:[%s4 + $0x5c] sm:$0xf]
      %v3012 = vld [vmem:[%s4 + $0x60] sm:$0xf]
      %v3013 = vld [vmem:[%s4 + $0x64] sm:$0xf]
      %v3014 = vld [vmem:[%s4 + $0x68] sm:$0xf]
      %v3015 = vld [vmem:[%s4 + $0x6c] sm:$0xf]
      %v3016 = vld [vmem:[%s4 + $0x70] sm:$0xf]
      %v3017 = vld [vmem:[%s4 + $0x74] sm:$0xf]
      %v3018 = vld [vmem:[%s4 + $0x78] sm:$0xf]
      %v3019 = vld [vmem:[%s4 + $0x7c] sm:$0xf]
      %v3020 = vld [vmem:[%s4 + $0x80] sm:$0xf]
      %v3021 = vld [vmem:[%s4 + $0x84] sm:$0xf]
      %v3022 = vld [vmem:[%s4 + $0x88] sm:$0xf]
      %v3023 = vld [vmem:[%s4 + $0x8c] sm:$0xf]
      %v3024 = vpack.c.bf16 %v2986, %v2984
      %v3025 = vpack.c.bf16 %v2987, %v2985
      %v3062 = vunpack.c.l.b16 %v2988
      %v3063 = vunpack.c.l.b16 %v2989
      %v3064 = vunpack.c.l.b16 %v2990
      %v3065 = vunpack.c.l.b16 %v2991
      %v3066 = vunpack.c.l.b16 %v2992
      %v3067 = vunpack.c.l.b16 %v2993
      %v3068 = vunpack.c.l.b16 %v2994
      %v3069 = vunpack.c.l.b16 %v2995
      %v3070 = vunpack.c.l.b16 %v2996
      %v3071 = vunpack.c.l.b16 %v2997
      %v3072 = vunpack.c.l.b16 %v2998
      %v3073 = vunpack.c.l.b16 %v2999
      %v3074 = vunpack.c.l.b16 %v3000
      %v3075 = vunpack.c.l.b16 %v3001
      %v3076 = vunpack.c.l.b16 %v3002
      %v3077 = vunpack.c.l.b16 %v3003
      %v3078 = vunpack.c.l.b16 %v3004
      %v3079 = vunpack.c.l.b16 %v3005
      %v3080 = vunpack.c.l.b16 %v3006
      %v3081 = vunpack.c.l.b16 %v3007
      %v3082 = vunpack.c.l.b16 %v3008
      %v3083 = vunpack.c.l.b16 %v3009
      %v3084 = vunpack.c.l.b16 %v3010
      %v3085 = vunpack.c.l.b16 %v3011
      %v3086 = vunpack.c.l.b16 %v3012
      %v3087 = vunpack.c.l.b16 %v3013
      %v3088 = vunpack.c.l.b16 %v3014
      %v3089 = vunpack.c.l.b16 %v3015
      %v3090 = vunpack.c.l.b16 %v3016
      %v3091 = vunpack.c.l.b16 %v3017
      %v3092 = vunpack.c.l.b16 %v3018
      %v3093 = vunpack.c.l.b16 %v3019
      %v3094 = vunpack.c.l.b16 %v3020
      %v3095 = vunpack.c.l.b16 %v3021
      %v3096 = vunpack.c.l.b16 %v3022
      %v3097 = vunpack.c.l.b16 %v3023
      %v3098 = vpack.c.b16 %v3063, %v3062
      %v3099 = vpack.c.b16 %v3065, %v3064
      %v3100 = vpack.c.b16 %v3067, %v3066
      %v3101 = vpack.c.b16 %v3069, %v3068
      %v3102 = vpack.c.b16 %v3071, %v3070
      %v3103 = vpack.c.b16 %v3073, %v3072
      %v3104 = vpack.c.b16 %v3075, %v3074
      %v3105 = vpack.c.b16 %v3077, %v3076
      %v3106 = vpack.c.b16 %v3079, %v3078
      %v3107 = vpack.c.b16 %v3081, %v3080
      %v3108 = vpack.c.b16 %v3083, %v3082
      %v3109 = vpack.c.b16 %v3085, %v3084
      %v3110 = vpack.c.b16 %v3087, %v3086
      %v3111 = vpack.c.b16 %v3089, %v3088
      %v3112 = vpack.c.b16 %v3091, %v3090
      %v3113 = vpack.c.b16 %v3093, %v3092
      %v3114 = vpack.c.b16 %v3095, %v3094
      %v3115 = vpack.c.b16 %v3097, %v3096
      %vm3116 = vcmask 130048
      %v3118 = vsel %vm3116, %v3098, 0
      %v3121 = vsel %vm3116, %v3099, 0
      %v3124 = vsel %vm3116, %v3100, 0
      %v3127 = vsel %vm3116, %v3101, 0
      %v3130 = vsel %vm3116, %v3102, 0
      %v3133 = vsel %vm3116, %v3103, 0
      %v3136 = vsel %vm3116, %v3104, 0
      %v3139 = vsel %vm3116, %v3105, 0
      %v3142 = vsel %vm3116, %v3106, 0
      %v3145 = vsel %vm3116, %v3107, 0
      %v3148 = vsel %vm3116, %v3108, 0
      %v3151 = vsel %vm3116, %v3109, 0
      %v3154 = vsel %vm3116, %v3110, 0
      %v3157 = vsel %vm3116, %v3111, 0
      %v3160 = vsel %vm3116, %v3112, 0
      %v3163 = vsel %vm3116, %v3113, 0
      %v3166 = vsel %vm3116, %v3114, 0
      %v3169 = vsel %vm3116, %v3115, 0
      %3171 = vmatpush.bf16.msra.mxu0 0
      %3172 = vmatpush.bf16.msra.mxu0 0
      %3173 = vmatpush.bf16.msra.mxu0 0
      %3174 = vmatpush.bf16.msra.mxu0 0
      %3175 = vmatpush.bf16.msra.mxu0 0
      %3176 = vmatpush.bf16.msra.mxu0 0
      %3177 = vmatpush.bf16.msra.mxu0 0
      %3178 = vmatpush.bf16.msra.mxu0 %v3024
      %3179 = vmatmul.bf16.gmra.mxu0 %v3118
      %v3180 = vpop.f32.mrf.mxu0
      %v3181 = vadd.f32 0.0, %v3180
      %v3182 = vpop.f32.mrf.mxu0
      %v3183 = vadd.f32 0.0, %v3182
      %3184 = vmatmul.bf16.gmra.mxu0 %v3121
      %v3185 = vpop.f32.mrf.mxu0
      %v3186 = vadd.f32 0.0, %v3185
      %v3187 = vpop.f32.mrf.mxu0
      %v3188 = vadd.f32 0.0, %v3187
      %3189 = vmatmul.bf16.gmra.mxu0 %v3124
      %v3190 = vpop.f32.mrf.mxu0
      %v3191 = vadd.f32 0.0, %v3190
      %v3192 = vpop.f32.mrf.mxu0
      %v3193 = vadd.f32 0.0, %v3192
      %3194 = vmatmul.bf16.gmra.mxu0 %v3127
      %v3195 = vpop.f32.mrf.mxu0
      %v3196 = vadd.f32 0.0, %v3195
      %v3197 = vpop.f32.mrf.mxu0
      %v3198 = vadd.f32 0.0, %v3197
      %3199 = vmatmul.bf16.gmra.mxu0 %v3130
      %v3200 = vpop.f32.mrf.mxu0
      %v3201 = vadd.f32 0.0, %v3200
      %v3202 = vpop.f32.mrf.mxu0
      %v3203 = vadd.f32 0.0, %v3202
      %3204 = vmatmul.bf16.gmra.mxu0 %v3133
      %v3205 = vpop.f32.mrf.mxu0
      %v3206 = vadd.f32 0.0, %v3205
      %v3207 = vpop.f32.mrf.mxu0
      %v3208 = vadd.f32 0.0, %v3207
      %3209 = vmatmul.bf16.gmra.mxu0 %v3136
      %v3210 = vpop.f32.mrf.mxu0
      %v3211 = vadd.f32 0.0, %v3210
      %v3212 = vpop.f32.mrf.mxu0
      %v3213 = vadd.f32 0.0, %v3212
      %3214 = vmatmul.bf16.gmra.mxu0 %v3139
      %v3215 = vpop.f32.mrf.mxu0
      %v3216 = vadd.f32 0.0, %v3215
      %v3217 = vpop.f32.mrf.mxu0
      %v3218 = vadd.f32 0.0, %v3217
      %3219 = vmatmul.bf16.gmra.mxu0 %v3142
      %v3220 = vpop.f32.mrf.mxu0
      %v3221 = vadd.f32 0.0, %v3220
      %v3222 = vpop.f32.mrf.mxu0
      %v3223 = vadd.f32 0.0, %v3222
      %3224 = vmatmul.bf16.gmra.mxu0 %v3145
      %v3225 = vpop.f32.mrf.mxu0
      %v3226 = vadd.f32 0.0, %v3225
      %v3227 = vpop.f32.mrf.mxu0
      %v3228 = vadd.f32 0.0, %v3227
      %3229 = vmatmul.bf16.gmra.mxu0 %v3148
      %v3230 = vpop.f32.mrf.mxu0
      %v3231 = vadd.f32 0.0, %v3230
      %v3232 = vpop.f32.mrf.mxu0
      %v3233 = vadd.f32 0.0, %v3232
      %3234 = vmatmul.bf16.gmra.mxu0 %v3151
      %v3235 = vpop.f32.mrf.mxu0
      %v3236 = vadd.f32 0.0, %v3235
      %v3237 = vpop.f32.mrf.mxu0
      %v3238 = vadd.f32 0.0, %v3237
      %3239 = vmatmul.bf16.gmra.mxu0 %v3154
      %v3240 = vpop.f32.mrf.mxu0
      %v3241 = vadd.f32 0.0, %v3240
      %v3242 = vpop.f32.mrf.mxu0
      %v3243 = vadd.f32 0.0, %v3242
      %3244 = vmatmul.bf16.gmra.mxu0 %v3157
      %v3245 = vpop.f32.mrf.mxu0
      %v3246 = vadd.f32 0.0, %v3245
      %v3247 = vpop.f32.mrf.mxu0
      %v3248 = vadd.f32 0.0, %v3247
      %3249 = vmatmul.bf16.gmra.mxu0 %v3160
      %v3250 = vpop.f32.mrf.mxu0
      %v3251 = vadd.f32 0.0, %v3250
      %v3252 = vpop.f32.mrf.mxu0
      %v3253 = vadd.f32 0.0, %v3252
      %3254 = vmatmul.bf16.gmra.mxu0 %v3163
      %v3255 = vpop.f32.mrf.mxu0
      %v3256 = vadd.f32 0.0, %v3255
      %v3257 = vpop.f32.mrf.mxu0
      %v3258 = vadd.f32 0.0, %v3257
      %3259 = vmatmul.bf16.gmra.mxu0 %v3166
      %v3260 = vpop.f32.mrf.mxu0
      %v3261 = vadd.f32 0.0, %v3260
      %v3262 = vpop.f32.mrf.mxu0
      %v3263 = vadd.f32 0.0, %v3262
      %3264 = vmatmul.bf16.gmra.mxu0 %v3169
      %v3265 = vpop.f32.mrf.mxu0
      %v3266 = vadd.f32 0.0, %v3265
      %v3267 = vpop.f32.mrf.mxu0
      %v3268 = vadd.f32 0.0, %v3267
      %3269 = vdwg.mxu0
      %3270 = vmatpush.bf16.msra.mxu0 0
      %3271 = vmatpush.bf16.msra.mxu0 0
      %3272 = vmatpush.bf16.msra.mxu0 0
      %3273 = vmatpush.bf16.msra.mxu0 0
      %3274 = vmatpush.bf16.msra.mxu0 0
      %3275 = vmatpush.bf16.msra.mxu0 0
      %3276 = vmatpush.bf16.msra.mxu0 0
      %3277 = vmatpush.bf16.msra.mxu0 %v3025
      %3278 = vmatmul.bf16.gmra.mxu0 %v3118
      %v3279 = vpop.f32.mrf.mxu0
      %v3280 = vadd.f32 0.0, %v3279
      %v3281 = vpop.f32.mrf.mxu0
      %v3282 = vadd.f32 0.0, %v3281
      %3283 = vmatmul.bf16.gmra.mxu0 %v3121
      %v3284 = vpop.f32.mrf.mxu0
      %v3285 = vadd.f32 0.0, %v3284
      %v3286 = vpop.f32.mrf.mxu0
      %v3287 = vadd.f32 0.0, %v3286
      %3288 = vmatmul.bf16.gmra.mxu0 %v3124
      %v3289 = vpop.f32.mrf.mxu0
      %v3290 = vadd.f32 0.0, %v3289
      %v3291 = vpop.f32.mrf.mxu0
      %v3292 = vadd.f32 0.0, %v3291
      %3293 = vmatmul.bf16.gmra.mxu0 %v3127
      %v3294 = vpop.f32.mrf.mxu0
      %v3295 = vadd.f32 0.0, %v3294
      %v3296 = vpop.f32.mrf.mxu0
      %v3297 = vadd.f32 0.0, %v3296
      %3298 = vmatmul.bf16.gmra.mxu0 %v3130
      %v3299 = vpop.f32.mrf.mxu0
      %v3300 = vadd.f32 0.0, %v3299
      %v3301 = vpop.f32.mrf.mxu0
      %v3302 = vadd.f32 0.0, %v3301
      %3303 = vmatmul.bf16.gmra.mxu0 %v3133
      %v3304 = vpop.f32.mrf.mxu0
      %v3305 = vadd.f32 0.0, %v3304
      %v3306 = vpop.f32.mrf.mxu0
      %v3307 = vadd.f32 0.0, %v3306
      %3308 = vmatmul.bf16.gmra.mxu0 %v3136
      %v3309 = vpop.f32.mrf.mxu0
      %v3310 = vadd.f32 0.0, %v3309
      %v3311 = vpop.f32.mrf.mxu0
      %v3312 = vadd.f32 0.0, %v3311
      %3313 = vmatmul.bf16.gmra.mxu0 %v3139
      %v3314 = vpop.f32.mrf.mxu0
      %v3315 = vadd.f32 0.0, %v3314
      %v3316 = vpop.f32.mrf.mxu0
      %v3317 = vadd.f32 0.0, %v3316
      %3318 = vmatmul.bf16.gmra.mxu0 %v3142
      %v3319 = vpop.f32.mrf.mxu0
      %v3320 = vadd.f32 0.0, %v3319
      %v3321 = vpop.f32.mrf.mxu0
      %v3322 = vadd.f32 0.0, %v3321
      %3323 = vmatmul.bf16.gmra.mxu0 %v3145
      %v3324 = vpop.f32.mrf.mxu0
      %v3325 = vadd.f32 0.0, %v3324
      %v3326 = vpop.f32.mrf.mxu0
      %v3327 = vadd.f32 0.0, %v3326
      %3328 = vmatmul.bf16.gmra.mxu0 %v3148
      %v3329 = vpop.f32.mrf.mxu0
      %v3330 = vadd.f32 0.0, %v3329
      %v3331 = vpop.f32.mrf.mxu0
      %v3332 = vadd.f32 0.0, %v3331
      %3333 = vmatmul.bf16.gmra.mxu0 %v3151
      %v3334 = vpop.f32.mrf.mxu0
      %v3335 = vadd.f32 0.0, %v3334
      %v3336 = vpop.f32.mrf.mxu0
      %v3337 = vadd.f32 0.0, %v3336
      %3338 = vmatmul.bf16.gmra.mxu0 %v3154
      %v3339 = vpop.f32.mrf.mxu0
      %v3340 = vadd.f32 0.0, %v3339
      %v3341 = vpop.f32.mrf.mxu0
      %v3342 = vadd.f32 0.0, %v3341
      %3343 = vmatmul.bf16.gmra.mxu0 %v3157
      %v3344 = vpop.f32.mrf.mxu0
      %v3345 = vadd.f32 0.0, %v3344
      %v3346 = vpop.f32.mrf.mxu0
      %v3347 = vadd.f32 0.0, %v3346
      %3348 = vmatmul.bf16.gmra.mxu0 %v3160
      %v3349 = vpop.f32.mrf.mxu0
      %v3350 = vadd.f32 0.0, %v3349
      %v3351 = vpop.f32.mrf.mxu0
      %v3352 = vadd.f32 0.0, %v3351
      %3353 = vmatmul.bf16.gmra.mxu0 %v3163
      %v3354 = vpop.f32.mrf.mxu0
      %v3355 = vadd.f32 0.0, %v3354
      %v3356 = vpop.f32.mrf.mxu0
      %v3357 = vadd.f32 0.0, %v3356
      %3358 = vmatmul.bf16.gmra.mxu0 %v3166
      %v3359 = vpop.f32.mrf.mxu0
      %v3360 = vadd.f32 0.0, %v3359
      %v3361 = vpop.f32.mrf.mxu0
      %v3362 = vadd.f32 0.0, %v3361
      %3363 = vmatmul.bf16.gmra.mxu0 %v3169
      %v3364 = vpop.f32.mrf.mxu0
      %v3365 = vadd.f32 0.0, %v3364
      %v3366 = vpop.f32.mrf.mxu0
      %v3367 = vadd.f32 0.0, %v3366
      %3368 = vdwg.mxu0
      %v3369 = vpack.c.bf16 %v3183, %v3181
      %v3370 = vpack.c.bf16 %v3282, %v3280
      %v3371 = vpack.c.bf16 %v3188, %v3186
      %v3372 = vpack.c.bf16 %v3287, %v3285
      %v3373 = vld [vmem:[%s6] sm:$0xf]
      %v3374 = vld [vmem:[%s6 + $0x4] sm:$0xf]
      %v3375 = vld [vmem:[%s6 + $0x8] sm:$0xf]
      %v3376 = vld [vmem:[%s6 + $0xc] sm:$0xf]
      %v3377 = vld [vmem:[%s6 + $0x10] sm:$0xf]
      %v3378 = vld [vmem:[%s6 + $0x14] sm:$0xf]
      %v3379 = vld [vmem:[%s6 + $0x18] sm:$0xf]
      %v3380 = vld [vmem:[%s6 + $0x1c] sm:$0xf]
      %v3381 = vld [vmem:[%s6 + $0x20] sm:$0xf]
      %v3382 = vld [vmem:[%s6 + $0x24] sm:$0xf]
      %v3383 = vld [vmem:[%s6 + $0x28] sm:$0xf]
      %v3384 = vld [vmem:[%s6 + $0x2c] sm:$0xf]
      %v3385 = vld [vmem:[%s6 + $0x30] sm:$0xf]
      %v3386 = vld [vmem:[%s6 + $0x34] sm:$0xf]
      %v3387 = vld [vmem:[%s6 + $0x38] sm:$0xf]
      %v3388 = vld [vmem:[%s6 + $0x3c] sm:$0xf]
      %v3389 = vld [vmem:[%s6 + $0x40] sm:$0xf]
      %v3390 = vld [vmem:[%s6 + $0x44] sm:$0xf]
      %v3391 = vld [vmem:[%s6 + $0x48] sm:$0xf]
      %v3392 = vld [vmem:[%s6 + $0x4c] sm:$0xf]
      %v3393 = vld [vmem:[%s6 + $0x50] sm:$0xf]
      %v3394 = vld [vmem:[%s6 + $0x54] sm:$0xf]
      %v3395 = vld [vmem:[%s6 + $0x58] sm:$0xf]
      %v3396 = vld [vmem:[%s6 + $0x5c] sm:$0xf]
      %v3397 = vld [vmem:[%s6 + $0x60] sm:$0xf]
      %v3398 = vld [vmem:[%s6 + $0x64] sm:$0xf]
      %v3399 = vld [vmem:[%s6 + $0x68] sm:$0xf]
      %v3400 = vld [vmem:[%s6 + $0x6c] sm:$0xf]
      %v3401 = vld [vmem:[%s6 + $0x70] sm:$0xf]
      %v3402 = vld [vmem:[%s6 + $0x74] sm:$0xf]
      %v3403 = vld [vmem:[%s6 + $0x78] sm:$0xf]
      %v3404 = vld [vmem:[%s6 + $0x7c] sm:$0xf]
      %v3405 = vpack.c.bf16 %v3193, %v3191
      %v3406 = vpack.c.bf16 %v3292, %v3290
      %v3407 = vpack.c.bf16 %v3198, %v3196
      %v3408 = vpack.c.bf16 %v3297, %v3295
      %s3409 = scalar_lea.vmem %s6, 128
      %v3410 = vld [vmem:[%s3409] sm:$0xf]
      %v3411 = vld [vmem:[%s3409 + $0x4] sm:$0xf]
      %v3412 = vld [vmem:[%s3409 + $0x8] sm:$0xf]
      %v3413 = vld [vmem:[%s3409 + $0xc] sm:$0xf]
      %v3414 = vld [vmem:[%s3409 + $0x10] sm:$0xf]
      %v3415 = vld [vmem:[%s3409 + $0x14] sm:$0xf]
      %v3416 = vld [vmem:[%s3409 + $0x18] sm:$0xf]
      %v3417 = vld [vmem:[%s3409 + $0x1c] sm:$0xf]
      %v3418 = vld [vmem:[%s3409 + $0x20] sm:$0xf]
      %v3419 = vld [vmem:[%s3409 + $0x24] sm:$0xf]
      %v3420 = vld [vmem:[%s3409 + $0x28] sm:$0xf]
      %v3421 = vld [vmem:[%s3409 + $0x2c] sm:$0xf]
      %v3422 = vld [vmem:[%s3409 + $0x30] sm:$0xf]
      %v3423 = vld [vmem:[%s3409 + $0x34] sm:$0xf]
      %v3424 = vld [vmem:[%s3409 + $0x38] sm:$0xf]
      %v3425 = vld [vmem:[%s3409 + $0x3c] sm:$0xf]
      %v3426 = vld [vmem:[%s3409 + $0x40] sm:$0xf]
      %v3427 = vld [vmem:[%s3409 + $0x44] sm:$0xf]
      %v3428 = vld [vmem:[%s3409 + $0x48] sm:$0xf]
      %v3429 = vld [vmem:[%s3409 + $0x4c] sm:$0xf]
      %v3430 = vld [vmem:[%s3409 + $0x50] sm:$0xf]
      %v3431 = vld [vmem:[%s3409 + $0x54] sm:$0xf]
      %v3432 = vld [vmem:[%s3409 + $0x58] sm:$0xf]
      %v3433 = vld [vmem:[%s3409 + $0x5c] sm:$0xf]
      %v3434 = vld [vmem:[%s3409 + $0x60] sm:$0xf]
      %v3435 = vld [vmem:[%s3409 + $0x64] sm:$0xf]
      %v3436 = vld [vmem:[%s3409 + $0x68] sm:$0xf]
      %v3437 = vld [vmem:[%s3409 + $0x6c] sm:$0xf]
      %v3438 = vld [vmem:[%s3409 + $0x70] sm:$0xf]
      %v3439 = vld [vmem:[%s3409 + $0x74] sm:$0xf]
      %v3440 = vld [vmem:[%s3409 + $0x78] sm:$0xf]
      %v3441 = vld [vmem:[%s3409 + $0x7c] sm:$0xf]
      %v3474 = vunpack.c.l.b16 %v3410
      %v3475 = vunpack.c.l.b16 %v3411
      %v3476 = vunpack.c.l.b16 %v3412
      %v3477 = vunpack.c.l.b16 %v3413
      %v3478 = vunpack.c.l.b16 %v3414
      %v3479 = vunpack.c.l.b16 %v3415
      %v3480 = vunpack.c.l.b16 %v3416
      %v3481 = vunpack.c.l.b16 %v3417
      %v3482 = vunpack.c.l.b16 %v3418
      %v3483 = vunpack.c.l.b16 %v3419
      %v3484 = vunpack.c.l.b16 %v3420
      %v3485 = vunpack.c.l.b16 %v3421
      %v3486 = vunpack.c.l.b16 %v3422
      %v3487 = vunpack.c.l.b16 %v3423
      %v3488 = vunpack.c.l.b16 %v3424
      %v3489 = vunpack.c.l.b16 %v3425
      %v3490 = vunpack.c.l.b16 %v3426
      %v3491 = vunpack.c.l.b16 %v3427
      %v3492 = vunpack.c.l.b16 %v3428
      %v3493 = vunpack.c.l.b16 %v3429
      %v3494 = vunpack.c.l.b16 %v3430
      %v3495 = vunpack.c.l.b16 %v3431
      %v3496 = vunpack.c.l.b16 %v3432
      %v3497 = vunpack.c.l.b16 %v3433
      %v3498 = vunpack.c.l.b16 %v3434
      %v3499 = vunpack.c.l.b16 %v3435
      %v3500 = vunpack.c.l.b16 %v3436
      %v3501 = vunpack.c.l.b16 %v3437
      %v3502 = vunpack.c.l.b16 %v3438
      %v3503 = vunpack.c.l.b16 %v3439
      %v3504 = vunpack.c.l.b16 %v3440
      %v3505 = vunpack.c.l.b16 %v3441
      %v3506 = vpack.c.b16 %v3475, %v3474
      %v3507 = vpack.c.b16 %v3477, %v3476
      %v3508 = vpack.c.b16 %v3479, %v3478
      %v3509 = vpack.c.b16 %v3481, %v3480
      %v3510 = vpack.c.b16 %v3483, %v3482
      %v3511 = vpack.c.b16 %v3485, %v3484
      %v3512 = vpack.c.b16 %v3487, %v3486
      %v3513 = vpack.c.b16 %v3489, %v3488
      %v3514 = vpack.c.b16 %v3491, %v3490
      %v3515 = vpack.c.b16 %v3493, %v3492
      %v3516 = vpack.c.b16 %v3495, %v3494
      %v3517 = vpack.c.b16 %v3497, %v3496
      %v3518 = vpack.c.b16 %v3499, %v3498
      %v3519 = vpack.c.b16 %v3501, %v3500
      %v3520 = vpack.c.b16 %v3503, %v3502
      %v3521 = vpack.c.b16 %v3505, %v3504
      %3538 = vmatpush.bf16.msra.mxu0 %v3513
      %3539 = vmatpush.bf16.msra.mxu0 %v3512
      %3540 = vmatpush.bf16.msra.mxu0 %v3511
      %3541 = vmatpush.bf16.msra.mxu0 %v3510
      %3542 = vmatpush.bf16.msra.mxu0 %v3509
      %3543 = vmatpush.bf16.msra.mxu0 %v3508
      %3544 = vmatpush.bf16.msra.mxu0 %v3507
      %3545 = vmatpush.bf16.msra.mxu0 %v3506
      %3546 = vmatmul.bf16.gmra.mxu0 %v3405
      %v3547 = vpop.f32.mrf.mxu0
      %v3548 = vadd.f32 0.0, %v3547
      %v3549 = vpop.f32.mrf.mxu0
      %v3550 = vadd.f32 0.0, %v3549
      %3551 = vmatmul.bf16.gmra.mxu0 %v3407
      %v3552 = vpop.f32.mrf.mxu0
      %v3553 = vadd.f32 0.0, %v3552
      %v3554 = vpop.f32.mrf.mxu0
      %v3555 = vadd.f32 0.0, %v3554
      %3556 = vdwg.mxu0
      %3557 = vmatpush.bf16.msra.mxu0 %v3521
      %3558 = vmatpush.bf16.msra.mxu0 %v3520
      %3559 = vmatpush.bf16.msra.mxu0 %v3519
      %3560 = vmatpush.bf16.msra.mxu0 %v3518
      %3561 = vmatpush.bf16.msra.mxu0 %v3517
      %3562 = vmatpush.bf16.msra.mxu0 %v3516
      %3563 = vmatpush.bf16.msra.mxu0 %v3515
      %3564 = vmatpush.bf16.msra.mxu0 %v3514
      %3565 = vmatmul.bf16.gmra.mxu0 %v3406
      %v3566 = vpop.f32.mrf.mxu0
      %v3567 = vadd.f32 %v3548, %v3566
      %v3568 = vpop.f32.mrf.mxu0
      %v3569 = vadd.f32 %v3550, %v3568
      %3570 = vmatmul.bf16.gmra.mxu0 %v3408
      %v3571 = vpop.f32.mrf.mxu0
      %v3572 = vadd.f32 %v3553, %v3571
      %v3573 = vpop.f32.mrf.mxu0
      %v3574 = vadd.f32 %v3555, %v3573
      %3575 = vdwg.mxu0
      %v3576 = vpack.c.bf16 %v3203, %v3201
      %v3577 = vpack.c.bf16 %v3302, %v3300
      %v3578 = vpack.c.bf16 %v3208, %v3206
      %v3579 = vpack.c.bf16 %v3307, %v3305
      %s3580 = scalar_lea.vmem %s6, 256
      %v3581 = vld [vmem:[%s3580] sm:$0xf]
      %v3582 = vld [vmem:[%s3580 + $0x4] sm:$0xf]
      %v3583 = vld [vmem:[%s3580 + $0x8] sm:$0xf]
      %v3584 = vld [vmem:[%s3580 + $0xc] sm:$0xf]
      %v3585 = vld [vmem:[%s3580 + $0x10] sm:$0xf]
      %v3586 = vld [vmem:[%s3580 + $0x14] sm:$0xf]
      %v3587 = vld [vmem:[%s3580 + $0x18] sm:$0xf]
      %v3588 = vld [vmem:[%s3580 + $0x1c] sm:$0xf]
      %v3589 = vld [vmem:[%s3580 + $0x20] sm:$0xf]
      %v3590 = vld [vmem:[%s3580 + $0x24] sm:$0xf]
      %v3591 = vld [vmem:[%s3580 + $0x28] sm:$0xf]
      %v3592 = vld [vmem:[%s3580 + $0x2c] sm:$0xf]
      %v3593 = vld [vmem:[%s3580 + $0x30] sm:$0xf]
      %v3594 = vld [vmem:[%s3580 + $0x34] sm:$0xf]
      %v3595 = vld [vmem:[%s3580 + $0x38] sm:$0xf]
      %v3596 = vld [vmem:[%s3580 + $0x3c] sm:$0xf]
      %v3597 = vld [vmem:[%s3580 + $0x40] sm:$0xf]
      %v3598 = vld [vmem:[%s3580 + $0x44] sm:$0xf]
      %v3599 = vld [vmem:[%s3580 + $0x48] sm:$0xf]
      %v3600 = vld [vmem:[%s3580 + $0x4c] sm:$0xf]
      %v3601 = vld [vmem:[%s3580 + $0x50] sm:$0xf]
      %v3602 = vld [vmem:[%s3580 + $0x54] sm:$0xf]
      %v3603 = vld [vmem:[%s3580 + $0x58] sm:$0xf]
      %v3604 = vld [vmem:[%s3580 + $0x5c] sm:$0xf]
      %v3605 = vld [vmem:[%s3580 + $0x60] sm:$0xf]
      %v3606 = vld [vmem:[%s3580 + $0x64] sm:$0xf]
      %v3607 = vld [vmem:[%s3580 + $0x68] sm:$0xf]
      %v3608 = vld [vmem:[%s3580 + $0x6c] sm:$0xf]
      %v3609 = vld [vmem:[%s3580 + $0x70] sm:$0xf]
      %v3610 = vld [vmem:[%s3580 + $0x74] sm:$0xf]
      %v3611 = vld [vmem:[%s3580 + $0x78] sm:$0xf]
      %v3612 = vld [vmem:[%s3580 + $0x7c] sm:$0xf]
      %v3613 = vpack.c.bf16 %v3213, %v3211
      %v3614 = vpack.c.bf16 %v3312, %v3310
      %v3615 = vpack.c.bf16 %v3218, %v3216
      %v3616 = vpack.c.bf16 %v3317, %v3315
      %s3617 = scalar_lea.vmem %s6, 384
      %v3618 = vld [vmem:[%s3617] sm:$0xf]
      %v3619 = vld [vmem:[%s3617 + $0x4] sm:$0xf]
      %v3620 = vld [vmem:[%s3617 + $0x8] sm:$0xf]
      %v3621 = vld [vmem:[%s3617 + $0xc] sm:$0xf]
      %v3622 = vld [vmem:[%s3617 + $0x10] sm:$0xf]
      %v3623 = vld [vmem:[%s3617 + $0x14] sm:$0xf]
      %v3624 = vld [vmem:[%s3617 + $0x18] sm:$0xf]
      %v3625 = vld [vmem:[%s3617 + $0x1c] sm:$0xf]
      %v3626 = vld [vmem:[%s3617 + $0x20] sm:$0xf]
      %v3627 = vld [vmem:[%s3617 + $0x24] sm:$0xf]
      %v3628 = vld [vmem:[%s3617 + $0x28] sm:$0xf]
      %v3629 = vld [vmem:[%s3617 + $0x2c] sm:$0xf]
      %v3630 = vld [vmem:[%s3617 + $0x30] sm:$0xf]
      %v3631 = vld [vmem:[%s3617 + $0x34] sm:$0xf]
      %v3632 = vld [vmem:[%s3617 + $0x38] sm:$0xf]
      %v3633 = vld [vmem:[%s3617 + $0x3c] sm:$0xf]
      %v3634 = vld [vmem:[%s3617 + $0x40] sm:$0xf]
      %v3635 = vld [vmem:[%s3617 + $0x44] sm:$0xf]
      %v3636 = vld [vmem:[%s3617 + $0x48] sm:$0xf]
      %v3637 = vld [vmem:[%s3617 + $0x4c] sm:$0xf]
      %v3638 = vld [vmem:[%s3617 + $0x50] sm:$0xf]
      %v3639 = vld [vmem:[%s3617 + $0x54] sm:$0xf]
      %v3640 = vld [vmem:[%s3617 + $0x58] sm:$0xf]
      %v3641 = vld [vmem:[%s3617 + $0x5c] sm:$0xf]
      %v3642 = vld [vmem:[%s3617 + $0x60] sm:$0xf]
      %v3643 = vld [vmem:[%s3617 + $0x64] sm:$0xf]
      %v3644 = vld [vmem:[%s3617 + $0x68] sm:$0xf]
      %v3645 = vld [vmem:[%s3617 + $0x6c] sm:$0xf]
      %v3646 = vld [vmem:[%s3617 + $0x70] sm:$0xf]
      %v3647 = vld [vmem:[%s3617 + $0x74] sm:$0xf]
      %v3648 = vld [vmem:[%s3617 + $0x78] sm:$0xf]
      %v3649 = vld [vmem:[%s3617 + $0x7c] sm:$0xf]
      %v3682 = vunpack.c.l.b16 %v3618
      %v3683 = vunpack.c.l.b16 %v3619
      %v3684 = vunpack.c.l.b16 %v3620
      %v3685 = vunpack.c.l.b16 %v3621
      %v3686 = vunpack.c.l.b16 %v3622
      %v3687 = vunpack.c.l.b16 %v3623
      %v3688 = vunpack.c.l.b16 %v3624
      %v3689 = vunpack.c.l.b16 %v3625
      %v3690 = vunpack.c.l.b16 %v3626
      %v3691 = vunpack.c.l.b16 %v3627
      %v3692 = vunpack.c.l.b16 %v3628
      %v3693 = vunpack.c.l.b16 %v3629
      %v3694 = vunpack.c.l.b16 %v3630
      %v3695 = vunpack.c.l.b16 %v3631
      %v3696 = vunpack.c.l.b16 %v3632
      %v3697 = vunpack.c.l.b16 %v3633
      %v3698 = vunpack.c.l.b16 %v3634
      %v3699 = vunpack.c.l.b16 %v3635
      %v3700 = vunpack.c.l.b16 %v3636
      %v3701 = vunpack.c.l.b16 %v3637
      %v3702 = vunpack.c.l.b16 %v3638
      %v3703 = vunpack.c.l.b16 %v3639
      %v3704 = vunpack.c.l.b16 %v3640
      %v3705 = vunpack.c.l.b16 %v3641
      %v3706 = vunpack.c.l.b16 %v3642
      %v3707 = vunpack.c.l.b16 %v3643
      %v3708 = vunpack.c.l.b16 %v3644
      %v3709 = vunpack.c.l.b16 %v3645
      %v3710 = vunpack.c.l.b16 %v3646
      %v3711 = vunpack.c.l.b16 %v3647
      %v3712 = vunpack.c.l.b16 %v3648
      %v3713 = vunpack.c.l.b16 %v3649
      %v3714 = vpack.c.b16 %v3683, %v3682
      %v3715 = vpack.c.b16 %v3685, %v3684
      %v3716 = vpack.c.b16 %v3687, %v3686
      %v3717 = vpack.c.b16 %v3689, %v3688
      %v3718 = vpack.c.b16 %v3691, %v3690
      %v3719 = vpack.c.b16 %v3693, %v3692
      %v3720 = vpack.c.b16 %v3695, %v3694
      %v3721 = vpack.c.b16 %v3697, %v3696
      %v3722 = vpack.c.b16 %v3699, %v3698
      %v3723 = vpack.c.b16 %v3701, %v3700
      %v3724 = vpack.c.b16 %v3703, %v3702
      %v3725 = vpack.c.b16 %v3705, %v3704
      %v3726 = vpack.c.b16 %v3707, %v3706
      %v3727 = vpack.c.b16 %v3709, %v3708
      %v3728 = vpack.c.b16 %v3711, %v3710
      %v3729 = vpack.c.b16 %v3713, %v3712
      %3746 = vmatpush.bf16.msra.mxu0 %v3721
      %3747 = vmatpush.bf16.msra.mxu0 %v3720
      %3748 = vmatpush.bf16.msra.mxu0 %v3719
      %3749 = vmatpush.bf16.msra.mxu0 %v3718
      %3750 = vmatpush.bf16.msra.mxu0 %v3717
      %3751 = vmatpush.bf16.msra.mxu0 %v3716
      %3752 = vmatpush.bf16.msra.mxu0 %v3715
      %3753 = vmatpush.bf16.msra.mxu0 %v3714
      %3754 = vmatmul.bf16.gmra.mxu0 %v3613
      %v3755 = vpop.f32.mrf.mxu0
      %v3756 = vadd.f32 0.0, %v3755
      %v3757 = vpop.f32.mrf.mxu0
      %v3758 = vadd.f32 0.0, %v3757
      %3759 = vmatmul.bf16.gmra.mxu0 %v3615
      %v3760 = vpop.f32.mrf.mxu0
      %v3761 = vadd.f32 0.0, %v3760
      %v3762 = vpop.f32.mrf.mxu0
      %v3763 = vadd.f32 0.0, %v3762
      %3764 = vdwg.mxu0
      %3765 = vmatpush.bf16.msra.mxu0 %v3729
      %3766 = vmatpush.bf16.msra.mxu0 %v3728
      %3767 = vmatpush.bf16.msra.mxu0 %v3727
      %3768 = vmatpush.bf16.msra.mxu0 %v3726
      %3769 = vmatpush.bf16.msra.mxu0 %v3725
      %3770 = vmatpush.bf16.msra.mxu0 %v3724
      %3771 = vmatpush.bf16.msra.mxu0 %v3723
      %3772 = vmatpush.bf16.msra.mxu0 %v3722
      %3773 = vmatmul.bf16.gmra.mxu0 %v3614
      %v3774 = vpop.f32.mrf.mxu0
      %v3775 = vadd.f32 %v3756, %v3774
      %v3776 = vpop.f32.mrf.mxu0
      %v3777 = vadd.f32 %v3758, %v3776
      %3778 = vmatmul.bf16.gmra.mxu0 %v3616
      %v3779 = vpop.f32.mrf.mxu0
      %v3780 = vadd.f32 %v3761, %v3779
      %v3781 = vpop.f32.mrf.mxu0
      %v3782 = vadd.f32 %v3763, %v3781
      %3783 = vdwg.mxu0
      %v3784 = vpack.c.bf16 %v3223, %v3221
      %v3785 = vpack.c.bf16 %v3322, %v3320
      %v3786 = vpack.c.bf16 %v3228, %v3226
      %v3787 = vpack.c.bf16 %v3327, %v3325
      %s3788 = scalar_lea.vmem %s6, 512
      %v3789 = vld [vmem:[%s3788] sm:$0xf]
      %v3790 = vld [vmem:[%s3788 + $0x4] sm:$0xf]
      %v3791 = vld [vmem:[%s3788 + $0x8] sm:$0xf]
      %v3792 = vld [vmem:[%s3788 + $0xc] sm:$0xf]
      %v3793 = vld [vmem:[%s3788 + $0x10] sm:$0xf]
      %v3794 = vld [vmem:[%s3788 + $0x14] sm:$0xf]
      %v3795 = vld [vmem:[%s3788 + $0x18] sm:$0xf]
      %v3796 = vld [vmem:[%s3788 + $0x1c] sm:$0xf]
      %v3797 = vld [vmem:[%s3788 + $0x20] sm:$0xf]
      %v3798 = vld [vmem:[%s3788 + $0x24] sm:$0xf]
      %v3799 = vld [vmem:[%s3788 + $0x28] sm:$0xf]
      %v3800 = vld [vmem:[%s3788 + $0x2c] sm:$0xf]
      %v3801 = vld [vmem:[%s3788 + $0x30] sm:$0xf]
      %v3802 = vld [vmem:[%s3788 + $0x34] sm:$0xf]
      %v3803 = vld [vmem:[%s3788 + $0x38] sm:$0xf]
      %v3804 = vld [vmem:[%s3788 + $0x3c] sm:$0xf]
      %v3805 = vld [vmem:[%s3788 + $0x40] sm:$0xf]
      %v3806 = vld [vmem:[%s3788 + $0x44] sm:$0xf]
      %v3807 = vld [vmem:[%s3788 + $0x48] sm:$0xf]
      %v3808 = vld [vmem:[%s3788 + $0x4c] sm:$0xf]
      %v3809 = vld [vmem:[%s3788 + $0x50] sm:$0xf]
      %v3810 = vld [vmem:[%s3788 + $0x54] sm:$0xf]
      %v3811 = vld [vmem:[%s3788 + $0x58] sm:$0xf]
      %v3812 = vld [vmem:[%s3788 + $0x5c] sm:$0xf]
      %v3813 = vld [vmem:[%s3788 + $0x60] sm:$0xf]
      %v3814 = vld [vmem:[%s3788 + $0x64] sm:$0xf]
      %v3815 = vld [vmem:[%s3788 + $0x68] sm:$0xf]
      %v3816 = vld [vmem:[%s3788 + $0x6c] sm:$0xf]
      %v3817 = vld [vmem:[%s3788 + $0x70] sm:$0xf]
      %v3818 = vld [vmem:[%s3788 + $0x74] sm:$0xf]
      %v3819 = vld [vmem:[%s3788 + $0x78] sm:$0xf]
      %v3820 = vld [vmem:[%s3788 + $0x7c] sm:$0xf]
      %v3821 = vpack.c.bf16 %v3233, %v3231
      %v3822 = vpack.c.bf16 %v3332, %v3330
      %v3823 = vpack.c.bf16 %v3238, %v3236
      %v3824 = vpack.c.bf16 %v3337, %v3335
      %s3825 = scalar_lea.vmem %s6, 640
      %v3826 = vld [vmem:[%s3825] sm:$0xf]
      %v3827 = vld [vmem:[%s3825 + $0x4] sm:$0xf]
      %v3828 = vld [vmem:[%s3825 + $0x8] sm:$0xf]
      %v3829 = vld [vmem:[%s3825 + $0xc] sm:$0xf]
      %v3830 = vld [vmem:[%s3825 + $0x10] sm:$0xf]
      %v3831 = vld [vmem:[%s3825 + $0x14] sm:$0xf]
      %v3832 = vld [vmem:[%s3825 + $0x18] sm:$0xf]
      %v3833 = vld [vmem:[%s3825 + $0x1c] sm:$0xf]
      %v3834 = vld [vmem:[%s3825 + $0x20] sm:$0xf]
      %v3835 = vld [vmem:[%s3825 + $0x24] sm:$0xf]
      %v3836 = vld [vmem:[%s3825 + $0x28] sm:$0xf]
      %v3837 = vld [vmem:[%s3825 + $0x2c] sm:$0xf]
      %v3838 = vld [vmem:[%s3825 + $0x30] sm:$0xf]
      %v3839 = vld [vmem:[%s3825 + $0x34] sm:$0xf]
      %v3840 = vld [vmem:[%s3825 + $0x38] sm:$0xf]
      %v3841 = vld [vmem:[%s3825 + $0x3c] sm:$0xf]
      %v3842 = vld [vmem:[%s3825 + $0x40] sm:$0xf]
      %v3843 = vld [vmem:[%s3825 + $0x44] sm:$0xf]
      %v3844 = vld [vmem:[%s3825 + $0x48] sm:$0xf]
      %v3845 = vld [vmem:[%s3825 + $0x4c] sm:$0xf]
      %v3846 = vld [vmem:[%s3825 + $0x50] sm:$0xf]
      %v3847 = vld [vmem:[%s3825 + $0x54] sm:$0xf]
      %v3848 = vld [vmem:[%s3825 + $0x58] sm:$0xf]
      %v3849 = vld [vmem:[%s3825 + $0x5c] sm:$0xf]
      %v3850 = vld [vmem:[%s3825 + $0x60] sm:$0xf]
      %v3851 = vld [vmem:[%s3825 + $0x64] sm:$0xf]
      %v3852 = vld [vmem:[%s3825 + $0x68] sm:$0xf]
      %v3853 = vld [vmem:[%s3825 + $0x6c] sm:$0xf]
      %v3854 = vld [vmem:[%s3825 + $0x70] sm:$0xf]
      %v3855 = vld [vmem:[%s3825 + $0x74] sm:$0xf]
      %v3856 = vld [vmem:[%s3825 + $0x78] sm:$0xf]
      %v3857 = vld [vmem:[%s3825 + $0x7c] sm:$0xf]
      %v3890 = vunpack.c.l.b16 %v3826
      %v3891 = vunpack.c.l.b16 %v3827
      %v3892 = vunpack.c.l.b16 %v3828
      %v3893 = vunpack.c.l.b16 %v3829
      %v3894 = vunpack.c.l.b16 %v3830
      %v3895 = vunpack.c.l.b16 %v3831
      %v3896 = vunpack.c.l.b16 %v3832
      %v3897 = vunpack.c.l.b16 %v3833
      %v3898 = vunpack.c.l.b16 %v3834
      %v3899 = vunpack.c.l.b16 %v3835
      %v3900 = vunpack.c.l.b16 %v3836
      %v3901 = vunpack.c.l.b16 %v3837
      %v3902 = vunpack.c.l.b16 %v3838
      %v3903 = vunpack.c.l.b16 %v3839
      %v3904 = vunpack.c.l.b16 %v3840
      %v3905 = vunpack.c.l.b16 %v3841
      %v3906 = vunpack.c.l.b16 %v3842
      %v3907 = vunpack.c.l.b16 %v3843
      %v3908 = vunpack.c.l.b16 %v3844
      %v3909 = vunpack.c.l.b16 %v3845
      %v3910 = vunpack.c.l.b16 %v3846
      %v3911 = vunpack.c.l.b16 %v3847
      %v3912 = vunpack.c.l.b16 %v3848
      %v3913 = vunpack.c.l.b16 %v3849
      %v3914 = vunpack.c.l.b16 %v3850
      %v3915 = vunpack.c.l.b16 %v3851
      %v3916 = vunpack.c.l.b16 %v3852
      %v3917 = vunpack.c.l.b16 %v3853
      %v3918 = vunpack.c.l.b16 %v3854
      %v3919 = vunpack.c.l.b16 %v3855
      %v3920 = vunpack.c.l.b16 %v3856
      %v3921 = vunpack.c.l.b16 %v3857
      %v3922 = vpack.c.b16 %v3891, %v3890
      %v3923 = vpack.c.b16 %v3893, %v3892
      %v3924 = vpack.c.b16 %v3895, %v3894
      %v3925 = vpack.c.b16 %v3897, %v3896
      %v3926 = vpack.c.b16 %v3899, %v3898
      %v3927 = vpack.c.b16 %v3901, %v3900
      %v3928 = vpack.c.b16 %v3903, %v3902
      %v3929 = vpack.c.b16 %v3905, %v3904
      %v3930 = vpack.c.b16 %v3907, %v3906
      %v3931 = vpack.c.b16 %v3909, %v3908
      %v3932 = vpack.c.b16 %v3911, %v3910
      %v3933 = vpack.c.b16 %v3913, %v3912
      %v3934 = vpack.c.b16 %v3915, %v3914
      %v3935 = vpack.c.b16 %v3917, %v3916
      %v3936 = vpack.c.b16 %v3919, %v3918
      %v3937 = vpack.c.b16 %v3921, %v3920
      %3954 = vmatpush.bf16.msra.mxu0 %v3929
      %3955 = vmatpush.bf16.msra.mxu0 %v3928
      %3956 = vmatpush.bf16.msra.mxu0 %v3927
      %3957 = vmatpush.bf16.msra.mxu0 %v3926
      %3958 = vmatpush.bf16.msra.mxu0 %v3925
      %3959 = vmatpush.bf16.msra.mxu0 %v3924
      %3960 = vmatpush.bf16.msra.mxu0 %v3923
      %3961 = vmatpush.bf16.msra.mxu0 %v3922
      %3962 = vmatmul.bf16.gmra.mxu0 %v3821
      %v3963 = vpop.f32.mrf.mxu0
      %v3964 = vadd.f32 0.0, %v3963
      %v3965 = vpop.f32.mrf.mxu0
      %v3966 = vadd.f32 0.0, %v3965
      %3967 = vmatmul.bf16.gmra.mxu0 %v3823
      %v3968 = vpop.f32.mrf.mxu0
      %v3969 = vadd.f32 0.0, %v3968
      %v3970 = vpop.f32.mrf.mxu0
      %v3971 = vadd.f32 0.0, %v3970
      %3972 = vdwg.mxu0
      %3973 = vmatpush.bf16.msra.mxu0 %v3937
      %3974 = vmatpush.bf16.msra.mxu0 %v3936
      %3975 = vmatpush.bf16.msra.mxu0 %v3935
      %3976 = vmatpush.bf16.msra.mxu0 %v3934
      %3977 = vmatpush.bf16.msra.mxu0 %v3933
      %3978 = vmatpush.bf16.msra.mxu0 %v3932
      %3979 = vmatpush.bf16.msra.mxu0 %v3931
      %3980 = vmatpush.bf16.msra.mxu0 %v3930
      %3981 = vmatmul.bf16.gmra.mxu0 %v3822
      %v3982 = vpop.f32.mrf.mxu0
      %v3983 = vadd.f32 %v3964, %v3982
      %v3984 = vpop.f32.mrf.mxu0
      %v3985 = vadd.f32 %v3966, %v3984
      %3986 = vmatmul.bf16.gmra.mxu0 %v3824
      %v3987 = vpop.f32.mrf.mxu0
      %v3988 = vadd.f32 %v3969, %v3987
      %v3989 = vpop.f32.mrf.mxu0
      %v3990 = vadd.f32 %v3971, %v3989
      %3991 = vdwg.mxu0
      %v3992 = vpack.c.bf16 %v3243, %v3241
      %v3993 = vpack.c.bf16 %v3342, %v3340
      %v3994 = vpack.c.bf16 %v3248, %v3246
      %v3995 = vpack.c.bf16 %v3347, %v3345
      %s3996 = scalar_lea.vmem %s6, 768
      %v3997 = vld [vmem:[%s3996] sm:$0xf]
      %v3998 = vld [vmem:[%s3996 + $0x4] sm:$0xf]
      %v3999 = vld [vmem:[%s3996 + $0x8] sm:$0xf]
      %v4000 = vld [vmem:[%s3996 + $0xc] sm:$0xf]
      %v4001 = vld [vmem:[%s3996 + $0x10] sm:$0xf]
      %v4002 = vld [vmem:[%s3996 + $0x14] sm:$0xf]
      %v4003 = vld [vmem:[%s3996 + $0x18] sm:$0xf]
      %v4004 = vld [vmem:[%s3996 + $0x1c] sm:$0xf]
      %v4005 = vld [vmem:[%s3996 + $0x20] sm:$0xf]
      %v4006 = vld [vmem:[%s3996 + $0x24] sm:$0xf]
      %v4007 = vld [vmem:[%s3996 + $0x28] sm:$0xf]
      %v4008 = vld [vmem:[%s3996 + $0x2c] sm:$0xf]
      %v4009 = vld [vmem:[%s3996 + $0x30] sm:$0xf]
      %v4010 = vld [vmem:[%s3996 + $0x34] sm:$0xf]
      %v4011 = vld [vmem:[%s3996 + $0x38] sm:$0xf]
      %v4012 = vld [vmem:[%s3996 + $0x3c] sm:$0xf]
      %v4013 = vld [vmem:[%s3996 + $0x40] sm:$0xf]
      %v4014 = vld [vmem:[%s3996 + $0x44] sm:$0xf]
      %v4015 = vld [vmem:[%s3996 + $0x48] sm:$0xf]
      %v4016 = vld [vmem:[%s3996 + $0x4c] sm:$0xf]
      %v4017 = vld [vmem:[%s3996 + $0x50] sm:$0xf]
      %v4018 = vld [vmem:[%s3996 + $0x54] sm:$0xf]
      %v4019 = vld [vmem:[%s3996 + $0x58] sm:$0xf]
      %v4020 = vld [vmem:[%s3996 + $0x5c] sm:$0xf]
      %v4021 = vld [vmem:[%s3996 + $0x60] sm:$0xf]
      %v4022 = vld [vmem:[%s3996 + $0x64] sm:$0xf]
      %v4023 = vld [vmem:[%s3996 + $0x68] sm:$0xf]
      %v4024 = vld [vmem:[%s3996 + $0x6c] sm:$0xf]
      %v4025 = vld [vmem:[%s3996 + $0x70] sm:$0xf]
      %v4026 = vld [vmem:[%s3996 + $0x74] sm:$0xf]
      %v4027 = vld [vmem:[%s3996 + $0x78] sm:$0xf]
      %v4028 = vld [vmem:[%s3996 + $0x7c] sm:$0xf]
      %v4029 = vpack.c.bf16 %v3253, %v3251
      %v4030 = vpack.c.bf16 %v3352, %v3350
      %v4031 = vpack.c.bf16 %v3258, %v3256
      %v4032 = vpack.c.bf16 %v3357, %v3355
      %s4033 = scalar_lea.vmem %s6, 896
      %v4034 = vld [vmem:[%s4033] sm:$0xf]
      %v4035 = vld [vmem:[%s4033 + $0x4] sm:$0xf]
      %v4036 = vld [vmem:[%s4033 + $0x8] sm:$0xf]
      %v4037 = vld [vmem:[%s4033 + $0xc] sm:$0xf]
      %v4038 = vld [vmem:[%s4033 + $0x10] sm:$0xf]
      %v4039 = vld [vmem:[%s4033 + $0x14] sm:$0xf]
      %v4040 = vld [vmem:[%s4033 + $0x18] sm:$0xf]
      %v4041 = vld [vmem:[%s4033 + $0x1c] sm:$0xf]
      %v4042 = vld [vmem:[%s4033 + $0x20] sm:$0xf]
      %v4043 = vld [vmem:[%s4033 + $0x24] sm:$0xf]
      %v4044 = vld [vmem:[%s4033 + $0x28] sm:$0xf]
      %v4045 = vld [vmem:[%s4033 + $0x2c] sm:$0xf]
      %v4046 = vld [vmem:[%s4033 + $0x30] sm:$0xf]
      %v4047 = vld [vmem:[%s4033 + $0x34] sm:$0xf]
      %v4048 = vld [vmem:[%s4033 + $0x38] sm:$0xf]
      %v4049 = vld [vmem:[%s4033 + $0x3c] sm:$0xf]
      %v4050 = vld [vmem:[%s4033 + $0x40] sm:$0xf]
      %v4051 = vld [vmem:[%s4033 + $0x44] sm:$0xf]
      %v4052 = vld [vmem:[%s4033 + $0x48] sm:$0xf]
      %v4053 = vld [vmem:[%s4033 + $0x4c] sm:$0xf]
      %v4054 = vld [vmem:[%s4033 + $0x50] sm:$0xf]
      %v4055 = vld [vmem:[%s4033 + $0x54] sm:$0xf]
      %v4056 = vld [vmem:[%s4033 + $0x58] sm:$0xf]
      %v4057 = vld [vmem:[%s4033 + $0x5c] sm:$0xf]
      %v4058 = vld [vmem:[%s4033 + $0x60] sm:$0xf]
      %v4059 = vld [vmem:[%s4033 + $0x64] sm:$0xf]
      %v4060 = vld [vmem:[%s4033 + $0x68] sm:$0xf]
      %v4061 = vld [vmem:[%s4033 + $0x6c] sm:$0xf]
      %v4062 = vld [vmem:[%s4033 + $0x70] sm:$0xf]
      %v4063 = vld [vmem:[%s4033 + $0x74] sm:$0xf]
      %v4064 = vld [vmem:[%s4033 + $0x78] sm:$0xf]
      %v4065 = vld [vmem:[%s4033 + $0x7c] sm:$0xf]
      %v4098 = vunpack.c.l.b16 %v4034
      %v4099 = vunpack.c.l.b16 %v4035
      %v4100 = vunpack.c.l.b16 %v4036
      %v4101 = vunpack.c.l.b16 %v4037
      %v4102 = vunpack.c.l.b16 %v4038
      %v4103 = vunpack.c.l.b16 %v4039
      %v4104 = vunpack.c.l.b16 %v4040
      %v4105 = vunpack.c.l.b16 %v4041
      %v4106 = vunpack.c.l.b16 %v4042
      %v4107 = vunpack.c.l.b16 %v4043
      %v4108 = vunpack.c.l.b16 %v4044
      %v4109 = vunpack.c.l.b16 %v4045
      %v4110 = vunpack.c.l.b16 %v4046
      %v4111 = vunpack.c.l.b16 %v4047
      %v4112 = vunpack.c.l.b16 %v4048
      %v4113 = vunpack.c.l.b16 %v4049
      %v4114 = vunpack.c.l.b16 %v4050
      %v4115 = vunpack.c.l.b16 %v4051
      %v4116 = vunpack.c.l.b16 %v4052
      %v4117 = vunpack.c.l.b16 %v4053
      %v4118 = vunpack.c.l.b16 %v4054
      %v4119 = vunpack.c.l.b16 %v4055
      %v4120 = vunpack.c.l.b16 %v4056
      %v4121 = vunpack.c.l.b16 %v4057
      %v4122 = vunpack.c.l.b16 %v4058
      %v4123 = vunpack.c.l.b16 %v4059
      %v4124 = vunpack.c.l.b16 %v4060
      %v4125 = vunpack.c.l.b16 %v4061
      %v4126 = vunpack.c.l.b16 %v4062
      %v4127 = vunpack.c.l.b16 %v4063
      %v4128 = vunpack.c.l.b16 %v4064
      %v4129 = vunpack.c.l.b16 %v4065
      %v4130 = vpack.c.b16 %v4099, %v4098
      %v4131 = vpack.c.b16 %v4101, %v4100
      %v4132 = vpack.c.b16 %v4103, %v4102
      %v4133 = vpack.c.b16 %v4105, %v4104
      %v4134 = vpack.c.b16 %v4107, %v4106
      %v4135 = vpack.c.b16 %v4109, %v4108
      %v4136 = vpack.c.b16 %v4111, %v4110
      %v4137 = vpack.c.b16 %v4113, %v4112
      %v4138 = vpack.c.b16 %v4115, %v4114
      %v4139 = vpack.c.b16 %v4117, %v4116
      %v4140 = vpack.c.b16 %v4119, %v4118
      %v4141 = vpack.c.b16 %v4121, %v4120
      %v4142 = vpack.c.b16 %v4123, %v4122
      %v4143 = vpack.c.b16 %v4125, %v4124
      %v4144 = vpack.c.b16 %v4127, %v4126
      %v4145 = vpack.c.b16 %v4129, %v4128
      %4162 = vmatpush.bf16.msra.mxu0 %v4137
      %4163 = vmatpush.bf16.msra.mxu0 %v4136
      %4164 = vmatpush.bf16.msra.mxu0 %v4135
      %4165 = vmatpush.bf16.msra.mxu0 %v4134
      %4166 = vmatpush.bf16.msra.mxu0 %v4133
      %4167 = vmatpush.bf16.msra.mxu0 %v4132
      %4168 = vmatpush.bf16.msra.mxu0 %v4131
      %4169 = vmatpush.bf16.msra.mxu0 %v4130
      %4170 = vmatmul.bf16.gmra.mxu0 %v4029
      %v4171 = vpop.f32.mrf.mxu0
      %v4172 = vadd.f32 0.0, %v4171
      %v4173 = vpop.f32.mrf.mxu0
      %v4174 = vadd.f32 0.0, %v4173
      %4175 = vmatmul.bf16.gmra.mxu0 %v4031
      %v4176 = vpop.f32.mrf.mxu0
      %v4177 = vadd.f32 0.0, %v4176
      %v4178 = vpop.f32.mrf.mxu0
      %v4179 = vadd.f32 0.0, %v4178
      %4180 = vdwg.mxu0
      %4181 = vmatpush.bf16.msra.mxu0 %v4145
      %4182 = vmatpush.bf16.msra.mxu0 %v4144
      %4183 = vmatpush.bf16.msra.mxu0 %v4143
      %4184 = vmatpush.bf16.msra.mxu0 %v4142
      %4185 = vmatpush.bf16.msra.mxu0 %v4141
      %4186 = vmatpush.bf16.msra.mxu0 %v4140
      %4187 = vmatpush.bf16.msra.mxu0 %v4139
      %4188 = vmatpush.bf16.msra.mxu0 %v4138
      %4189 = vmatmul.bf16.gmra.mxu0 %v4030
      %v4190 = vpop.f32.mrf.mxu0
      %v4191 = vadd.f32 %v4172, %v4190
      %v4192 = vpop.f32.mrf.mxu0
      %v4193 = vadd.f32 %v4174, %v4192
      %4194 = vmatmul.bf16.gmra.mxu0 %v4032
      %v4195 = vpop.f32.mrf.mxu0
      %v4196 = vadd.f32 %v4177, %v4195
      %v4197 = vpop.f32.mrf.mxu0
      %v4198 = vadd.f32 %v4179, %v4197
      %4199 = vdwg.mxu0
      %v4200 = vpack.c.bf16 %v3263, %v3261
      %v4201 = vpack.c.bf16 %v3362, %v3360
      %v4202 = vpack.c.bf16 %v3268, %v3266
      %v4203 = vpack.c.bf16 %v3367, %v3365
      %s4204 = scalar_lea.vmem %s6, 1024
      %v4205 = vld [vmem:[%s4204] sm:$0xf]
      %v4206 = vld [vmem:[%s4204 + $0x4] sm:$0xf]
      %v4207 = vld [vmem:[%s4204 + $0x8] sm:$0xf]
      %v4208 = vld [vmem:[%s4204 + $0xc] sm:$0xf]
      %v4209 = vld [vmem:[%s4204 + $0x10] sm:$0xf]
      %v4210 = vld [vmem:[%s4204 + $0x14] sm:$0xf]
      %v4211 = vld [vmem:[%s4204 + $0x18] sm:$0xf]
      %v4212 = vld [vmem:[%s4204 + $0x1c] sm:$0xf]
      %v4213 = vld [vmem:[%s4204 + $0x20] sm:$0xf]
      %v4214 = vld [vmem:[%s4204 + $0x24] sm:$0xf]
      %v4215 = vld [vmem:[%s4204 + $0x28] sm:$0xf]
      %v4216 = vld [vmem:[%s4204 + $0x2c] sm:$0xf]
      %v4217 = vld [vmem:[%s4204 + $0x30] sm:$0xf]
      %v4218 = vld [vmem:[%s4204 + $0x34] sm:$0xf]
      %v4219 = vld [vmem:[%s4204 + $0x38] sm:$0xf]
      %v4220 = vld [vmem:[%s4204 + $0x3c] sm:$0xf]
      %v4221 = vld [vmem:[%s4204 + $0x40] sm:$0xf]
      %v4222 = vld [vmem:[%s4204 + $0x44] sm:$0xf]
      %v4223 = vld [vmem:[%s4204 + $0x48] sm:$0xf]
      %v4224 = vld [vmem:[%s4204 + $0x4c] sm:$0xf]
      %v4225 = vld [vmem:[%s4204 + $0x50] sm:$0xf]
      %v4226 = vld [vmem:[%s4204 + $0x54] sm:$0xf]
      %v4227 = vld [vmem:[%s4204 + $0x58] sm:$0xf]
      %v4228 = vld [vmem:[%s4204 + $0x5c] sm:$0xf]
      %v4229 = vld [vmem:[%s4204 + $0x60] sm:$0xf]
      %v4230 = vld [vmem:[%s4204 + $0x64] sm:$0xf]
      %v4231 = vld [vmem:[%s4204 + $0x68] sm:$0xf]
      %v4232 = vld [vmem:[%s4204 + $0x6c] sm:$0xf]
      %v4233 = vld [vmem:[%s4204 + $0x70] sm:$0xf]
      %v4234 = vld [vmem:[%s4204 + $0x74] sm:$0xf]
      %v4235 = vld [vmem:[%s4204 + $0x78] sm:$0xf]
      %v4236 = vld [vmem:[%s4204 + $0x7c] sm:$0xf]
      %v4269 = vunpack.c.l.b16 %v4205
      %v4270 = vunpack.c.l.b16 %v4206
      %v4271 = vunpack.c.l.b16 %v4207
      %v4272 = vunpack.c.l.b16 %v4208
      %v4273 = vunpack.c.l.b16 %v4209
      %v4274 = vunpack.c.l.b16 %v4210
      %v4275 = vunpack.c.l.b16 %v4211
      %v4276 = vunpack.c.l.b16 %v4212
      %v4277 = vunpack.c.l.b16 %v4213
      %v4278 = vunpack.c.l.b16 %v4214
      %v4279 = vunpack.c.l.b16 %v4215
      %v4280 = vunpack.c.l.b16 %v4216
      %v4281 = vunpack.c.l.b16 %v4217
      %v4282 = vunpack.c.l.b16 %v4218
      %v4283 = vunpack.c.l.b16 %v4219
      %v4284 = vunpack.c.l.b16 %v4220
      %v4285 = vunpack.c.l.b16 %v4221
      %v4286 = vunpack.c.l.b16 %v4222
      %v4287 = vunpack.c.l.b16 %v4223
      %v4288 = vunpack.c.l.b16 %v4224
      %v4289 = vunpack.c.l.b16 %v4225
      %v4290 = vunpack.c.l.b16 %v4226
      %v4291 = vunpack.c.l.b16 %v4227
      %v4292 = vunpack.c.l.b16 %v4228
      %v4293 = vunpack.c.l.b16 %v4229
      %v4294 = vunpack.c.l.b16 %v4230
      %v4295 = vunpack.c.l.b16 %v4231
      %v4296 = vunpack.c.l.b16 %v4232
      %v4297 = vunpack.c.l.b16 %v4233
      %v4298 = vunpack.c.l.b16 %v4234
      %v4299 = vunpack.c.l.b16 %v4235
      %v4300 = vunpack.c.l.b16 %v4236
      %v4301 = vpack.c.b16 %v4270, %v4269
      %v4302 = vpack.c.b16 %v4272, %v4271
      %v4303 = vpack.c.b16 %v4274, %v4273
      %v4304 = vpack.c.b16 %v4276, %v4275
      %v4305 = vpack.c.b16 %v4278, %v4277
      %v4306 = vpack.c.b16 %v4280, %v4279
      %v4307 = vpack.c.b16 %v4282, %v4281
      %v4308 = vpack.c.b16 %v4284, %v4283
      %v4309 = vpack.c.b16 %v4286, %v4285
      %v4310 = vpack.c.b16 %v4288, %v4287
      %v4311 = vpack.c.b16 %v4290, %v4289
      %v4312 = vpack.c.b16 %v4292, %v4291
      %v4313 = vpack.c.b16 %v4294, %v4293
      %v4314 = vpack.c.b16 %v4296, %v4295
      %v4315 = vpack.c.b16 %v4298, %v4297
      %v4316 = vpack.c.b16 %v4300, %v4299
      %4333 = vmatpush.bf16.msra.mxu0 %v4308
      %4334 = vmatpush.bf16.msra.mxu0 %v4307
      %4335 = vmatpush.bf16.msra.mxu0 %v4306
      %4336 = vmatpush.bf16.msra.mxu0 %v4305
      %4337 = vmatpush.bf16.msra.mxu0 %v4304
      %4338 = vmatpush.bf16.msra.mxu0 %v4303
      %4339 = vmatpush.bf16.msra.mxu0 %v4302
      %4340 = vmatpush.bf16.msra.mxu0 %v4301
      %4341 = vmatmul.bf16.gmra.mxu0 %v4200
      %v4342 = vpop.f32.mrf.mxu0
      %v4343 = vadd.f32 0.0, %v4342
      %v4344 = vpop.f32.mrf.mxu0
      %v4345 = vadd.f32 0.0, %v4344
      %4346 = vmatmul.bf16.gmra.mxu0 %v4202
      %v4347 = vpop.f32.mrf.mxu0
      %v4348 = vadd.f32 0.0, %v4347
      %v4349 = vpop.f32.mrf.mxu0
      %v4350 = vadd.f32 0.0, %v4349
      %4351 = vdwg.mxu0
      %4352 = vmatpush.bf16.msra.mxu0 %v4316
      %4353 = vmatpush.bf16.msra.mxu0 %v4315
      %4354 = vmatpush.bf16.msra.mxu0 %v4314
      %4355 = vmatpush.bf16.msra.mxu0 %v4313
      %4356 = vmatpush.bf16.msra.mxu0 %v4312
      %4357 = vmatpush.bf16.msra.mxu0 %v4311
      %4358 = vmatpush.bf16.msra.mxu0 %v4310
      %4359 = vmatpush.bf16.msra.mxu0 %v4309
      %4360 = vmatmul.bf16.gmra.mxu0 %v4201
      %v4361 = vpop.f32.mrf.mxu0
      %v4362 = vadd.f32 %v4343, %v4361
      %v4363 = vpop.f32.mrf.mxu0
      %v4364 = vadd.f32 %v4345, %v4363
      %4365 = vmatmul.bf16.gmra.mxu0 %v4203
      %v4366 = vpop.f32.mrf.mxu0
      %v4367 = vadd.f32 %v4348, %v4366
      %v4368 = vpop.f32.mrf.mxu0
      %v4369 = vadd.f32 %v4350, %v4368
      %4370 = vdwg.mxu0
      %v4403 = vunpack.c.l.b16 %v3373
      %v4404 = vunpack.c.l.b16 %v3374
      %v4405 = vunpack.c.l.b16 %v3375
      %v4406 = vunpack.c.l.b16 %v3376
      %v4407 = vunpack.c.l.b16 %v3377
      %v4408 = vunpack.c.l.b16 %v3378
      %v4409 = vunpack.c.l.b16 %v3379
      %v4410 = vunpack.c.l.b16 %v3380
      %v4411 = vunpack.c.l.b16 %v3381
      %v4412 = vunpack.c.l.b16 %v3382
      %v4413 = vunpack.c.l.b16 %v3383
      %v4414 = vunpack.c.l.b16 %v3384
      %v4415 = vunpack.c.l.b16 %v3385
      %v4416 = vunpack.c.l.b16 %v3386
      %v4417 = vunpack.c.l.b16 %v3387
      %v4418 = vunpack.c.l.b16 %v3388
      %v4419 = vunpack.c.l.b16 %v3389
      %v4420 = vunpack.c.l.b16 %v3390
      %v4421 = vunpack.c.l.b16 %v3391
      %v4422 = vunpack.c.l.b16 %v3392
      %v4423 = vunpack.c.l.b16 %v3393
      %v4424 = vunpack.c.l.b16 %v3394
      %v4425 = vunpack.c.l.b16 %v3395
      %v4426 = vunpack.c.l.b16 %v3396
      %v4427 = vunpack.c.l.b16 %v3397
      %v4428 = vunpack.c.l.b16 %v3398
      %v4429 = vunpack.c.l.b16 %v3399
      %v4430 = vunpack.c.l.b16 %v3400
      %v4431 = vunpack.c.l.b16 %v3401
      %v4432 = vunpack.c.l.b16 %v3402
      %v4433 = vunpack.c.l.b16 %v3403
      %v4434 = vunpack.c.l.b16 %v3404
      %v4435 = vpack.c.b16 %v4404, %v4403
      %v4436 = vpack.c.b16 %v4406, %v4405
      %v4437 = vpack.c.b16 %v4408, %v4407
      %v4438 = vpack.c.b16 %v4410, %v4409
      %v4439 = vpack.c.b16 %v4412, %v4411
      %v4440 = vpack.c.b16 %v4414, %v4413
      %v4441 = vpack.c.b16 %v4416, %v4415
      %v4442 = vpack.c.b16 %v4418, %v4417
      %v4443 = vpack.c.b16 %v4420, %v4419
      %v4444 = vpack.c.b16 %v4422, %v4421
      %v4445 = vpack.c.b16 %v4424, %v4423
      %v4446 = vpack.c.b16 %v4426, %v4425
      %v4447 = vpack.c.b16 %v4428, %v4427
      %v4448 = vpack.c.b16 %v4430, %v4429
      %v4449 = vpack.c.b16 %v4432, %v4431
      %v4450 = vpack.c.b16 %v4434, %v4433
      %4467 = vmatpush.bf16.msra.mxu0 %v4442
      %4468 = vmatpush.bf16.msra.mxu0 %v4441
      %4469 = vmatpush.bf16.msra.mxu0 %v4440
      %4470 = vmatpush.bf16.msra.mxu0 %v4439
      %4471 = vmatpush.bf16.msra.mxu0 %v4438
      %4472 = vmatpush.bf16.msra.mxu0 %v4437
      %4473 = vmatpush.bf16.msra.mxu0 %v4436
      %4474 = vmatpush.bf16.msra.mxu0 %v4435
      %4475 = vmatmul.bf16.gmra.mxu0 %v3369
      %v4476 = vpop.f32.mrf.mxu0
      %v4477 = vadd.f32 %v3567, %v4476
      %v4478 = vpop.f32.mrf.mxu0
      %v4479 = vadd.f32 %v3569, %v4478
      %4480 = vmatmul.bf16.gmra.mxu0 %v3371
      %v4481 = vpop.f32.mrf.mxu0
      %v4482 = vadd.f32 %v3572, %v4481
      %v4483 = vpop.f32.mrf.mxu0
      %v4484 = vadd.f32 %v3574, %v4483
      %4485 = vdwg.mxu0
      %4486 = vmatpush.bf16.msra.mxu0 %v4450
      %4487 = vmatpush.bf16.msra.mxu0 %v4449
      %4488 = vmatpush.bf16.msra.mxu0 %v4448
      %4489 = vmatpush.bf16.msra.mxu0 %v4447
      %4490 = vmatpush.bf16.msra.mxu0 %v4446
      %4491 = vmatpush.bf16.msra.mxu0 %v4445
      %4492 = vmatpush.bf16.msra.mxu0 %v4444
      %4493 = vmatpush.bf16.msra.mxu0 %v4443
      %4494 = vmatmul.bf16.gmra.mxu0 %v3370
      %v4495 = vpop.f32.mrf.mxu0
      %v4496 = vadd.f32 %v4477, %v4495
      %v4497 = vpop.f32.mrf.mxu0
      %v4498 = vadd.f32 %v4479, %v4497
      %4499 = vmatmul.bf16.gmra.mxu0 %v3372
      %v4500 = vpop.f32.mrf.mxu0
      %v4501 = vadd.f32 %v4482, %v4500
      %v4502 = vpop.f32.mrf.mxu0
      %v4503 = vadd.f32 %v4484, %v4502
      %4504 = vdwg.mxu0
      %v4537 = vunpack.c.l.b16 %v3581
      %v4538 = vunpack.c.l.b16 %v3582
      %v4539 = vunpack.c.l.b16 %v3583
      %v4540 = vunpack.c.l.b16 %v3584
      %v4541 = vunpack.c.l.b16 %v3585
      %v4542 = vunpack.c.l.b16 %v3586
      %v4543 = vunpack.c.l.b16 %v3587
      %v4544 = vunpack.c.l.b16 %v3588
      %v4545 = vunpack.c.l.b16 %v3589
      %v4546 = vunpack.c.l.b16 %v3590
      %v4547 = vunpack.c.l.b16 %v3591
      %v4548 = vunpack.c.l.b16 %v3592
      %v4549 = vunpack.c.l.b16 %v3593
      %v4550 = vunpack.c.l.b16 %v3594
      %v4551 = vunpack.c.l.b16 %v3595
      %v4552 = vunpack.c.l.b16 %v3596
      %v4553 = vunpack.c.l.b16 %v3597
      %v4554 = vunpack.c.l.b16 %v3598
      %v4555 = vunpack.c.l.b16 %v3599
      %v4556 = vunpack.c.l.b16 %v3600
      %v4557 = vunpack.c.l.b16 %v3601
      %v4558 = vunpack.c.l.b16 %v3602
      %v4559 = vunpack.c.l.b16 %v3603
      %v4560 = vunpack.c.l.b16 %v3604
      %v4561 = vunpack.c.l.b16 %v3605
      %v4562 = vunpack.c.l.b16 %v3606
      %v4563 = vunpack.c.l.b16 %v3607
      %v4564 = vunpack.c.l.b16 %v3608
      %v4565 = vunpack.c.l.b16 %v3609
      %v4566 = vunpack.c.l.b16 %v3610
      %v4567 = vunpack.c.l.b16 %v3611
      %v4568 = vunpack.c.l.b16 %v3612
      %v4569 = vpack.c.b16 %v4538, %v4537
      %v4570 = vpack.c.b16 %v4540, %v4539
      %v4571 = vpack.c.b16 %v4542, %v4541
      %v4572 = vpack.c.b16 %v4544, %v4543
      %v4573 = vpack.c.b16 %v4546, %v4545
      %v4574 = vpack.c.b16 %v4548, %v4547
      %v4575 = vpack.c.b16 %v4550, %v4549
      %v4576 = vpack.c.b16 %v4552, %v4551
      %v4577 = vpack.c.b16 %v4554, %v4553
      %v4578 = vpack.c.b16 %v4556, %v4555
      %v4579 = vpack.c.b16 %v4558, %v4557
      %v4580 = vpack.c.b16 %v4560, %v4559
      %v4581 = vpack.c.b16 %v4562, %v4561
      %v4582 = vpack.c.b16 %v4564, %v4563
      %v4583 = vpack.c.b16 %v4566, %v4565
      %v4584 = vpack.c.b16 %v4568, %v4567
      %4601 = vmatpush.bf16.msra.mxu0 %v4576
      %4602 = vmatpush.bf16.msra.mxu0 %v4575
      %4603 = vmatpush.bf16.msra.mxu0 %v4574
      %4604 = vmatpush.bf16.msra.mxu0 %v4573
      %4605 = vmatpush.bf16.msra.mxu0 %v4572
      %4606 = vmatpush.bf16.msra.mxu0 %v4571
      %4607 = vmatpush.bf16.msra.mxu0 %v4570
      %4608 = vmatpush.bf16.msra.mxu0 %v4569
      %4609 = vmatmul.bf16.gmra.mxu0 %v3576
      %v4610 = vpop.f32.mrf.mxu0
      %v4611 = vadd.f32 %v3775, %v4610
      %v4612 = vpop.f32.mrf.mxu0
      %v4613 = vadd.f32 %v3777, %v4612
      %4614 = vmatmul.bf16.gmra.mxu0 %v3578
      %v4615 = vpop.f32.mrf.mxu0
      %v4616 = vadd.f32 %v3780, %v4615
      %v4617 = vpop.f32.mrf.mxu0
      %v4618 = vadd.f32 %v3782, %v4617
      %4619 = vdwg.mxu0
      %4620 = vmatpush.bf16.msra.mxu0 %v4584
      %4621 = vmatpush.bf16.msra.mxu0 %v4583
      %4622 = vmatpush.bf16.msra.mxu0 %v4582
      %4623 = vmatpush.bf16.msra.mxu0 %v4581
      %4624 = vmatpush.bf16.msra.mxu0 %v4580
      %4625 = vmatpush.bf16.msra.mxu0 %v4579
      %4626 = vmatpush.bf16.msra.mxu0 %v4578
      %4627 = vmatpush.bf16.msra.mxu0 %v4577
      %4628 = vmatmul.bf16.gmra.mxu0 %v3577
      %v4629 = vpop.f32.mrf.mxu0
      %v4630 = vadd.f32 %v4611, %v4629
      %v4631 = vpop.f32.mrf.mxu0
      %v4632 = vadd.f32 %v4613, %v4631
      %4633 = vmatmul.bf16.gmra.mxu0 %v3579
      %v4634 = vpop.f32.mrf.mxu0
      %v4635 = vadd.f32 %v4616, %v4634
      %v4636 = vpop.f32.mrf.mxu0
      %v4637 = vadd.f32 %v4618, %v4636
      %4638 = vdwg.mxu0
      %v4671 = vunpack.c.l.b16 %v3789
      %v4672 = vunpack.c.l.b16 %v3790
      %v4673 = vunpack.c.l.b16 %v3791
      %v4674 = vunpack.c.l.b16 %v3792
      %v4675 = vunpack.c.l.b16 %v3793
      %v4676 = vunpack.c.l.b16 %v3794
      %v4677 = vunpack.c.l.b16 %v3795
      %v4678 = vunpack.c.l.b16 %v3796
      %v4679 = vunpack.c.l.b16 %v3797
      %v4680 = vunpack.c.l.b16 %v3798
      %v4681 = vunpack.c.l.b16 %v3799
      %v4682 = vunpack.c.l.b16 %v3800
      %v4683 = vunpack.c.l.b16 %v3801
      %v4684 = vunpack.c.l.b16 %v3802
      %v4685 = vunpack.c.l.b16 %v3803
      %v4686 = vunpack.c.l.b16 %v3804
      %v4687 = vunpack.c.l.b16 %v3805
      %v4688 = vunpack.c.l.b16 %v3806
      %v4689 = vunpack.c.l.b16 %v3807
      %v4690 = vunpack.c.l.b16 %v3808
      %v4691 = vunpack.c.l.b16 %v3809
      %v4692 = vunpack.c.l.b16 %v3810
      %v4693 = vunpack.c.l.b16 %v3811
      %v4694 = vunpack.c.l.b16 %v3812
      %v4695 = vunpack.c.l.b16 %v3813
      %v4696 = vunpack.c.l.b16 %v3814
      %v4697 = vunpack.c.l.b16 %v3815
      %v4698 = vunpack.c.l.b16 %v3816
      %v4699 = vunpack.c.l.b16 %v3817
      %v4700 = vunpack.c.l.b16 %v3818
      %v4701 = vunpack.c.l.b16 %v3819
      %v4702 = vunpack.c.l.b16 %v3820
      %v4703 = vpack.c.b16 %v4672, %v4671
      %v4704 = vpack.c.b16 %v4674, %v4673
      %v4705 = vpack.c.b16 %v4676, %v4675
      %v4706 = vpack.c.b16 %v4678, %v4677
      %v4707 = vpack.c.b16 %v4680, %v4679
      %v4708 = vpack.c.b16 %v4682, %v4681
      %v4709 = vpack.c.b16 %v4684, %v4683
      %v4710 = vpack.c.b16 %v4686, %v4685
      %v4711 = vpack.c.b16 %v4688, %v4687
      %v4712 = vpack.c.b16 %v4690, %v4689
      %v4713 = vpack.c.b16 %v4692, %v4691
      %v4714 = vpack.c.b16 %v4694, %v4693
      %v4715 = vpack.c.b16 %v4696, %v4695
      %v4716 = vpack.c.b16 %v4698, %v4697
      %v4717 = vpack.c.b16 %v4700, %v4699
      %v4718 = vpack.c.b16 %v4702, %v4701
      %4735 = vmatpush.bf16.msra.mxu0 %v4710
      %4736 = vmatpush.bf16.msra.mxu0 %v4709
      %4737 = vmatpush.bf16.msra.mxu0 %v4708
      %4738 = vmatpush.bf16.msra.mxu0 %v4707
      %4739 = vmatpush.bf16.msra.mxu0 %v4706
      %4740 = vmatpush.bf16.msra.mxu0 %v4705
      %4741 = vmatpush.bf16.msra.mxu0 %v4704
      %4742 = vmatpush.bf16.msra.mxu0 %v4703
      %4743 = vmatmul.bf16.gmra.mxu0 %v3784
      %v4744 = vpop.f32.mrf.mxu0
      %v4745 = vadd.f32 %v3983, %v4744
      %v4746 = vpop.f32.mrf.mxu0
      %v4747 = vadd.f32 %v3985, %v4746
      %4748 = vmatmul.bf16.gmra.mxu0 %v3786
      %v4749 = vpop.f32.mrf.mxu0
      %v4750 = vadd.f32 %v3988, %v4749
      %v4751 = vpop.f32.mrf.mxu0
      %v4752 = vadd.f32 %v3990, %v4751
      %4753 = vdwg.mxu0
      %4754 = vmatpush.bf16.msra.mxu0 %v4718
      %4755 = vmatpush.bf16.msra.mxu0 %v4717
      %4756 = vmatpush.bf16.msra.mxu0 %v4716
      %4757 = vmatpush.bf16.msra.mxu0 %v4715
      %4758 = vmatpush.bf16.msra.mxu0 %v4714
      %4759 = vmatpush.bf16.msra.mxu0 %v4713
      %4760 = vmatpush.bf16.msra.mxu0 %v4712
      %4761 = vmatpush.bf16.msra.mxu0 %v4711
      %4762 = vmatmul.bf16.gmra.mxu0 %v3785
      %v4763 = vpop.f32.mrf.mxu0
      %v4764 = vadd.f32 %v4745, %v4763
      %v4765 = vpop.f32.mrf.mxu0
      %v4766 = vadd.f32 %v4747, %v4765
      %4767 = vmatmul.bf16.gmra.mxu0 %v3787
      %v4768 = vpop.f32.mrf.mxu0
      %v4769 = vadd.f32 %v4750, %v4768
      %v4770 = vpop.f32.mrf.mxu0
      %v4771 = vadd.f32 %v4752, %v4770
      %4772 = vdwg.mxu0
      %v4805 = vunpack.c.l.b16 %v3997
      %v4806 = vunpack.c.l.b16 %v3998
      %v4807 = vunpack.c.l.b16 %v3999
      %v4808 = vunpack.c.l.b16 %v4000
      %v4809 = vunpack.c.l.b16 %v4001
      %v4810 = vunpack.c.l.b16 %v4002
      %v4811 = vunpack.c.l.b16 %v4003
      %v4812 = vunpack.c.l.b16 %v4004
      %v4813 = vunpack.c.l.b16 %v4005
      %v4814 = vunpack.c.l.b16 %v4006
      %v4815 = vunpack.c.l.b16 %v4007
      %v4816 = vunpack.c.l.b16 %v4008
      %v4817 = vunpack.c.l.b16 %v4009
      %v4818 = vunpack.c.l.b16 %v4010
      %v4819 = vunpack.c.l.b16 %v4011
      %v4820 = vunpack.c.l.b16 %v4012
      %v4821 = vunpack.c.l.b16 %v4013
      %v4822 = vunpack.c.l.b16 %v4014
      %v4823 = vunpack.c.l.b16 %v4015
      %v4824 = vunpack.c.l.b16 %v4016
      %v4825 = vunpack.c.l.b16 %v4017
      %v4826 = vunpack.c.l.b16 %v4018
      %v4827 = vunpack.c.l.b16 %v4019
      %v4828 = vunpack.c.l.b16 %v4020
      %v4829 = vunpack.c.l.b16 %v4021
      %v4830 = vunpack.c.l.b16 %v4022
      %v4831 = vunpack.c.l.b16 %v4023
      %v4832 = vunpack.c.l.b16 %v4024
      %v4833 = vunpack.c.l.b16 %v4025
      %v4834 = vunpack.c.l.b16 %v4026
      %v4835 = vunpack.c.l.b16 %v4027
      %v4836 = vunpack.c.l.b16 %v4028
      %v4837 = vpack.c.b16 %v4806, %v4805
      %v4838 = vpack.c.b16 %v4808, %v4807
      %v4839 = vpack.c.b16 %v4810, %v4809
      %v4840 = vpack.c.b16 %v4812, %v4811
      %v4841 = vpack.c.b16 %v4814, %v4813
      %v4842 = vpack.c.b16 %v4816, %v4815
      %v4843 = vpack.c.b16 %v4818, %v4817
      %v4844 = vpack.c.b16 %v4820, %v4819
      %v4845 = vpack.c.b16 %v4822, %v4821
      %v4846 = vpack.c.b16 %v4824, %v4823
      %v4847 = vpack.c.b16 %v4826, %v4825
      %v4848 = vpack.c.b16 %v4828, %v4827
      %v4849 = vpack.c.b16 %v4830, %v4829
      %v4850 = vpack.c.b16 %v4832, %v4831
      %v4851 = vpack.c.b16 %v4834, %v4833
      %v4852 = vpack.c.b16 %v4836, %v4835
      %4869 = vmatpush.bf16.msra.mxu0 %v4844
      %4870 = vmatpush.bf16.msra.mxu0 %v4843
      %4871 = vmatpush.bf16.msra.mxu0 %v4842
      %4872 = vmatpush.bf16.msra.mxu0 %v4841
      %4873 = vmatpush.bf16.msra.mxu0 %v4840
      %4874 = vmatpush.bf16.msra.mxu0 %v4839
      %4875 = vmatpush.bf16.msra.mxu0 %v4838
      %4876 = vmatpush.bf16.msra.mxu0 %v4837
      %4877 = vmatmul.bf16.gmra.mxu0 %v3992
      %v4878 = vpop.f32.mrf.mxu0
      %v4879 = vadd.f32 %v4191, %v4878
      %v4880 = vpop.f32.mrf.mxu0
      %v4881 = vadd.f32 %v4193, %v4880
      %4882 = vmatmul.bf16.gmra.mxu0 %v3994
      %v4883 = vpop.f32.mrf.mxu0
      %v4884 = vadd.f32 %v4196, %v4883
      %v4885 = vpop.f32.mrf.mxu0
      %v4886 = vadd.f32 %v4198, %v4885
      %4887 = vdwg.mxu0
      %4888 = vmatpush.bf16.msra.mxu0 %v4852
      %4889 = vmatpush.bf16.msra.mxu0 %v4851
      %4890 = vmatpush.bf16.msra.mxu0 %v4850
      %4891 = vmatpush.bf16.msra.mxu0 %v4849
      %4892 = vmatpush.bf16.msra.mxu0 %v4848
      %4893 = vmatpush.bf16.msra.mxu0 %v4847
      %4894 = vmatpush.bf16.msra.mxu0 %v4846
      %4895 = vmatpush.bf16.msra.mxu0 %v4845
      %4896 = vmatmul.bf16.gmra.mxu0 %v3993
      %v4897 = vpop.f32.mrf.mxu0
      %v4898 = vadd.f32 %v4879, %v4897
      %v4899 = vpop.f32.mrf.mxu0
      %v4900 = vadd.f32 %v4881, %v4899
      %4901 = vmatmul.bf16.gmra.mxu0 %v3995
      %v4902 = vpop.f32.mrf.mxu0
      %v4903 = vadd.f32 %v4884, %v4902
      %v4904 = vpop.f32.mrf.mxu0
      %v4905 = vadd.f32 %v4886, %v4904
      %4906 = vdwg.mxu0
      %v4907 = vadd.f32 %v4496, %v4630
      %v4908 = vadd.f32 %v4498, %v4632
      %v4909 = vadd.f32 %v4501, %v4635
      %v4910 = vadd.f32 %v4503, %v4637
      %v4911 = vadd.f32 %v4764, %v4898
      %v4912 = vadd.f32 %v4766, %v4900
      %v4913 = vadd.f32 %v4769, %v4903
      %v4914 = vadd.f32 %v4771, %v4905
      %v4915 = vadd.f32 %v4907, %v4911
      %v4916 = vadd.f32 %v4908, %v4912
      %v4917 = vadd.f32 %v4909, %v4913
      %v4918 = vadd.f32 %v4910, %v4914
      %v4919 = vadd.f32 %v4915, %v4362
      %v4920 = vadd.f32 %v4916, %v4364
      %v4921 = vadd.f32 %v4917, %v4367
      %v4922 = vadd.f32 %v4918, %v4369
      %v4923 = vld [vmem:[%s5] sm:$0xff]
      %v4924 = vld [vmem:[%s5 + $0x8] sm:$0xff]
      %v4925 = vld [vmem:[%s5 + $0x10] sm:$0xff]
      %v4926 = vld [vmem:[%s5 + $0x18] sm:$0xff]
      %4928 = vset.pattern.permute.xlu0 0
      %4929 = vperm.xlu0 %4928, %v4923
      %v4930 = vpop.permute.xlu0 %4929
      %4933 = vset.pattern.permute.xlu0 0
      %4934 = vperm.xlu0 %4933, %v4924
      %v4935 = vpop.permute.xlu0 %4934
      %4938 = vset.pattern.permute.xlu0 0
      %4939 = vperm.xlu0 %4938, %v4925
      %v4940 = vpop.permute.xlu0 %4939
      %4943 = vset.pattern.permute.xlu0 0
      %4944 = vperm.xlu0 %4943, %v4926
      %v4945 = vpop.permute.xlu0 %4944
      %v4947 = vadd.f32 %v4919, %v4930
      %v4948 = vadd.f32 %v4920, %v4935
      %v4949 = vadd.f32 %v4921, %v4940
      %v4950 = vadd.f32 %v4922, %v4945
      %v4951 = vmax.f32 %v4947, 0.0
      %v4952 = vmax.f32 %v4948, 0.0
      %v4953 = vmax.f32 %v4949, 0.0
      %v4954 = vmax.f32 %v4950, 0.0
      %vm4955 = vcmask 523264
      %4956 = vst.msk [vmem:[%s475] sm:$0xff] %vm4955, %v4951
      %4957 = vst.msk [vmem:[%s475 + $0x8] sm:$0xff] %vm4955, %v4952
      %4958 = vst.msk [vmem:[%s475 + $0x10] sm:$0xff] %vm4955, %v4953
      %4959 = vst.msk [vmem:[%s475 + $0x18] sm:$0xff] %vm4955, %v4954
      %v4960 = vld [vmem:[%s7] sm:$0xf]
      %v4961 = vld [vmem:[%s7 + $0x4] sm:$0xf]
      %v4962 = vld [vmem:[%s7 + $0x8] sm:$0xf]
      %v4963 = vld [vmem:[%s7 + $0xc] sm:$0xf]
      %v4964 = vld [vmem:[%s7 + $0x10] sm:$0xf]
      %v4965 = vld [vmem:[%s7 + $0x14] sm:$0xf]
      %v4966 = vld [vmem:[%s7 + $0x18] sm:$0xf]
      %v4967 = vld [vmem:[%s7 + $0x1c] sm:$0xf]
      %v4968 = vld [vmem:[%s7 + $0x20] sm:$0xf]
      %v4969 = vld [vmem:[%s7 + $0x24] sm:$0xf]
      %v4970 = vld [vmem:[%s7 + $0x28] sm:$0xf]
      %v4971 = vld [vmem:[%s7 + $0x2c] sm:$0xf]
      %v4972 = vld [vmem:[%s7 + $0x30] sm:$0xf]
      %v4973 = vld [vmem:[%s7 + $0x34] sm:$0xf]
      %v4974 = vld [vmem:[%s7 + $0x38] sm:$0xf]
      %v4975 = vld [vmem:[%s7 + $0x3c] sm:$0xf]
      %v4976 = vld [vmem:[%s7 + $0x40] sm:$0xf]
      %v4977 = vld [vmem:[%s7 + $0x44] sm:$0xf]
      %v4978 = vpack.c.bf16 %v4952, %v4951
      %v4979 = vpack.c.bf16 %v4954, %v4953
      %v4998 = vunpack.c.l.b16 %v4960
      %v4999 = vunpack.c.l.b16 %v4961
      %v5000 = vunpack.c.l.b16 %v4962
      %v5001 = vunpack.c.l.b16 %v4963
      %v5002 = vunpack.c.l.b16 %v4964
      %v5003 = vunpack.c.l.b16 %v4965
      %v5004 = vunpack.c.l.b16 %v4966
      %v5005 = vunpack.c.l.b16 %v4967
      %v5006 = vunpack.c.l.b16 %v4968
      %v5007 = vunpack.c.l.b16 %v4969
      %v5008 = vunpack.c.l.b16 %v4970
      %v5009 = vunpack.c.l.b16 %v4971
      %v5010 = vunpack.c.l.b16 %v4972
      %v5011 = vunpack.c.l.b16 %v4973
      %v5012 = vunpack.c.l.b16 %v4974
      %v5013 = vunpack.c.l.b16 %v4975
      %v5014 = vunpack.c.l.b16 %v4976
      %v5015 = vunpack.c.l.b16 %v4977
      %v5016 = vpack.c.b16 %v4999, %v4998
      %v5017 = vpack.c.b16 %v5001, %v5000
      %v5018 = vpack.c.b16 %v5003, %v5002
      %v5019 = vpack.c.b16 %v5005, %v5004
      %v5020 = vpack.c.b16 %v5007, %v5006
      %v5021 = vpack.c.b16 %v5009, %v5008
      %v5022 = vpack.c.b16 %v5011, %v5010
      %v5023 = vpack.c.b16 %v5013, %v5012
      %v5024 = vpack.c.b16 %v5015, %v5014
      %vm5025 = vcmask 261120
      %v5027 = vsel %vm5025, %v5016, 0
      %v5030 = vsel %vm5025, %v5017, 0
      %v5033 = vsel %vm5025, %v5018, 0
      %v5036 = vsel %vm5025, %v5019, 0
      %v5039 = vsel %vm5025, %v5020, 0
      %v5042 = vsel %vm5025, %v5021, 0
      %v5045 = vsel %vm5025, %v5022, 0
      %v5048 = vsel %vm5025, %v5023, 0
      %v5051 = vsel %vm5025, %v5024, 0
      %5053 = vmatpush.bf16.msra.mxu0 0
      %5054 = vmatpush.bf16.msra.mxu0 0
      %5055 = vmatpush.bf16.msra.mxu0 0
      %5056 = vmatpush.bf16.msra.mxu0 0
      %5057 = vmatpush.bf16.msra.mxu0 0
      %5058 = vmatpush.bf16.msra.mxu0 0
      %5059 = vmatpush.bf16.msra.mxu0 %v4979
      %5060 = vmatpush.bf16.msra.mxu0 %v4978
      %5061 = vmatmul.bf16.gmra.mxu0 %v5027
      %v5062 = vpop.f32.mrf.mxu0
      %v5063 = vadd.f32 0.0, %v5062
      %v5064 = vpop.f32.mrf.mxu0
      %v5065 = vadd.f32 0.0, %v5064
      %5066 = vmatmul.bf16.gmra.mxu0 %v5030
      %v5067 = vpop.f32.mrf.mxu0
      %v5068 = vadd.f32 0.0, %v5067
      %v5069 = vpop.f32.mrf.mxu0
      %v5070 = vadd.f32 0.0, %v5069
      %5071 = vmatmul.bf16.gmra.mxu0 %v5033
      %v5072 = vpop.f32.mrf.mxu0
      %v5073 = vadd.f32 0.0, %v5072
      %v5074 = vpop.f32.mrf.mxu0
      %v5075 = vadd.f32 0.0, %v5074
      %5076 = vmatmul.bf16.gmra.mxu0 %v5036
      %v5077 = vpop.f32.mrf.mxu0
      %v5078 = vadd.f32 0.0, %v5077
      %v5079 = vpop.f32.mrf.mxu0
      %v5080 = vadd.f32 0.0, %v5079
      %5081 = vmatmul.bf16.gmra.mxu0 %v5039
      %v5082 = vpop.f32.mrf.mxu0
      %v5083 = vadd.f32 0.0, %v5082
      %v5084 = vpop.f32.mrf.mxu0
      %v5085 = vadd.f32 0.0, %v5084
      %5086 = vmatmul.bf16.gmra.mxu0 %v5042
      %v5087 = vpop.f32.mrf.mxu0
      %v5088 = vadd.f32 0.0, %v5087
      %v5089 = vpop.f32.mrf.mxu0
      %v5090 = vadd.f32 0.0, %v5089
      %5091 = vmatmul.bf16.gmra.mxu0 %v5045
      %v5092 = vpop.f32.mrf.mxu0
      %v5093 = vadd.f32 0.0, %v5092
      %v5094 = vpop.f32.mrf.mxu0
      %v5095 = vadd.f32 0.0, %v5094
      %5096 = vmatmul.bf16.gmra.mxu0 %v5048
      %v5097 = vpop.f32.mrf.mxu0
      %v5098 = vadd.f32 0.0, %v5097
      %v5099 = vpop.f32.mrf.mxu0
      %v5100 = vadd.f32 0.0, %v5099
      %5101 = vmatmul.bf16.gmra.mxu0 %v5051
      %v5102 = vpop.f32.mrf.mxu0
      %v5103 = vadd.f32 0.0, %v5102
      %v5104 = vpop.f32.mrf.mxu0
      %v5105 = vadd.f32 0.0, %v5104
      %5106 = vdwg.mxu0
      %v5107 = vpack.c.bf16 %v5065, %v5063
      %v5108 = vld [vmem:[%s9] sm:$0xff]
      %v5109 = vld [vmem:[%s9 + $0x8] sm:$0xf]
      %v5110 = vld [vmem:[%s9 + $0xc] sm:$0xff]
      %v5111 = vld [vmem:[%s9 + $0x14] sm:$0xf]
      %v5112 = vld [vmem:[%s9 + $0x18] sm:$0xff]
      %v5113 = vld [vmem:[%s9 + $0x20] sm:$0xf]
      %v5114 = vld [vmem:[%s9 + $0x24] sm:$0xff]
      %v5115 = vld [vmem:[%s9 + $0x2c] sm:$0xf]
      %v5116 = vld [vmem:[%s9 + $0x30] sm:$0xff]
      %v5117 = vld [vmem:[%s9 + $0x38] sm:$0xf]
      %v5118 = vld [vmem:[%s9 + $0x3c] sm:$0xff]
      %v5119 = vld [vmem:[%s9 + $0x44] sm:$0xf]
      %v5120 = vld [vmem:[%s9 + $0x48] sm:$0xff]
      %v5121 = vld [vmem:[%s9 + $0x50] sm:$0xf]
      %v5122 = vld [vmem:[%s9 + $0x54] sm:$0xff]
      %v5123 = vld [vmem:[%s9 + $0x5c] sm:$0xf]
      %v5124 = vpack.c.bf16 %v5070, %v5068
      %s5125 = scalar_lea.vmem %s9, 96
      %v5126 = vld [vmem:[%s5125] sm:$0xff]
      %v5127 = vld [vmem:[%s5125 + $0x8] sm:$0xf]
      %v5128 = vld [vmem:[%s5125 + $0xc] sm:$0xff]
      %v5129 = vld [vmem:[%s5125 + $0x14] sm:$0xf]
      %v5130 = vld [vmem:[%s5125 + $0x18] sm:$0xff]
      %v5131 = vld [vmem:[%s5125 + $0x20] sm:$0xf]
      %v5132 = vld [vmem:[%s5125 + $0x24] sm:$0xff]
      %v5133 = vld [vmem:[%s5125 + $0x2c] sm:$0xf]
      %v5134 = vld [vmem:[%s5125 + $0x30] sm:$0xff]
      %v5135 = vld [vmem:[%s5125 + $0x38] sm:$0xf]
      %v5136 = vld [vmem:[%s5125 + $0x3c] sm:$0xff]
      %v5137 = vld [vmem:[%s5125 + $0x44] sm:$0xf]
      %v5138 = vld [vmem:[%s5125 + $0x48] sm:$0xff]
      %v5139 = vld [vmem:[%s5125 + $0x50] sm:$0xf]
      %v5140 = vld [vmem:[%s5125 + $0x54] sm:$0xff]
      %v5141 = vld [vmem:[%s5125 + $0x5c] sm:$0xf]
      %v5158 = vunpack.c.l.b16 %v5126
      %v5159 = vunpack.c.h.b16 %v5126
      %v5160 = vunpack.c.l.b16 %v5127
      %v5161 = vunpack.c.l.b16 %v5128
      %v5162 = vunpack.c.h.b16 %v5128
      %v5163 = vunpack.c.l.b16 %v5129
      %v5164 = vunpack.c.l.b16 %v5130
      %v5165 = vunpack.c.h.b16 %v5130
      %v5166 = vunpack.c.l.b16 %v5131
      %v5167 = vunpack.c.l.b16 %v5132
      %v5168 = vunpack.c.h.b16 %v5132
      %v5169 = vunpack.c.l.b16 %v5133
      %v5170 = vunpack.c.l.b16 %v5134
      %v5171 = vunpack.c.h.b16 %v5134
      %v5172 = vunpack.c.l.b16 %v5135
      %v5173 = vunpack.c.l.b16 %v5136
      %v5174 = vunpack.c.h.b16 %v5136
      %v5175 = vunpack.c.l.b16 %v5137
      %v5176 = vunpack.c.l.b16 %v5138
      %v5177 = vunpack.c.h.b16 %v5138
      %v5178 = vunpack.c.l.b16 %v5139
      %v5179 = vunpack.c.l.b16 %v5140
      %v5180 = vunpack.c.h.b16 %v5140
      %v5181 = vunpack.c.l.b16 %v5141
      %v5182 = vpack.c.b16 %v5161, %v5158
      %v5183 = vpack.c.b16 %v5162, %v5159
      %v5184 = vpack.c.b16 %v5163, %v5160
      %v5185 = vpack.c.b16 %v5167, %v5164
      %v5186 = vpack.c.b16 %v5168, %v5165
      %v5187 = vpack.c.b16 %v5169, %v5166
      %v5188 = vpack.c.b16 %v5173, %v5170
      %v5189 = vpack.c.b16 %v5174, %v5171
      %v5190 = vpack.c.b16 %v5175, %v5172
      %v5191 = vpack.c.b16 %v5179, %v5176
      %v5192 = vpack.c.b16 %v5180, %v5177
      %v5193 = vpack.c.b16 %v5181, %v5178
      %v5207 = vsel %vm4955, %v5124, 0
      %5209 = vmatpush.bf16.msra.mxu0 0
      %5210 = vmatpush.bf16.msra.mxu0 0
      %5211 = vmatpush.bf16.msra.mxu0 0
      %5212 = vmatpush.bf16.msra.mxu0 0
      %5213 = vmatpush.bf16.msra.mxu0 %v5191
      %5214 = vmatpush.bf16.msra.mxu0 %v5188
      %5215 = vmatpush.bf16.msra.mxu0 %v5185
      %5216 = vmatpush.bf16.msra.mxu0 %v5182
      %5217 = vmatmul.bf16.gmra.mxu0 %v5207
      %v5218 = vpop.f32.mrf.mxu0
      %v5219 = vadd.f32 0.0, %v5218
      %v5220 = vpop.f32.mrf.mxu0
      %v5221 = vadd.f32 0.0, %v5220
      %5222 = vdwg.mxu0
      %5223 = vmatpush.bf16.msra.mxu0 0
      %5224 = vmatpush.bf16.msra.mxu0 0
      %5225 = vmatpush.bf16.msra.mxu0 0
      %5226 = vmatpush.bf16.msra.mxu0 0
      %5227 = vmatpush.bf16.msra.mxu0 %v5192
      %5228 = vmatpush.bf16.msra.mxu0 %v5189
      %5229 = vmatpush.bf16.msra.mxu0 %v5186
      %5230 = vmatpush.bf16.msra.mxu0 %v5183
      %5231 = vmatmul.bf16.gmra.mxu0 %v5207
      %v5232 = vpop.f32.mrf.mxu0
      %v5233 = vadd.f32 0.0, %v5232
      %v5234 = vpop.f32.mrf.mxu0
      %v5235 = vadd.f32 0.0, %v5234
      %5236 = vdwg.mxu0
      %5237 = vmatpush.bf16.msra.mxu0 0
      %5238 = vmatpush.bf16.msra.mxu0 0
      %5239 = vmatpush.bf16.msra.mxu0 0
      %5240 = vmatpush.bf16.msra.mxu0 0
      %5241 = vmatpush.bf16.msra.mxu0 %v5193
      %5242 = vmatpush.bf16.msra.mxu0 %v5190
      %5243 = vmatpush.bf16.msra.mxu0 %v5187
      %5244 = vmatpush.bf16.msra.mxu0 %v5184
      %5245 = vmatmul.bf16.gmra.mxu0 %v5207
      %v5246 = vpop.f32.mrf.mxu0
      %v5247 = vadd.f32 0.0, %v5246
      %v5248 = vpop.f32.mrf.mxu0
      %v5249 = vadd.f32 0.0, %v5248
      %5250 = vdwg.mxu0
      %v5251 = vpack.c.bf16 %v5075, %v5073
      %s5252 = scalar_lea.vmem %s9, 192
      %v5253 = vld [vmem:[%s5252] sm:$0xff]
      %v5254 = vld [vmem:[%s5252 + $0x8] sm:$0xf]
      %v5255 = vld [vmem:[%s5252 + $0xc] sm:$0xff]
      %v5256 = vld [vmem:[%s5252 + $0x14] sm:$0xf]
      %v5257 = vld [vmem:[%s5252 + $0x18] sm:$0xff]
      %v5258 = vld [vmem:[%s5252 + $0x20] sm:$0xf]
      %v5259 = vld [vmem:[%s5252 + $0x24] sm:$0xff]
      %v5260 = vld [vmem:[%s5252 + $0x2c] sm:$0xf]
      %v5261 = vld [vmem:[%s5252 + $0x30] sm:$0xff]
      %v5262 = vld [vmem:[%s5252 + $0x38] sm:$0xf]
      %v5263 = vld [vmem:[%s5252 + $0x3c] sm:$0xff]
      %v5264 = vld [vmem:[%s5252 + $0x44] sm:$0xf]
      %v5265 = vld [vmem:[%s5252 + $0x48] sm:$0xff]
      %v5266 = vld [vmem:[%s5252 + $0x50] sm:$0xf]
      %v5267 = vld [vmem:[%s5252 + $0x54] sm:$0xff]
      %v5268 = vld [vmem:[%s5252 + $0x5c] sm:$0xf]
      %v5269 = vpack.c.bf16 %v5080, %v5078
      %s5270 = scalar_lea.vmem %s9, 288
      %v5271 = vld [vmem:[%s5270] sm:$0xff]
      %v5272 = vld [vmem:[%s5270 + $0x8] sm:$0xf]
      %v5273 = vld [vmem:[%s5270 + $0xc] sm:$0xff]
      %v5274 = vld [vmem:[%s5270 + $0x14] sm:$0xf]
      %v5275 = vld [vmem:[%s5270 + $0x18] sm:$0xff]
      %v5276 = vld [vmem:[%s5270 + $0x20] sm:$0xf]
      %v5277 = vld [vmem:[%s5270 + $0x24] sm:$0xff]
      %v5278 = vld [vmem:[%s5270 + $0x2c] sm:$0xf]
      %v5279 = vld [vmem:[%s5270 + $0x30] sm:$0xff]
      %v5280 = vld [vmem:[%s5270 + $0x38] sm:$0xf]
      %v5281 = vld [vmem:[%s5270 + $0x3c] sm:$0xff]
      %v5282 = vld [vmem:[%s5270 + $0x44] sm:$0xf]
      %v5283 = vld [vmem:[%s5270 + $0x48] sm:$0xff]
      %v5284 = vld [vmem:[%s5270 + $0x50] sm:$0xf]
      %v5285 = vld [vmem:[%s5270 + $0x54] sm:$0xff]
      %v5286 = vld [vmem:[%s5270 + $0x5c] sm:$0xf]
      %v5303 = vunpack.c.l.b16 %v5271
      %v5304 = vunpack.c.h.b16 %v5271
      %v5305 = vunpack.c.l.b16 %v5272
      %v5306 = vunpack.c.l.b16 %v5273
      %v5307 = vunpack.c.h.b16 %v5273
      %v5308 = vunpack.c.l.b16 %v5274
      %v5309 = vunpack.c.l.b16 %v5275
      %v5310 = vunpack.c.h.b16 %v5275
      %v5311 = vunpack.c.l.b16 %v5276
      %v5312 = vunpack.c.l.b16 %v5277
      %v5313 = vunpack.c.h.b16 %v5277
      %v5314 = vunpack.c.l.b16 %v5278
      %v5315 = vunpack.c.l.b16 %v5279
      %v5316 = vunpack.c.h.b16 %v5279
      %v5317 = vunpack.c.l.b16 %v5280
      %v5318 = vunpack.c.l.b16 %v5281
      %v5319 = vunpack.c.h.b16 %v5281
      %v5320 = vunpack.c.l.b16 %v5282
      %v5321 = vunpack.c.l.b16 %v5283
      %v5322 = vunpack.c.h.b16 %v5283
      %v5323 = vunpack.c.l.b16 %v5284
      %v5324 = vunpack.c.l.b16 %v5285
      %v5325 = vunpack.c.h.b16 %v5285
      %v5326 = vunpack.c.l.b16 %v5286
      %v5327 = vpack.c.b16 %v5306, %v5303
      %v5328 = vpack.c.b16 %v5307, %v5304
      %v5329 = vpack.c.b16 %v5308, %v5305
      %v5330 = vpack.c.b16 %v5312, %v5309
      %v5331 = vpack.c.b16 %v5313, %v5310
      %v5332 = vpack.c.b16 %v5314, %v5311
      %v5333 = vpack.c.b16 %v5318, %v5315
      %v5334 = vpack.c.b16 %v5319, %v5316
      %v5335 = vpack.c.b16 %v5320, %v5317
      %v5336 = vpack.c.b16 %v5324, %v5321
      %v5337 = vpack.c.b16 %v5325, %v5322
      %v5338 = vpack.c.b16 %v5326, %v5323
      %v5352 = vsel %vm4955, %v5269, 0
      %5354 = vmatpush.bf16.msra.mxu0 0
      %5355 = vmatpush.bf16.msra.mxu0 0
      %5356 = vmatpush.bf16.msra.mxu0 0
      %5357 = vmatpush.bf16.msra.mxu0 0
      %5358 = vmatpush.bf16.msra.mxu0 %v5336
      %5359 = vmatpush.bf16.msra.mxu0 %v5333
      %5360 = vmatpush.bf16.msra.mxu0 %v5330
      %5361 = vmatpush.bf16.msra.mxu0 %v5327
      %5362 = vmatmul.bf16.gmra.mxu0 %v5352
      %v5363 = vpop.f32.mrf.mxu0
      %v5364 = vadd.f32 0.0, %v5363
      %v5365 = vpop.f32.mrf.mxu0
      %v5366 = vadd.f32 0.0, %v5365
      %5367 = vdwg.mxu0
      %5368 = vmatpush.bf16.msra.mxu0 0
      %5369 = vmatpush.bf16.msra.mxu0 0
      %5370 = vmatpush.bf16.msra.mxu0 0
      %5371 = vmatpush.bf16.msra.mxu0 0
      %5372 = vmatpush.bf16.msra.mxu0 %v5337
      %5373 = vmatpush.bf16.msra.mxu0 %v5334
      %5374 = vmatpush.bf16.msra.mxu0 %v5331
      %5375 = vmatpush.bf16.msra.mxu0 %v5328
      %5376 = vmatmul.bf16.gmra.mxu0 %v5352
      %v5377 = vpop.f32.mrf.mxu0
      %v5378 = vadd.f32 0.0, %v5377
      %v5379 = vpop.f32.mrf.mxu0
      %v5380 = vadd.f32 0.0, %v5379
      %5381 = vdwg.mxu0
      %5382 = vmatpush.bf16.msra.mxu0 0
      %5383 = vmatpush.bf16.msra.mxu0 0
      %5384 = vmatpush.bf16.msra.mxu0 0
      %5385 = vmatpush.bf16.msra.mxu0 0
      %5386 = vmatpush.bf16.msra.mxu0 %v5338
      %5387 = vmatpush.bf16.msra.mxu0 %v5335
      %5388 = vmatpush.bf16.msra.mxu0 %v5332
      %5389 = vmatpush.bf16.msra.mxu0 %v5329
      %5390 = vmatmul.bf16.gmra.mxu0 %v5352
      %v5391 = vpop.f32.mrf.mxu0
      %v5392 = vadd.f32 0.0, %v5391
      %v5393 = vpop.f32.mrf.mxu0
      %v5394 = vadd.f32 0.0, %v5393
      %5395 = vdwg.mxu0
      %v5396 = vpack.c.bf16 %v5085, %v5083
      %s5397 = scalar_lea.vmem %s9, 384
      %v5398 = vld [vmem:[%s5397] sm:$0xff]
      %v5399 = vld [vmem:[%s5397 + $0x8] sm:$0xf]
      %v5400 = vld [vmem:[%s5397 + $0xc] sm:$0xff]
      %v5401 = vld [vmem:[%s5397 + $0x14] sm:$0xf]
      %v5402 = vld [vmem:[%s5397 + $0x18] sm:$0xff]
      %v5403 = vld [vmem:[%s5397 + $0x20] sm:$0xf]
      %v5404 = vld [vmem:[%s5397 + $0x24] sm:$0xff]
      %v5405 = vld [vmem:[%s5397 + $0x2c] sm:$0xf]
      %v5406 = vld [vmem:[%s5397 + $0x30] sm:$0xff]
      %v5407 = vld [vmem:[%s5397 + $0x38] sm:$0xf]
      %v5408 = vld [vmem:[%s5397 + $0x3c] sm:$0xff]
      %v5409 = vld [vmem:[%s5397 + $0x44] sm:$0xf]
      %v5410 = vld [vmem:[%s5397 + $0x48] sm:$0xff]
      %v5411 = vld [vmem:[%s5397 + $0x50] sm:$0xf]
      %v5412 = vld [vmem:[%s5397 + $0x54] sm:$0xff]
      %v5413 = vld [vmem:[%s5397 + $0x5c] sm:$0xf]
      %v5414 = vpack.c.bf16 %v5090, %v5088
      %s5415 = scalar_lea.vmem %s9, 480
      %v5416 = vld [vmem:[%s5415] sm:$0xff]
      %v5417 = vld [vmem:[%s5415 + $0x8] sm:$0xf]
      %v5418 = vld [vmem:[%s5415 + $0xc] sm:$0xff]
      %v5419 = vld [vmem:[%s5415 + $0x14] sm:$0xf]
      %v5420 = vld [vmem:[%s5415 + $0x18] sm:$0xff]
      %v5421 = vld [vmem:[%s5415 + $0x20] sm:$0xf]
      %v5422 = vld [vmem:[%s5415 + $0x24] sm:$0xff]
      %v5423 = vld [vmem:[%s5415 + $0x2c] sm:$0xf]
      %v5424 = vld [vmem:[%s5415 + $0x30] sm:$0xff]
      %v5425 = vld [vmem:[%s5415 + $0x38] sm:$0xf]
      %v5426 = vld [vmem:[%s5415 + $0x3c] sm:$0xff]
      %v5427 = vld [vmem:[%s5415 + $0x44] sm:$0xf]
      %v5428 = vld [vmem:[%s5415 + $0x48] sm:$0xff]
      %v5429 = vld [vmem:[%s5415 + $0x50] sm:$0xf]
      %v5430 = vld [vmem:[%s5415 + $0x54] sm:$0xff]
      %v5431 = vld [vmem:[%s5415 + $0x5c] sm:$0xf]
      %v5448 = vunpack.c.l.b16 %v5416
      %v5449 = vunpack.c.h.b16 %v5416
      %v5450 = vunpack.c.l.b16 %v5417
      %v5451 = vunpack.c.l.b16 %v5418
      %v5452 = vunpack.c.h.b16 %v5418
      %v5453 = vunpack.c.l.b16 %v5419
      %v5454 = vunpack.c.l.b16 %v5420
      %v5455 = vunpack.c.h.b16 %v5420
      %v5456 = vunpack.c.l.b16 %v5421
      %v5457 = vunpack.c.l.b16 %v5422
      %v5458 = vunpack.c.h.b16 %v5422
      %v5459 = vunpack.c.l.b16 %v5423
      %v5460 = vunpack.c.l.b16 %v5424
      %v5461 = vunpack.c.h.b16 %v5424
      %v5462 = vunpack.c.l.b16 %v5425
      %v5463 = vunpack.c.l.b16 %v5426
      %v5464 = vunpack.c.h.b16 %v5426
      %v5465 = vunpack.c.l.b16 %v5427
      %v5466 = vunpack.c.l.b16 %v5428
      %v5467 = vunpack.c.h.b16 %v5428
      %v5468 = vunpack.c.l.b16 %v5429
      %v5469 = vunpack.c.l.b16 %v5430
      %v5470 = vunpack.c.h.b16 %v5430
      %v5471 = vunpack.c.l.b16 %v5431
      %v5472 = vpack.c.b16 %v5451, %v5448
      %v5473 = vpack.c.b16 %v5452, %v5449
      %v5474 = vpack.c.b16 %v5453, %v5450
      %v5475 = vpack.c.b16 %v5457, %v5454
      %v5476 = vpack.c.b16 %v5458, %v5455
      %v5477 = vpack.c.b16 %v5459, %v5456
      %v5478 = vpack.c.b16 %v5463, %v5460
      %v5479 = vpack.c.b16 %v5464, %v5461
      %v5480 = vpack.c.b16 %v5465, %v5462
      %v5481 = vpack.c.b16 %v5469, %v5466
      %v5482 = vpack.c.b16 %v5470, %v5467
      %v5483 = vpack.c.b16 %v5471, %v5468
      %v5497 = vsel %vm4955, %v5414, 0
      %5499 = vmatpush.bf16.msra.mxu0 0
      %5500 = vmatpush.bf16.msra.mxu0 0
      %5501 = vmatpush.bf16.msra.mxu0 0
      %5502 = vmatpush.bf16.msra.mxu0 0
      %5503 = vmatpush.bf16.msra.mxu0 %v5481
      %5504 = vmatpush.bf16.msra.mxu0 %v5478
      %5505 = vmatpush.bf16.msra.mxu0 %v5475
      %5506 = vmatpush.bf16.msra.mxu0 %v5472
      %5507 = vmatmul.bf16.gmra.mxu0 %v5497
      %v5508 = vpop.f32.mrf.mxu0
      %v5509 = vadd.f32 0.0, %v5508
      %v5510 = vpop.f32.mrf.mxu0
      %v5511 = vadd.f32 0.0, %v5510
      %5512 = vdwg.mxu0
      %5513 = vmatpush.bf16.msra.mxu0 0
      %5514 = vmatpush.bf16.msra.mxu0 0
      %5515 = vmatpush.bf16.msra.mxu0 0
      %5516 = vmatpush.bf16.msra.mxu0 0
      %5517 = vmatpush.bf16.msra.mxu0 %v5482
      %5518 = vmatpush.bf16.msra.mxu0 %v5479
      %5519 = vmatpush.bf16.msra.mxu0 %v5476
      %5520 = vmatpush.bf16.msra.mxu0 %v5473
      %5521 = vmatmul.bf16.gmra.mxu0 %v5497
      %v5522 = vpop.f32.mrf.mxu0
      %v5523 = vadd.f32 0.0, %v5522
      %v5524 = vpop.f32.mrf.mxu0
      %v5525 = vadd.f32 0.0, %v5524
      %5526 = vdwg.mxu0
      %5527 = vmatpush.bf16.msra.mxu0 0
      %5528 = vmatpush.bf16.msra.mxu0 0
      %5529 = vmatpush.bf16.msra.mxu0 0
      %5530 = vmatpush.bf16.msra.mxu0 0
      %5531 = vmatpush.bf16.msra.mxu0 %v5483
      %5532 = vmatpush.bf16.msra.mxu0 %v5480
      %5533 = vmatpush.bf16.msra.mxu0 %v5477
      %5534 = vmatpush.bf16.msra.mxu0 %v5474
      %5535 = vmatmul.bf16.gmra.mxu0 %v5497
      %v5536 = vpop.f32.mrf.mxu0
      %v5537 = vadd.f32 0.0, %v5536
      %v5538 = vpop.f32.mrf.mxu0
      %v5539 = vadd.f32 0.0, %v5538
      %5540 = vdwg.mxu0
      %v5541 = vpack.c.bf16 %v5095, %v5093
      %s5542 = scalar_lea.vmem %s9, 576
      %v5543 = vld [vmem:[%s5542] sm:$0xff]
      %v5544 = vld [vmem:[%s5542 + $0x8] sm:$0xf]
      %v5545 = vld [vmem:[%s5542 + $0xc] sm:$0xff]
      %v5546 = vld [vmem:[%s5542 + $0x14] sm:$0xf]
      %v5547 = vld [vmem:[%s5542 + $0x18] sm:$0xff]
      %v5548 = vld [vmem:[%s5542 + $0x20] sm:$0xf]
      %v5549 = vld [vmem:[%s5542 + $0x24] sm:$0xff]
      %v5550 = vld [vmem:[%s5542 + $0x2c] sm:$0xf]
      %v5551 = vld [vmem:[%s5542 + $0x30] sm:$0xff]
      %v5552 = vld [vmem:[%s5542 + $0x38] sm:$0xf]
      %v5553 = vld [vmem:[%s5542 + $0x3c] sm:$0xff]
      %v5554 = vld [vmem:[%s5542 + $0x44] sm:$0xf]
      %v5555 = vld [vmem:[%s5542 + $0x48] sm:$0xff]
      %v5556 = vld [vmem:[%s5542 + $0x50] sm:$0xf]
      %v5557 = vld [vmem:[%s5542 + $0x54] sm:$0xff]
      %v5558 = vld [vmem:[%s5542 + $0x5c] sm:$0xf]
      %v5559 = vpack.c.bf16 %v5100, %v5098
      %s5560 = scalar_lea.vmem %s9, 672
      %v5561 = vld [vmem:[%s5560] sm:$0xff]
      %v5562 = vld [vmem:[%s5560 + $0x8] sm:$0xf]
      %v5563 = vld [vmem:[%s5560 + $0xc] sm:$0xff]
      %v5564 = vld [vmem:[%s5560 + $0x14] sm:$0xf]
      %v5565 = vld [vmem:[%s5560 + $0x18] sm:$0xff]
      %v5566 = vld [vmem:[%s5560 + $0x20] sm:$0xf]
      %v5567 = vld [vmem:[%s5560 + $0x24] sm:$0xff]
      %v5568 = vld [vmem:[%s5560 + $0x2c] sm:$0xf]
      %v5569 = vld [vmem:[%s5560 + $0x30] sm:$0xff]
      %v5570 = vld [vmem:[%s5560 + $0x38] sm:$0xf]
      %v5571 = vld [vmem:[%s5560 + $0x3c] sm:$0xff]
      %v5572 = vld [vmem:[%s5560 + $0x44] sm:$0xf]
      %v5573 = vld [vmem:[%s5560 + $0x48] sm:$0xff]
      %v5574 = vld [vmem:[%s5560 + $0x50] sm:$0xf]
      %v5575 = vld [vmem:[%s5560 + $0x54] sm:$0xff]
      %v5576 = vld [vmem:[%s5560 + $0x5c] sm:$0xf]
      %v5593 = vunpack.c.l.b16 %v5561
      %v5594 = vunpack.c.h.b16 %v5561
      %v5595 = vunpack.c.l.b16 %v5562
      %v5596 = vunpack.c.l.b16 %v5563
      %v5597 = vunpack.c.h.b16 %v5563
      %v5598 = vunpack.c.l.b16 %v5564
      %v5599 = vunpack.c.l.b16 %v5565
      %v5600 = vunpack.c.h.b16 %v5565
      %v5601 = vunpack.c.l.b16 %v5566
      %v5602 = vunpack.c.l.b16 %v5567
      %v5603 = vunpack.c.h.b16 %v5567
      %v5604 = vunpack.c.l.b16 %v5568
      %v5605 = vunpack.c.l.b16 %v5569
      %v5606 = vunpack.c.h.b16 %v5569
      %v5607 = vunpack.c.l.b16 %v5570
      %v5608 = vunpack.c.l.b16 %v5571
      %v5609 = vunpack.c.h.b16 %v5571
      %v5610 = vunpack.c.l.b16 %v5572
      %v5611 = vunpack.c.l.b16 %v5573
      %v5612 = vunpack.c.h.b16 %v5573
      %v5613 = vunpack.c.l.b16 %v5574
      %v5614 = vunpack.c.l.b16 %v5575
      %v5615 = vunpack.c.h.b16 %v5575
      %v5616 = vunpack.c.l.b16 %v5576
      %v5617 = vpack.c.b16 %v5596, %v5593
      %v5618 = vpack.c.b16 %v5597, %v5594
      %v5619 = vpack.c.b16 %v5598, %v5595
      %v5620 = vpack.c.b16 %v5602, %v5599
      %v5621 = vpack.c.b16 %v5603, %v5600
      %v5622 = vpack.c.b16 %v5604, %v5601
      %v5623 = vpack.c.b16 %v5608, %v5605
      %v5624 = vpack.c.b16 %v5609, %v5606
      %v5625 = vpack.c.b16 %v5610, %v5607
      %v5626 = vpack.c.b16 %v5614, %v5611
      %v5627 = vpack.c.b16 %v5615, %v5612
      %v5628 = vpack.c.b16 %v5616, %v5613
      %v5642 = vsel %vm4955, %v5559, 0
      %5644 = vmatpush.bf16.msra.mxu0 0
      %5645 = vmatpush.bf16.msra.mxu0 0
      %5646 = vmatpush.bf16.msra.mxu0 0
      %5647 = vmatpush.bf16.msra.mxu0 0
      %5648 = vmatpush.bf16.msra.mxu0 %v5626
      %5649 = vmatpush.bf16.msra.mxu0 %v5623
      %5650 = vmatpush.bf16.msra.mxu0 %v5620
      %5651 = vmatpush.bf16.msra.mxu0 %v5617
      %5652 = vmatmul.bf16.gmra.mxu0 %v5642
      %v5653 = vpop.f32.mrf.mxu0
      %v5654 = vadd.f32 0.0, %v5653
      %v5655 = vpop.f32.mrf.mxu0
      %v5656 = vadd.f32 0.0, %v5655
      %5657 = vdwg.mxu0
      %5658 = vmatpush.bf16.msra.mxu0 0
      %5659 = vmatpush.bf16.msra.mxu0 0
      %5660 = vmatpush.bf16.msra.mxu0 0
      %5661 = vmatpush.bf16.msra.mxu0 0
      %5662 = vmatpush.bf16.msra.mxu0 %v5627
      %5663 = vmatpush.bf16.msra.mxu0 %v5624
      %5664 = vmatpush.bf16.msra.mxu0 %v5621
      %5665 = vmatpush.bf16.msra.mxu0 %v5618
      %5666 = vmatmul.bf16.gmra.mxu0 %v5642
      %v5667 = vpop.f32.mrf.mxu0
      %v5668 = vadd.f32 0.0, %v5667
      %v5669 = vpop.f32.mrf.mxu0
      %v5670 = vadd.f32 0.0, %v5669
      %5671 = vdwg.mxu0
      %5672 = vmatpush.bf16.msra.mxu0 0
      %5673 = vmatpush.bf16.msra.mxu0 0
      %5674 = vmatpush.bf16.msra.mxu0 0
      %5675 = vmatpush.bf16.msra.mxu0 0
      %5676 = vmatpush.bf16.msra.mxu0 %v5628
      %5677 = vmatpush.bf16.msra.mxu0 %v5625
      %5678 = vmatpush.bf16.msra.mxu0 %v5622
      %5679 = vmatpush.bf16.msra.mxu0 %v5619
      %5680 = vmatmul.bf16.gmra.mxu0 %v5642
      %v5681 = vpop.f32.mrf.mxu0
      %v5682 = vadd.f32 0.0, %v5681
      %v5683 = vpop.f32.mrf.mxu0
      %v5684 = vadd.f32 0.0, %v5683
      %5685 = vdwg.mxu0
      %v5686 = vpack.c.bf16 %v5105, %v5103
      %s5687 = scalar_lea.vmem %s9, 768
      %v5688 = vld [vmem:[%s5687] sm:$0xff]
      %v5689 = vld [vmem:[%s5687 + $0x8] sm:$0xf]
      %v5690 = vld [vmem:[%s5687 + $0xc] sm:$0xff]
      %v5691 = vld [vmem:[%s5687 + $0x14] sm:$0xf]
      %v5692 = vld [vmem:[%s5687 + $0x18] sm:$0xff]
      %v5693 = vld [vmem:[%s5687 + $0x20] sm:$0xf]
      %v5694 = vld [vmem:[%s5687 + $0x24] sm:$0xff]
      %v5695 = vld [vmem:[%s5687 + $0x2c] sm:$0xf]
      %v5696 = vld [vmem:[%s5687 + $0x30] sm:$0xff]
      %v5697 = vld [vmem:[%s5687 + $0x38] sm:$0xf]
      %v5698 = vld [vmem:[%s5687 + $0x3c] sm:$0xff]
      %v5699 = vld [vmem:[%s5687 + $0x44] sm:$0xf]
      %v5700 = vld [vmem:[%s5687 + $0x48] sm:$0xff]
      %v5701 = vld [vmem:[%s5687 + $0x50] sm:$0xf]
      %v5702 = vld [vmem:[%s5687 + $0x54] sm:$0xff]
      %v5703 = vld [vmem:[%s5687 + $0x5c] sm:$0xf]
      %v5720 = vunpack.c.l.b16 %v5688
      %v5721 = vunpack.c.h.b16 %v5688
      %v5722 = vunpack.c.l.b16 %v5689
      %v5723 = vunpack.c.l.b16 %v5690
      %v5724 = vunpack.c.h.b16 %v5690
      %v5725 = vunpack.c.l.b16 %v5691
      %v5726 = vunpack.c.l.b16 %v5692
      %v5727 = vunpack.c.h.b16 %v5692
      %v5728 = vunpack.c.l.b16 %v5693
      %v5729 = vunpack.c.l.b16 %v5694
      %v5730 = vunpack.c.h.b16 %v5694
      %v5731 = vunpack.c.l.b16 %v5695
      %v5732 = vunpack.c.l.b16 %v5696
      %v5733 = vunpack.c.h.b16 %v5696
      %v5734 = vunpack.c.l.b16 %v5697
      %v5735 = vunpack.c.l.b16 %v5698
      %v5736 = vunpack.c.h.b16 %v5698
      %v5737 = vunpack.c.l.b16 %v5699
      %v5738 = vunpack.c.l.b16 %v5700
      %v5739 = vunpack.c.h.b16 %v5700
      %v5740 = vunpack.c.l.b16 %v5701
      %v5741 = vunpack.c.l.b16 %v5702
      %v5742 = vunpack.c.h.b16 %v5702
      %v5743 = vunpack.c.l.b16 %v5703
      %v5744 = vpack.c.b16 %v5723, %v5720
      %v5745 = vpack.c.b16 %v5724, %v5721
      %v5746 = vpack.c.b16 %v5725, %v5722
      %v5747 = vpack.c.b16 %v5729, %v5726
      %v5748 = vpack.c.b16 %v5730, %v5727
      %v5749 = vpack.c.b16 %v5731, %v5728
      %v5750 = vpack.c.b16 %v5735, %v5732
      %v5751 = vpack.c.b16 %v5736, %v5733
      %v5752 = vpack.c.b16 %v5737, %v5734
      %v5753 = vpack.c.b16 %v5741, %v5738
      %v5754 = vpack.c.b16 %v5742, %v5739
      %v5755 = vpack.c.b16 %v5743, %v5740
      %v5769 = vsel %vm4955, %v5686, 0
      %5771 = vmatpush.bf16.msra.mxu0 0
      %5772 = vmatpush.bf16.msra.mxu0 0
      %5773 = vmatpush.bf16.msra.mxu0 0
      %5774 = vmatpush.bf16.msra.mxu0 0
      %5775 = vmatpush.bf16.msra.mxu0 %v5753
      %5776 = vmatpush.bf16.msra.mxu0 %v5750
      %5777 = vmatpush.bf16.msra.mxu0 %v5747
      %5778 = vmatpush.bf16.msra.mxu0 %v5744
      %5779 = vmatmul.bf16.gmra.mxu0 %v5769
      %v5780 = vpop.f32.mrf.mxu0
      %v5781 = vadd.f32 0.0, %v5780
      %v5782 = vpop.f32.mrf.mxu0
      %v5783 = vadd.f32 0.0, %v5782
      %5784 = vdwg.mxu0
      %5785 = vmatpush.bf16.msra.mxu0 0
      %5786 = vmatpush.bf16.msra.mxu0 0
      %5787 = vmatpush.bf16.msra.mxu0 0
      %5788 = vmatpush.bf16.msra.mxu0 0
      %5789 = vmatpush.bf16.msra.mxu0 %v5754
      %5790 = vmatpush.bf16.msra.mxu0 %v5751
      %5791 = vmatpush.bf16.msra.mxu0 %v5748
      %5792 = vmatpush.bf16.msra.mxu0 %v5745
      %5793 = vmatmul.bf16.gmra.mxu0 %v5769
      %v5794 = vpop.f32.mrf.mxu0
      %v5795 = vadd.f32 0.0, %v5794
      %v5796 = vpop.f32.mrf.mxu0
      %v5797 = vadd.f32 0.0, %v5796
      %5798 = vdwg.mxu0
      %5799 = vmatpush.bf16.msra.mxu0 0
      %5800 = vmatpush.bf16.msra.mxu0 0
      %5801 = vmatpush.bf16.msra.mxu0 0
      %5802 = vmatpush.bf16.msra.mxu0 0
      %5803 = vmatpush.bf16.msra.mxu0 %v5755
      %5804 = vmatpush.bf16.msra.mxu0 %v5752
      %5805 = vmatpush.bf16.msra.mxu0 %v5749
      %5806 = vmatpush.bf16.msra.mxu0 %v5746
      %5807 = vmatmul.bf16.gmra.mxu0 %v5769
      %v5808 = vpop.f32.mrf.mxu0
      %v5809 = vadd.f32 0.0, %v5808
      %v5810 = vpop.f32.mrf.mxu0
      %v5811 = vadd.f32 0.0, %v5810
      %5812 = vdwg.mxu0
      %v5829 = vunpack.c.l.b16 %v5108
      %v5830 = vunpack.c.h.b16 %v5108
      %v5831 = vunpack.c.l.b16 %v5109
      %v5832 = vunpack.c.l.b16 %v5110
      %v5833 = vunpack.c.h.b16 %v5110
      %v5834 = vunpack.c.l.b16 %v5111
      %v5835 = vunpack.c.l.b16 %v5112
      %v5836 = vunpack.c.h.b16 %v5112
      %v5837 = vunpack.c.l.b16 %v5113
      %v5838 = vunpack.c.l.b16 %v5114
      %v5839 = vunpack.c.h.b16 %v5114
      %v5840 = vunpack.c.l.b16 %v5115
      %v5841 = vunpack.c.l.b16 %v5116
      %v5842 = vunpack.c.h.b16 %v5116
      %v5843 = vunpack.c.l.b16 %v5117
      %v5844 = vunpack.c.l.b16 %v5118
      %v5845 = vunpack.c.h.b16 %v5118
      %v5846 = vunpack.c.l.b16 %v5119
      %v5847 = vunpack.c.l.b16 %v5120
      %v5848 = vunpack.c.h.b16 %v5120
      %v5849 = vunpack.c.l.b16 %v5121
      %v5850 = vunpack.c.l.b16 %v5122
      %v5851 = vunpack.c.h.b16 %v5122
      %v5852 = vunpack.c.l.b16 %v5123
      %v5853 = vpack.c.b16 %v5832, %v5829
      %v5854 = vpack.c.b16 %v5833, %v5830
      %v5855 = vpack.c.b16 %v5834, %v5831
      %v5856 = vpack.c.b16 %v5838, %v5835
      %v5857 = vpack.c.b16 %v5839, %v5836
      %v5858 = vpack.c.b16 %v5840, %v5837
      %v5859 = vpack.c.b16 %v5844, %v5841
      %v5860 = vpack.c.b16 %v5845, %v5842
      %v5861 = vpack.c.b16 %v5846, %v5843
      %v5862 = vpack.c.b16 %v5850, %v5847
      %v5863 = vpack.c.b16 %v5851, %v5848
      %v5864 = vpack.c.b16 %v5852, %v5849
      %v5878 = vsel %vm4955, %v5107, 0
      %5880 = vmatpush.bf16.msra.mxu0 0
      %5881 = vmatpush.bf16.msra.mxu0 0
      %5882 = vmatpush.bf16.msra.mxu0 0
      %5883 = vmatpush.bf16.msra.mxu0 0
      %5884 = vmatpush.bf16.msra.mxu0 %v5862
      %5885 = vmatpush.bf16.msra.mxu0 %v5859
      %5886 = vmatpush.bf16.msra.mxu0 %v5856
      %5887 = vmatpush.bf16.msra.mxu0 %v5853
      %5888 = vmatmul.bf16.gmra.mxu0 %v5878
      %v5889 = vpop.f32.mrf.mxu0
      %v5890 = vadd.f32 %v5219, %v5889
      %v5891 = vpop.f32.mrf.mxu0
      %v5892 = vadd.f32 %v5221, %v5891
      %5893 = vdwg.mxu0
      %5894 = vmatpush.bf16.msra.mxu0 0
      %5895 = vmatpush.bf16.msra.mxu0 0
      %5896 = vmatpush.bf16.msra.mxu0 0
      %5897 = vmatpush.bf16.msra.mxu0 0
      %5898 = vmatpush.bf16.msra.mxu0 %v5863
      %5899 = vmatpush.bf16.msra.mxu0 %v5860
      %5900 = vmatpush.bf16.msra.mxu0 %v5857
      %5901 = vmatpush.bf16.msra.mxu0 %v5854
      %5902 = vmatmul.bf16.gmra.mxu0 %v5878
      %v5903 = vpop.f32.mrf.mxu0
      %v5904 = vadd.f32 %v5233, %v5903
      %v5905 = vpop.f32.mrf.mxu0
      %v5906 = vadd.f32 %v5235, %v5905
      %5907 = vdwg.mxu0
      %5908 = vmatpush.bf16.msra.mxu0 0
      %5909 = vmatpush.bf16.msra.mxu0 0
      %5910 = vmatpush.bf16.msra.mxu0 0
      %5911 = vmatpush.bf16.msra.mxu0 0
      %5912 = vmatpush.bf16.msra.mxu0 %v5864
      %5913 = vmatpush.bf16.msra.mxu0 %v5861
      %5914 = vmatpush.bf16.msra.mxu0 %v5858
      %5915 = vmatpush.bf16.msra.mxu0 %v5855
      %5916 = vmatmul.bf16.gmra.mxu0 %v5878
      %v5917 = vpop.f32.mrf.mxu0
      %v5918 = vadd.f32 %v5247, %v5917
      %v5919 = vpop.f32.mrf.mxu0
      %v5920 = vadd.f32 %v5249, %v5919
      %5921 = vdwg.mxu0
      %v5938 = vunpack.c.l.b16 %v5253
      %v5939 = vunpack.c.h.b16 %v5253
      %v5940 = vunpack.c.l.b16 %v5254
      %v5941 = vunpack.c.l.b16 %v5255
      %v5942 = vunpack.c.h.b16 %v5255
      %v5943 = vunpack.c.l.b16 %v5256
      %v5944 = vunpack.c.l.b16 %v5257
      %v5945 = vunpack.c.h.b16 %v5257
      %v5946 = vunpack.c.l.b16 %v5258
      %v5947 = vunpack.c.l.b16 %v5259
      %v5948 = vunpack.c.h.b16 %v5259
      %v5949 = vunpack.c.l.b16 %v5260
      %v5950 = vunpack.c.l.b16 %v5261
      %v5951 = vunpack.c.h.b16 %v5261
      %v5952 = vunpack.c.l.b16 %v5262
      %v5953 = vunpack.c.l.b16 %v5263
      %v5954 = vunpack.c.h.b16 %v5263
      %v5955 = vunpack.c.l.b16 %v5264
      %v5956 = vunpack.c.l.b16 %v5265
      %v5957 = vunpack.c.h.b16 %v5265
      %v5958 = vunpack.c.l.b16 %v5266
      %v5959 = vunpack.c.l.b16 %v5267
      %v5960 = vunpack.c.h.b16 %v5267
      %v5961 = vunpack.c.l.b16 %v5268
      %v5962 = vpack.c.b16 %v5941, %v5938
      %v5963 = vpack.c.b16 %v5942, %v5939
      %v5964 = vpack.c.b16 %v5943, %v5940
      %v5965 = vpack.c.b16 %v5947, %v5944
      %v5966 = vpack.c.b16 %v5948, %v5945
      %v5967 = vpack.c.b16 %v5949, %v5946
      %v5968 = vpack.c.b16 %v5953, %v5950
      %v5969 = vpack.c.b16 %v5954, %v5951
      %v5970 = vpack.c.b16 %v5955, %v5952
      %v5971 = vpack.c.b16 %v5959, %v5956
      %v5972 = vpack.c.b16 %v5960, %v5957
      %v5973 = vpack.c.b16 %v5961, %v5958
      %v5987 = vsel %vm4955, %v5251, 0
      %5989 = vmatpush.bf16.msra.mxu0 0
      %5990 = vmatpush.bf16.msra.mxu0 0
      %5991 = vmatpush.bf16.msra.mxu0 0
      %5992 = vmatpush.bf16.msra.mxu0 0
      %5993 = vmatpush.bf16.msra.mxu0 %v5971
      %5994 = vmatpush.bf16.msra.mxu0 %v5968
      %5995 = vmatpush.bf16.msra.mxu0 %v5965
      %5996 = vmatpush.bf16.msra.mxu0 %v5962
      %5997 = vmatmul.bf16.gmra.mxu0 %v5987
      %v5998 = vpop.f32.mrf.mxu0
      %v5999 = vadd.f32 %v5364, %v5998
      %v6000 = vpop.f32.mrf.mxu0
      %v6001 = vadd.f32 %v5366, %v6000
      %6002 = vdwg.mxu0
      %6003 = vmatpush.bf16.msra.mxu0 0
      %6004 = vmatpush.bf16.msra.mxu0 0
      %6005 = vmatpush.bf16.msra.mxu0 0
      %6006 = vmatpush.bf16.msra.mxu0 0
      %6007 = vmatpush.bf16.msra.mxu0 %v5972
      %6008 = vmatpush.bf16.msra.mxu0 %v5969
      %6009 = vmatpush.bf16.msra.mxu0 %v5966
      %6010 = vmatpush.bf16.msra.mxu0 %v5963
      %6011 = vmatmul.bf16.gmra.mxu0 %v5987
      %v6012 = vpop.f32.mrf.mxu0
      %v6013 = vadd.f32 %v5378, %v6012
      %v6014 = vpop.f32.mrf.mxu0
      %v6015 = vadd.f32 %v5380, %v6014
      %6016 = vdwg.mxu0
      %6017 = vmatpush.bf16.msra.mxu0 0
      %6018 = vmatpush.bf16.msra.mxu0 0
      %6019 = vmatpush.bf16.msra.mxu0 0
      %6020 = vmatpush.bf16.msra.mxu0 0
      %6021 = vmatpush.bf16.msra.mxu0 %v5973
      %6022 = vmatpush.bf16.msra.mxu0 %v5970
      %6023 = vmatpush.bf16.msra.mxu0 %v5967
      %6024 = vmatpush.bf16.msra.mxu0 %v5964
      %6025 = vmatmul.bf16.gmra.mxu0 %v5987
      %v6026 = vpop.f32.mrf.mxu0
      %v6027 = vadd.f32 %v5392, %v6026
      %v6028 = vpop.f32.mrf.mxu0
      %v6029 = vadd.f32 %v5394, %v6028
      %6030 = vdwg.mxu0
      %v6047 = vunpack.c.l.b16 %v5398
      %v6048 = vunpack.c.h.b16 %v5398
      %v6049 = vunpack.c.l.b16 %v5399
      %v6050 = vunpack.c.l.b16 %v5400
      %v6051 = vunpack.c.h.b16 %v5400
      %v6052 = vunpack.c.l.b16 %v5401
      %v6053 = vunpack.c.l.b16 %v5402
      %v6054 = vunpack.c.h.b16 %v5402
      %v6055 = vunpack.c.l.b16 %v5403
      %v6056 = vunpack.c.l.b16 %v5404
      %v6057 = vunpack.c.h.b16 %v5404
      %v6058 = vunpack.c.l.b16 %v5405
      %v6059 = vunpack.c.l.b16 %v5406
      %v6060 = vunpack.c.h.b16 %v5406
      %v6061 = vunpack.c.l.b16 %v5407
      %v6062 = vunpack.c.l.b16 %v5408
      %v6063 = vunpack.c.h.b16 %v5408
      %v6064 = vunpack.c.l.b16 %v5409
      %v6065 = vunpack.c.l.b16 %v5410
      %v6066 = vunpack.c.h.b16 %v5410
      %v6067 = vunpack.c.l.b16 %v5411
      %v6068 = vunpack.c.l.b16 %v5412
      %v6069 = vunpack.c.h.b16 %v5412
      %v6070 = vunpack.c.l.b16 %v5413
      %v6071 = vpack.c.b16 %v6050, %v6047
      %v6072 = vpack.c.b16 %v6051, %v6048
      %v6073 = vpack.c.b16 %v6052, %v6049
      %v6074 = vpack.c.b16 %v6056, %v6053
      %v6075 = vpack.c.b16 %v6057, %v6054
      %v6076 = vpack.c.b16 %v6058, %v6055
      %v6077 = vpack.c.b16 %v6062, %v6059
      %v6078 = vpack.c.b16 %v6063, %v6060
      %v6079 = vpack.c.b16 %v6064, %v6061
      %v6080 = vpack.c.b16 %v6068, %v6065
      %v6081 = vpack.c.b16 %v6069, %v6066
      %v6082 = vpack.c.b16 %v6070, %v6067
      %v6096 = vsel %vm4955, %v5396, 0
      %6098 = vmatpush.bf16.msra.mxu0 0
      %6099 = vmatpush.bf16.msra.mxu0 0
      %6100 = vmatpush.bf16.msra.mxu0 0
      %6101 = vmatpush.bf16.msra.mxu0 0
      %6102 = vmatpush.bf16.msra.mxu0 %v6080
      %6103 = vmatpush.bf16.msra.mxu0 %v6077
      %6104 = vmatpush.bf16.msra.mxu0 %v6074
      %6105 = vmatpush.bf16.msra.mxu0 %v6071
      %6106 = vmatmul.bf16.gmra.mxu0 %v6096
      %v6107 = vpop.f32.mrf.mxu0
      %v6108 = vadd.f32 %v5509, %v6107
      %v6109 = vpop.f32.mrf.mxu0
      %v6110 = vadd.f32 %v5511, %v6109
      %6111 = vdwg.mxu0
      %6112 = vmatpush.bf16.msra.mxu0 0
      %6113 = vmatpush.bf16.msra.mxu0 0
      %6114 = vmatpush.bf16.msra.mxu0 0
      %6115 = vmatpush.bf16.msra.mxu0 0
      %6116 = vmatpush.bf16.msra.mxu0 %v6081
      %6117 = vmatpush.bf16.msra.mxu0 %v6078
      %6118 = vmatpush.bf16.msra.mxu0 %v6075
      %6119 = vmatpush.bf16.msra.mxu0 %v6072
      %6120 = vmatmul.bf16.gmra.mxu0 %v6096
      %v6121 = vpop.f32.mrf.mxu0
      %v6122 = vadd.f32 %v5523, %v6121
      %v6123 = vpop.f32.mrf.mxu0
      %v6124 = vadd.f32 %v5525, %v6123
      %6125 = vdwg.mxu0
      %6126 = vmatpush.bf16.msra.mxu0 0
      %6127 = vmatpush.bf16.msra.mxu0 0
      %6128 = vmatpush.bf16.msra.mxu0 0
      %6129 = vmatpush.bf16.msra.mxu0 0
      %6130 = vmatpush.bf16.msra.mxu0 %v6082
      %6131 = vmatpush.bf16.msra.mxu0 %v6079
      %6132 = vmatpush.bf16.msra.mxu0 %v6076
      %6133 = vmatpush.bf16.msra.mxu0 %v6073
      %6134 = vmatmul.bf16.gmra.mxu0 %v6096
      %v6135 = vpop.f32.mrf.mxu0
      %v6136 = vadd.f32 %v5537, %v6135
      %v6137 = vpop.f32.mrf.mxu0
      %v6138 = vadd.f32 %v5539, %v6137
      %6139 = vdwg.mxu0
      %v6156 = vunpack.c.l.b16 %v5543
      %v6157 = vunpack.c.h.b16 %v5543
      %v6158 = vunpack.c.l.b16 %v5544
      %v6159 = vunpack.c.l.b16 %v5545
      %v6160 = vunpack.c.h.b16 %v5545
      %v6161 = vunpack.c.l.b16 %v5546
      %v6162 = vunpack.c.l.b16 %v5547
      %v6163 = vunpack.c.h.b16 %v5547
      %v6164 = vunpack.c.l.b16 %v5548
      %v6165 = vunpack.c.l.b16 %v5549
      %v6166 = vunpack.c.h.b16 %v5549
      %v6167 = vunpack.c.l.b16 %v5550
      %v6168 = vunpack.c.l.b16 %v5551
      %v6169 = vunpack.c.h.b16 %v5551
      %v6170 = vunpack.c.l.b16 %v5552
      %v6171 = vunpack.c.l.b16 %v5553
      %v6172 = vunpack.c.h.b16 %v5553
      %v6173 = vunpack.c.l.b16 %v5554
      %v6174 = vunpack.c.l.b16 %v5555
      %v6175 = vunpack.c.h.b16 %v5555
      %v6176 = vunpack.c.l.b16 %v5556
      %v6177 = vunpack.c.l.b16 %v5557
      %v6178 = vunpack.c.h.b16 %v5557
      %v6179 = vunpack.c.l.b16 %v5558
      %v6180 = vpack.c.b16 %v6159, %v6156
      %v6181 = vpack.c.b16 %v6160, %v6157
      %v6182 = vpack.c.b16 %v6161, %v6158
      %v6183 = vpack.c.b16 %v6165, %v6162
      %v6184 = vpack.c.b16 %v6166, %v6163
      %v6185 = vpack.c.b16 %v6167, %v6164
      %v6186 = vpack.c.b16 %v6171, %v6168
      %v6187 = vpack.c.b16 %v6172, %v6169
      %v6188 = vpack.c.b16 %v6173, %v6170
      %v6189 = vpack.c.b16 %v6177, %v6174
      %v6190 = vpack.c.b16 %v6178, %v6175
      %v6191 = vpack.c.b16 %v6179, %v6176
      %v6205 = vsel %vm4955, %v5541, 0
      %6207 = vmatpush.bf16.msra.mxu0 0
      %6208 = vmatpush.bf16.msra.mxu0 0
      %6209 = vmatpush.bf16.msra.mxu0 0
      %6210 = vmatpush.bf16.msra.mxu0 0
      %6211 = vmatpush.bf16.msra.mxu0 %v6189
      %6212 = vmatpush.bf16.msra.mxu0 %v6186
      %6213 = vmatpush.bf16.msra.mxu0 %v6183
      %6214 = vmatpush.bf16.msra.mxu0 %v6180
      %6215 = vmatmul.bf16.gmra.mxu0 %v6205
      %v6216 = vpop.f32.mrf.mxu0
      %v6217 = vadd.f32 %v5654, %v6216
      %v6218 = vpop.f32.mrf.mxu0
      %v6219 = vadd.f32 %v5656, %v6218
      %6220 = vdwg.mxu0
      %6221 = vmatpush.bf16.msra.mxu0 0
      %6222 = vmatpush.bf16.msra.mxu0 0
      %6223 = vmatpush.bf16.msra.mxu0 0
      %6224 = vmatpush.bf16.msra.mxu0 0
      %6225 = vmatpush.bf16.msra.mxu0 %v6190
      %6226 = vmatpush.bf16.msra.mxu0 %v6187
      %6227 = vmatpush.bf16.msra.mxu0 %v6184
      %6228 = vmatpush.bf16.msra.mxu0 %v6181
      %6229 = vmatmul.bf16.gmra.mxu0 %v6205
      %v6230 = vpop.f32.mrf.mxu0
      %v6231 = vadd.f32 %v5668, %v6230
      %v6232 = vpop.f32.mrf.mxu0
      %v6233 = vadd.f32 %v5670, %v6232
      %6234 = vdwg.mxu0
      %6235 = vmatpush.bf16.msra.mxu0 0
      %6236 = vmatpush.bf16.msra.mxu0 0
      %6237 = vmatpush.bf16.msra.mxu0 0
      %6238 = vmatpush.bf16.msra.mxu0 0
      %6239 = vmatpush.bf16.msra.mxu0 %v6191
      %6240 = vmatpush.bf16.msra.mxu0 %v6188
      %6241 = vmatpush.bf16.msra.mxu0 %v6185
      %6242 = vmatpush.bf16.msra.mxu0 %v6182
      %6243 = vmatmul.bf16.gmra.mxu0 %v6205
      %v6244 = vpop.f32.mrf.mxu0
      %v6245 = vadd.f32 %v5682, %v6244
      %v6246 = vpop.f32.mrf.mxu0
      %v6247 = vadd.f32 %v5684, %v6246
      %6248 = vdwg.mxu0
      %v6249 = vadd.f32 %v5890, %v5999
      %v6250 = vadd.f32 %v5904, %v6013
      %v6251 = vadd.f32 %v5918, %v6027
      %v6252 = vadd.f32 %v5892, %v6001
      %v6253 = vadd.f32 %v5906, %v6015
      %v6254 = vadd.f32 %v5920, %v6029
      %v6255 = vadd.f32 %v6108, %v6217
      %v6256 = vadd.f32 %v6122, %v6231
      %v6257 = vadd.f32 %v6136, %v6245
      %v6258 = vadd.f32 %v6110, %v6219
      %v6259 = vadd.f32 %v6124, %v6233
      %v6260 = vadd.f32 %v6138, %v6247
      %v6261 = vadd.f32 %v6249, %v6255
      %v6262 = vadd.f32 %v6250, %v6256
      %v6263 = vadd.f32 %v6251, %v6257
      %v6264 = vadd.f32 %v6252, %v6258
      %v6265 = vadd.f32 %v6253, %v6259
      %v6266 = vadd.f32 %v6254, %v6260
      %v6267 = vadd.f32 %v6261, %v5781
      %v6268 = vadd.f32 %v6262, %v5795
      %v6269 = vadd.f32 %v6263, %v5809
      %v6270 = vadd.f32 %v6264, %v5783
      %v6271 = vadd.f32 %v6265, %v5797
      %v6272 = vadd.f32 %v6266, %v5811
      %v6273 = vld [vmem:[%s8] sm:$0xff]
      %v6274 = vld [vmem:[%s8 + $0x8] sm:$0xff]
      %6276 = vset.pattern.permute.xlu0 0
      %6277 = vperm.xlu0 %6276, %v6273
      %v6278 = vpop.permute.xlu0 %6277
      %6281 = vset.pattern.permute.xlu0 0
      %6282 = vperm.xlu0 %6281, %v6274
      %v6283 = vpop.permute.xlu0 %6282
      %v6285 = vadd.f32 %v6267, %v6278
      %v6286 = vadd.f32 %v6268, %v6278
      %v6287 = vadd.f32 %v6269, %v6278
      %v6288 = vadd.f32 %v6270, %v6283
      %v6289 = vadd.f32 %v6271, %v6283
      %v6290 = vadd.f32 %v6272, %v6283
      %v6291 = vmax.f32 %v6285, 0.0
      %v6292 = vmax.f32 %v6286, 0.0
      %v6293 = vmax.f32 %v6287, 0.0
      %v6294 = vmax.f32 %v6288, 0.0
      %v6295 = vmax.f32 %v6289, 0.0
      %v6296 = vmax.f32 %v6290, 0.0
      %v6297 = vld [vmem:[%s10] sm:$0xf]
      %v6298 = vld [vmem:[%s10 + $0x4] sm:$0xf]
      %v6299 = vld [vmem:[%s10 + $0x8] sm:$0xf]
      %v6300 = vld [vmem:[%s10 + $0xc] sm:$0xf]
      %v6301 = vpack.c.bf16 %v6294, %v6291
      %v6302 = vpack.c.bf16 %v6295, %v6292
      %v6303 = vpack.c.bf16 %v6296, %v6293
      %v6308 = vunpack.c.l.b16 %v6297
      %v6309 = vunpack.c.l.b16 %v6298
      %v6310 = vunpack.c.l.b16 %v6299
      %v6311 = vunpack.c.l.b16 %v6300
      %v6312 = vpack.c.b16 %v6309, %v6308
      %v6313 = vpack.c.b16 %v6311, %v6310
      %v6315 = vsel %vm3116, %v6312, 0
      %v6318 = vsel %vm3116, %v6313, 0
      %6320 = vmatpush.bf16.msra.mxu0 0
      %6321 = vmatpush.bf16.msra.mxu0 0
      %6322 = vmatpush.bf16.msra.mxu0 0
      %6323 = vmatpush.bf16.msra.mxu0 0
      %6324 = vmatpush.bf16.msra.mxu0 0
      %6325 = vmatpush.bf16.msra.mxu0 0
      %6326 = vmatpush.bf16.msra.mxu0 0
      %6327 = vmatpush.bf16.msra.mxu0 %v6301
      %6328 = vmatmul.bf16.gmra.mxu0 %v6315
      %v6329 = vpop.f32.mrf.mxu0
      %v6330 = vadd.f32 0.0, %v6329
      %v6331 = vpop.f32.mrf.mxu0
      %v6332 = vadd.f32 0.0, %v6331
      %6333 = vmatmul.bf16.gmra.mxu0 %v6318
      %v6334 = vpop.f32.mrf.mxu0
      %v6335 = vadd.f32 0.0, %v6334
      %v6336 = vpop.f32.mrf.mxu0
      %v6337 = vadd.f32 0.0, %v6336
      %6338 = vdwg.mxu0
      %6339 = vmatpush.bf16.msra.mxu0 0
      %6340 = vmatpush.bf16.msra.mxu0 0
      %6341 = vmatpush.bf16.msra.mxu0 0
      %6342 = vmatpush.bf16.msra.mxu0 0
      %6343 = vmatpush.bf16.msra.mxu0 0
      %6344 = vmatpush.bf16.msra.mxu0 0
      %6345 = vmatpush.bf16.msra.mxu0 0
      %6346 = vmatpush.bf16.msra.mxu0 %v6302
      %6347 = vmatmul.bf16.gmra.mxu0 %v6315
      %v6348 = vpop.f32.mrf.mxu0
      %v6349 = vadd.f32 0.0, %v6348
      %v6350 = vpop.f32.mrf.mxu0
      %v6351 = vadd.f32 0.0, %v6350
      %6352 = vmatmul.bf16.gmra.mxu0 %v6318
      %v6353 = vpop.f32.mrf.mxu0
      %v6354 = vadd.f32 0.0, %v6353
      %v6355 = vpop.f32.mrf.mxu0
      %v6356 = vadd.f32 0.0, %v6355
      %6357 = vdwg.mxu0
      %6358 = vmatpush.bf16.msra.mxu0 0
      %6359 = vmatpush.bf16.msra.mxu0 0
      %6360 = vmatpush.bf16.msra.mxu0 0
      %6361 = vmatpush.bf16.msra.mxu0 0
      %6362 = vmatpush.bf16.msra.mxu0 0
      %6363 = vmatpush.bf16.msra.mxu0 0
      %6364 = vmatpush.bf16.msra.mxu0 0
      %6365 = vmatpush.bf16.msra.mxu0 %v6303
      %6366 = vmatmul.bf16.gmra.mxu0 %v6315
      %v6367 = vpop.f32.mrf.mxu0
      %v6368 = vadd.f32 0.0, %v6367
      %v6369 = vpop.f32.mrf.mxu0
      %v6370 = vadd.f32 0.0, %v6369
      %6371 = vmatmul.bf16.gmra.mxu0 %v6318
      %v6372 = vpop.f32.mrf.mxu0
      %v6373 = vadd.f32 0.0, %v6372
      %v6374 = vpop.f32.mrf.mxu0
      %v6375 = vadd.f32 0.0, %v6374
      %6376 = vdwg.mxu0
      %v6377 = vpack.c.bf16 %v6330, %v6330
      %v6378 = vpack.c.bf16 %v6349, %v6349
      %v6379 = vpack.c.bf16 %v6368, %v6368
      %v6380 = vld [vmem:[%s12] sm:$0xff]
      %v6381 = vld [vmem:[%s12 + $0x8] sm:$0xff]
      %v6382 = vld [vmem:[%s12 + $0x10] sm:$0xff]
      %v6383 = vld [vmem:[%s12 + $0x18] sm:$0xff]
      %v6384 = vld [vmem:[%s12 + $0x20] sm:$0xff]
      %v6385 = vld [vmem:[%s12 + $0x28] sm:$0xff]
      %v6386 = vld [vmem:[%s12 + $0x30] sm:$0xff]
      %v6387 = vld [vmem:[%s12 + $0x38] sm:$0xff]
      %v6388 = vld [vmem:[%s12 + $0x40] sm:$0xff]
      %v6389 = vld [vmem:[%s12 + $0x48] sm:$0xff]
      %v6390 = vld [vmem:[%s12 + $0x50] sm:$0xff]
      %v6391 = vld [vmem:[%s12 + $0x58] sm:$0xff]
      %v6392 = vld [vmem:[%s12 + $0x60] sm:$0xff]
      %v6393 = vld [vmem:[%s12 + $0x68] sm:$0xff]
      %v6394 = vld [vmem:[%s12 + $0x70] sm:$0xff]
      %v6395 = vld [vmem:[%s12 + $0x78] sm:$0xff]
      %v6396 = vld [vmem:[%s12 + $0x80] sm:$0xff]
      %v6397 = vld [vmem:[%s12 + $0x88] sm:$0xff]
      %v6398 = vld [vmem:[%s12 + $0x90] sm:$0xff]
      %v6399 = vld [vmem:[%s12 + $0x98] sm:$0xff]
      %v6400 = vld [vmem:[%s12 + $0xa0] sm:$0xff]
      %v6401 = vld [vmem:[%s12 + $0xa8] sm:$0xff]
      %v6402 = vld [vmem:[%s12 + $0xb0] sm:$0xff]
      %v6403 = vld [vmem:[%s12 + $0xb8] sm:$0xff]
      %v6404 = vld [vmem:[%s12 + $0xc0] sm:$0xff]
      %v6405 = vld [vmem:[%s12 + $0xc8] sm:$0xff]
      %v6406 = vld [vmem:[%s12 + $0xd0] sm:$0xff]
      %v6407 = vld [vmem:[%s12 + $0xd8] sm:$0xff]
      %v6408 = vld [vmem:[%s12 + $0xe0] sm:$0xff]
      %v6409 = vld [vmem:[%s12 + $0xe8] sm:$0xff]
      %v6410 = vld [vmem:[%s12 + $0xf0] sm:$0xff]
      %v6411 = vld [vmem:[%s12 + $0xf8] sm:$0xff]
      %v6412 = vld [vmem:[%s12 + $0x100] sm:$0xff]
      %v6413 = vld [vmem:[%s12 + $0x108] sm:$0xff]
      %v6414 = vld [vmem:[%s12 + $0x110] sm:$0xff]
      %v6415 = vld [vmem:[%s12 + $0x118] sm:$0xff]
      %v6416 = vld [vmem:[%s12 + $0x120] sm:$0x11]
      %v6417 = vpack.c.bf16 %v6332, %v6332
      %v6418 = vpack.c.bf16 %v6351, %v6351
      %v6419 = vpack.c.bf16 %v6370, %v6370
      %s6420 = scalar_lea.vmem %s12, 296
      %v6421 = vld [vmem:[%s6420] sm:$0xff]
      %v6422 = vld [vmem:[%s6420 + $0x8] sm:$0xff]
      %v6423 = vld [vmem:[%s6420 + $0x10] sm:$0xff]
      %v6424 = vld [vmem:[%s6420 + $0x18] sm:$0xff]
      %v6425 = vld [vmem:[%s6420 + $0x20] sm:$0xff]
      %v6426 = vld [vmem:[%s6420 + $0x28] sm:$0xff]
      %v6427 = vld [vmem:[%s6420 + $0x30] sm:$0xff]
      %v6428 = vld [vmem:[%s6420 + $0x38] sm:$0xff]
      %v6429 = vld [vmem:[%s6420 + $0x40] sm:$0xff]
      %v6430 = vld [vmem:[%s6420 + $0x48] sm:$0xff]
      %v6431 = vld [vmem:[%s6420 + $0x50] sm:$0xff]
      %v6432 = vld [vmem:[%s6420 + $0x58] sm:$0xff]
      %v6433 = vld [vmem:[%s6420 + $0x60] sm:$0xff]
      %v6434 = vld [vmem:[%s6420 + $0x68] sm:$0xff]
      %v6435 = vld [vmem:[%s6420 + $0x70] sm:$0xff]
      %v6436 = vld [vmem:[%s6420 + $0x78] sm:$0xff]
      %v6437 = vld [vmem:[%s6420 + $0x80] sm:$0xff]
      %v6438 = vld [vmem:[%s6420 + $0x88] sm:$0xff]
      %v6439 = vld [vmem:[%s6420 + $0x90] sm:$0xff]
      %v6440 = vld [vmem:[%s6420 + $0x98] sm:$0xff]
      %v6441 = vld [vmem:[%s6420 + $0xa0] sm:$0xff]
      %v6442 = vld [vmem:[%s6420 + $0xa8] sm:$0xff]
      %v6443 = vld [vmem:[%s6420 + $0xb0] sm:$0xff]
      %v6444 = vld [vmem:[%s6420 + $0xb8] sm:$0xff]
      %v6445 = vld [vmem:[%s6420 + $0xc0] sm:$0xff]
      %v6446 = vld [vmem:[%s6420 + $0xc8] sm:$0xff]
      %v6447 = vld [vmem:[%s6420 + $0xd0] sm:$0xff]
      %v6448 = vld [vmem:[%s6420 + $0xd8] sm:$0xff]
      %v6449 = vld [vmem:[%s6420 + $0xe0] sm:$0xff]
      %v6450 = vld [vmem:[%s6420 + $0xe8] sm:$0xff]
      %v6451 = vld [vmem:[%s6420 + $0xf0] sm:$0xff]
      %v6452 = vld [vmem:[%s6420 + $0xf8] sm:$0xff]
      %v6453 = vld [vmem:[%s6420 + $0x100] sm:$0xff]
      %v6454 = vld [vmem:[%s6420 + $0x108] sm:$0xff]
      %v6455 = vld [vmem:[%s6420 + $0x110] sm:$0xff]
      %v6456 = vld [vmem:[%s6420 + $0x118] sm:$0xff]
      %v6457 = vld [vmem:[%s6420 + $0x120] sm:$0x11]
      %v6495 = vunpack.c.l.b16 %v6421
      %v6496 = vunpack.c.h.b16 %v6421
      %v6497 = vunpack.c.l.b16 %v6422
      %v6498 = vunpack.c.h.b16 %v6422
      %v6499 = vunpack.c.l.b16 %v6423
      %v6500 = vunpack.c.h.b16 %v6423
      %v6501 = vunpack.c.l.b16 %v6424
      %v6502 = vunpack.c.h.b16 %v6424
      %v6503 = vunpack.c.l.b16 %v6425
      %v6504 = vunpack.c.h.b16 %v6425
      %v6505 = vunpack.c.l.b16 %v6426
      %v6506 = vunpack.c.h.b16 %v6426
      %v6507 = vunpack.c.l.b16 %v6427
      %v6508 = vunpack.c.h.b16 %v6427
      %v6509 = vunpack.c.l.b16 %v6428
      %v6510 = vunpack.c.h.b16 %v6428
      %v6511 = vunpack.c.l.b16 %v6429
      %v6512 = vunpack.c.h.b16 %v6429
      %v6513 = vunpack.c.l.b16 %v6430
      %v6514 = vunpack.c.h.b16 %v6430
      %v6515 = vunpack.c.l.b16 %v6431
      %v6516 = vunpack.c.h.b16 %v6431
      %v6517 = vunpack.c.l.b16 %v6432
      %v6518 = vunpack.c.h.b16 %v6432
      %v6519 = vunpack.c.l.b16 %v6433
      %v6520 = vunpack.c.h.b16 %v6433
      %v6521 = vunpack.c.l.b16 %v6434
      %v6522 = vunpack.c.h.b16 %v6434
      %v6523 = vunpack.c.l.b16 %v6435
      %v6524 = vunpack.c.h.b16 %v6435
      %v6525 = vunpack.c.l.b16 %v6436
      %v6526 = vunpack.c.h.b16 %v6436
      %v6527 = vunpack.c.l.b16 %v6437
      %v6528 = vunpack.c.h.b16 %v6437
      %v6529 = vunpack.c.l.b16 %v6438
      %v6530 = vunpack.c.h.b16 %v6438
      %v6531 = vunpack.c.l.b16 %v6439
      %v6532 = vunpack.c.h.b16 %v6439
      %v6533 = vunpack.c.l.b16 %v6440
      %v6534 = vunpack.c.h.b16 %v6440
      %v6535 = vunpack.c.l.b16 %v6441
      %v6536 = vunpack.c.h.b16 %v6441
      %v6537 = vunpack.c.l.b16 %v6442
      %v6538 = vunpack.c.h.b16 %v6442
      %v6539 = vunpack.c.l.b16 %v6443
      %v6540 = vunpack.c.h.b16 %v6443
      %v6541 = vunpack.c.l.b16 %v6444
      %v6542 = vunpack.c.h.b16 %v6444
      %v6543 = vunpack.c.l.b16 %v6445
      %v6544 = vunpack.c.h.b16 %v6445
      %v6545 = vunpack.c.l.b16 %v6446
      %v6546 = vunpack.c.h.b16 %v6446
      %v6547 = vunpack.c.l.b16 %v6447
      %v6548 = vunpack.c.h.b16 %v6447
      %v6549 = vunpack.c.l.b16 %v6448
      %v6550 = vunpack.c.h.b16 %v6448
      %v6551 = vunpack.c.l.b16 %v6449
      %v6552 = vunpack.c.h.b16 %v6449
      %v6553 = vunpack.c.l.b16 %v6450
      %v6554 = vunpack.c.h.b16 %v6450
      %v6555 = vunpack.c.l.b16 %v6451
      %v6556 = vunpack.c.h.b16 %v6451
      %v6557 = vunpack.c.l.b16 %v6452
      %v6558 = vunpack.c.h.b16 %v6452
      %v6559 = vunpack.c.l.b16 %v6453
      %v6560 = vunpack.c.h.b16 %v6453
      %v6561 = vunpack.c.l.b16 %v6454
      %v6562 = vunpack.c.h.b16 %v6454
      %v6563 = vunpack.c.l.b16 %v6455
      %v6564 = vunpack.c.h.b16 %v6455
      %v6565 = vunpack.c.l.b16 %v6456
      %v6566 = vunpack.c.h.b16 %v6456
      %v6567 = vunpack.c.l.b16 %v6457
      %v6568 = vunpack.c.h.b16 %v6457
      %v6569 = vpack.c.b16 %v6497, %v6495
      %v6570 = vpack.c.b16 %v6498, %v6496
      %v6571 = vpack.c.b16 %v6501, %v6499
      %v6572 = vpack.c.b16 %v6502, %v6500
      %v6573 = vpack.c.b16 %v6505, %v6503
      %v6574 = vpack.c.b16 %v6506, %v6504
      %v6575 = vpack.c.b16 %v6509, %v6507
      %v6576 = vpack.c.b16 %v6510, %v6508
      %v6577 = vpack.c.b16 %v6513, %v6511
      %v6578 = vpack.c.b16 %v6514, %v6512
      %v6579 = vpack.c.b16 %v6517, %v6515
      %v6580 = vpack.c.b16 %v6518, %v6516
      %v6581 = vpack.c.b16 %v6521, %v6519
      %v6582 = vpack.c.b16 %v6522, %v6520
      %v6583 = vpack.c.b16 %v6525, %v6523
      %v6584 = vpack.c.b16 %v6526, %v6524
      %v6585 = vpack.c.b16 %v6529, %v6527
      %v6586 = vpack.c.b16 %v6530, %v6528
      %v6587 = vpack.c.b16 %v6533, %v6531
      %v6588 = vpack.c.b16 %v6534, %v6532
      %v6589 = vpack.c.b16 %v6537, %v6535
      %v6590 = vpack.c.b16 %v6538, %v6536
      %v6591 = vpack.c.b16 %v6541, %v6539
      %v6592 = vpack.c.b16 %v6542, %v6540
      %v6593 = vpack.c.b16 %v6545, %v6543
      %v6594 = vpack.c.b16 %v6546, %v6544
      %v6595 = vpack.c.b16 %v6549, %v6547
      %v6596 = vpack.c.b16 %v6550, %v6548
      %v6597 = vpack.c.b16 %v6553, %v6551
      %v6598 = vpack.c.b16 %v6554, %v6552
      %v6599 = vpack.c.b16 %v6557, %v6555
      %v6600 = vpack.c.b16 %v6558, %v6556
      %v6601 = vpack.c.b16 %v6561, %v6559
      %v6602 = vpack.c.b16 %v6562, %v6560
      %v6603 = vpack.c.b16 %v6565, %v6563
      %v6604 = vpack.c.b16 %v6566, %v6564
      %v6605 = vpack.c.b16 %v6567, %v6567
      %v6606 = vpack.c.b16 %v6568, %v6568
      %vm6643 = vcmask 269312
      %v6645 = vsel %vm6643, %v6419, 0
      %v6647 = vsel 0, 4294967295, 65535
      %v6648 = vsel %vm578, %v6647, 0
      %v6650 = vand.u32 %v6605, %v6648
      %v6653 = vand.u32 %v6606, %v6648
      %6655 = vmatpush.bf16.msra.mxu0 %v6583
      %6656 = vmatpush.bf16.msra.mxu0 %v6581
      %6657 = vmatpush.bf16.msra.mxu0 %v6579
      %6658 = vmatpush.bf16.msra.mxu0 %v6577
      %6659 = vmatpush.bf16.msra.mxu0 %v6575
      %6660 = vmatpush.bf16.msra.mxu0 %v6573
      %6661 = vmatpush.bf16.msra.mxu0 %v6571
      %6662 = vmatpush.bf16.msra.mxu0 %v6569
      %6663 = vmatmul.bf16.gmra.mxu0 %v6417
      %v6664 = vpop.f32.mrf.mxu0
      %v6665 = vadd.f32 0.0, %v6664
      %v6666 = vpop.f32.mrf.mxu0
      %6667 = vdwg.mxu0
      %6668 = vmatpush.bf16.msra.mxu0 %v6599
      %6669 = vmatpush.bf16.msra.mxu0 %v6597
      %6670 = vmatpush.bf16.msra.mxu0 %v6595
      %6671 = vmatpush.bf16.msra.mxu0 %v6593
      %6672 = vmatpush.bf16.msra.mxu0 %v6591
      %6673 = vmatpush.bf16.msra.mxu0 %v6589
      %6674 = vmatpush.bf16.msra.mxu0 %v6587
      %6675 = vmatpush.bf16.msra.mxu0 %v6585
      %6676 = vmatmul.bf16.gmra.mxu0 %v6418
      %v6677 = vpop.f32.mrf.mxu0
      %v6678 = vadd.f32 %v6665, %v6677
      %v6679 = vpop.f32.mrf.mxu0
      %6680 = vdwg.mxu0
      %6681 = vmatpush.bf16.msra.mxu0 0
      %6682 = vmatpush.bf16.msra.mxu0 0
      %6683 = vmatpush.bf16.msra.mxu0 0
      %6684 = vmatpush.bf16.msra.mxu0 0
      %6685 = vmatpush.bf16.msra.mxu0 0
      %6686 = vmatpush.bf16.msra.mxu0 %v6650
      %6687 = vmatpush.bf16.msra.mxu0 %v6603
      %6688 = vmatpush.bf16.msra.mxu0 %v6601
      %6689 = vmatmul.bf16.gmra.mxu0 %v6645
      %v6690 = vpop.f32.mrf.mxu0
      %v6691 = vadd.f32 %v6678, %v6690
      %v6692 = vpop.f32.mrf.mxu0
      %6693 = vdwg.mxu0
      %6694 = vmatpush.bf16.msra.mxu0 %v6584
      %6695 = vmatpush.bf16.msra.mxu0 %v6582
      %6696 = vmatpush.bf16.msra.mxu0 %v6580
      %6697 = vmatpush.bf16.msra.mxu0 %v6578
      %6698 = vmatpush.bf16.msra.mxu0 %v6576
      %6699 = vmatpush.bf16.msra.mxu0 %v6574
      %6700 = vmatpush.bf16.msra.mxu0 %v6572
      %6701 = vmatpush.bf16.msra.mxu0 %v6570
      %6702 = vmatmul.bf16.gmra.mxu0 %v6417
      %v6703 = vpop.f32.mrf.mxu0
      %v6704 = vadd.f32 0.0, %v6703
      %v6705 = vpop.f32.mrf.mxu0
      %6706 = vdwg.mxu0
      %6707 = vmatpush.bf16.msra.mxu0 %v6600
      %6708 = vmatpush.bf16.msra.mxu0 %v6598
      %6709 = vmatpush.bf16.msra.mxu0 %v6596
      %6710 = vmatpush.bf16.msra.mxu0 %v6594
      %6711 = vmatpush.bf16.msra.mxu0 %v6592
      %6712 = vmatpush.bf16.msra.mxu0 %v6590
      %6713 = vmatpush.bf16.msra.mxu0 %v6588
      %6714 = vmatpush.bf16.msra.mxu0 %v6586
      %6715 = vmatmul.bf16.gmra.mxu0 %v6418
      %v6716 = vpop.f32.mrf.mxu0
      %v6717 = vadd.f32 %v6704, %v6716
      %v6718 = vpop.f32.mrf.mxu0
      %6719 = vdwg.mxu0
      %6720 = vmatpush.bf16.msra.mxu0 0
      %6721 = vmatpush.bf16.msra.mxu0 0
      %6722 = vmatpush.bf16.msra.mxu0 0
      %6723 = vmatpush.bf16.msra.mxu0 0
      %6724 = vmatpush.bf16.msra.mxu0 0
      %6725 = vmatpush.bf16.msra.mxu0 %v6653
      %6726 = vmatpush.bf16.msra.mxu0 %v6604
      %6727 = vmatpush.bf16.msra.mxu0 %v6602
      %6728 = vmatmul.bf16.gmra.mxu0 %v6645
      %v6729 = vpop.f32.mrf.mxu0
      %v6730 = vadd.f32 %v6717, %v6729
      %v6731 = vpop.f32.mrf.mxu0
      %6732 = vdwg.mxu0
      %v6733 = vpack.c.bf16 %v6335, %v6335
      %v6734 = vpack.c.bf16 %v6354, %v6354
      %v6735 = vpack.c.bf16 %v6373, %v6373
      %s6736 = scalar_lea.vmem %s12, 592
      %v6737 = vld [vmem:[%s6736] sm:$0xff]
      %v6738 = vld [vmem:[%s6736 + $0x8] sm:$0xff]
      %v6739 = vld [vmem:[%s6736 + $0x10] sm:$0xff]
      %v6740 = vld [vmem:[%s6736 + $0x18] sm:$0xff]
      %v6741 = vld [vmem:[%s6736 + $0x20] sm:$0xff]
      %v6742 = vld [vmem:[%s6736 + $0x28] sm:$0xff]
      %v6743 = vld [vmem:[%s6736 + $0x30] sm:$0xff]
      %v6744 = vld [vmem:[%s6736 + $0x38] sm:$0xff]
      %v6745 = vld [vmem:[%s6736 + $0x40] sm:$0xff]
      %v6746 = vld [vmem:[%s6736 + $0x48] sm:$0xff]
      %v6747 = vld [vmem:[%s6736 + $0x50] sm:$0xff]
      %v6748 = vld [vmem:[%s6736 + $0x58] sm:$0xff]
      %v6749 = vld [vmem:[%s6736 + $0x60] sm:$0xff]
      %v6750 = vld [vmem:[%s6736 + $0x68] sm:$0xff]
      %v6751 = vld [vmem:[%s6736 + $0x70] sm:$0xff]
      %v6752 = vld [vmem:[%s6736 + $0x78] sm:$0xff]
      %v6753 = vld [vmem:[%s6736 + $0x80] sm:$0xff]
      %v6754 = vld [vmem:[%s6736 + $0x88] sm:$0xff]
      %v6755 = vld [vmem:[%s6736 + $0x90] sm:$0xff]
      %v6756 = vld [vmem:[%s6736 + $0x98] sm:$0xff]
      %v6757 = vld [vmem:[%s6736 + $0xa0] sm:$0xff]
      %v6758 = vld [vmem:[%s6736 + $0xa8] sm:$0xff]
      %v6759 = vld [vmem:[%s6736 + $0xb0] sm:$0xff]
      %v6760 = vld [vmem:[%s6736 + $0xb8] sm:$0xff]
      %v6761 = vld [vmem:[%s6736 + $0xc0] sm:$0xff]
      %v6762 = vld [vmem:[%s6736 + $0xc8] sm:$0xff]
      %v6763 = vld [vmem:[%s6736 + $0xd0] sm:$0xff]
      %v6764 = vld [vmem:[%s6736 + $0xd8] sm:$0xff]
      %v6765 = vld [vmem:[%s6736 + $0xe0] sm:$0xff]
      %v6766 = vld [vmem:[%s6736 + $0xe8] sm:$0xff]
      %v6767 = vld [vmem:[%s6736 + $0xf0] sm:$0xff]
      %v6768 = vld [vmem:[%s6736 + $0xf8] sm:$0xff]
      %v6769 = vld [vmem:[%s6736 + $0x100] sm:$0xff]
      %v6770 = vld [vmem:[%s6736 + $0x108] sm:$0xff]
      %v6771 = vld [vmem:[%s6736 + $0x110] sm:$0xff]
      %v6772 = vld [vmem:[%s6736 + $0x118] sm:$0xff]
      %v6773 = vld [vmem:[%s6736 + $0x120] sm:$0x11]
      %v6774 = vpack.c.bf16 %v6337, %v6337
      %v6775 = vpack.c.bf16 %v6356, %v6356
      %v6776 = vpack.c.bf16 %v6375, %v6375
      %s6777 = scalar_lea.vmem %s12, 888
      %v6778 = vld [vmem:[%s6777] sm:$0xff]
      %v6779 = vld [vmem:[%s6777 + $0x8] sm:$0xff]
      %v6780 = vld [vmem:[%s6777 + $0x10] sm:$0xff]
      %v6781 = vld [vmem:[%s6777 + $0x18] sm:$0xff]
      %v6782 = vld [vmem:[%s6777 + $0x20] sm:$0xff]
      %v6783 = vld [vmem:[%s6777 + $0x28] sm:$0xff]
      %v6784 = vld [vmem:[%s6777 + $0x30] sm:$0xff]
      %v6785 = vld [vmem:[%s6777 + $0x38] sm:$0xff]
      %v6786 = vld [vmem:[%s6777 + $0x40] sm:$0xff]
      %v6787 = vld [vmem:[%s6777 + $0x48] sm:$0xff]
      %v6788 = vld [vmem:[%s6777 + $0x50] sm:$0xff]
      %v6789 = vld [vmem:[%s6777 + $0x58] sm:$0xff]
      %v6790 = vld [vmem:[%s6777 + $0x60] sm:$0xff]
      %v6791 = vld [vmem:[%s6777 + $0x68] sm:$0xff]
      %v6792 = vld [vmem:[%s6777 + $0x70] sm:$0xff]
      %v6793 = vld [vmem:[%s6777 + $0x78] sm:$0xff]
      %v6794 = vld [vmem:[%s6777 + $0x80] sm:$0xff]
      %v6795 = vld [vmem:[%s6777 + $0x88] sm:$0xff]
      %v6796 = vld [vmem:[%s6777 + $0x90] sm:$0xff]
      %v6797 = vld [vmem:[%s6777 + $0x98] sm:$0xff]
      %v6798 = vld [vmem:[%s6777 + $0xa0] sm:$0xff]
      %v6799 = vld [vmem:[%s6777 + $0xa8] sm:$0xff]
      %v6800 = vld [vmem:[%s6777 + $0xb0] sm:$0xff]
      %v6801 = vld [vmem:[%s6777 + $0xb8] sm:$0xff]
      %v6802 = vld [vmem:[%s6777 + $0xc0] sm:$0xff]
      %v6803 = vld [vmem:[%s6777 + $0xc8] sm:$0xff]
      %v6804 = vld [vmem:[%s6777 + $0xd0] sm:$0xff]
      %v6805 = vld [vmem:[%s6777 + $0xd8] sm:$0xff]
      %v6806 = vld [vmem:[%s6777 + $0xe0] sm:$0xff]
      %v6807 = vld [vmem:[%s6777 + $0xe8] sm:$0xff]
      %v6808 = vld [vmem:[%s6777 + $0xf0] sm:$0xff]
      %v6809 = vld [vmem:[%s6777 + $0xf8] sm:$0xff]
      %v6810 = vld [vmem:[%s6777 + $0x100] sm:$0xff]
      %v6811 = vld [vmem:[%s6777 + $0x108] sm:$0xff]
      %v6812 = vld [vmem:[%s6777 + $0x110] sm:$0xff]
      %v6813 = vld [vmem:[%s6777 + $0x118] sm:$0xff]
      %v6814 = vld [vmem:[%s6777 + $0x120] sm:$0x11]
      %v6852 = vunpack.c.l.b16 %v6778
      %v6853 = vunpack.c.h.b16 %v6778
      %v6854 = vunpack.c.l.b16 %v6779
      %v6855 = vunpack.c.h.b16 %v6779
      %v6856 = vunpack.c.l.b16 %v6780
      %v6857 = vunpack.c.h.b16 %v6780
      %v6858 = vunpack.c.l.b16 %v6781
      %v6859 = vunpack.c.h.b16 %v6781
      %v6860 = vunpack.c.l.b16 %v6782
      %v6861 = vunpack.c.h.b16 %v6782
      %v6862 = vunpack.c.l.b16 %v6783
      %v6863 = vunpack.c.h.b16 %v6783
      %v6864 = vunpack.c.l.b16 %v6784
      %v6865 = vunpack.c.h.b16 %v6784
      %v6866 = vunpack.c.l.b16 %v6785
      %v6867 = vunpack.c.h.b16 %v6785
      %v6868 = vunpack.c.l.b16 %v6786
      %v6869 = vunpack.c.h.b16 %v6786
      %v6870 = vunpack.c.l.b16 %v6787
      %v6871 = vunpack.c.h.b16 %v6787
      %v6872 = vunpack.c.l.b16 %v6788
      %v6873 = vunpack.c.h.b16 %v6788
      %v6874 = vunpack.c.l.b16 %v6789
      %v6875 = vunpack.c.h.b16 %v6789
      %v6876 = vunpack.c.l.b16 %v6790
      %v6877 = vunpack.c.h.b16 %v6790
      %v6878 = vunpack.c.l.b16 %v6791
      %v6879 = vunpack.c.h.b16 %v6791
      %v6880 = vunpack.c.l.b16 %v6792
      %v6881 = vunpack.c.h.b16 %v6792
      %v6882 = vunpack.c.l.b16 %v6793
      %v6883 = vunpack.c.h.b16 %v6793
      %v6884 = vunpack.c.l.b16 %v6794
      %v6885 = vunpack.c.h.b16 %v6794
      %v6886 = vunpack.c.l.b16 %v6795
      %v6887 = vunpack.c.h.b16 %v6795
      %v6888 = vunpack.c.l.b16 %v6796
      %v6889 = vunpack.c.h.b16 %v6796
      %v6890 = vunpack.c.l.b16 %v6797
      %v6891 = vunpack.c.h.b16 %v6797
      %v6892 = vunpack.c.l.b16 %v6798
      %v6893 = vunpack.c.h.b16 %v6798
      %v6894 = vunpack.c.l.b16 %v6799
      %v6895 = vunpack.c.h.b16 %v6799
      %v6896 = vunpack.c.l.b16 %v6800
      %v6897 = vunpack.c.h.b16 %v6800
      %v6898 = vunpack.c.l.b16 %v6801
      %v6899 = vunpack.c.h.b16 %v6801
      %v6900 = vunpack.c.l.b16 %v6802
      %v6901 = vunpack.c.h.b16 %v6802
      %v6902 = vunpack.c.l.b16 %v6803
      %v6903 = vunpack.c.h.b16 %v6803
      %v6904 = vunpack.c.l.b16 %v6804
      %v6905 = vunpack.c.h.b16 %v6804
      %v6906 = vunpack.c.l.b16 %v6805
      %v6907 = vunpack.c.h.b16 %v6805
      %v6908 = vunpack.c.l.b16 %v6806
      %v6909 = vunpack.c.h.b16 %v6806
      %v6910 = vunpack.c.l.b16 %v6807
      %v6911 = vunpack.c.h.b16 %v6807
      %v6912 = vunpack.c.l.b16 %v6808
      %v6913 = vunpack.c.h.b16 %v6808
      %v6914 = vunpack.c.l.b16 %v6809
      %v6915 = vunpack.c.h.b16 %v6809
      %v6916 = vunpack.c.l.b16 %v6810
      %v6917 = vunpack.c.h.b16 %v6810
      %v6918 = vunpack.c.l.b16 %v6811
      %v6919 = vunpack.c.h.b16 %v6811
      %v6920 = vunpack.c.l.b16 %v6812
      %v6921 = vunpack.c.h.b16 %v6812
      %v6922 = vunpack.c.l.b16 %v6813
      %v6923 = vunpack.c.h.b16 %v6813
      %v6924 = vunpack.c.l.b16 %v6814
      %v6925 = vunpack.c.h.b16 %v6814
      %v6926 = vpack.c.b16 %v6854, %v6852
      %v6927 = vpack.c.b16 %v6855, %v6853
      %v6928 = vpack.c.b16 %v6858, %v6856
      %v6929 = vpack.c.b16 %v6859, %v6857
      %v6930 = vpack.c.b16 %v6862, %v6860
      %v6931 = vpack.c.b16 %v6863, %v6861
      %v6932 = vpack.c.b16 %v6866, %v6864
      %v6933 = vpack.c.b16 %v6867, %v6865
      %v6934 = vpack.c.b16 %v6870, %v6868
      %v6935 = vpack.c.b16 %v6871, %v6869
      %v6936 = vpack.c.b16 %v6874, %v6872
      %v6937 = vpack.c.b16 %v6875, %v6873
      %v6938 = vpack.c.b16 %v6878, %v6876
      %v6939 = vpack.c.b16 %v6879, %v6877
      %v6940 = vpack.c.b16 %v6882, %v6880
      %v6941 = vpack.c.b16 %v6883, %v6881
      %v6942 = vpack.c.b16 %v6886, %v6884
      %v6943 = vpack.c.b16 %v6887, %v6885
      %v6944 = vpack.c.b16 %v6890, %v6888
      %v6945 = vpack.c.b16 %v6891, %v6889
      %v6946 = vpack.c.b16 %v6894, %v6892
      %v6947 = vpack.c.b16 %v6895, %v6893
      %v6948 = vpack.c.b16 %v6898, %v6896
      %v6949 = vpack.c.b16 %v6899, %v6897
      %v6950 = vpack.c.b16 %v6902, %v6900
      %v6951 = vpack.c.b16 %v6903, %v6901
      %v6952 = vpack.c.b16 %v6906, %v6904
      %v6953 = vpack.c.b16 %v6907, %v6905
      %v6954 = vpack.c.b16 %v6910, %v6908
      %v6955 = vpack.c.b16 %v6911, %v6909
      %v6956 = vpack.c.b16 %v6914, %v6912
      %v6957 = vpack.c.b16 %v6915, %v6913
      %v6958 = vpack.c.b16 %v6918, %v6916
      %v6959 = vpack.c.b16 %v6919, %v6917
      %v6960 = vpack.c.b16 %v6922, %v6920
      %v6961 = vpack.c.b16 %v6923, %v6921
      %v6962 = vpack.c.b16 %v6924, %v6924
      %v6963 = vpack.c.b16 %v6925, %v6925
      %v7001 = vsel %vm6643, %v6776, 0
      %v7004 = vand.u32 %v6962, %v6648
      %v7007 = vand.u32 %v6963, %v6648
      %7009 = vmatpush.bf16.msra.mxu0 %v6940
      %7010 = vmatpush.bf16.msra.mxu0 %v6938
      %7011 = vmatpush.bf16.msra.mxu0 %v6936
      %7012 = vmatpush.bf16.msra.mxu0 %v6934
      %7013 = vmatpush.bf16.msra.mxu0 %v6932
      %7014 = vmatpush.bf16.msra.mxu0 %v6930
      %7015 = vmatpush.bf16.msra.mxu0 %v6928
      %7016 = vmatpush.bf16.msra.mxu0 %v6926
      %7017 = vmatmul.bf16.gmra.mxu0 %v6774
      %v7018 = vpop.f32.mrf.mxu0
      %v7019 = vadd.f32 0.0, %v7018
      %v7020 = vpop.f32.mrf.mxu0
      %7021 = vdwg.mxu0
      %7022 = vmatpush.bf16.msra.mxu0 %v6956
      %7023 = vmatpush.bf16.msra.mxu0 %v6954
      %7024 = vmatpush.bf16.msra.mxu0 %v6952
      %7025 = vmatpush.bf16.msra.mxu0 %v6950
      %7026 = vmatpush.bf16.msra.mxu0 %v6948
      %7027 = vmatpush.bf16.msra.mxu0 %v6946
      %7028 = vmatpush.bf16.msra.mxu0 %v6944
      %7029 = vmatpush.bf16.msra.mxu0 %v6942
      %7030 = vmatmul.bf16.gmra.mxu0 %v6775
      %v7031 = vpop.f32.mrf.mxu0
      %v7032 = vadd.f32 %v7019, %v7031
      %v7033 = vpop.f32.mrf.mxu0
      %7034 = vdwg.mxu0
      %7035 = vmatpush.bf16.msra.mxu0 0
      %7036 = vmatpush.bf16.msra.mxu0 0
      %7037 = vmatpush.bf16.msra.mxu0 0
      %7038 = vmatpush.bf16.msra.mxu0 0
      %7039 = vmatpush.bf16.msra.mxu0 0
      %7040 = vmatpush.bf16.msra.mxu0 %v7004
      %7041 = vmatpush.bf16.msra.mxu0 %v6960
      %7042 = vmatpush.bf16.msra.mxu0 %v6958
      %7043 = vmatmul.bf16.gmra.mxu0 %v7001
      %v7044 = vpop.f32.mrf.mxu0
      %v7045 = vadd.f32 %v7032, %v7044
      %v7046 = vpop.f32.mrf.mxu0
      %7047 = vdwg.mxu0
      %7048 = vmatpush.bf16.msra.mxu0 %v6941
      %7049 = vmatpush.bf16.msra.mxu0 %v6939
      %7050 = vmatpush.bf16.msra.mxu0 %v6937
      %7051 = vmatpush.bf16.msra.mxu0 %v6935
      %7052 = vmatpush.bf16.msra.mxu0 %v6933
      %7053 = vmatpush.bf16.msra.mxu0 %v6931
      %7054 = vmatpush.bf16.msra.mxu0 %v6929
      %7055 = vmatpush.bf16.msra.mxu0 %v6927
      %7056 = vmatmul.bf16.gmra.mxu0 %v6774
      %v7057 = vpop.f32.mrf.mxu0
      %v7058 = vadd.f32 0.0, %v7057
      %v7059 = vpop.f32.mrf.mxu0
      %7060 = vdwg.mxu0
      %7061 = vmatpush.bf16.msra.mxu0 %v6957
      %7062 = vmatpush.bf16.msra.mxu0 %v6955
      %7063 = vmatpush.bf16.msra.mxu0 %v6953
      %7064 = vmatpush.bf16.msra.mxu0 %v6951
      %7065 = vmatpush.bf16.msra.mxu0 %v6949
      %7066 = vmatpush.bf16.msra.mxu0 %v6947
      %7067 = vmatpush.bf16.msra.mxu0 %v6945
      %7068 = vmatpush.bf16.msra.mxu0 %v6943
      %7069 = vmatmul.bf16.gmra.mxu0 %v6775
      %v7070 = vpop.f32.mrf.mxu0
      %v7071 = vadd.f32 %v7058, %v7070
      %v7072 = vpop.f32.mrf.mxu0
      %7073 = vdwg.mxu0
      %7074 = vmatpush.bf16.msra.mxu0 0
      %7075 = vmatpush.bf16.msra.mxu0 0
      %7076 = vmatpush.bf16.msra.mxu0 0
      %7077 = vmatpush.bf16.msra.mxu0 0
      %7078 = vmatpush.bf16.msra.mxu0 0
      %7079 = vmatpush.bf16.msra.mxu0 %v7007
      %7080 = vmatpush.bf16.msra.mxu0 %v6961
      %7081 = vmatpush.bf16.msra.mxu0 %v6959
      %7082 = vmatmul.bf16.gmra.mxu0 %v7001
      %v7083 = vpop.f32.mrf.mxu0
      %v7084 = vadd.f32 %v7071, %v7083
      %v7085 = vpop.f32.mrf.mxu0
      %7086 = vdwg.mxu0
      %v7124 = vunpack.c.l.b16 %v6380
      %v7125 = vunpack.c.h.b16 %v6380
      %v7126 = vunpack.c.l.b16 %v6381
      %v7127 = vunpack.c.h.b16 %v6381
      %v7128 = vunpack.c.l.b16 %v6382
      %v7129 = vunpack.c.h.b16 %v6382
      %v7130 = vunpack.c.l.b16 %v6383
      %v7131 = vunpack.c.h.b16 %v6383
      %v7132 = vunpack.c.l.b16 %v6384
      %v7133 = vunpack.c.h.b16 %v6384
      %v7134 = vunpack.c.l.b16 %v6385
      %v7135 = vunpack.c.h.b16 %v6385
      %v7136 = vunpack.c.l.b16 %v6386
      %v7137 = vunpack.c.h.b16 %v6386
      %v7138 = vunpack.c.l.b16 %v6387
      %v7139 = vunpack.c.h.b16 %v6387
      %v7140 = vunpack.c.l.b16 %v6388
      %v7141 = vunpack.c.h.b16 %v6388
      %v7142 = vunpack.c.l.b16 %v6389
      %v7143 = vunpack.c.h.b16 %v6389
      %v7144 = vunpack.c.l.b16 %v6390
      %v7145 = vunpack.c.h.b16 %v6390
      %v7146 = vunpack.c.l.b16 %v6391
      %v7147 = vunpack.c.h.b16 %v6391
      %v7148 = vunpack.c.l.b16 %v6392
      %v7149 = vunpack.c.h.b16 %v6392
      %v7150 = vunpack.c.l.b16 %v6393
      %v7151 = vunpack.c.h.b16 %v6393
      %v7152 = vunpack.c.l.b16 %v6394
      %v7153 = vunpack.c.h.b16 %v6394
      %v7154 = vunpack.c.l.b16 %v6395
      %v7155 = vunpack.c.h.b16 %v6395
      %v7156 = vunpack.c.l.b16 %v6396
      %v7157 = vunpack.c.h.b16 %v6396
      %v7158 = vunpack.c.l.b16 %v6397
      %v7159 = vunpack.c.h.b16 %v6397
      %v7160 = vunpack.c.l.b16 %v6398
      %v7161 = vunpack.c.h.b16 %v6398
      %v7162 = vunpack.c.l.b16 %v6399
      %v7163 = vunpack.c.h.b16 %v6399
      %v7164 = vunpack.c.l.b16 %v6400
      %v7165 = vunpack.c.h.b16 %v6400
      %v7166 = vunpack.c.l.b16 %v6401
      %v7167 = vunpack.c.h.b16 %v6401
      %v7168 = vunpack.c.l.b16 %v6402
      %v7169 = vunpack.c.h.b16 %v6402
      %v7170 = vunpack.c.l.b16 %v6403
      %v7171 = vunpack.c.h.b16 %v6403
      %v7172 = vunpack.c.l.b16 %v6404
      %v7173 = vunpack.c.h.b16 %v6404
      %v7174 = vunpack.c.l.b16 %v6405
      %v7175 = vunpack.c.h.b16 %v6405
      %v7176 = vunpack.c.l.b16 %v6406
      %v7177 = vunpack.c.h.b16 %v6406
      %v7178 = vunpack.c.l.b16 %v6407
      %v7179 = vunpack.c.h.b16 %v6407
      %v7180 = vunpack.c.l.b16 %v6408
      %v7181 = vunpack.c.h.b16 %v6408
      %v7182 = vunpack.c.l.b16 %v6409
      %v7183 = vunpack.c.h.b16 %v6409
      %v7184 = vunpack.c.l.b16 %v6410
      %v7185 = vunpack.c.h.b16 %v6410
      %v7186 = vunpack.c.l.b16 %v6411
      %v7187 = vunpack.c.h.b16 %v6411
      %v7188 = vunpack.c.l.b16 %v6412
      %v7189 = vunpack.c.h.b16 %v6412
      %v7190 = vunpack.c.l.b16 %v6413
      %v7191 = vunpack.c.h.b16 %v6413
      %v7192 = vunpack.c.l.b16 %v6414
      %v7193 = vunpack.c.h.b16 %v6414
      %v7194 = vunpack.c.l.b16 %v6415
      %v7195 = vunpack.c.h.b16 %v6415
      %v7196 = vunpack.c.l.b16 %v6416
      %v7197 = vunpack.c.h.b16 %v6416
      %v7198 = vpack.c.b16 %v7126, %v7124
      %v7199 = vpack.c.b16 %v7127, %v7125
      %v7200 = vpack.c.b16 %v7130, %v7128
      %v7201 = vpack.c.b16 %v7131, %v7129
      %v7202 = vpack.c.b16 %v7134, %v7132
      %v7203 = vpack.c.b16 %v7135, %v7133
      %v7204 = vpack.c.b16 %v7138, %v7136
      %v7205 = vpack.c.b16 %v7139, %v7137
      %v7206 = vpack.c.b16 %v7142, %v7140
      %v7207 = vpack.c.b16 %v7143, %v7141
      %v7208 = vpack.c.b16 %v7146, %v7144
      %v7209 = vpack.c.b16 %v7147, %v7145
      %v7210 = vpack.c.b16 %v7150, %v7148
      %v7211 = vpack.c.b16 %v7151, %v7149
      %v7212 = vpack.c.b16 %v7154, %v7152
      %v7213 = vpack.c.b16 %v7155, %v7153
      %v7214 = vpack.c.b16 %v7158, %v7156
      %v7215 = vpack.c.b16 %v7159, %v7157
      %v7216 = vpack.c.b16 %v7162, %v7160
      %v7217 = vpack.c.b16 %v7163, %v7161
      %v7218 = vpack.c.b16 %v7166, %v7164
      %v7219 = vpack.c.b16 %v7167, %v7165
      %v7220 = vpack.c.b16 %v7170, %v7168
      %v7221 = vpack.c.b16 %v7171, %v7169
      %v7222 = vpack.c.b16 %v7174, %v7172
      %v7223 = vpack.c.b16 %v7175, %v7173
      %v7224 = vpack.c.b16 %v7178, %v7176
      %v7225 = vpack.c.b16 %v7179, %v7177
      %v7226 = vpack.c.b16 %v7182, %v7180
      %v7227 = vpack.c.b16 %v7183, %v7181
      %v7228 = vpack.c.b16 %v7186, %v7184
      %v7229 = vpack.c.b16 %v7187, %v7185
      %v7230 = vpack.c.b16 %v7190, %v7188
      %v7231 = vpack.c.b16 %v7191, %v7189
      %v7232 = vpack.c.b16 %v7194, %v7192
      %v7233 = vpack.c.b16 %v7195, %v7193
      %v7234 = vpack.c.b16 %v7196, %v7196
      %v7235 = vpack.c.b16 %v7197, %v7197
      %v7273 = vsel %vm6643, %v6379, 0
      %v7276 = vand.u32 %v7234, %v6648
      %v7279 = vand.u32 %v7235, %v6648
      %7281 = vmatpush.bf16.msra.mxu0 %v7212
      %7282 = vmatpush.bf16.msra.mxu0 %v7210
      %7283 = vmatpush.bf16.msra.mxu0 %v7208
      %7284 = vmatpush.bf16.msra.mxu0 %v7206
      %7285 = vmatpush.bf16.msra.mxu0 %v7204
      %7286 = vmatpush.bf16.msra.mxu0 %v7202
      %7287 = vmatpush.bf16.msra.mxu0 %v7200
      %7288 = vmatpush.bf16.msra.mxu0 %v7198
      %7289 = vmatmul.bf16.gmra.mxu0 %v6377
      %v7290 = vpop.f32.mrf.mxu0
      %v7291 = vadd.f32 %v6691, %v7290
      %v7292 = vpop.f32.mrf.mxu0
      %7293 = vdwg.mxu0
      %7294 = vmatpush.bf16.msra.mxu0 %v7228
      %7295 = vmatpush.bf16.msra.mxu0 %v7226
      %7296 = vmatpush.bf16.msra.mxu0 %v7224
      %7297 = vmatpush.bf16.msra.mxu0 %v7222
      %7298 = vmatpush.bf16.msra.mxu0 %v7220
      %7299 = vmatpush.bf16.msra.mxu0 %v7218
      %7300 = vmatpush.bf16.msra.mxu0 %v7216
      %7301 = vmatpush.bf16.msra.mxu0 %v7214
      %7302 = vmatmul.bf16.gmra.mxu0 %v6378
      %v7303 = vpop.f32.mrf.mxu0
      %v7304 = vadd.f32 %v7291, %v7303
      %v7305 = vpop.f32.mrf.mxu0
      %7306 = vdwg.mxu0
      %7307 = vmatpush.bf16.msra.mxu0 0
      %7308 = vmatpush.bf16.msra.mxu0 0
      %7309 = vmatpush.bf16.msra.mxu0 0
      %7310 = vmatpush.bf16.msra.mxu0 0
      %7311 = vmatpush.bf16.msra.mxu0 0
      %7312 = vmatpush.bf16.msra.mxu0 %v7276
      %7313 = vmatpush.bf16.msra.mxu0 %v7232
      %7314 = vmatpush.bf16.msra.mxu0 %v7230
      %7315 = vmatmul.bf16.gmra.mxu0 %v7273
      %v7316 = vpop.f32.mrf.mxu0
      %v7317 = vadd.f32 %v7304, %v7316
      %v7318 = vpop.f32.mrf.mxu0
      %7319 = vdwg.mxu0
      %7320 = vmatpush.bf16.msra.mxu0 %v7213
      %7321 = vmatpush.bf16.msra.mxu0 %v7211
      %7322 = vmatpush.bf16.msra.mxu0 %v7209
      %7323 = vmatpush.bf16.msra.mxu0 %v7207
      %7324 = vmatpush.bf16.msra.mxu0 %v7205
      %7325 = vmatpush.bf16.msra.mxu0 %v7203
      %7326 = vmatpush.bf16.msra.mxu0 %v7201
      %7327 = vmatpush.bf16.msra.mxu0 %v7199
      %7328 = vmatmul.bf16.gmra.mxu0 %v6377
      %v7329 = vpop.f32.mrf.mxu0
      %v7330 = vadd.f32 %v6730, %v7329
      %v7331 = vpop.f32.mrf.mxu0
      %7332 = vdwg.mxu0
      %7333 = vmatpush.bf16.msra.mxu0 %v7229
      %7334 = vmatpush.bf16.msra.mxu0 %v7227
      %7335 = vmatpush.bf16.msra.mxu0 %v7225
      %7336 = vmatpush.bf16.msra.mxu0 %v7223
      %7337 = vmatpush.bf16.msra.mxu0 %v7221
      %7338 = vmatpush.bf16.msra.mxu0 %v7219
      %7339 = vmatpush.bf16.msra.mxu0 %v7217
      %7340 = vmatpush.bf16.msra.mxu0 %v7215
      %7341 = vmatmul.bf16.gmra.mxu0 %v6378
      %v7342 = vpop.f32.mrf.mxu0
      %v7343 = vadd.f32 %v7330, %v7342
      %v7344 = vpop.f32.mrf.mxu0
      %7345 = vdwg.mxu0
      %7346 = vmatpush.bf16.msra.mxu0 0
      %7347 = vmatpush.bf16.msra.mxu0 0
      %7348 = vmatpush.bf16.msra.mxu0 0
      %7349 = vmatpush.bf16.msra.mxu0 0
      %7350 = vmatpush.bf16.msra.mxu0 0
      %7351 = vmatpush.bf16.msra.mxu0 %v7279
      %7352 = vmatpush.bf16.msra.mxu0 %v7233
      %7353 = vmatpush.bf16.msra.mxu0 %v7231
      %7354 = vmatmul.bf16.gmra.mxu0 %v7273
      %v7355 = vpop.f32.mrf.mxu0
      %v7356 = vadd.f32 %v7343, %v7355
      %v7357 = vpop.f32.mrf.mxu0
      %7358 = vdwg.mxu0
      %v7396 = vunpack.c.l.b16 %v6737
      %v7397 = vunpack.c.h.b16 %v6737
      %v7398 = vunpack.c.l.b16 %v6738
      %v7399 = vunpack.c.h.b16 %v6738
      %v7400 = vunpack.c.l.b16 %v6739
      %v7401 = vunpack.c.h.b16 %v6739
      %v7402 = vunpack.c.l.b16 %v6740
      %v7403 = vunpack.c.h.b16 %v6740
      %v7404 = vunpack.c.l.b16 %v6741
      %v7405 = vunpack.c.h.b16 %v6741
      %v7406 = vunpack.c.l.b16 %v6742
      %v7407 = vunpack.c.h.b16 %v6742
      %v7408 = vunpack.c.l.b16 %v6743
      %v7409 = vunpack.c.h.b16 %v6743
      %v7410 = vunpack.c.l.b16 %v6744
      %v7411 = vunpack.c.h.b16 %v6744
      %v7412 = vunpack.c.l.b16 %v6745
      %v7413 = vunpack.c.h.b16 %v6745
      %v7414 = vunpack.c.l.b16 %v6746
      %v7415 = vunpack.c.h.b16 %v6746
      %v7416 = vunpack.c.l.b16 %v6747
      %v7417 = vunpack.c.h.b16 %v6747
      %v7418 = vunpack.c.l.b16 %v6748
      %v7419 = vunpack.c.h.b16 %v6748
      %v7420 = vunpack.c.l.b16 %v6749
      %v7421 = vunpack.c.h.b16 %v6749
      %v7422 = vunpack.c.l.b16 %v6750
      %v7423 = vunpack.c.h.b16 %v6750
      %v7424 = vunpack.c.l.b16 %v6751
      %v7425 = vunpack.c.h.b16 %v6751
      %v7426 = vunpack.c.l.b16 %v6752
      %v7427 = vunpack.c.h.b16 %v6752
      %v7428 = vunpack.c.l.b16 %v6753
      %v7429 = vunpack.c.h.b16 %v6753
      %v7430 = vunpack.c.l.b16 %v6754
      %v7431 = vunpack.c.h.b16 %v6754
      %v7432 = vunpack.c.l.b16 %v6755
      %v7433 = vunpack.c.h.b16 %v6755
      %v7434 = vunpack.c.l.b16 %v6756
      %v7435 = vunpack.c.h.b16 %v6756
      %v7436 = vunpack.c.l.b16 %v6757
      %v7437 = vunpack.c.h.b16 %v6757
      %v7438 = vunpack.c.l.b16 %v6758
      %v7439 = vunpack.c.h.b16 %v6758
      %v7440 = vunpack.c.l.b16 %v6759
      %v7441 = vunpack.c.h.b16 %v6759
      %v7442 = vunpack.c.l.b16 %v6760
      %v7443 = vunpack.c.h.b16 %v6760
      %v7444 = vunpack.c.l.b16 %v6761
      %v7445 = vunpack.c.h.b16 %v6761
      %v7446 = vunpack.c.l.b16 %v6762
      %v7447 = vunpack.c.h.b16 %v6762
      %v7448 = vunpack.c.l.b16 %v6763
      %v7449 = vunpack.c.h.b16 %v6763
      %v7450 = vunpack.c.l.b16 %v6764
      %v7451 = vunpack.c.h.b16 %v6764
      %v7452 = vunpack.c.l.b16 %v6765
      %v7453 = vunpack.c.h.b16 %v6765
      %v7454 = vunpack.c.l.b16 %v6766
      %v7455 = vunpack.c.h.b16 %v6766
      %v7456 = vunpack.c.l.b16 %v6767
      %v7457 = vunpack.c.h.b16 %v6767
      %v7458 = vunpack.c.l.b16 %v6768
      %v7459 = vunpack.c.h.b16 %v6768
      %v7460 = vunpack.c.l.b16 %v6769
      %v7461 = vunpack.c.h.b16 %v6769
      %v7462 = vunpack.c.l.b16 %v6770
      %v7463 = vunpack.c.h.b16 %v6770
      %v7464 = vunpack.c.l.b16 %v6771
      %v7465 = vunpack.c.h.b16 %v6771
      %v7466 = vunpack.c.l.b16 %v6772
      %v7467 = vunpack.c.h.b16 %v6772
      %v7468 = vunpack.c.l.b16 %v6773
      %v7469 = vunpack.c.h.b16 %v6773
      %v7470 = vpack.c.b16 %v7398, %v7396
      %v7471 = vpack.c.b16 %v7399, %v7397
      %v7472 = vpack.c.b16 %v7402, %v7400
      %v7473 = vpack.c.b16 %v7403, %v7401
      %v7474 = vpack.c.b16 %v7406, %v7404
      %v7475 = vpack.c.b16 %v7407, %v7405
      %v7476 = vpack.c.b16 %v7410, %v7408
      %v7477 = vpack.c.b16 %v7411, %v7409
      %v7478 = vpack.c.b16 %v7414, %v7412
      %v7479 = vpack.c.b16 %v7415, %v7413
      %v7480 = vpack.c.b16 %v7418, %v7416
      %v7481 = vpack.c.b16 %v7419, %v7417
      %v7482 = vpack.c.b16 %v7422, %v7420
      %v7483 = vpack.c.b16 %v7423, %v7421
      %v7484 = vpack.c.b16 %v7426, %v7424
      %v7485 = vpack.c.b16 %v7427, %v7425
      %v7486 = vpack.c.b16 %v7430, %v7428
      %v7487 = vpack.c.b16 %v7431, %v7429
      %v7488 = vpack.c.b16 %v7434, %v7432
      %v7489 = vpack.c.b16 %v7435, %v7433
      %v7490 = vpack.c.b16 %v7438, %v7436
      %v7491 = vpack.c.b16 %v7439, %v7437
      %v7492 = vpack.c.b16 %v7442, %v7440
      %v7493 = vpack.c.b16 %v7443, %v7441
      %v7494 = vpack.c.b16 %v7446, %v7444
      %v7495 = vpack.c.b16 %v7447, %v7445
      %v7496 = vpack.c.b16 %v7450, %v7448
      %v7497 = vpack.c.b16 %v7451, %v7449
      %v7498 = vpack.c.b16 %v7454, %v7452
      %v7499 = vpack.c.b16 %v7455, %v7453
      %v7500 = vpack.c.b16 %v7458, %v7456
      %v7501 = vpack.c.b16 %v7459, %v7457
      %v7502 = vpack.c.b16 %v7462, %v7460
      %v7503 = vpack.c.b16 %v7463, %v7461
      %v7504 = vpack.c.b16 %v7466, %v7464
      %v7505 = vpack.c.b16 %v7467, %v7465
      %v7506 = vpack.c.b16 %v7468, %v7468
      %v7507 = vpack.c.b16 %v7469, %v7469
      %v7545 = vsel %vm6643, %v6735, 0
      %v7548 = vand.u32 %v7506, %v6648
      %v7551 = vand.u32 %v7507, %v6648
      %7553 = vmatpush.bf16.msra.mxu0 %v7484
      %7554 = vmatpush.bf16.msra.mxu0 %v7482
      %7555 = vmatpush.bf16.msra.mxu0 %v7480
      %7556 = vmatpush.bf16.msra.mxu0 %v7478
      %7557 = vmatpush.bf16.msra.mxu0 %v7476
      %7558 = vmatpush.bf16.msra.mxu0 %v7474
      %7559 = vmatpush.bf16.msra.mxu0 %v7472
      %7560 = vmatpush.bf16.msra.mxu0 %v7470
      %7561 = vmatmul.bf16.gmra.mxu0 %v6733
      %v7562 = vpop.f32.mrf.mxu0
      %v7563 = vadd.f32 %v7045, %v7562
      %v7564 = vpop.f32.mrf.mxu0
      %7565 = vdwg.mxu0
      %7566 = vmatpush.bf16.msra.mxu0 %v7500
      %7567 = vmatpush.bf16.msra.mxu0 %v7498
      %7568 = vmatpush.bf16.msra.mxu0 %v7496
      %7569 = vmatpush.bf16.msra.mxu0 %v7494
      %7570 = vmatpush.bf16.msra.mxu0 %v7492
      %7571 = vmatpush.bf16.msra.mxu0 %v7490
      %7572 = vmatpush.bf16.msra.mxu0 %v7488
      %7573 = vmatpush.bf16.msra.mxu0 %v7486
      %7574 = vmatmul.bf16.gmra.mxu0 %v6734
      %v7575 = vpop.f32.mrf.mxu0
      %v7576 = vadd.f32 %v7563, %v7575
      %v7577 = vpop.f32.mrf.mxu0
      %7578 = vdwg.mxu0
      %7579 = vmatpush.bf16.msra.mxu0 0
      %7580 = vmatpush.bf16.msra.mxu0 0
      %7581 = vmatpush.bf16.msra.mxu0 0
      %7582 = vmatpush.bf16.msra.mxu0 0
      %7583 = vmatpush.bf16.msra.mxu0 0
      %7584 = vmatpush.bf16.msra.mxu0 %v7548
      %7585 = vmatpush.bf16.msra.mxu0 %v7504
      %7586 = vmatpush.bf16.msra.mxu0 %v7502
      %7587 = vmatmul.bf16.gmra.mxu0 %v7545
      %v7588 = vpop.f32.mrf.mxu0
      %v7589 = vadd.f32 %v7576, %v7588
      %v7590 = vpop.f32.mrf.mxu0
      %7591 = vdwg.mxu0
      %7592 = vmatpush.bf16.msra.mxu0 %v7485
      %7593 = vmatpush.bf16.msra.mxu0 %v7483
      %7594 = vmatpush.bf16.msra.mxu0 %v7481
      %7595 = vmatpush.bf16.msra.mxu0 %v7479
      %7596 = vmatpush.bf16.msra.mxu0 %v7477
      %7597 = vmatpush.bf16.msra.mxu0 %v7475
      %7598 = vmatpush.bf16.msra.mxu0 %v7473
      %7599 = vmatpush.bf16.msra.mxu0 %v7471
      %7600 = vmatmul.bf16.gmra.mxu0 %v6733
      %v7601 = vpop.f32.mrf.mxu0
      %v7602 = vadd.f32 %v7084, %v7601
      %v7603 = vpop.f32.mrf.mxu0
      %7604 = vdwg.mxu0
      %7605 = vmatpush.bf16.msra.mxu0 %v7501
      %7606 = vmatpush.bf16.msra.mxu0 %v7499
      %7607 = vmatpush.bf16.msra.mxu0 %v7497
      %7608 = vmatpush.bf16.msra.mxu0 %v7495
      %7609 = vmatpush.bf16.msra.mxu0 %v7493
      %7610 = vmatpush.bf16.msra.mxu0 %v7491
      %7611 = vmatpush.bf16.msra.mxu0 %v7489
      %7612 = vmatpush.bf16.msra.mxu0 %v7487
      %7613 = vmatmul.bf16.gmra.mxu0 %v6734
      %v7614 = vpop.f32.mrf.mxu0
      %v7615 = vadd.f32 %v7602, %v7614
      %v7616 = vpop.f32.mrf.mxu0
      %7617 = vdwg.mxu0
      %7618 = vmatpush.bf16.msra.mxu0 0
      %7619 = vmatpush.bf16.msra.mxu0 0
      %7620 = vmatpush.bf16.msra.mxu0 0
      %7621 = vmatpush.bf16.msra.mxu0 0
      %7622 = vmatpush.bf16.msra.mxu0 0
      %7623 = vmatpush.bf16.msra.mxu0 %v7551
      %7624 = vmatpush.bf16.msra.mxu0 %v7505
      %7625 = vmatpush.bf16.msra.mxu0 %v7503
      %7626 = vmatmul.bf16.gmra.mxu0 %v7545
      %v7627 = vpop.f32.mrf.mxu0
      %v7628 = vadd.f32 %v7615, %v7627
      %v7629 = vpop.f32.mrf.mxu0
      %7630 = vdwg.mxu0
      %v7631 = vadd.f32 %v7317, %v7589
      %v7632 = vadd.f32 %v7356, %v7628
      %v7633 = vld [vmem:[%s11] sm:$0x7]
      %7635 = vset.pattern.permute.xlu0 0
      %7636 = vperm.xlu0 %7635, %v7633
      %v7637 = vpop.permute.xlu0 %7636
      %v7639 = vadd.f32 %v7631, %v7637
      %v7640 = vadd.f32 %v7632, %v7637
      %v7641 = vtanh.pop %v7639
      %v7642 = vtanh.pop %v7640
      %v7645 = vrot.slane %v7642, 4
      %vm7646 = vcmask 1043456
      %v7647 = vsel %vm7646, %v7641, %v7645
      %7649 = vst [vmem:[%s480] sm:$0x77] %v7647
      %p7650 = scmp.lt.s32.totalorder %s26, 1
      %s7651 = scalar_select %p7650, %s26, 1
      %s7652 = smul.addr %s7651, 4
      %s7653 = smul.addr %s7652, 8
      %s7654 = scalar_lea.vmem %s13, %s7653
      %p7655 = scmp.lt.s32.totalorder %s26, 1
      %s7656 = scalar_select %p7655, %s26, 1
      %s7657 = smul.addr %s7656, 2
      %s7658 = smul.addr %s7657, 4
      %s7659 = scalar_lea.vmem %s14, %s7658
      // Predicated region
      $region73: #{autoencoder_forward.1} parent=71 // pred_check
        %p7660 = pneg %p322
      $region74: #{autoencoder_forward.1} parent=71 // pred_check_branch
        %7662 = sbr.rel (%p7660) target = $region76
      $region75: #{autoencoder_forward.1} parent=71 // pred_region
        _
      $region76: #{autoencoder_forward.1} parent=71 // pred_fallthru
        _
      // Predicated region
      $region77: #{autoencoder_forward.1} parent=71 // pred_check
        %p7663 = pneg %p348
      $region78: #{autoencoder_forward.1} parent=71 // pred_check_branch
        %7665 = sbr.rel (%p7663) target = $region80
      $region79: #{autoencoder_forward.1} parent=71 // pred_region
        _
      $region80: #{autoencoder_forward.1} parent=71 // pred_fallthru
        _
    $region72: #{autoencoder_forward.1} parent=5 // pred_fallthru
      _
    %p7666 = scmp.le.s32.totalorder 2, %s21
    // Predicated region
    $region81: #{autoencoder_forward.1} parent=5 // pred_check
      %p7667 = pneg %p7666
    $region82: #{autoencoder_forward.1} parent=5 // pred_check_branch
      %7669 = sbr.rel (%p7667) target = $region84
    $region83: #{autoencoder_forward.1} parent=5 // pred_region
      %s7670 = ssub.s32 %s21, 2
      // Predicated region
      $region85: #{autoencoder_forward.1} parent=83 // pred_check
        %p7671 = pneg %p328
      $region86: #{autoencoder_forward.1} parent=83 // pred_check_branch
        %7673 = sbr.rel (%p7671) target = $region88
      $region87: #{autoencoder_forward.1} parent=83 // pred_region
        %p7674 = scmp.lt.s32.totalorder %s27, 1
        %s7675 = scalar_select %p7674, %s27, 1
        %s7676 = smul.addr %s7675, 4
        %s7677 = smul.addr %s7676, 8
        %s7678 = scalar_lea.vmem %s13, %s7677
      $region88: #{autoencoder_forward.1} parent=83 // pred_fallthru
        _
      // Predicated region
      $region89: #{autoencoder_forward.1} parent=83 // pred_check
        %p7679 = pneg %p354
      $region90: #{autoencoder_forward.1} parent=83 // pred_check_branch
        %7681 = sbr.rel (%p7679) target = $region92
      $region91: #{autoencoder_forward.1} parent=83 // pred_region
        %p7682 = scmp.lt.s32.totalorder %s27, 1
        %s7683 = scalar_select %p7682, %s27, 1
        %s7684 = smul.addr %s7683, 2
        %s7685 = smul.addr %s7684, 4
        %s7686 = scalar_lea.vmem %s14, %s7685
      $region92: #{autoencoder_forward.1} parent=83 // pred_fallthru
        _
    $region84: #{autoencoder_forward.1} parent=5 // pred_fallthru
      _
  $region6: #{autoencoder_forward.1} parent=0 // loop_footer
    %s25 = sadd.s32 1, %s21
  $region7: #{autoencoder_forward.1} parent=0 // loop_footer_branch
    %20 = sbr.rel target = $region3
  $region8: #{autoencoder_forward.1} parent=0 // loop_exit
    _

</llo_original>
